<compile_context>
chip_gen: v7x
topology: tpu7x:2x2x1
jax: 0.10.0
libtpu: 0.0.40
codegen_flags: <defaults>
</compile_context>

<pallas_src>
import jax
import jax.numpy as jnp
from jax import lax
from jax.experimental import pallas as pl
from jax.experimental.pallas import tpu as pltpu

# ---- hyperparameters mirroring LTC1.__init__ ----
LTC_INPUT_SIZE = 16
LTC_HIDDEN_SIZE = 19
NUM_CLASSES = 2
SEQ_LENGTH = 32
ODE_UNFOLDS = 6      # ncps LTCCell default
ODE_EPS = 1e-8
BN_EPS = 1e-5


# ================= Pallas kernel 1: fused conv-GEMM + bias + ReLU =================
# (per-channel BN scale is folded into the weight matrix in the wrapper, so the
#  kernel only does dot + bias + relu)
def _gemm_bias_relu_kernel(p_ref, w_ref, bias_ref, o_ref):
    acc = jnp.dot(p_ref[...], w_ref[...], preferred_element_type=jnp.float32)
    o_ref[...] = jnp.maximum(acc + bias_ref[...], 0.0)


def conv_gemm_bias_relu(patches, w_mat, bias):
    """Whole-array single-invocation GEMM: no grid, no row padding.

    Largest call (conv4): patches 205 KB + weights 819 KB + output 16 KB,
    comfortably within scoped VMEM on v5e/v6e/v7x.
    """
    M, _ = patches.shape
    N = w_mat.shape[1]
    return pl.pallas_call(
        _gemm_bias_relu_kernel,
        out_shape=jax.ShapeDtypeStruct((M, N), jnp.float32),
    )(patches, w_mat, bias.reshape(1, N))


def im2col_nhwc(x, kh, kw, stride, pad):
    """x: (B,H,W,C) -> patches (B*Ho*Wo, kh*kw*C), feature ordering (kh, kw, C)."""
    # TODO(synk): an in-kernel shifted-window conv would avoid this patch
    # materialization; kept as XLA glue because the awkward spatial sizes
    # (30/17/9) make in-kernel strided reshapes a lowering risk.
    if pad:
        x = jnp.pad(x, ((0, 0), (pad, pad), (pad, pad), (0, 0)))
    B, H, W, C = x.shape
    Ho = (H - kh) // stride + 1
    Wo = (W - kw) // stride + 1
    cols = [x[:, i:i + stride * Ho:stride, j:j + stride * Wo:stride, :]
            for i in range(kh) for j in range(kw)]
    patches = jnp.concatenate(cols, axis=-1)        # (B,Ho,Wo,kh*kw*C)
    return patches.reshape(B * Ho * Wo, kh * kw * C), Ho, Wo


# ============ Pallas kernel 2: fused LTC (sensory + serial recurrence + output) ============
# One grid step per batch element. All per-neuron tensors are packed on lanes as
# [numerator-half | denominator-half] (width 2N = 38 lanes), so each unfold does a
# single combined weighted reduction.
def _ltc_fused_kernel(x_ref, inw_ref, inb_ref, smu_ref, ssig_ref, sw_ref,
                      mu_ref, sig_ref, w_ref, cmt_ref, gv_ref, dbase_ref,
                      outw_ref, outb_ref, o_ref, sens_ref):
    T = x_ref.shape[1]
    S = x_ref.shape[2]
    N = LTC_HIDDEN_SIZE
    N2 = 2 * N

    # ---- sensory prologue: all T timesteps at once (num|den packed on lanes) ----
    inp = x_ref[0] * inw_ref[...] + inb_ref[...]                    # (T, S) affine input map
    sens = jnp.zeros((T, N2), jnp.float32)
    for s in range(S):                                              # static unroll, S=16
        col = inp[:, s:s + 1]                                       # (T, 1)
        a = jax.nn.sigmoid((col - smu_ref[s:s + 1, :]) * ssig_ref[s:s + 1, :])   # (T, 2N)
        sens = sens + sw_ref[s:s + 1, :] * a
    sens_ref[...] = sens

    # ---- loop-invariant hoists (small: ~16 vregs, no spill pressure) ----
    mu_c = mu_ref[...]          # (N, 2N)  [mu | mu]
    sig_c = sig_ref[...]        # (N, 2N)  [sigma | sigma]
    w_c = w_ref[...]            # (N, 2N)  [wrev | wmat]
    cmt = cmt_ref[...]          # (1, N)   softplus(cm) * ode_unfolds
    gv = gv_ref[...]            # (1, N)   softplus(gleak) * vleak
    dbase = dbase_ref[...]      # (1, N)   cmt + softplus(gleak) + eps
    # identity mask: turns the (1,N) state row into an (N,1) column without a transpose
    eye = (lax.broadcasted_iota(jnp.int32, (N, N), 0)
           == lax.broadcasted_iota(jnp.int32, (N, N), 1)).astype(jnp.float32)

    def step(t, v_row):                                             # v_row: (1, N)
        sens_t = sens_ref[pl.ds(t, 1), :]                           # (1, 2N)
        ns = sens_t[:, :N]                                          # sensory numerator
        ds = sens_t[:, N:N2]                                        # sensory denominator
        for _ in range(ODE_UNFOLDS):                                # static unroll (6)
            v_col = jnp.sum(v_row * eye, axis=1, keepdims=True)     # (N, 1)
            ract = jax.nn.sigmoid((v_col - mu_c) * sig_c)           # (N, 2N)
            red = jnp.sum(w_c * ract, axis=0, keepdims=True)        # (1, 2N) combined reduce
            num = red[:, :N] + ns
            den = red[:, N:N2] + ds
            numer = cmt * v_row + gv + num
            denom = dbase + den
            r = pl.reciprocal(denom, approx=True)
            r = r * (2.0 - denom * r)                               # one Newton step -> ~exact
            v_row = numer * r
        return v_row

    v_last = lax.fori_loop(0, T, step, jnp.zeros((1, N), jnp.float32))

    # ---- output projection folded into the epilogue (motor neurons = first columns) ----
    res = v_last[:, :NUM_CLASSES] * outw_ref[...] + outb_ref[...]   # (1, NUM_CLASSES)
    o_ref[...] = res.reshape(1, 1, NUM_CLASSES)


def ltc_forward(x_bts, p):
    """x_bts: (B, T, S) -> (B, NUM_CLASSES). One fused kernel, grid over batch."""
    B, T, S = x_bts.shape
    N = LTC_HIDDEN_SIZE
    N2 = 2 * N

    def fullspec(shape):
        return pl.BlockSpec(shape, lambda b: (0,) * len(shape))

    out = pl.pallas_call(
        _ltc_fused_kernel,
        out_shape=jax.ShapeDtypeStruct((B, 1, NUM_CLASSES), jnp.float32),
        grid=(B,),
        in_specs=[
            pl.BlockSpec((1, T, S), lambda b: (b, 0, 0)),
            fullspec((1, S)), fullspec((1, S)),
            fullspec((S, N2)), fullspec((S, N2)), fullspec((S, N2)),
            fullspec((N, N2)), fullspec((N, N2)), fullspec((N, N2)),
            fullspec((1, N)), fullspec((1, N)), fullspec((1, N)),
            fullspec((1, NUM_CLASSES)), fullspec((1, NUM_CLASSES)),
        ],
        out_specs=pl.BlockSpec((1, 1, NUM_CLASSES), lambda b: (b, 0, 0)),
        scratch_shapes=[pltpu.VMEM((T, N2), jnp.float32)],
        # "parallel" over batch: lets v7x run the two 192-step serial chains on
        # its two TensorCores; neutral (one extra cheap grid step) on v5e/v6e.
        compiler_params=pltpu.CompilerParams(dimension_semantics=("parallel",)),
    )(x_bts,
      p["input_w"], p["input_b"],
      p["smu_c"], p["ssig_c"], p["sw_c"],
      p["mu_c"], p["sig_c"], p["w_c"],
      p["cmt"], p["gv"], p["dbase"],
      p["output_w"], p["output_b"])
    return out.reshape(B, NUM_CLASSES)


# ================= parameter initialization (deterministic) =================
def init_params(key):
    ks = iter(jax.random.split(key, 40))

    def u(shape, lo, hi):
        return jax.random.uniform(next(ks), shape, jnp.float32, lo, hi)

    def conv_w(kh, kw, cin, cout):
        bound = 1.0 / (cin * kh * kw) ** 0.5
        return u((kh, kw, cin, cout), -bound, bound), u((cout,), -bound, bound)

    p = {}
    p["w1"], p["b1"] = conv_w(3, 3, 1, 16)
    p["w2"], p["b2"] = conv_w(3, 3, 16, 32)
    p["w3"], p["b3"] = conv_w(5, 5, 32, 64)
    p["w4"], p["b4"] = conv_w(5, 5, 64, 128)
    for name, c in (("bn2", 32), ("bn4", 128)):
        p[name + "_g"] = u((c,), 0.5, 1.5)
        p[name + "_b"] = u((c,), -0.1, 0.1)
        p[name + "_m"] = u((c,), -0.1, 0.1)
        p[name + "_v"] = u((c,), 0.5, 1.5)

    # --- LTC cell parameters (ncps LTCCell init ranges, implicit softplus constraints) ---
    S, N = LTC_INPUT_SIZE, LTC_HIDDEN_SIZE
    gleak = u((N,), 0.001, 1.0)
    vleak = u((N,), -0.2, 0.2)
    cm = u((N,), 0.4, 0.6)
    sigma = u((N, N), 3.0, 8.0)
    mu = u((N, N), 0.3, 0.8)
    w = u((N, N), 0.001, 1.0)
    s_sigma = u((S, N), 3.0, 8.0)
    s_mu = u((S, N), 0.3, 0.8)
    s_w = u((S, N), 0.001, 1.0)

    # TODO(synk): exact AutoNCP wiring graph is replaced by a deterministic synthetic adjacency.
    def adjacency(shape):
        sign = jnp.where(jax.random.bernoulli(next(ks), 0.5, shape), 1.0, -1.0)
        mask = jax.random.bernoulli(next(ks), 0.75, shape).astype(jnp.float32)
        return sign * mask

    erev = adjacency((N, N))
    s_erev = adjacency((S, N))
    sparsity = jnp.abs(erev)
    s_sparsity = jnp.abs(s_erev)

    sp = jax.nn.softplus
    wmat = sp(w) * sparsity                 # recurrent synaptic weights
    wrev = wmat * erev                      # weighted reversal potentials
    swe = sp(s_w) * s_sparsity              # sensory synaptic weights
    srev = swe * s_erev

    cmt = (sp(cm) * ODE_UNFOLDS).reshape(1, N)      # cm_t = softplus(cm)/(1.0/ode_unfolds)
    gleak_sp = sp(gleak).reshape(1, N)

    p["ltc"] = dict(
        input_w=jnp.ones((1, S), jnp.float32), input_b=jnp.zeros((1, S), jnp.float32),
        # lane-packed [num | den] sensory params (S, 2N)
        smu_c=jnp.concatenate([s_mu, s_mu], axis=1),
        ssig_c=jnp.concatenate([s_sigma, s_sigma], axis=1),
        sw_c=jnp.concatenate([srev, swe], axis=1),
        # lane-packed [num | den] recurrent params (N, 2N)
        mu_c=jnp.concatenate([mu, mu], axis=1),
        sig_c=jnp.concatenate([sigma, sigma], axis=1),
        w_c=jnp.concatenate([wrev, wmat], axis=1),
        cmt=cmt,
        gv=gleak_sp * vleak.reshape(1, N),
        dbase=cmt + gleak_sp + ODE_EPS,
        output_w=jnp.ones((1, NUM_CLASSES), jnp.float32),
        output_b=jnp.zeros((1, NUM_CLASSES), jnp.float32),
    )
    return p


# ================= full forward pass =================
def forward(p, x_nchw):
    x = jnp.transpose(x_nchw, (0, 2, 3, 1)).astype(jnp.float32)   # NCHW -> NHWC
    B = x.shape[0]

    def conv_block(x, w, kh, kw, stride, pad, scale, bias, cout):
        patches, Ho, Wo = im2col_nhwc(x, kh, kw, stride, pad)
        w_mat = w.reshape(-1, cout)
        if scale is not None:
            w_mat = w_mat * scale[None, :]          # fold BN scale into the weights
        y = conv_gemm_bias_relu(patches, w_mat, bias)
        return y.reshape(B, Ho, Wo, cout)

    # conv1 + relu
    x = conv_block(x, p["w1"], 3, 3, 1, 0, None, p["b1"], 16)
    # conv2 + bn2(eval, folded) + relu
    s2 = p["bn2_g"] / jnp.sqrt(p["bn2_v"] + BN_EPS)
    b2 = p["bn2_b"] + s2 * (p["b2"] - p["bn2_m"])
    x = conv_block(x, p["w2"], 3, 3, 2, 2, s2, b2, 32)
    # conv3 + relu
    x = conv_block(x, p["w3"], 5, 5, 2, 2, None, p["b3"], 64)
    # conv4 + bn4(eval, folded) + relu
    s4 = p["bn4_g"] / jnp.sqrt(p["bn4_v"] + BN_EPS)
    b4 = p["bn4_b"] + s4 * (p["b4"] - p["bn4_m"])
    x = conv_block(x, p["w4"], 5, 5, 2, 2, s4, b4, 128)

    # max_pool2d (2,2): (B,4,4,128) -> (B,2,2,128)
    Bc, H, W, C = x.shape
    x = x.reshape(Bc, H // 2, 2, W // 2, 2, C).max(axis=(2, 4))

    # match PyTorch x.view(-1, 32, 16) on NCHW memory order
    x = jnp.transpose(x, (0, 3, 1, 2)).reshape(Bc, SEQ_LENGTH, LTC_INPUT_SIZE)

    # fused LTC: sensory + serial recurrence (h0 = zeros in-kernel) + output projection
    return ltc_forward(x, p["ltc"])


if __name__ == "__main__":
    key = jax.random.PRNGKey(0)
    pkey, xkey = jax.random.split(key)
    params = init_params(pkey)

    B = 2
    # input spatial 32x32 so that 128*2*2 = 512 = seq_length * ltc_input_size per sample
    x = jax.random.normal(xkey, (B, 1, 32, 32), dtype=jnp.float32)   # NCHW like PyTorch

    fwd = jax.jit(forward)
    out = fwd(params, x)
    out = jax.block_until_ready(out)
    assert out.shape == (B, NUM_CLASSES), out.shape
    assert jnp.all(jnp.isfinite(out))
    print("KERNEL_OK")
</pallas_src>

<mosaic_0001>
module attributes {stable_mosaic.version = 11 : i64} {
  func.func @_gemm_bias_relu_kernel(%arg0: memref<1800x9xf32, #tpu.memory_space<vmem>>, %arg1: memref<9x16xf32, #tpu.memory_space<vmem>>, %arg2: memref<1x16xf32, #tpu.memory_space<vmem>>, %arg3: memref<1800x16xf32, #tpu.memory_space<vmem>>) attributes {dimension_semantics = [], scalar_prefetch = 0 : i64, scratch_operands = 0 : i64, tpu.core_type = #tpu.core_type<tc>} {
    %c0 = arith.constant 0 : index
    %c0_0 = arith.constant 0 : index
    %0 = vector.load %arg0[%c0, %c0_0] : memref<1800x9xf32, #tpu.memory_space<vmem>>, vector<1800x9xf32>
    %c0_1 = arith.constant 0 : index
    %c0_2 = arith.constant 0 : index
    %1 = vector.load %arg1[%c0_1, %c0_2] : memref<9x16xf32, #tpu.memory_space<vmem>>, vector<9x16xf32>
    %cst = arith.constant dense<0.000000e+00> : vector<1800x16xf32>
    %2 = tpu.matmul %0, %1, %cst {dimension_numbers = #tpu.dot_dimension_numbers<[1], [0], [0], [1], [0, 0, 1, 1], [], []>} : vector<1800x9xf32>, vector<9x16xf32>, vector<1800x16xf32> -> vector<1800x16xf32>
    %c0_3 = arith.constant 0 : index
    %c0_4 = arith.constant 0 : index
    %3 = vector.load %arg2[%c0_3, %c0_4] : memref<1x16xf32, #tpu.memory_space<vmem>>, vector<1x16xf32>
    %4 = vector.broadcast %3 : vector<1x16xf32> to vector<1800x16xf32>
    %5 = arith.addf %2, %4 : vector<1800x16xf32>
    %cst_5 = arith.constant 0.000000e+00 : f32
    %6 = vector.broadcast %cst_5 : f32 to vector<1800x16xf32>
    %7 = arith.maximumf %5, %6 : vector<1800x16xf32>
    %c0_6 = arith.constant 0 : index
    %c0_7 = arith.constant 0 : index
    %8 = vector.load %arg3[%c0_6, %c0_7] : memref<1800x16xf32, #tpu.memory_space<vmem>>, vector<1800x16xf32>
    tpu.vector_store %arg3[%c0_6, %c0_7], %7 {strides = array<i32>} : memref<1800x16xf32, #tpu.memory_space<vmem>>, vector<1800x16xf32>,
    return
  }
}

module attributes {stable_mosaic.version = 11 : i64} {
  func.func @_gemm_bias_relu_kernel(%arg0: memref<512x144xf32, #tpu.memory_space<vmem>>, %arg1: memref<144x32xf32, #tpu.memory_space<vmem>>, %arg2: memref<1x32xf32, #tpu.memory_space<vmem>>, %arg3: memref<512x32xf32, #tpu.memory_space<vmem>>) attributes {dimension_semantics = [], scalar_prefetch = 0 : i64, scratch_operands = 0 : i64, tpu.core_type = #tpu.core_type<tc>} {
    %c0 = arith.constant 0 : index
    %c0_0 = arith.constant 0 : index
    %0 = vector.load %arg0[%c0, %c0_0] : memref<512x144xf32, #tpu.memory_space<vmem>>, vector<512x144xf32>
    %c0_1 = arith.constant 0 : index
    %c0_2 = arith.constant 0 : index
    %1 = vector.load %arg1[%c0_1, %c0_2] : memref<144x32xf32, #tpu.memory_space<vmem>>, vector<144x32xf32>
    %cst = arith.constant dense<0.000000e+00> : vector<512x32xf32>
    %2 = tpu.matmul %0, %1, %cst {dimension_numbers = #tpu.dot_dimension_numbers<[1], [0], [0], [1], [0, 0, 1, 1], [], []>} : vector<512x144xf32>, vector<144x32xf32>, vector<512x32xf32> -> vector<512x32xf32>
    %c0_3 = arith.constant 0 : index
    %c0_4 = arith.constant 0 : index
    %3 = vector.load %arg2[%c0_3, %c0_4] : memref<1x32xf32, #tpu.memory_space<vmem>>, vector<1x32xf32>
    %4 = vector.broadcast %3 : vector<1x32xf32> to vector<512x32xf32>
    %5 = arith.addf %2, %4 : vector<512x32xf32>
    %cst_5 = arith.constant 0.000000e+00 : f32
    %6 = vector.broadcast %cst_5 : f32 to vector<512x32xf32>
    %7 = arith.maximumf %5, %6 : vector<512x32xf32>
    %c0_6 = arith.constant 0 : index
    %c0_7 = arith.constant 0 : index
    %8 = vector.load %arg3[%c0_6, %c0_7] : memref<512x32xf32, #tpu.memory_space<vmem>>, vector<512x32xf32>
    tpu.vector_store %arg3[%c0_6, %c0_7], %7 {strides = array<i32>} : memref<512x32xf32, #tpu.memory_space<vmem>>, vector<512x32xf32>,
    return
  }
}

module attributes {stable_mosaic.version = 11 : i64} {
  func.func @_gemm_bias_relu_kernel(%arg0: memref<128x800xf32, #tpu.memory_space<vmem>>, %arg1: memref<800x64xf32, #tpu.memory_space<vmem>>, %arg2: memref<1x64xf32, #tpu.memory_space<vmem>>, %arg3: memref<128x64xf32, #tpu.memory_space<vmem>>) attributes {dimension_semantics = [], scalar_prefetch = 0 : i64, scratch_operands = 0 : i64, tpu.core_type = #tpu.core_type<tc>} {
    %c0 = arith.constant 0 : index
    %c0_0 = arith.constant 0 : index
    %0 = vector.load %arg0[%c0, %c0_0] : memref<128x800xf32, #tpu.memory_space<vmem>>, vector<128x800xf32>
    %c0_1 = arith.constant 0 : index
    %c0_2 = arith.constant 0 : index
    %1 = vector.load %arg1[%c0_1, %c0_2] : memref<800x64xf32, #tpu.memory_space<vmem>>, vector<800x64xf32>
    %cst = arith.constant dense<0.000000e+00> : vector<128x64xf32>
    %2 = tpu.matmul %0, %1, %cst {dimension_numbers = #tpu.dot_dimension_numbers<[1], [0], [0], [1], [0, 0, 1, 1], [], []>} : vector<128x800xf32>, vector<800x64xf32>, vector<128x64xf32> -> vector<128x64xf32>
    %c0_3 = arith.constant 0 : index
    %c0_4 = arith.constant 0 : index
    %3 = vector.load %arg2[%c0_3, %c0_4] : memref<1x64xf32, #tpu.memory_space<vmem>>, vector<1x64xf32>
    %4 = vector.broadcast %3 : vector<1x64xf32> to vector<128x64xf32>
    %5 = arith.addf %2, %4 : vector<128x64xf32>
    %cst_5 = arith.constant 0.000000e+00 : f32
    %6 = vector.broadcast %cst_5 : f32 to vector<128x64xf32>
    %7 = arith.maximumf %5, %6 : vector<128x64xf32>
    %c0_6 = arith.constant 0 : index
    %c0_7 = arith.constant 0 : index
    %8 = vector.load %arg3[%c0_6, %c0_7] : memref<128x64xf32, #tpu.memory_space<vmem>>, vector<128x64xf32>
    tpu.vector_store %arg3[%c0_6, %c0_7], %7 {strides = array<i32>} : memref<128x64xf32, #tpu.memory_space<vmem>>, vector<128x64xf32>,
    return
  }
}

module attributes {stable_mosaic.version = 11 : i64} {
  func.func @_gemm_bias_relu_kernel(%arg0: memref<32x1600xf32, #tpu.memory_space<vmem>>, %arg1: memref<1600x128xf32, #tpu.memory_space<vmem>>, %arg2: memref<1x128xf32, #tpu.memory_space<vmem>>, %arg3: memref<32x128xf32, #tpu.memory_space<vmem>>) attributes {dimension_semantics = [], scalar_prefetch = 0 : i64, scratch_operands = 0 : i64, tpu.core_type = #tpu.core_type<tc>} {
    %c0 = arith.constant 0 : index
    %c0_0 = arith.constant 0 : index
    %0 = vector.load %arg0[%c0, %c0_0] : memref<32x1600xf32, #tpu.memory_space<vmem>>, vector<32x1600xf32>
    %c0_1 = arith.constant 0 : index
    %c0_2 = arith.constant 0 : index
    %1 = vector.load %arg1[%c0_1, %c0_2] : memref<1600x128xf32, #tpu.memory_space<vmem>>, vector<1600x128xf32>
    %cst = arith.constant dense<0.000000e+00> : vector<32x128xf32>
    %2 = tpu.matmul %0, %1, %cst {dimension_numbers = #tpu.dot_dimension_numbers<[1], [0], [0], [1], [0, 0, 1, 1], [], []>} : vector<32x1600xf32>, vector<1600x128xf32>, vector<32x128xf32> -> vector<32x128xf32>
    %c0_3 = arith.constant 0 : index
    %c0_4 = arith.constant 0 : index
    %3 = vector.load %arg2[%c0_3, %c0_4] : memref<1x128xf32, #tpu.memory_space<vmem>>, vector<1x128xf32>
    %4 = vector.broadcast %3 : vector<1x128xf32> to vector<32x128xf32>
    %5 = arith.addf %2, %4 : vector<32x128xf32>
    %cst_5 = arith.constant 0.000000e+00 : f32
    %6 = vector.broadcast %cst_5 : f32 to vector<32x128xf32>
    %7 = arith.maximumf %5, %6 : vector<32x128xf32>
    %c0_6 = arith.constant 0 : index
    %c0_7 = arith.constant 0 : index
    %8 = vector.load %arg3[%c0_6, %c0_7] : memref<32x128xf32, #tpu.memory_space<vmem>>, vector<32x128xf32>
    tpu.vector_store %arg3[%c0_6, %c0_7], %7 {strides = array<i32>} : memref<32x128xf32, #tpu.memory_space<vmem>>, vector<32x128xf32>,
    return
  }
}

module attributes {stable_mosaic.version = 11 : i64} {
  func.func @_ltc_fused_kernel(%arg0: i32, %arg1: memref<1x32x16xf32, #tpu.memory_space<vmem>>, %arg2: memref<1x16xf32, #tpu.memory_space<vmem>>, %arg3: memref<1x16xf32, #tpu.memory_space<vmem>>, %arg4: memref<16x38xf32, #tpu.memory_space<vmem>>, %arg5: memref<16x38xf32, #tpu.memory_space<vmem>>, %arg6: memref<16x38xf32, #tpu.memory_space<vmem>>, %arg7: memref<19x38xf32, #tpu.memory_space<vmem>>, %arg8: memref<19x38xf32, #tpu.memory_space<vmem>>, %arg9: memref<19x38xf32, #tpu.memory_space<vmem>>, %arg10: memref<1x19xf32, #tpu.memory_space<vmem>>, %arg11: memref<1x19xf32, #tpu.memory_space<vmem>>, %arg12: memref<1x19xf32, #tpu.memory_space<vmem>>, %arg13: memref<1x2xf32, #tpu.memory_space<vmem>>, %arg14: memref<1x2xf32, #tpu.memory_space<vmem>>, %arg15: memref<1x1x2xf32, #tpu.memory_space<vmem>>, %arg16: memref<32x38xf32, #tpu.memory_space<vmem>>) attributes {dimension_semantics = [#tpu.dimension_semantics<parallel>], iteration_bounds = array<i64: 2>, scalar_prefetch = 0 : i64, scratch_operands = 1 : i64, tpu.core_type = #tpu.core_type<tc>, window_params = [{transform_indices = @transform_0, window_bounds = array<i64: 1, 32, 16>}, {pipeline_mode = #tpu.pipeline_mode<synchronous>, transform_indices = @transform_1, window_bounds = array<i64: 1, 16>}, {pipeline_mode = #tpu.pipeline_mode<synchronous>, transform_indices = @transform_2, window_bounds = array<i64: 1, 16>}, {pipeline_mode = #tpu.pipeline_mode<synchronous>, transform_indices = @transform_3, window_bounds = array<i64: 16, 38>}, {pipeline_mode = #tpu.pipeline_mode<synchronous>, transform_indices = @transform_4, window_bounds = array<i64: 16, 38>}, {pipeline_mode = #tpu.pipeline_mode<synchronous>, transform_indices = @transform_5, window_bounds = array<i64: 16, 38>}, {pipeline_mode = #tpu.pipeline_mode<synchronous>, transform_indices = @transform_6, window_bounds = array<i64: 19, 38>}, {pipeline_mode = #tpu.pipeline_mode<synchronous>, transform_indices = @transform_7, window_bounds = array<i64: 19, 38>}, {pipeline_mode = #tpu.pipeline_mode<synchronous>, transform_indices = @transform_8, window_bounds = array<i64: 19, 38>}, {pipeline_mode = #tpu.pipeline_mode<synchronous>, transform_indices = @transform_9, window_bounds = array<i64: 1, 19>}, {pipeline_mode = #tpu.pipeline_mode<synchronous>, transform_indices = @transform_10, window_bounds = array<i64: 1, 19>}, {pipeline_mode = #tpu.pipeline_mode<synchronous>, transform_indices = @transform_11, window_bounds = array<i64: 1, 19>}, {pipeline_mode = #tpu.pipeline_mode<synchronous>, transform_indices = @transform_12, window_bounds = array<i64: 1, 2>}, {pipeline_mode = #tpu.pipeline_mode<synchronous>, transform_indices = @transform_13, window_bounds = array<i64: 1, 2>}, {transform_indices = @transform_14, window_bounds = array<i64: 1, 1, 2>}]} {
    %c0 = arith.constant 0 : index
    %c0_0 = arith.constant 0 : index
    %c0_1 = arith.constant 0 : index
    %0 = vector.load %arg1[%c0, %c0_0, %c0_1] : memref<1x32x16xf32, #tpu.memory_space<vmem>>, vector<1x32x16xf32>
    %1 = vector.shape_cast %0 : vector<1x32x16xf32> to vector<32x16xf32>
    %c0_2 = arith.constant 0 : index
    %c0_3 = arith.constant 0 : index
    %2 = vector.load %arg2[%c0_2, %c0_3] : memref<1x16xf32, #tpu.memory_space<vmem>>, vector<1x16xf32>
    %3 = vector.broadcast %2 : vector<1x16xf32> to vector<32x16xf32>
    %4 = arith.mulf %1, %3 : vector<32x16xf32>
    %c0_4 = arith.constant 0 : index
    %c0_5 = arith.constant 0 : index
    %5 = vector.load %arg3[%c0_4, %c0_5] : memref<1x16xf32, #tpu.memory_space<vmem>>, vector<1x16xf32>
    %6 = vector.broadcast %5 : vector<1x16xf32> to vector<32x16xf32>
    %7 = arith.addf %4, %6 : vector<32x16xf32>
    %cst = arith.constant 0.000000e+00 : f32
    %8 = vector.broadcast %cst : f32 to vector<32x38xf32>
    %9 = vector.extract_strided_slice %7 {offsets = [0, 0], sizes = [32, 1], strides = [1, 1]} : vector<32x16xf32> to vector<32x1xf32>
    %c0_6 = arith.constant 0 : index
    %c0_7 = arith.constant 0 : index
    %10 = vector.load %arg4[%c0_6, %c0_7] : memref<16x38xf32, #tpu.memory_space<vmem>>, vector<1x38xf32>
    %11 = vector.broadcast %9 : vector<32x1xf32> to vector<32x38xf32>
    %12 = vector.broadcast %10 : vector<1x38xf32> to vector<32x38xf32>
    %13 = arith.subf %11, %12 : vector<32x38xf32>
    %c0_8 = arith.constant 0 : index
    %c0_9 = arith.constant 0 : index
    %14 = vector.load %arg5[%c0_8, %c0_9] : memref<16x38xf32, #tpu.memory_space<vmem>>, vector<1x38xf32>
    %15 = vector.broadcast %14 : vector<1x38xf32> to vector<32x38xf32>
    %16 = arith.mulf %13, %15 : vector<32x38xf32>
    %17 = arith.negf %16 : vector<32x38xf32>
    %18 = math.exp %17 : vector<32x38xf32>
    %cst_10 = arith.constant 1.000000e+00 : f32
    %19 = vector.broadcast %cst_10 : f32 to vector<32x38xf32>
    %20 = arith.addf %19, %18 : vector<32x38xf32>
    %21 = arith.divf %19, %20 : vector<32x38xf32>
    %c0_11 = arith.constant 0 : index
    %c0_12 = arith.constant 0 : index
    %22 = vector.load %arg6[%c0_11, %c0_12] : memref<16x38xf32, #tpu.memory_space<vmem>>, vector<1x38xf32>
    %23 = vector.broadcast %22 : vector<1x38xf32> to vector<32x38xf32>
    %24 = arith.mulf %23, %21 : vector<32x38xf32>
    %25 = arith.addf %8, %24 : vector<32x38xf32>
    %26 = vector.extract_strided_slice %7 {offsets = [0, 1], sizes = [32, 1], strides = [1, 1]} : vector<32x16xf32> to vector<32x1xf32>
    %c1 = arith.constant 1 : index
    %c0_13 = arith.constant 0 : index
    %27 = vector.load %arg4[%c1, %c0_13] : memref<16x38xf32, #tpu.memory_space<vmem>>, vector<1x38xf32>
    %28 = vector.broadcast %26 : vector<32x1xf32> to vector<32x38xf32>
    %29 = vector.broadcast %27 : vector<1x38xf32> to vector<32x38xf32>
    %30 = arith.subf %28, %29 : vector<32x38xf32>
    %c1_14 = arith.constant 1 : index
    %c0_15 = arith.constant 0 : index
    %31 = vector.load %arg5[%c1_14, %c0_15] : memref<16x38xf32, #tpu.memory_space<vmem>>, vector<1x38xf32>
    %32 = vector.broadcast %31 : vector<1x38xf32> to vector<32x38xf32>
    %33 = arith.mulf %30, %32 : vector<32x38xf32>
    %34 = arith.negf %33 : vector<32x38xf32>
    %35 = math.exp %34 : vector<32x38xf32>
    %cst_16 = arith.constant 1.000000e+00 : f32
    %36 = vector.broadcast %cst_16 : f32 to vector<32x38xf32>
    %37 = arith.addf %36, %35 : vector<32x38xf32>
    %38 = arith.divf %36, %37 : vector<32x38xf32>
    %c1_17 = arith.constant 1 : index
    %c0_18 = arith.constant 0 : index
    %39 = vector.load %arg6[%c1_17, %c0_18] : memref<16x38xf32, #tpu.memory_space<vmem>>, vector<1x38xf32>
    %40 = vector.broadcast %39 : vector<1x38xf32> to vector<32x38xf32>
    %41 = arith.mulf %40, %38 : vector<32x38xf32>
    %42 = arith.addf %25, %41 : vector<32x38xf32>
    %43 = vector.extract_strided_slice %7 {offsets = [0, 2], sizes = [32, 1], strides = [1, 1]} : vector<32x16xf32> to vector<32x1xf32>
    %c2 = arith.constant 2 : index
    %c0_19 = arith.constant 0 : index
    %44 = vector.load %arg4[%c2, %c0_19] : memref<16x38xf32, #tpu.memory_space<vmem>>, vector<1x38xf32>
    %45 = vector.broadcast %43 : vector<32x1xf32> to vector<32x38xf32>
    %46 = vector.broadcast %44 : vector<1x38xf32> to vector<32x38xf32>
    %47 = arith.subf %45, %46 : vector<32x38xf32>
    %c2_20 = arith.constant 2 : index
    %c0_21 = arith.constant 0 : index
    %48 = vector.load %arg5[%c2_20, %c0_21] : memref<16x38xf32, #tpu.memory_space<vmem>>, vector<1x38xf32>
    %49 = vector.broadcast %48 : vector<1x38xf32> to vector<32x38xf32>
    %50 = arith.mulf %47, %49 : vector<32x38xf32>
    %51 = arith.negf %50 : vector<32x38xf32>
    %52 = math.exp %51 : vector<32x38xf32>
    %cst_22 = arith.constant 1.000000e+00 : f32
    %53 = vector.broadcast %cst_22 : f32 to vector<32x38xf32>
    %54 = arith.addf %53, %52 : vector<32x38xf32>
    %55 = arith.divf %53, %54 : vector<32x38xf32>
    %c2_23 = arith.constant 2 : index
    %c0_24 = arith.constant 0 : index
    %56 = vector.load %arg6[%c2_23, %c0_24] : memref<16x38xf32, #tpu.memory_space<vmem>>, vector<1x38xf32>
    %57 = vector.broadcast %56 : vector<1x38xf32> to vector<32x38xf32>
    %58 = arith.mulf %57, %55 : vector<32x38xf32>
    %59 = arith.addf %42, %58 : vector<32x38xf32>
    %60 = vector.extract_strided_slice %7 {offsets = [0, 3], sizes = [32, 1], strides = [1, 1]} : vector<32x16xf32> to vector<32x1xf32>
    %c3 = arith.constant 3 : index
    %c0_25 = arith.constant 0 : index
    %61 = vector.load %arg4[%c3, %c0_25] : memref<16x38xf32, #tpu.memory_space<vmem>>, vector<1x38xf32>
    %62 = vector.broadcast %60 : vector<32x1xf32> to vector<32x38xf32>
    %63 = vector.broadcast %61 : vector<1x38xf32> to vector<32x38xf32>
    %64 = arith.subf %62, %63 : vector<32x38xf32>
    %c3_26 = arith.constant 3 : index
    %c0_27 = arith.constant 0 : index
    %65 = vector.load %arg5[%c3_26, %c0_27] : memref<16x38xf32, #tpu.memory_space<vmem>>, vector<1x38xf32>
    %66 = vector.broadcast %65 : vector<1x38xf32> to vector<32x38xf32>
    %67 = arith.mulf %64, %66 : vector<32x38xf32>
    %68 = arith.negf %67 : vector<32x38xf32>
    %69 = math.exp %68 : vector<32x38xf32>
    %cst_28 = arith.constant 1.000000e+00 : f32
    %70 = vector.broadcast %cst_28 : f32 to vector<32x38xf32>
    %71 = arith.addf %70, %69 : vector<32x38xf32>
    %72 = arith.divf %70, %71 : vector<32x38xf32>
    %c3_29 = arith.constant 3 : index
    %c0_30 = arith.constant 0 : index
    %73 = vector.load %arg6[%c3_29, %c0_30] : memref<16x38xf32, #tpu.memory_space<vmem>>, vector<1x38xf32>
    %74 = vector.broadcast %73 : vector<1x38xf32> to vector<32x38xf32>
    %75 = arith.mulf %74, %72 : vector<32x38xf32>
    %76 = arith.addf %59, %75 : vector<32x38xf32>
    %77 = vector.extract_strided_slice %7 {offsets = [0, 4], sizes = [32, 1], strides = [1, 1]} : vector<32x16xf32> to vector<32x1xf32>
    %c4 = arith.constant 4 : index
    %c0_31 = arith.constant 0 : index
    %78 = vector.load %arg4[%c4, %c0_31] : memref<16x38xf32, #tpu.memory_space<vmem>>, vector<1x38xf32>
    %79 = vector.broadcast %77 : vector<32x1xf32> to vector<32x38xf32>
    %80 = vector.broadcast %78 : vector<1x38xf32> to vector<32x38xf32>
    %81 = arith.subf %79, %80 : vector<32x38xf32>
    %c4_32 = arith.constant 4 : index
    %c0_33 = arith.constant 0 : index
    %82 = vector.load %arg5[%c4_32, %c0_33] : memref<16x38xf32, #tpu.memory_space<vmem>>, vector<1x38xf32>
    %83 = vector.broadcast %82 : vector<1x38xf32> to vector<32x38xf32>
    %84 = arith.mulf %81, %83 : vector<32x38xf32>
    %85 = arith.negf %84 : vector<32x38xf32>
    %86 = math.exp %85 : vector<32x38xf32>
    %cst_34 = arith.constant 1.000000e+00 : f32
    %87 = vector.broadcast %cst_34 : f32 to vector<32x38xf32>
    %88 = arith.addf %87, %86 : vector<32x38xf32>
    %89 = arith.divf %87, %88 : vector<32x38xf32>
    %c4_35 = arith.constant 4 : index
    %c0_36 = arith.constant 0 : index
    %90 = vector.load %arg6[%c4_35, %c0_36] : memref<16x38xf32, #tpu.memory_space<vmem>>, vector<1x38xf32>
    %91 = vector.broadcast %90 : vector<1x38xf32> to vector<32x38xf32>
    %92 = arith.mulf %91, %89 : vector<32x38xf32>
    %93 = arith.addf %76, %92 : vector<32x38xf32>
    %94 = vector.extract_strided_slice %7 {offsets = [0, 5], sizes = [32, 1], strides = [1, 1]} : vector<32x16xf32> to vector<32x1xf32>
    %c5 = arith.constant 5 : index
    %c0_37 = arith.constant 0 : index
    %95 = vector.load %arg4[%c5, %c0_37] : memref<16x38xf32, #tpu.memory_space<vmem>>, vector<1x38xf32>
    %96 = vector.broadcast %94 : vector<32x1xf32> to vector<32x38xf32>
    %97 = vector.broadcast %95 : vector<1x38xf32> to vector<32x38xf32>
    %98 = arith.subf %96, %97 : vector<32x38xf32>
    %c5_38 = arith.constant 5 : index
    %c0_39 = arith.constant 0 : index
    %99 = vector.load %arg5[%c5_38, %c0_39] : memref<16x38xf32, #tpu.memory_space<vmem>>, vector<1x38xf32>
    %100 = vector.broadcast %99 : vector<1x38xf32> to vector<32x38xf32>
    %101 = arith.mulf %98, %100 : vector<32x38xf32>
    %102 = arith.negf %101 : vector<32x38xf32>
    %103 = math.exp %102 : vector<32x38xf32>
    %cst_40 = arith.constant 1.000000e+00 : f32
    %104 = vector.broadcast %cst_40 : f32 to vector<32x38xf32>
    %105 = arith.addf %104, %103 : vector<32x38xf32>
    %106 = arith.divf %104, %105 : vector<32x38xf32>
    %c5_41 = arith.constant 5 : index
    %c0_42 = arith.constant 0 : index
    %107 = vector.load %arg6[%c5_41, %c0_42] : memref<16x38xf32, #tpu.memory_space<vmem>>, vector<1x38xf32>
    %108 = vector.broadcast %107 : vector<1x38xf32> to vector<32x38xf32>
    %109 = arith.mulf %108, %106 : vector<32x38xf32>
    %110 = arith.addf %93, %109 : vector<32x38xf32>
    %111 = vector.extract_strided_slice %7 {offsets = [0, 6], sizes = [32, 1], strides = [1, 1]} : vector<32x16xf32> to vector<32x1xf32>
    %c6 = arith.constant 6 : index
    %c0_43 = arith.constant 0 : index
    %112 = vector.load %arg4[%c6, %c0_43] : memref<16x38xf32, #tpu.memory_space<vmem>>, vector<1x38xf32>
    %113 = vector.broadcast %111 : vector<32x1xf32> to vector<32x38xf32>
    %114 = vector.broadcast %112 : vector<1x38xf32> to vector<32x38xf32>
    %115 = arith.subf %113, %114 : vector<32x38xf32>
    %c6_44 = arith.constant 6 : index
    %c0_45 = arith.constant 0 : index
    %116 = vector.load %arg5[%c6_44, %c0_45] : memref<16x38xf32, #tpu.memory_space<vmem>>, vector<1x38xf32>
    %117 = vector.broadcast %116 : vector<1x38xf32> to vector<32x38xf32>
    %118 = arith.mulf %115, %117 : vector<32x38xf32>
    %119 = arith.negf %118 : vector<32x38xf32>
    %120 = math.exp %119 : vector<32x38xf32>
    %cst_46 = arith.constant 1.000000e+00 : f32
    %121 = vector.broadcast %cst_46 : f32 to vector<32x38xf32>
    %122 = arith.addf %121, %120 : vector<32x38xf32>
    %123 = arith.divf %121, %122 : vector<32x38xf32>
    %c6_47 = arith.constant 6 : index
    %c0_48 = arith.constant 0 : index
    %124 = vector.load %arg6[%c6_47, %c0_48] : memref<16x38xf32, #tpu.memory_space<vmem>>, vector<1x38xf32>
    %125 = vector.broadcast %124 : vector<1x38xf32> to vector<32x38xf32>
    %126 = arith.mulf %125, %123 : vector<32x38xf32>
    %127 = arith.addf %110, %126 : vector<32x38xf32>
    %128 = vector.extract_strided_slice %7 {offsets = [0, 7], sizes = [32, 1], strides = [1, 1]} : vector<32x16xf32> to vector<32x1xf32>
    %c7 = arith.constant 7 : index
    %c0_49 = arith.constant 0 : index
    %129 = vector.load %arg4[%c7, %c0_49] : memref<16x38xf32, #tpu.memory_space<vmem>>, vector<1x38xf32>
    %130 = vector.broadcast %128 : vector<32x1xf32> to vector<32x38xf32>
    %131 = vector.broadcast %129 : vector<1x38xf32> to vector<32x38xf32>
    %132 = arith.subf %130, %131 : vector<32x38xf32>
    %c7_50 = arith.constant 7 : index
    %c0_51 = arith.constant 0 : index
    %133 = vector.load %arg5[%c7_50, %c0_51] : memref<16x38xf32, #tpu.memory_space<vmem>>, vector<1x38xf32>
    %134 = vector.broadcast %133 : vector<1x38xf32> to vector<32x38xf32>
    %135 = arith.mulf %132, %134 : vector<32x38xf32>
    %136 = arith.negf %135 : vector<32x38xf32>
    %137 = math.exp %136 : vector<32x38xf32>
    %cst_52 = arith.constant 1.000000e+00 : f32
    %138 = vector.broadcast %cst_52 : f32 to vector<32x38xf32>
    %139 = arith.addf %138, %137 : vector<32x38xf32>
    %140 = arith.divf %138, %139 : vector<32x38xf32>
    %c7_53 = arith.constant 7 : index
    %c0_54 = arith.constant 0 : index
    %141 = vector.load %arg6[%c7_53, %c0_54] : memref<16x38xf32, #tpu.memory_space<vmem>>, vector<1x38xf32>
    %142 = vector.broadcast %141 : vector<1x38xf32> to vector<32x38xf32>
    %143 = arith.mulf %142, %140 : vector<32x38xf32>
    %144 = arith.addf %127, %143 : vector<32x38xf32>
    %145 = vector.extract_strided_slice %7 {offsets = [0, 8], sizes = [32, 1], strides = [1, 1]} : vector<32x16xf32> to vector<32x1xf32>
    %c8 = arith.constant 8 : index
    %c0_55 = arith.constant 0 : index
    %146 = vector.load %arg4[%c8, %c0_55] : memref<16x38xf32, #tpu.memory_space<vmem>>, vector<1x38xf32>
    %147 = vector.broadcast %145 : vector<32x1xf32> to vector<32x38xf32>
    %148 = vector.broadcast %146 : vector<1x38xf32> to vector<32x38xf32>
    %149 = arith.subf %147, %148 : vector<32x38xf32>
    %c8_56 = arith.constant 8 : index
    %c0_57 = arith.constant 0 : index
    %150 = vector.load %arg5[%c8_56, %c0_57] : memref<16x38xf32, #tpu.memory_space<vmem>>, vector<1x38xf32>
    %151 = vector.broadcast %150 : vector<1x38xf32> to vector<32x38xf32>
    %152 = arith.mulf %149, %151 : vector<32x38xf32>
    %153 = arith.negf %152 : vector<32x38xf32>
    %154 = math.exp %153 : vector<32x38xf32>
    %cst_58 = arith.constant 1.000000e+00 : f32
    %155 = vector.broadcast %cst_58 : f32 to vector<32x38xf32>
    %156 = arith.addf %155, %154 : vector<32x38xf32>
    %157 = arith.divf %155, %156 : vector<32x38xf32>
    %c8_59 = arith.constant 8 : index
    %c0_60 = arith.constant 0 : index
    %158 = vector.load %arg6[%c8_59, %c0_60] : memref<16x38xf32, #tpu.memory_space<vmem>>, vector<1x38xf32>
    %159 = vector.broadcast %158 : vector<1x38xf32> to vector<32x38xf32>
    %160 = arith.mulf %159, %157 : vector<32x38xf32>
    %161 = arith.addf %144, %160 : vector<32x38xf32>
    %162 = vector.extract_strided_slice %7 {offsets = [0, 9], sizes = [32, 1], strides = [1, 1]} : vector<32x16xf32> to vector<32x1xf32>
    %c9 = arith.constant 9 : index
    %c0_61 = arith.constant 0 : index
    %163 = vector.load %arg4[%c9, %c0_61] : memref<16x38xf32, #tpu.memory_space<vmem>>, vector<1x38xf32>
    %164 = vector.broadcast %162 : vector<32x1xf32> to vector<32x38xf32>
    %165 = vector.broadcast %163 : vector<1x38xf32> to vector<32x38xf32>
    %166 = arith.subf %164, %165 : vector<32x38xf32>
    %c9_62 = arith.constant 9 : index
    %c0_63 = arith.constant 0 : index
    %167 = vector.load %arg5[%c9_62, %c0_63] : memref<16x38xf32, #tpu.memory_space<vmem>>, vector<1x38xf32>
    %168 = vector.broadcast %167 : vector<1x38xf32> to vector<32x38xf32>
    %169 = arith.mulf %166, %168 : vector<32x38xf32>
    %170 = arith.negf %169 : vector<32x38xf32>
    %171 = math.exp %170 : vector<32x38xf32>
    %cst_64 = arith.constant 1.000000e+00 : f32
    %172 = vector.broadcast %cst_64 : f32 to vector<32x38xf32>
    %173 = arith.addf %172, %171 : vector<32x38xf32>
    %174 = arith.divf %172, %173 : vector<32x38xf32>
    %c9_65 = arith.constant 9 : index
    %c0_66 = arith.constant 0 : index
    %175 = vector.load %arg6[%c9_65, %c0_66] : memref<16x38xf32, #tpu.memory_space<vmem>>, vector<1x38xf32>
    %176 = vector.broadcast %175 : vector<1x38xf32> to vector<32x38xf32>
    %177 = arith.mulf %176, %174 : vector<32x38xf32>
    %178 = arith.addf %161, %177 : vector<32x38xf32>
    %179 = vector.extract_strided_slice %7 {offsets = [0, 10], sizes = [32, 1], strides = [1, 1]} : vector<32x16xf32> to vector<32x1xf32>
    %c10 = arith.constant 10 : index
    %c0_67 = arith.constant 0 : index
    %180 = vector.load %arg4[%c10, %c0_67] : memref<16x38xf32, #tpu.memory_space<vmem>>, vector<1x38xf32>
    %181 = vector.broadcast %179 : vector<32x1xf32> to vector<32x38xf32>
    %182 = vector.broadcast %180 : vector<1x38xf32> to vector<32x38xf32>
    %183 = arith.subf %181, %182 : vector<32x38xf32>
    %c10_68 = arith.constant 10 : index
    %c0_69 = arith.constant 0 : index
    %184 = vector.load %arg5[%c10_68, %c0_69] : memref<16x38xf32, #tpu.memory_space<vmem>>, vector<1x38xf32>
    %185 = vector.broadcast %184 : vector<1x38xf32> to vector<32x38xf32>
    %186 = arith.mulf %183, %185 : vector<32x38xf32>
    %187 = arith.negf %186 : vector<32x38xf32>
    %188 = math.exp %187 : vector<32x38xf32>
    %cst_70 = arith.constant 1.000000e+00 : f32
    %189 = vector.broadcast %cst_70 : f32 to vector<32x38xf32>
    %190 = arith.addf %189, %188 : vector<32x38xf32>
    %191 = arith.divf %189, %190 : vector<32x38xf32>
    %c10_71 = arith.constant 10 : index
    %c0_72 = arith.constant 0 : index
    %192 = vector.load %arg6[%c10_71, %c0_72] : memref<16x38xf32, #tpu.memory_space<vmem>>, vector<1x38xf32>
    %193 = vector.broadcast %192 : vector<1x38xf32> to vector<32x38xf32>
    %194 = arith.mulf %193, %191 : vector<32x38xf32>
    %195 = arith.addf %178, %194 : vector<32x38xf32>
    %196 = vector.extract_strided_slice %7 {offsets = [0, 11], sizes = [32, 1], strides = [1, 1]} : vector<32x16xf32> to vector<32x1xf32>
    %c11 = arith.constant 11 : index
    %c0_73 = arith.constant 0 : index
    %197 = vector.load %arg4[%c11, %c0_73] : memref<16x38xf32, #tpu.memory_space<vmem>>, vector<1x38xf32>
    %198 = vector.broadcast %196 : vector<32x1xf32> to vector<32x38xf32>
    %199 = vector.broadcast %197 : vector<1x38xf32> to vector<32x38xf32>
    %200 = arith.subf %198, %199 : vector<32x38xf32>
    %c11_74 = arith.constant 11 : index
    %c0_75 = arith.constant 0 : index
    %201 = vector.load %arg5[%c11_74, %c0_75] : memref<16x38xf32, #tpu.memory_space<vmem>>, vector<1x38xf32>
    %202 = vector.broadcast %201 : vector<1x38xf32> to vector<32x38xf32>
    %203 = arith.mulf %200, %202 : vector<32x38xf32>
    %204 = arith.negf %203 : vector<32x38xf32>
    %205 = math.exp %204 : vector<32x38xf32>
    %cst_76 = arith.constant 1.000000e+00 : f32
    %206 = vector.broadcast %cst_76 : f32 to vector<32x38xf32>
    %207 = arith.addf %206, %205 : vector<32x38xf32>
    %208 = arith.divf %206, %207 : vector<32x38xf32>
    %c11_77 = arith.constant 11 : index
    %c0_78 = arith.constant 0 : index
    %209 = vector.load %arg6[%c11_77, %c0_78] : memref<16x38xf32, #tpu.memory_space<vmem>>, vector<1x38xf32>
    %210 = vector.broadcast %209 : vector<1x38xf32> to vector<32x38xf32>
    %211 = arith.mulf %210, %208 : vector<32x38xf32>
    %212 = arith.addf %195, %211 : vector<32x38xf32>
    %213 = vector.extract_strided_slice %7 {offsets = [0, 12], sizes = [32, 1], strides = [1, 1]} : vector<32x16xf32> to vector<32x1xf32>
    %c12 = arith.constant 12 : index
    %c0_79 = arith.constant 0 : index
    %214 = vector.load %arg4[%c12, %c0_79] : memref<16x38xf32, #tpu.memory_space<vmem>>, vector<1x38xf32>
    %215 = vector.broadcast %213 : vector<32x1xf32> to vector<32x38xf32>
    %216 = vector.broadcast %214 : vector<1x38xf32> to vector<32x38xf32>
    %217 = arith.subf %215, %216 : vector<32x38xf32>
    %c12_80 = arith.constant 12 : index
    %c0_81 = arith.constant 0 : index
    %218 = vector.load %arg5[%c12_80, %c0_81] : memref<16x38xf32, #tpu.memory_space<vmem>>, vector<1x38xf32>
    %219 = vector.broadcast %218 : vector<1x38xf32> to vector<32x38xf32>
    %220 = arith.mulf %217, %219 : vector<32x38xf32>
    %221 = arith.negf %220 : vector<32x38xf32>
    %222 = math.exp %221 : vector<32x38xf32>
    %cst_82 = arith.constant 1.000000e+00 : f32
    %223 = vector.broadcast %cst_82 : f32 to vector<32x38xf32>
    %224 = arith.addf %223, %222 : vector<32x38xf32>
    %225 = arith.divf %223, %224 : vector<32x38xf32>
    %c12_83 = arith.constant 12 : index
    %c0_84 = arith.constant 0 : index
    %226 = vector.load %arg6[%c12_83, %c0_84] : memref<16x38xf32, #tpu.memory_space<vmem>>, vector<1x38xf32>
    %227 = vector.broadcast %226 : vector<1x38xf32> to vector<32x38xf32>
    %228 = arith.mulf %227, %225 : vector<32x38xf32>
    %229 = arith.addf %212, %228 : vector<32x38xf32>
    %230 = vector.extract_strided_slice %7 {offsets = [0, 13], sizes = [32, 1], strides = [1, 1]} : vector<32x16xf32> to vector<32x1xf32>
    %c13 = arith.constant 13 : index
    %c0_85 = arith.constant 0 : index
    %231 = vector.load %arg4[%c13, %c0_85] : memref<16x38xf32, #tpu.memory_space<vmem>>, vector<1x38xf32>
    %232 = vector.broadcast %230 : vector<32x1xf32> to vector<32x38xf32>
    %233 = vector.broadcast %231 : vector<1x38xf32> to vector<32x38xf32>
    %234 = arith.subf %232, %233 : vector<32x38xf32>
    %c13_86 = arith.constant 13 : index
    %c0_87 = arith.constant 0 : index
    %235 = vector.load %arg5[%c13_86, %c0_87] : memref<16x38xf32, #tpu.memory_space<vmem>>, vector<1x38xf32>
    %236 = vector.broadcast %235 : vector<1x38xf32> to vector<32x38xf32>
    %237 = arith.mulf %234, %236 : vector<32x38xf32>
    %238 = arith.negf %237 : vector<32x38xf32>
    %239 = math.exp %238 : vector<32x38xf32>
    %cst_88 = arith.constant 1.000000e+00 : f32
    %240 = vector.broadcast %cst_88 : f32 to vector<32x38xf32>
    %241 = arith.addf %240, %239 : vector<32x38xf32>
    %242 = arith.divf %240, %241 : vector<32x38xf32>
    %c13_89 = arith.constant 13 : index
    %c0_90 = arith.constant 0 : index
    %243 = vector.load %arg6[%c13_89, %c0_90] : memref<16x38xf32, #tpu.memory_space<vmem>>, vector<1x38xf32>
    %244 = vector.broadcast %243 : vector<1x38xf32> to vector<32x38xf32>
    %245 = arith.mulf %244, %242 : vector<32x38xf32>
    %246 = arith.addf %229, %245 : vector<32x38xf32>
    %247 = vector.extract_strided_slice %7 {offsets = [0, 14], sizes = [32, 1], strides = [1, 1]} : vector<32x16xf32> to vector<32x1xf32>
    %c14 = arith.constant 14 : index
    %c0_91 = arith.constant 0 : index
    %248 = vector.load %arg4[%c14, %c0_91] : memref<16x38xf32, #tpu.memory_space<vmem>>, vector<1x38xf32>
    %249 = vector.broadcast %247 : vector<32x1xf32> to vector<32x38xf32>
    %250 = vector.broadcast %248 : vector<1x38xf32> to vector<32x38xf32>
    %251 = arith.subf %249, %250 : vector<32x38xf32>
    %c14_92 = arith.constant 14 : index
    %c0_93 = arith.constant 0 : index
    %252 = vector.load %arg5[%c14_92, %c0_93] : memref<16x38xf32, #tpu.memory_space<vmem>>, vector<1x38xf32>
    %253 = vector.broadcast %252 : vector<1x38xf32> to vector<32x38xf32>
    %254 = arith.mulf %251, %253 : vector<32x38xf32>
    %255 = arith.negf %254 : vector<32x38xf32>
    %256 = math.exp %255 : vector<32x38xf32>
    %cst_94 = arith.constant 1.000000e+00 : f32
    %257 = vector.broadcast %cst_94 : f32 to vector<32x38xf32>
    %258 = arith.addf %257, %256 : vector<32x38xf32>
    %259 = arith.divf %257, %258 : vector<32x38xf32>
    %c14_95 = arith.constant 14 : index
    %c0_96 = arith.constant 0 : index
    %260 = vector.load %arg6[%c14_95, %c0_96] : memref<16x38xf32, #tpu.memory_space<vmem>>, vector<1x38xf32>
    %261 = vector.broadcast %260 : vector<1x38xf32> to vector<32x38xf32>
    %262 = arith.mulf %261, %259 : vector<32x38xf32>
    %263 = arith.addf %246, %262 : vector<32x38xf32>
    %264 = vector.extract_strided_slice %7 {offsets = [0, 15], sizes = [32, 1], strides = [1, 1]} : vector<32x16xf32> to vector<32x1xf32>
    %c15 = arith.constant 15 : index
    %c0_97 = arith.constant 0 : index
    %265 = vector.load %arg4[%c15, %c0_97] : memref<16x38xf32, #tpu.memory_space<vmem>>, vector<1x38xf32>
    %266 = vector.broadcast %264 : vector<32x1xf32> to vector<32x38xf32>
    %267 = vector.broadcast %265 : vector<1x38xf32> to vector<32x38xf32>
    %268 = arith.subf %266, %267 : vector<32x38xf32>
    %c15_98 = arith.constant 15 : index
    %c0_99 = arith.constant 0 : index
    %269 = vector.load %arg5[%c15_98, %c0_99] : memref<16x38xf32, #tpu.memory_space<vmem>>, vector<1x38xf32>
    %270 = vector.broadcast %269 : vector<1x38xf32> to vector<32x38xf32>
    %271 = arith.mulf %268, %270 : vector<32x38xf32>
    %272 = arith.negf %271 : vector<32x38xf32>
    %273 = math.exp %272 : vector<32x38xf32>
    %cst_100 = arith.constant 1.000000e+00 : f32
    %274 = vector.broadcast %cst_100 : f32 to vector<32x38xf32>
    %275 = arith.addf %274, %273 : vector<32x38xf32>
    %276 = arith.divf %274, %275 : vector<32x38xf32>
    %c15_101 = arith.constant 15 : index
    %c0_102 = arith.constant 0 : index
    %277 = vector.load %arg6[%c15_101, %c0_102] : memref<16x38xf32, #tpu.memory_space<vmem>>, vector<1x38xf32>
    %278 = vector.broadcast %277 : vector<1x38xf32> to vector<32x38xf32>
    %279 = arith.mulf %278, %276 : vector<32x38xf32>
    %280 = arith.addf %263, %279 : vector<32x38xf32>
    %c0_103 = arith.constant 0 : index
    %c0_104 = arith.constant 0 : index
    %281 = vector.load %arg16[%c0_103, %c0_104] : memref<32x38xf32, #tpu.memory_space<vmem>>, vector<32x38xf32>
    tpu.vector_store %arg16[%c0_103, %c0_104], %280 {strides = array<i32>} : memref<32x38xf32, #tpu.memory_space<vmem>>, vector<32x38xf32>,
    %c0_105 = arith.constant 0 : index
    %c0_106 = arith.constant 0 : index
    %282 = vector.load %arg7[%c0_105, %c0_106] : memref<19x38xf32, #tpu.memory_space<vmem>>, vector<19x38xf32>
    %c0_107 = arith.constant 0 : index
    %c0_108 = arith.constant 0 : index
    %283 = vector.load %arg8[%c0_107, %c0_108] : memref<19x38xf32, #tpu.memory_space<vmem>>, vector<19x38xf32>
    %c0_109 = arith.constant 0 : index
    %c0_110 = arith.constant 0 : index
    %284 = vector.load %arg9[%c0_109, %c0_110] : memref<19x38xf32, #tpu.memory_space<vmem>>, vector<19x38xf32>
    %c0_111 = arith.constant 0 : index
    %c0_112 = arith.constant 0 : index
    %285 = vector.load %arg10[%c0_111, %c0_112] : memref<1x19xf32, #tpu.memory_space<vmem>>, vector<1x19xf32>
    %c0_113 = arith.constant 0 : index
    %c0_114 = arith.constant 0 : index
    %286 = vector.load %arg11[%c0_113, %c0_114] : memref<1x19xf32, #tpu.memory_space<vmem>>, vector<1x19xf32>
    %c0_115 = arith.constant 0 : index
    %c0_116 = arith.constant 0 : index
    %287 = vector.load %arg12[%c0_115, %c0_116] : memref<1x19xf32, #tpu.memory_space<vmem>>, vector<1x19xf32>
    %288 = tpu.iota {dimensions = array<i32: 0>} : vector<19x19xi32>
    %289 = tpu.iota {dimensions = array<i32: 1>} : vector<19x19xi32>
    %290 = arith.cmpi eq, %288, %289 : vector<19x19xi32>
    %291 = arith.extui %290 : vector<19x19xi1> to vector<19x19xi32>
    %292 = arith.sitofp %291 : vector<19x19xi32> to vector<19x19xf32>
    %cst_117 = arith.constant 0.000000e+00 : f32
    %293 = vector.broadcast %cst_117 : f32 to vector<1x19xf32>
    %c0_i32 = arith.constant 0 : i32
    %c32_i32 = arith.constant 32 : i32
    %294 = arith.addi %c0_i32, %c32_i32 : i32
    %c1_i32 = arith.constant 1 : i32
    %295 = scf.for %arg17 = %c0_i32 to %294 step %c1_i32 iter_args(%arg18 = %293) -> (vector<1x19xf32>)  : i32 {
      %303 = arith.index_cast %arg17 : i32 to index
      %c0_126 = arith.constant 0 : index
      %304 = vector.load %arg16[%303, %c0_126] : memref<32x38xf32, #tpu.memory_space<vmem>>, vector<1x38xf32>
      %305 = vector.extract_strided_slice %304 {offsets = [0, 0], sizes = [1, 19], strides = [1, 1]} : vector<1x38xf32> to vector<1x19xf32>
      %306 = vector.extract_strided_slice %304 {offsets = [0, 19], sizes = [1, 19], strides = [1, 1]} : vector<1x38xf32> to vector<1x19xf32>
      %307 = vector.broadcast %arg18 : vector<1x19xf32> to vector<19x19xf32>
      %308 = arith.mulf %307, %292 : vector<19x19xf32>
      %cst_127 = arith.constant dense<0.000000e+00> : vector<19xf32>
      %309 = vector.multi_reduction <add>, %308, %cst_127 [1] : vector<19x19xf32> to vector<19xf32>
      %310 = vector.shape_cast %309 : vector<19xf32> to vector<19x1xf32>
      %311 = vector.broadcast %310 : vector<19x1xf32> to vector<19x38xf32>
      %312 = arith.subf %311, %282 : vector<19x38xf32>
      %313 = arith.mulf %312, %283 : vector<19x38xf32>
      %314 = arith.negf %313 : vector<19x38xf32>
      %315 = math.exp %314 : vector<19x38xf32>
      %cst_128 = arith.constant 1.000000e+00 : f32
      %316 = vector.broadcast %cst_128 : f32 to vector<19x38xf32>
      %317 = arith.addf %316, %315 : vector<19x38xf32>
      %318 = arith.divf %316, %317 : vector<19x38xf32>
      %319 = arith.mulf %284, %318 : vector<19x38xf32>
      %cst_129 = arith.constant dense<0.000000e+00> : vector<38xf32>
      %320 = vector.multi_reduction <add>, %319, %cst_129 [0] : vector<19x38xf32> to vector<38xf32>
      %321 = vector.shape_cast %320 : vector<38xf32> to vector<1x38xf32>
      %322 = vector.extract_strided_slice %321 {offsets = [0, 0], sizes = [1, 19], strides = [1, 1]} : vector<1x38xf32> to vector<1x19xf32>
      %323 = arith.addf %322, %305 : vector<1x19xf32>
      %324 = vector.extract_strided_slice %321 {offsets = [0, 19], sizes = [1, 19], strides = [1, 1]} : vector<1x38xf32> to vector<1x19xf32>
      %325 = arith.addf %324, %306 : vector<1x19xf32>
      %326 = arith.mulf %285, %arg18 : vector<1x19xf32>
      %327 = arith.addf %326, %286 : vector<1x19xf32>
      %328 = arith.addf %327, %323 : vector<1x19xf32>
      %329 = arith.addf %287, %325 : vector<1x19xf32>
      %330 = tpu.reciprocal %329 {approx = true} : vector<1x19xf32> -> vector<1x19xf32>
      %331 = arith.mulf %329, %330 : vector<1x19xf32>
      %cst_130 = arith.constant 2.000000e+00 : f32
      %332 = vector.broadcast %cst_130 : f32 to vector<1x19xf32>
      %333 = arith.subf %332, %331 : vector<1x19xf32>
      %334 = arith.mulf %330, %333 : vector<1x19xf32>
      %335 = arith.mulf %328, %334 : vector<1x19xf32>
      %336 = vector.broadcast %335 : vector<1x19xf32> to vector<19x19xf32>
      %337 = arith.mulf %336, %292 : vector<19x19xf32>
      %cst_131 = arith.constant dense<0.000000e+00> : vector<19xf32>
      %338 = vector.multi_reduction <add>, %337, %cst_131 [1] : vector<19x19xf32> to vector<19xf32>
      %339 = vector.shape_cast %338 : vector<19xf32> to vector<19x1xf32>
      %340 = vector.broadcast %339 : vector<19x1xf32> to vector<19x38xf32>
      %341 = arith.subf %340, %282 : vector<19x38xf32>
      %342 = arith.mulf %341, %283 : vector<19x38xf32>
      %343 = arith.negf %342 : vector<19x38xf32>
      %344 = math.exp %343 : vector<19x38xf32>
      %cst_132 = arith.constant 1.000000e+00 : f32
      %345 = vector.broadcast %cst_132 : f32 to vector<19x38xf32>
      %346 = arith.addf %345, %344 : vector<19x38xf32>
      %347 = arith.divf %345, %346 : vector<19x38xf32>
      %348 = arith.mulf %284, %347 : vector<19x38xf32>
      %cst_133 = arith.constant dense<0.000000e+00> : vector<38xf32>
      %349 = vector.multi_reduction <add>, %348, %cst_133 [0] : vector<19x38xf32> to vector<38xf32>
      %350 = vector.shape_cast %349 : vector<38xf32> to vector<1x38xf32>
      %351 = vector.extract_strided_slice %350 {offsets = [0, 0], sizes = [1, 19], strides = [1, 1]} : vector<1x38xf32> to vector<1x19xf32>
      %352 = arith.addf %351, %305 : vector<1x19xf32>
      %353 = vector.extract_strided_slice %350 {offsets = [0, 19], sizes = [1, 19], strides = [1, 1]} : vector<1x38xf32> to vector<1x19xf32>
      %354 = arith.addf %353, %306 : vector<1x19xf32>
      %355 = arith.mulf %285, %335 : vector<1x19xf32>
      %356 = arith.addf %355, %286 : vector<1x19xf32>
      %357 = arith.addf %356, %352 : vector<1x19xf32>
      %358 = arith.addf %287, %354 : vector<1x19xf32>
      %359 = tpu.reciprocal %358 {approx = true} : vector<1x19xf32> -> vector<1x19xf32>
      %360 = arith.mulf %358, %359 : vector<1x19xf32>
      %cst_134 = arith.constant 2.000000e+00 : f32
      %361 = vector.broadcast %cst_134 : f32 to vector<1x19xf32>
      %362 = arith.subf %361, %360 : vector<1x19xf32>
      %363 = arith.mulf %359, %362 : vector<1x19xf32>
      %364 = arith.mulf %357, %363 : vector<1x19xf32>
      %365 = vector.broadcast %364 : vector<1x19xf32> to vector<19x19xf32>
      %366 = arith.mulf %365, %292 : vector<19x19xf32>
      %cst_135 = arith.constant dense<0.000000e+00> : vector<19xf32>
      %367 = vector.multi_reduction <add>, %366, %cst_135 [1] : vector<19x19xf32> to vector<19xf32>
      %368 = vector.shape_cast %367 : vector<19xf32> to vector<19x1xf32>
      %369 = vector.broadcast %368 : vector<19x1xf32> to vector<19x38xf32>
      %370 = arith.subf %369, %282 : vector<19x38xf32>
      %371 = arith.mulf %370, %283 : vector<19x38xf32>
      %372 = arith.negf %371 : vector<19x38xf32>
      %373 = math.exp %372 : vector<19x38xf32>
      %cst_136 = arith.constant 1.000000e+00 : f32
      %374 = vector.broadcast %cst_136 : f32 to vector<19x38xf32>
      %375 = arith.addf %374, %373 : vector<19x38xf32>
      %376 = arith.divf %374, %375 : vector<19x38xf32>
      %377 = arith.mulf %284, %376 : vector<19x38xf32>
      %cst_137 = arith.constant dense<0.000000e+00> : vector<38xf32>
      %378 = vector.multi_reduction <add>, %377, %cst_137 [0] : vector<19x38xf32> to vector<38xf32>
      %379 = vector.shape_cast %378 : vector<38xf32> to vector<1x38xf32>
      %380 = vector.extract_strided_slice %379 {offsets = [0, 0], sizes = [1, 19], strides = [1, 1]} : vector<1x38xf32> to vector<1x19xf32>
      %381 = arith.addf %380, %305 : vector<1x19xf32>
      %382 = vector.extract_strided_slice %379 {offsets = [0, 19], sizes = [1, 19], strides = [1, 1]} : vector<1x38xf32> to vector<1x19xf32>
      %383 = arith.addf %382, %306 : vector<1x19xf32>
      %384 = arith.mulf %285, %364 : vector<1x19xf32>
      %385 = arith.addf %384, %286 : vector<1x19xf32>
      %386 = arith.addf %385, %381 : vector<1x19xf32>
      %387 = arith.addf %287, %383 : vector<1x19xf32>
      %388 = tpu.reciprocal %387 {approx = true} : vector<1x19xf32> -> vector<1x19xf32>
      %389 = arith.mulf %387, %388 : vector<1x19xf32>
      %cst_138 = arith.constant 2.000000e+00 : f32
      %390 = vector.broadcast %cst_138 : f32 to vector<1x19xf32>
      %391 = arith.subf %390, %389 : vector<1x19xf32>
      %392 = arith.mulf %388, %391 : vector<1x19xf32>
      %393 = arith.mulf %386, %392 : vector<1x19xf32>
      %394 = vector.broadcast %393 : vector<1x19xf32> to vector<19x19xf32>
      %395 = arith.mulf %394, %292 : vector<19x19xf32>
      %cst_139 = arith.constant dense<0.000000e+00> : vector<19xf32>
      %396 = vector.multi_reduction <add>, %395, %cst_139 [1] : vector<19x19xf32> to vector<19xf32>
      %397 = vector.shape_cast %396 : vector<19xf32> to vector<19x1xf32>
      %398 = vector.broadcast %397 : vector<19x1xf32> to vector<19x38xf32>
      %399 = arith.subf %398, %282 : vector<19x38xf32>
      %400 = arith.mulf %399, %283 : vector<19x38xf32>
      %401 = arith.negf %400 : vector<19x38xf32>
      %402 = math.exp %401 : vector<19x38xf32>
      %cst_140 = arith.constant 1.000000e+00 : f32
      %403 = vector.broadcast %cst_140 : f32 to vector<19x38xf32>
      %404 = arith.addf %403, %402 : vector<19x38xf32>
      %405 = arith.divf %403, %404 : vector<19x38xf32>
      %406 = arith.mulf %284, %405 : vector<19x38xf32>
      %cst_141 = arith.constant dense<0.000000e+00> : vector<38xf32>
      %407 = vector.multi_reduction <add>, %406, %cst_141 [0] : vector<19x38xf32> to vector<38xf32>
      %408 = vector.shape_cast %407 : vector<38xf32> to vector<1x38xf32>
      %409 = vector.extract_strided_slice %408 {offsets = [0, 0], sizes = [1, 19], strides = [1, 1]} : vector<1x38xf32> to vector<1x19xf32>
      %410 = arith.addf %409, %305 : vector<1x19xf32>
      %411 = vector.extract_strided_slice %408 {offsets = [0, 19], sizes = [1, 19], strides = [1, 1]} : vector<1x38xf32> to vector<1x19xf32>
      %412 = arith.addf %411, %306 : vector<1x19xf32>
      %413 = arith.mulf %285, %393 : vector<1x19xf32>
      %414 = arith.addf %413, %286 : vector<1x19xf32>
      %415 = arith.addf %414, %410 : vector<1x19xf32>
      %416 = arith.addf %287, %412 : vector<1x19xf32>
      %417 = tpu.reciprocal %416 {approx = true} : vector<1x19xf32> -> vector<1x19xf32>
      %418 = arith.mulf %416, %417 : vector<1x19xf32>
      %cst_142 = arith.constant 2.000000e+00 : f32
      %419 = vector.broadcast %cst_142 : f32 to vector<1x19xf32>
      %420 = arith.subf %419, %418 : vector<1x19xf32>
      %421 = arith.mulf %417, %420 : vector<1x19xf32>
      %422 = arith.mulf %415, %421 : vector<1x19xf32>
      %423 = vector.broadcast %422 : vector<1x19xf32> to vector<19x19xf32>
      %424 = arith.mulf %423, %292 : vector<19x19xf32>
      %cst_143 = arith.constant dense<0.000000e+00> : vector<19xf32>
      %425 = vector.multi_reduction <add>, %424, %cst_143 [1] : vector<19x19xf32> to vector<19xf32>
      %426 = vector.shape_cast %425 : vector<19xf32> to vector<19x1xf32>
      %427 = vector.broadcast %426 : vector<19x1xf32> to vector<19x38xf32>
      %428 = arith.subf %427, %282 : vector<19x38xf32>
      %429 = arith.mulf %428, %283 : vector<19x38xf32>
      %430 = arith.negf %429 : vector<19x38xf32>
      %431 = math.exp %430 : vector<19x38xf32>
      %cst_144 = arith.constant 1.000000e+00 : f32
      %432 = vector.broadcast %cst_144 : f32 to vector<19x38xf32>
      %433 = arith.addf %432, %431 : vector<19x38xf32>
      %434 = arith.divf %432, %433 : vector<19x38xf32>
      %435 = arith.mulf %284, %434 : vector<19x38xf32>
      %cst_145 = arith.constant dense<0.000000e+00> : vector<38xf32>
      %436 = vector.multi_reduction <add>, %435, %cst_145 [0] : vector<19x38xf32> to vector<38xf32>
      %437 = vector.shape_cast %436 : vector<38xf32> to vector<1x38xf32>
      %438 = vector.extract_strided_slice %437 {offsets = [0, 0], sizes = [1, 19], strides = [1, 1]} : vector<1x38xf32> to vector<1x19xf32>
      %439 = arith.addf %438, %305 : vector<1x19xf32>
      %440 = vector.extract_strided_slice %437 {offsets = [0, 19], sizes = [1, 19], strides = [1, 1]} : vector<1x38xf32> to vector<1x19xf32>
      %441 = arith.addf %440, %306 : vector<1x19xf32>
      %442 = arith.mulf %285, %422 : vector<1x19xf32>
      %443 = arith.addf %442, %286 : vector<1x19xf32>
      %444 = arith.addf %443, %439 : vector<1x19xf32>
      %445 = arith.addf %287, %441 : vector<1x19xf32>
      %446 = tpu.reciprocal %445 {approx = true} : vector<1x19xf32> -> vector<1x19xf32>
      %447 = arith.mulf %445, %446 : vector<1x19xf32>
      %cst_146 = arith.constant 2.000000e+00 : f32
      %448 = vector.broadcast %cst_146 : f32 to vector<1x19xf32>
      %449 = arith.subf %448, %447 : vector<1x19xf32>
      %450 = arith.mulf %446, %449 : vector<1x19xf32>
      %451 = arith.mulf %444, %450 : vector<1x19xf32>
      %452 = vector.broadcast %451 : vector<1x19xf32> to vector<19x19xf32>
      %453 = arith.mulf %452, %292 : vector<19x19xf32>
      %cst_147 = arith.constant dense<0.000000e+00> : vector<19xf32>
      %454 = vector.multi_reduction <add>, %453, %cst_147 [1] : vector<19x19xf32> to vector<19xf32>
      %455 = vector.shape_cast %454 : vector<19xf32> to vector<19x1xf32>
      %456 = vector.broadcast %455 : vector<19x1xf32> to vector<19x38xf32>
      %457 = arith.subf %456, %282 : vector<19x38xf32>
      %458 = arith.mulf %457, %283 : vector<19x38xf32>
      %459 = arith.negf %458 : vector<19x38xf32>
      %460 = math.exp %459 : vector<19x38xf32>
      %cst_148 = arith.constant 1.000000e+00 : f32
      %461 = vector.broadcast %cst_148 : f32 to vector<19x38xf32>
      %462 = arith.addf %461, %460 : vector<19x38xf32>
      %463 = arith.divf %461, %462 : vector<19x38xf32>
      %464 = arith.mulf %284, %463 : vector<19x38xf32>
      %cst_149 = arith.constant dense<0.000000e+00> : vector<38xf32>
      %465 = vector.multi_reduction <add>, %464, %cst_149 [0] : vector<19x38xf32> to vector<38xf32>
      %466 = vector.shape_cast %465 : vector<38xf32> to vector<1x38xf32>
      %467 = vector.extract_strided_slice %466 {offsets = [0, 0], sizes = [1, 19], strides = [1, 1]} : vector<1x38xf32> to vector<1x19xf32>
      %468 = arith.addf %467, %305 : vector<1x19xf32>
      %469 = vector.extract_strided_slice %466 {offsets = [0, 19], sizes = [1, 19], strides = [1, 1]} : vector<1x38xf32> to vector<1x19xf32>
      %470 = arith.addf %469, %306 : vector<1x19xf32>
      %471 = arith.mulf %285, %451 : vector<1x19xf32>
      %472 = arith.addf %471, %286 : vector<1x19xf32>
      %473 = arith.addf %472, %468 : vector<1x19xf32>
      %474 = arith.addf %287, %470 : vector<1x19xf32>
      %475 = tpu.reciprocal %474 {approx = true} : vector<1x19xf32> -> vector<1x19xf32>
      %476 = arith.mulf %474, %475 : vector<1x19xf32>
      %cst_150 = arith.constant 2.000000e+00 : f32
      %477 = vector.broadcast %cst_150 : f32 to vector<1x19xf32>
      %478 = arith.subf %477, %476 : vector<1x19xf32>
      %479 = arith.mulf %475, %478 : vector<1x19xf32>
      %480 = arith.mulf %473, %479 : vector<1x19xf32>
      scf.yield %480 : vector<1x19xf32>
    }
    %c32_i32_118 = arith.constant 32 : i32
    %296 = vector.extract_strided_slice %295 {offsets = [0, 0], sizes = [1, 2], strides = [1, 1]} : vector<1x19xf32> to vector<1x2xf32>
    %c0_119 = arith.constant 0 : index
    %c0_120 = arith.constant 0 : index
    %297 = vector.load %arg13[%c0_119, %c0_120] : memref<1x2xf32, #tpu.memory_space<vmem>>, vector<1x2xf32>
    %298 = arith.mulf %296, %297 : vector<1x2xf32>
    %c0_121 = arith.constant 0 : index
    %c0_122 = arith.constant 0 : index
    %299 = vector.load %arg14[%c0_121, %c0_122] : memref<1x2xf32, #tpu.memory_space<vmem>>, vector<1x2xf32>
    %300 = arith.addf %298, %299 : vector<1x2xf32>
    %301 = vector.shape_cast %300 : vector<1x2xf32> to vector<1x1x2xf32>
    %c0_123 = arith.constant 0 : index
    %c0_124 = arith.constant 0 : index
    %c0_125 = arith.constant 0 : index
    %302 = vector.load %arg15[%c0_123, %c0_124, %c0_125] : memref<1x1x2xf32, #tpu.memory_space<vmem>>, vector<1x1x2xf32>
    tpu.vector_store %arg15[%c0_123, %c0_124, %c0_125], %301 {strides = array<i32>} : memref<1x1x2xf32, #tpu.memory_space<vmem>>, vector<1x1x2xf32>,
    return
  }
  func.func @transform_0(%arg0: i32) -> (i32, i32, i32) {
    %c0_i32 = arith.constant 0 : i32
    %c0_i32_0 = arith.constant 0 : i32
    %c0_i32_1 = arith.constant 0 : i32
    return %arg0, %c0_i32, %c0_i32_0 : i32, i32, i32
  }
  func.func @transform_1(%arg0: i32) -> (i32, i32) {
    %c0_i32 = arith.constant 0 : i32
    %c0_i32_0 = arith.constant 0 : i32
    %c0_i32_1 = arith.constant 0 : i32
    return %c0_i32, %c0_i32_0 : i32, i32
  }
  func.func @transform_2(%arg0: i32) -> (i32, i32) {
    %c0_i32 = arith.constant 0 : i32
    %c0_i32_0 = arith.constant 0 : i32
    %c0_i32_1 = arith.constant 0 : i32
    return %c0_i32, %c0_i32_0 : i32, i32
  }
  func.func @transform_3(%arg0: i32) -> (i32, i32) {
    %c0_i32 = arith.constant 0 : i32
    %c0_i32_0 = arith.constant 0 : i32
    %c0_i32_1 = arith.constant 0 : i32
    return %c0_i32, %c0_i32_0 : i32, i32
  }
  func.func @transform_4(%arg0: i32) -> (i32, i32) {
    %c0_i32 = arith.constant 0 : i32
    %c0_i32_0 = arith.constant 0 : i32
    %c0_i32_1 = arith.constant 0 : i32
    return %c0_i32, %c0_i32_0 : i32, i32
  }
  func.func @transform_5(%arg0: i32) -> (i32, i32) {
    %c0_i32 = arith.constant 0 : i32
    %c0_i32_0 = arith.constant 0 : i32
    %c0_i32_1 = arith.constant 0 : i32
    return %c0_i32, %c0_i32_0 : i32, i32
  }
  func.func @transform_6(%arg0: i32) -> (i32, i32) {
    %c0_i32 = arith.constant 0 : i32
    %c0_i32_0 = arith.constant 0 : i32
    %c0_i32_1 = arith.constant 0 : i32
    return %c0_i32, %c0_i32_0 : i32, i32
  }
  func.func @transform_7(%arg0: i32) -> (i32, i32) {
    %c0_i32 = arith.constant 0 : i32
    %c0_i32_0 = arith.constant 0 : i32
    %c0_i32_1 = arith.constant 0 : i32
    return %c0_i32, %c0_i32_0 : i32, i32
  }
  func.func @transform_8(%arg0: i32) -> (i32, i32) {
    %c0_i32 = arith.constant 0 : i32
    %c0_i32_0 = arith.constant 0 : i32
    %c0_i32_1 = arith.constant 0 : i32
    return %c0_i32, %c0_i32_0 : i32, i32
  }
  func.func @transform_9(%arg0: i32) -> (i32, i32) {
    %c0_i32 = arith.constant 0 : i32
    %c0_i32_0 = arith.constant 0 : i32
    %c0_i32_1 = arith.constant 0 : i32
    return %c0_i32, %c0_i32_0 : i32, i32
  }
  func.func @transform_10(%arg0: i32) -> (i32, i32) {
    %c0_i32 = arith.constant 0 : i32
    %c0_i32_0 = arith.constant 0 : i32
    %c0_i32_1 = arith.constant 0 : i32
    return %c0_i32, %c0_i32_0 : i32, i32
  }
  func.func @transform_11(%arg0: i32) -> (i32, i32) {
    %c0_i32 = arith.constant 0 : i32
    %c0_i32_0 = arith.constant 0 : i32
    %c0_i32_1 = arith.constant 0 : i32
    return %c0_i32, %c0_i32_0 : i32, i32
  }
  func.func @transform_12(%arg0: i32) -> (i32, i32) {
    %c0_i32 = arith.constant 0 : i32
    %c0_i32_0 = arith.constant 0 : i32
    %c0_i32_1 = arith.constant 0 : i32
    return %c0_i32, %c0_i32_0 : i32, i32
  }
  func.func @transform_13(%arg0: i32) -> (i32, i32) {
    %c0_i32 = arith.constant 0 : i32
    %c0_i32_0 = arith.constant 0 : i32
    %c0_i32_1 = arith.constant 0 : i32
    return %c0_i32, %c0_i32_0 : i32, i32
  }
  func.func @transform_14(%arg0: i32) -> (i32, i32, i32) {
    %c0_i32 = arith.constant 0 : i32
    %c0_i32_0 = arith.constant 0 : i32
    %c0_i32_1 = arith.constant 0 : i32
    return %arg0, %c0_i32, %c0_i32_0 : i32, i32, i32
  }
}

</mosaic_0001>

<llo_original>
// kernel: forward.5
$region0: #{forward.5}
  #allocation0 [shape = 'u32[]', space=smem, size = 0x4, offset = 0x4, fixed_abs, tag = 'smem constant byte address 0x4 - core index']
  #allocation1 [shape = 'u32[144,128]{1,0:T(1,128)}', space=vmem, size = 0x12000, scoped, tag = 'internal scratch']
  %s0 = inlined_call_operand.vmem [shape: f32[1800,9], index: 0, kind: input, shape index: {}]
  %s1 = inlined_call_operand.vmem [shape: f32[9,16], index: 1, kind: input, shape index: {}]
  %s2 = inlined_call_operand.vmem [shape: f32[1,16], index: 2, kind: input, shape index: {}]
  %s3 = inlined_call_operand.vmem [shape: f32[1800,16], index: 3, kind: output, shape index: {}]
  %s4 = sld [smem:[#allocation0]]
  $region22: #{forward.5} parent=0
    _
  %s6 = ssub.s32 1, %s4
  %s7 = scalar_select 0, %s6, %s4
  // Predicated region
  $region2: #{forward.5} parent=0 // pred_check
    _
  $region3: #{forward.5} parent=0 // pred_check_branch
    %9 = sbr.rel (0) target = $region5
  $region4: #{forward.5} parent=0 // pred_region
    _
  $region5: #{forward.5} parent=0 // pred_fallthru
    _
  // Predicated region
  $region6: #{forward.5} parent=0 // pred_check
    _
  $region7: #{forward.5} parent=0 // pred_check_branch
    %11 = sbr.rel (0) target = $region9
  $region8: #{forward.5} parent=0 // pred_region
    _
  $region9: #{forward.5} parent=0 // pred_fallthru
    _
  // Predicated region
  $region10: #{forward.5} parent=0 // pred_check
    _
  $region11: #{forward.5} parent=0 // pred_check_branch
    %13 = sbr.rel (0) target = $region13
  $region12: #{forward.5} parent=0 // pred_region
    _
  $region13: #{forward.5} parent=0 // pred_fallthru
    _
  %v14 = vld [vmem:[%s0] sm:$0xff]
  %v15 = vld [vmem:[%s0 + $0x8] sm:$0xff]
  %v16 = vld [vmem:[%s0 + $0x10] sm:$0xff]
  %v17 = vld [vmem:[%s0 + $0x18] sm:$0xff]
  %v18 = vld [vmem:[%s0 + $0x20] sm:$0xff]
  %v19 = vld [vmem:[%s0 + $0x28] sm:$0xff]
  %v20 = vld [vmem:[%s0 + $0x30] sm:$0xff]
  %v21 = vld [vmem:[%s0 + $0x38] sm:$0xff]
  %v22 = vld [vmem:[%s0 + $0x40] sm:$0xff]
  %v23 = vld [vmem:[%s0 + $0x48] sm:$0xff]
  %v24 = vld [vmem:[%s0 + $0x50] sm:$0xff]
  %v25 = vld [vmem:[%s0 + $0x58] sm:$0xff]
  %v26 = vld [vmem:[%s0 + $0x60] sm:$0xff]
  %v27 = vld [vmem:[%s0 + $0x68] sm:$0xff]
  %v28 = vld [vmem:[%s0 + $0x70] sm:$0xff]
  %v29 = vld [vmem:[%s0 + $0x78] sm:$0xff]
  %v30 = vld [vmem:[%s0 + $0x80] sm:$0xff]
  %v31 = vld [vmem:[%s0 + $0x88] sm:$0xff]
  %v32 = vld [vmem:[%s0 + $0x90] sm:$0xff]
  %v33 = vld [vmem:[%s0 + $0x98] sm:$0xff]
  %v34 = vld [vmem:[%s0 + $0xa0] sm:$0xff]
  %v35 = vld [vmem:[%s0 + $0xa8] sm:$0xff]
  %v36 = vld [vmem:[%s0 + $0xb0] sm:$0xff]
  %v37 = vld [vmem:[%s0 + $0xb8] sm:$0xff]
  %v38 = vld [vmem:[%s0 + $0xc0] sm:$0xff]
  %v39 = vld [vmem:[%s0 + $0xc8] sm:$0xff]
  %v40 = vld [vmem:[%s0 + $0xd0] sm:$0xff]
  %v41 = vld [vmem:[%s0 + $0xd8] sm:$0xff]
  %v42 = vld [vmem:[%s0 + $0xe0] sm:$0xff]
  %v43 = vld [vmem:[%s0 + $0xe8] sm:$0xff]
  %v44 = vld [vmem:[%s0 + $0xf0] sm:$0xff]
  %v45 = vld [vmem:[%s0 + $0xf8] sm:$0xff]
  %v46 = vld [vmem:[%s0 + $0x100] sm:$0xff]
  %v47 = vld [vmem:[%s0 + $0x108] sm:$0xff]
  %v48 = vld [vmem:[%s0 + $0x110] sm:$0xff]
  %v49 = vld [vmem:[%s0 + $0x118] sm:$0xff]
  %v50 = vld [vmem:[%s0 + $0x120] sm:$0xff]
  %v51 = vld [vmem:[%s0 + $0x128] sm:$0xff]
  %v52 = vld [vmem:[%s0 + $0x130] sm:$0xff]
  %v53 = vld [vmem:[%s0 + $0x138] sm:$0xff]
  %v54 = vld [vmem:[%s0 + $0x140] sm:$0xff]
  %v55 = vld [vmem:[%s0 + $0x148] sm:$0xff]
  %v56 = vld [vmem:[%s0 + $0x150] sm:$0xff]
  %v57 = vld [vmem:[%s0 + $0x158] sm:$0xff]
  %v58 = vld [vmem:[%s0 + $0x160] sm:$0xff]
  %v59 = vld [vmem:[%s0 + $0x168] sm:$0xff]
  %v60 = vld [vmem:[%s0 + $0x170] sm:$0xff]
  %v61 = vld [vmem:[%s0 + $0x178] sm:$0xff]
  %v62 = vld [vmem:[%s0 + $0x180] sm:$0xff]
  %v63 = vld [vmem:[%s0 + $0x188] sm:$0xff]
  %v64 = vld [vmem:[%s0 + $0x190] sm:$0xff]
  %v65 = vld [vmem:[%s0 + $0x198] sm:$0xff]
  %v66 = vld [vmem:[%s0 + $0x1a0] sm:$0xff]
  %v67 = vld [vmem:[%s0 + $0x1a8] sm:$0xff]
  %v68 = vld [vmem:[%s0 + $0x1b0] sm:$0xff]
  %v69 = vld [vmem:[%s0 + $0x1b8] sm:$0xff]
  %v70 = vld [vmem:[%s0 + $0x1c0] sm:$0xff]
  %v71 = vld [vmem:[%s0 + $0x1c8] sm:$0xff]
  %v72 = vld [vmem:[%s0 + $0x1d0] sm:$0xff]
  %v73 = vld [vmem:[%s0 + $0x1d8] sm:$0xff]
  %v74 = vld [vmem:[%s0 + $0x1e0] sm:$0xff]
  %v75 = vld [vmem:[%s0 + $0x1e8] sm:$0xff]
  %v76 = vld [vmem:[%s0 + $0x1f0] sm:$0xff]
  %v77 = vld [vmem:[%s0 + $0x1f8] sm:$0xff]
  %v78 = vld [vmem:[%s0 + $0x200] sm:$0xff]
  %v79 = vld [vmem:[%s0 + $0x208] sm:$0xff]
  %v80 = vld [vmem:[%s0 + $0x210] sm:$0xff]
  %v81 = vld [vmem:[%s0 + $0x218] sm:$0xff]
  %v82 = vld [vmem:[%s0 + $0x220] sm:$0xff]
  %v83 = vld [vmem:[%s0 + $0x228] sm:$0xff]
  %v84 = vld [vmem:[%s0 + $0x230] sm:$0xff]
  %v85 = vld [vmem:[%s0 + $0x238] sm:$0xff]
  %v86 = vld [vmem:[%s0 + $0x240] sm:$0xff]
  %v87 = vld [vmem:[%s0 + $0x248] sm:$0xff]
  %v88 = vld [vmem:[%s0 + $0x250] sm:$0xff]
  %v89 = vld [vmem:[%s0 + $0x258] sm:$0xff]
  %v90 = vld [vmem:[%s0 + $0x260] sm:$0xff]
  %v91 = vld [vmem:[%s0 + $0x268] sm:$0xff]
  %v92 = vld [vmem:[%s0 + $0x270] sm:$0xff]
  %v93 = vld [vmem:[%s0 + $0x278] sm:$0xff]
  %v94 = vld [vmem:[%s0 + $0x280] sm:$0xff]
  %v95 = vld [vmem:[%s0 + $0x288] sm:$0xff]
  %v96 = vld [vmem:[%s0 + $0x290] sm:$0xff]
  %v97 = vld [vmem:[%s0 + $0x298] sm:$0xff]
  %v98 = vld [vmem:[%s0 + $0x2a0] sm:$0xff]
  %v99 = vld [vmem:[%s0 + $0x2a8] sm:$0xff]
  %v100 = vld [vmem:[%s0 + $0x2b0] sm:$0xff]
  %v101 = vld [vmem:[%s0 + $0x2b8] sm:$0xff]
  %v102 = vld [vmem:[%s0 + $0x2c0] sm:$0xff]
  %v103 = vld [vmem:[%s0 + $0x2c8] sm:$0xff]
  %v104 = vld [vmem:[%s0 + $0x2d0] sm:$0xff]
  %v105 = vld [vmem:[%s0 + $0x2d8] sm:$0xff]
  %v106 = vld [vmem:[%s0 + $0x2e0] sm:$0xff]
  %v107 = vld [vmem:[%s0 + $0x2e8] sm:$0xff]
  %v108 = vld [vmem:[%s0 + $0x2f0] sm:$0xff]
  %v109 = vld [vmem:[%s0 + $0x2f8] sm:$0xff]
  %v110 = vld [vmem:[%s0 + $0x300] sm:$0xff]
  %v111 = vld [vmem:[%s0 + $0x308] sm:$0xff]
  %v112 = vld [vmem:[%s0 + $0x310] sm:$0xff]
  %v113 = vld [vmem:[%s0 + $0x318] sm:$0xff]
  %v114 = vld [vmem:[%s0 + $0x320] sm:$0xff]
  %v115 = vld [vmem:[%s0 + $0x328] sm:$0xff]
  %v116 = vld [vmem:[%s0 + $0x330] sm:$0xff]
  %v117 = vld [vmem:[%s0 + $0x338] sm:$0xff]
  %v118 = vld [vmem:[%s0 + $0x340] sm:$0xff]
  %v119 = vld [vmem:[%s0 + $0x348] sm:$0xff]
  %v120 = vld [vmem:[%s0 + $0x350] sm:$0xff]
  %v121 = vld [vmem:[%s0 + $0x358] sm:$0xff]
  %v122 = vld [vmem:[%s0 + $0x360] sm:$0xff]
  %v123 = vld [vmem:[%s0 + $0x368] sm:$0xff]
  %v124 = vld [vmem:[%s0 + $0x370] sm:$0xff]
  %v125 = vld [vmem:[%s0 + $0x378] sm:$0xff]
  %v126 = vld [vmem:[%s0 + $0x380] sm:$0xff]
  %v127 = vld [vmem:[%s0 + $0x388] sm:$0xff]
  %v128 = vld [vmem:[%s0 + $0x390] sm:$0xff]
  %v129 = vld [vmem:[%s0 + $0x398] sm:$0xff]
  %v130 = vld [vmem:[%s0 + $0x3a0] sm:$0xff]
  %v131 = vld [vmem:[%s0 + $0x3a8] sm:$0xff]
  %v132 = vld [vmem:[%s0 + $0x3b0] sm:$0xff]
  %v133 = vld [vmem:[%s0 + $0x3b8] sm:$0xff]
  %v134 = vld [vmem:[%s0 + $0x3c0] sm:$0xff]
  %v135 = vld [vmem:[%s0 + $0x3c8] sm:$0xff]
  %v136 = vld [vmem:[%s0 + $0x3d0] sm:$0xff]
  %v137 = vld [vmem:[%s0 + $0x3d8] sm:$0xff]
  %v138 = vld [vmem:[%s0 + $0x3e0] sm:$0xff]
  %v139 = vld [vmem:[%s0 + $0x3e8] sm:$0xff]
  %v140 = vld [vmem:[%s0 + $0x3f0] sm:$0xff]
  %v141 = vld [vmem:[%s0 + $0x3f8] sm:$0xff]
  %v142 = vld [vmem:[%s0 + $0x400] sm:$0xff]
  %v143 = vld [vmem:[%s0 + $0x408] sm:$0xff]
  %v144 = vld [vmem:[%s0 + $0x410] sm:$0xff]
  %v145 = vld [vmem:[%s0 + $0x418] sm:$0xff]
  %v146 = vld [vmem:[%s0 + $0x420] sm:$0xff]
  %v147 = vld [vmem:[%s0 + $0x428] sm:$0xff]
  %v148 = vld [vmem:[%s0 + $0x430] sm:$0xff]
  %v149 = vld [vmem:[%s0 + $0x438] sm:$0xff]
  %v150 = vld [vmem:[%s0 + $0x440] sm:$0xff]
  %v151 = vld [vmem:[%s0 + $0x448] sm:$0xff]
  %v152 = vld [vmem:[%s0 + $0x450] sm:$0xff]
  %v153 = vld [vmem:[%s0 + $0x458] sm:$0xff]
  %v154 = vld [vmem:[%s0 + $0x460] sm:$0xff]
  %v155 = vld [vmem:[%s0 + $0x468] sm:$0xff]
  %v156 = vld [vmem:[%s0 + $0x470] sm:$0xff]
  %v157 = vld [vmem:[%s0 + $0x478] sm:$0xff]
  %v158 = vld [vmem:[%s0 + $0x480] sm:$0xff]
  %v159 = vld [vmem:[%s0 + $0x488] sm:$0xff]
  %v160 = vld [vmem:[%s0 + $0x490] sm:$0xff]
  %v161 = vld [vmem:[%s0 + $0x498] sm:$0xff]
  %v162 = vld [vmem:[%s0 + $0x4a0] sm:$0xff]
  %v163 = vld [vmem:[%s0 + $0x4a8] sm:$0xff]
  %v164 = vld [vmem:[%s0 + $0x4b0] sm:$0xff]
  %v165 = vld [vmem:[%s0 + $0x4b8] sm:$0xff]
  %v166 = vld [vmem:[%s0 + $0x4c0] sm:$0xff]
  %v167 = vld [vmem:[%s0 + $0x4c8] sm:$0xff]
  %v168 = vld [vmem:[%s0 + $0x4d0] sm:$0xff]
  %v169 = vld [vmem:[%s0 + $0x4d8] sm:$0xff]
  %v170 = vld [vmem:[%s0 + $0x4e0] sm:$0xff]
  %v171 = vld [vmem:[%s0 + $0x4e8] sm:$0xff]
  %v172 = vld [vmem:[%s0 + $0x4f0] sm:$0xff]
  %v173 = vld [vmem:[%s0 + $0x4f8] sm:$0xff]
  %v174 = vld [vmem:[%s0 + $0x500] sm:$0xff]
  %v175 = vld [vmem:[%s0 + $0x508] sm:$0xff]
  %v176 = vld [vmem:[%s0 + $0x510] sm:$0xff]
  %v177 = vld [vmem:[%s0 + $0x518] sm:$0xff]
  %v178 = vld [vmem:[%s0 + $0x520] sm:$0xff]
  %v179 = vld [vmem:[%s0 + $0x528] sm:$0xff]
  %v180 = vld [vmem:[%s0 + $0x530] sm:$0xff]
  %v181 = vld [vmem:[%s0 + $0x538] sm:$0xff]
  %v182 = vld [vmem:[%s0 + $0x540] sm:$0xff]
  %v183 = vld [vmem:[%s0 + $0x548] sm:$0xff]
  %v184 = vld [vmem:[%s0 + $0x550] sm:$0xff]
  %v185 = vld [vmem:[%s0 + $0x558] sm:$0xff]
  %v186 = vld [vmem:[%s0 + $0x560] sm:$0xff]
  %v187 = vld [vmem:[%s0 + $0x568] sm:$0xff]
  %v188 = vld [vmem:[%s0 + $0x570] sm:$0xff]
  %v189 = vld [vmem:[%s0 + $0x578] sm:$0xff]
  %v190 = vld [vmem:[%s0 + $0x580] sm:$0xff]
  %v191 = vld [vmem:[%s0 + $0x588] sm:$0xff]
  %v192 = vld [vmem:[%s0 + $0x590] sm:$0xff]
  %v193 = vld [vmem:[%s0 + $0x598] sm:$0xff]
  %v194 = vld [vmem:[%s0 + $0x5a0] sm:$0xff]
  %v195 = vld [vmem:[%s0 + $0x5a8] sm:$0xff]
  %v196 = vld [vmem:[%s0 + $0x5b0] sm:$0xff]
  %v197 = vld [vmem:[%s0 + $0x5b8] sm:$0xff]
  %v198 = vld [vmem:[%s0 + $0x5c0] sm:$0xff]
  %v199 = vld [vmem:[%s0 + $0x5c8] sm:$0xff]
  %v200 = vld [vmem:[%s0 + $0x5d0] sm:$0xff]
  %v201 = vld [vmem:[%s0 + $0x5d8] sm:$0xff]
  %v202 = vld [vmem:[%s0 + $0x5e0] sm:$0xff]
  %v203 = vld [vmem:[%s0 + $0x5e8] sm:$0xff]
  %v204 = vld [vmem:[%s0 + $0x5f0] sm:$0xff]
  %v205 = vld [vmem:[%s0 + $0x5f8] sm:$0xff]
  %v206 = vld [vmem:[%s0 + $0x600] sm:$0xff]
  %v207 = vld [vmem:[%s0 + $0x608] sm:$0xff]
  %v208 = vld [vmem:[%s0 + $0x610] sm:$0xff]
  %v209 = vld [vmem:[%s0 + $0x618] sm:$0xff]
  %v210 = vld [vmem:[%s0 + $0x620] sm:$0xff]
  %v211 = vld [vmem:[%s0 + $0x628] sm:$0xff]
  %v212 = vld [vmem:[%s0 + $0x630] sm:$0xff]
  %v213 = vld [vmem:[%s0 + $0x638] sm:$0xff]
  %v214 = vld [vmem:[%s0 + $0x640] sm:$0xff]
  %v215 = vld [vmem:[%s0 + $0x648] sm:$0xff]
  %v216 = vld [vmem:[%s0 + $0x650] sm:$0xff]
  %v217 = vld [vmem:[%s0 + $0x658] sm:$0xff]
  %v218 = vld [vmem:[%s0 + $0x660] sm:$0xff]
  %v219 = vld [vmem:[%s0 + $0x668] sm:$0xff]
  %v220 = vld [vmem:[%s0 + $0x670] sm:$0xff]
  %v221 = vld [vmem:[%s0 + $0x678] sm:$0xff]
  %v222 = vld [vmem:[%s0 + $0x680] sm:$0xff]
  %v223 = vld [vmem:[%s0 + $0x688] sm:$0xff]
  %v224 = vld [vmem:[%s0 + $0x690] sm:$0xff]
  %v225 = vld [vmem:[%s0 + $0x698] sm:$0xff]
  %v226 = vld [vmem:[%s0 + $0x6a0] sm:$0xff]
  %v227 = vld [vmem:[%s0 + $0x6a8] sm:$0xff]
  %v228 = vld [vmem:[%s0 + $0x6b0] sm:$0xff]
  %v229 = vld [vmem:[%s0 + $0x6b8] sm:$0xff]
  %v230 = vld [vmem:[%s0 + $0x6c0] sm:$0xff]
  %v231 = vld [vmem:[%s0 + $0x6c8] sm:$0xff]
  %v232 = vld [vmem:[%s0 + $0x6d0] sm:$0xff]
  %v233 = vld [vmem:[%s0 + $0x6d8] sm:$0xff]
  %v234 = vld [vmem:[%s0 + $0x6e0] sm:$0xff]
  %v235 = vld [vmem:[%s0 + $0x6e8] sm:$0xff]
  %v236 = vld [vmem:[%s0 + $0x6f0] sm:$0xff]
  %v237 = vld [vmem:[%s0 + $0x6f8] sm:$0xff]
  %v238 = vld [vmem:[%s0 + $0x700] sm:$0xff]
  %v239 = vld [vmem:[%s1] sm:$0xff]
  %v240 = vld [vmem:[%s1 + $0x8] sm:$0x1]
  %v241 = vld [vmem:[%s2] sm:$0x1]
  %v243 = vlaneseq
  %v244 = vshrl.u32 %v243, 7
  %v245 = vsub.s32 0, %v244
  %v246 = vrot.slane %v241, %v245
  %vm248 = vcmask 72704
  %v250 = vsel %vm248, %v14, 0
  %v253 = vsel %vm248, %v15, 0
  %v256 = vsel %vm248, %v16, 0
  %v259 = vsel %vm248, %v17, 0
  %v262 = vsel %vm248, %v18, 0
  %v265 = vsel %vm248, %v19, 0
  %v268 = vsel %vm248, %v20, 0
  %v271 = vsel %vm248, %v21, 0
  %v274 = vsel %vm248, %v22, 0
  %v277 = vsel %vm248, %v23, 0
  %v280 = vsel %vm248, %v24, 0
  %v283 = vsel %vm248, %v25, 0
  %v286 = vsel %vm248, %v26, 0
  %v289 = vsel %vm248, %v27, 0
  %v292 = vsel %vm248, %v28, 0
  %v295 = vsel %vm248, %v29, 0
  %v298 = vsel %vm248, %v30, 0
  %v301 = vsel %vm248, %v31, 0
  %v304 = vsel %vm248, %v32, 0
  %v307 = vsel %vm248, %v33, 0
  %v310 = vsel %vm248, %v34, 0
  %v313 = vsel %vm248, %v35, 0
  %v316 = vsel %vm248, %v36, 0
  %v319 = vsel %vm248, %v37, 0
  %v322 = vsel %vm248, %v38, 0
  %v325 = vsel %vm248, %v39, 0
  %v328 = vsel %vm248, %v40, 0
  %v331 = vsel %vm248, %v41, 0
  %v334 = vsel %vm248, %v42, 0
  %v337 = vsel %vm248, %v43, 0
  %v340 = vsel %vm248, %v44, 0
  %v343 = vsel %vm248, %v45, 0
  %v346 = vsel %vm248, %v46, 0
  %v349 = vsel %vm248, %v47, 0
  %v352 = vsel %vm248, %v48, 0
  %v355 = vsel %vm248, %v49, 0
  %v358 = vsel %vm248, %v50, 0
  %v361 = vsel %vm248, %v51, 0
  %v364 = vsel %vm248, %v52, 0
  %v367 = vsel %vm248, %v53, 0
  %v370 = vsel %vm248, %v54, 0
  %v373 = vsel %vm248, %v55, 0
  %v376 = vsel %vm248, %v56, 0
  %v379 = vsel %vm248, %v57, 0
  %v382 = vsel %vm248, %v58, 0
  %v385 = vsel %vm248, %v59, 0
  %v388 = vsel %vm248, %v60, 0
  %v391 = vsel %vm248, %v61, 0
  %v394 = vsel %vm248, %v62, 0
  %v397 = vsel %vm248, %v63, 0
  %v400 = vsel %vm248, %v64, 0
  %v403 = vsel %vm248, %v65, 0
  %v406 = vsel %vm248, %v66, 0
  %v409 = vsel %vm248, %v67, 0
  %v412 = vsel %vm248, %v68, 0
  %v415 = vsel %vm248, %v69, 0
  %v418 = vsel %vm248, %v70, 0
  %v421 = vsel %vm248, %v71, 0
  %v424 = vsel %vm248, %v72, 0
  %v427 = vsel %vm248, %v73, 0
  %v430 = vsel %vm248, %v74, 0
  %v433 = vsel %vm248, %v75, 0
  %v436 = vsel %vm248, %v76, 0
  %v439 = vsel %vm248, %v77, 0
  %v442 = vsel %vm248, %v78, 0
  %v445 = vsel %vm248, %v79, 0
  %v448 = vsel %vm248, %v80, 0
  %v451 = vsel %vm248, %v81, 0
  %v454 = vsel %vm248, %v82, 0
  %v457 = vsel %vm248, %v83, 0
  %v460 = vsel %vm248, %v84, 0
  %v463 = vsel %vm248, %v85, 0
  %v466 = vsel %vm248, %v86, 0
  %v469 = vsel %vm248, %v87, 0
  %v472 = vsel %vm248, %v88, 0
  %v475 = vsel %vm248, %v89, 0
  %v478 = vsel %vm248, %v90, 0
  %v481 = vsel %vm248, %v91, 0
  %v484 = vsel %vm248, %v92, 0
  %v487 = vsel %vm248, %v93, 0
  %v490 = vsel %vm248, %v94, 0
  %v493 = vsel %vm248, %v95, 0
  %v496 = vsel %vm248, %v96, 0
  %v499 = vsel %vm248, %v97, 0
  %v502 = vsel %vm248, %v98, 0
  %v505 = vsel %vm248, %v99, 0
  %v508 = vsel %vm248, %v100, 0
  %v511 = vsel %vm248, %v101, 0
  %v514 = vsel %vm248, %v102, 0
  %v517 = vsel %vm248, %v103, 0
  %v520 = vsel %vm248, %v104, 0
  %v523 = vsel %vm248, %v105, 0
  %v526 = vsel %vm248, %v106, 0
  %v529 = vsel %vm248, %v107, 0
  %v532 = vsel %vm248, %v108, 0
  %v535 = vsel %vm248, %v109, 0
  %v538 = vsel %vm248, %v110, 0
  %v541 = vsel %vm248, %v111, 0
  %v544 = vsel %vm248, %v112, 0
  %v547 = vsel %vm248, %v113, 0
  %v550 = vsel %vm248, %v114, 0
  %v553 = vsel %vm248, %v115, 0
  %v556 = vsel %vm248, %v116, 0
  %v559 = vsel %vm248, %v117, 0
  %v562 = vsel %vm248, %v118, 0
  %v565 = vsel %vm248, %v119, 0
  %v568 = vsel %vm248, %v120, 0
  %v571 = vsel %vm248, %v121, 0
  %v574 = vsel %vm248, %v122, 0
  %v577 = vsel %vm248, %v123, 0
  %v580 = vsel %vm248, %v124, 0
  %v583 = vsel %vm248, %v125, 0
  %v586 = vsel %vm248, %v126, 0
  %v589 = vsel %vm248, %v127, 0
  %v592 = vsel %vm248, %v128, 0
  %v595 = vsel %vm248, %v129, 0
  %v598 = vsel %vm248, %v130, 0
  %v601 = vsel %vm248, %v131, 0
  %v604 = vsel %vm248, %v132, 0
  %v607 = vsel %vm248, %v133, 0
  %v610 = vsel %vm248, %v134, 0
  %v613 = vsel %vm248, %v135, 0
  %v616 = vsel %vm248, %v136, 0
  %v619 = vsel %vm248, %v137, 0
  %v622 = vsel %vm248, %v138, 0
  %v625 = vsel %vm248, %v139, 0
  %v628 = vsel %vm248, %v140, 0
  %v631 = vsel %vm248, %v141, 0
  %v634 = vsel %vm248, %v142, 0
  %v637 = vsel %vm248, %v143, 0
  %v640 = vsel %vm248, %v144, 0
  %v643 = vsel %vm248, %v145, 0
  %v646 = vsel %vm248, %v146, 0
  %v649 = vsel %vm248, %v147, 0
  %v652 = vsel %vm248, %v148, 0
  %v655 = vsel %vm248, %v149, 0
  %v658 = vsel %vm248, %v150, 0
  %v661 = vsel %vm248, %v151, 0
  %v664 = vsel %vm248, %v152, 0
  %v667 = vsel %vm248, %v153, 0
  %v670 = vsel %vm248, %v154, 0
  %v673 = vsel %vm248, %v155, 0
  %v676 = vsel %vm248, %v156, 0
  %v679 = vsel %vm248, %v157, 0
  %v682 = vsel %vm248, %v158, 0
  %v685 = vsel %vm248, %v159, 0
  %v688 = vsel %vm248, %v160, 0
  %v691 = vsel %vm248, %v161, 0
  %v694 = vsel %vm248, %v162, 0
  %v697 = vsel %vm248, %v163, 0
  %v700 = vsel %vm248, %v164, 0
  %v703 = vsel %vm248, %v165, 0
  %v706 = vsel %vm248, %v166, 0
  %v709 = vsel %vm248, %v167, 0
  %v712 = vsel %vm248, %v168, 0
  %v715 = vsel %vm248, %v169, 0
  %v718 = vsel %vm248, %v170, 0
  %v721 = vsel %vm248, %v171, 0
  %v724 = vsel %vm248, %v172, 0
  %v727 = vsel %vm248, %v173, 0
  %v730 = vsel %vm248, %v174, 0
  %v733 = vsel %vm248, %v175, 0
  %v736 = vsel %vm248, %v176, 0
  %v739 = vsel %vm248, %v177, 0
  %v742 = vsel %vm248, %v178, 0
  %v745 = vsel %vm248, %v179, 0
  %v748 = vsel %vm248, %v180, 0
  %v751 = vsel %vm248, %v181, 0
  %v754 = vsel %vm248, %v182, 0
  %v757 = vsel %vm248, %v183, 0
  %v760 = vsel %vm248, %v184, 0
  %v763 = vsel %vm248, %v185, 0
  %v766 = vsel %vm248, %v186, 0
  %v769 = vsel %vm248, %v187, 0
  %v772 = vsel %vm248, %v188, 0
  %v775 = vsel %vm248, %v189, 0
  %v778 = vsel %vm248, %v190, 0
  %v781 = vsel %vm248, %v191, 0
  %v784 = vsel %vm248, %v192, 0
  %v787 = vsel %vm248, %v193, 0
  %v790 = vsel %vm248, %v194, 0
  %v793 = vsel %vm248, %v195, 0
  %v796 = vsel %vm248, %v196, 0
  %v799 = vsel %vm248, %v197, 0
  %v802 = vsel %vm248, %v198, 0
  %v805 = vsel %vm248, %v199, 0
  %v808 = vsel %vm248, %v200, 0
  %v811 = vsel %vm248, %v201, 0
  %v814 = vsel %vm248, %v202, 0
  %v817 = vsel %vm248, %v203, 0
  %v820 = vsel %vm248, %v204, 0
  %v823 = vsel %vm248, %v205, 0
  %v826 = vsel %vm248, %v206, 0
  %v829 = vsel %vm248, %v207, 0
  %v832 = vsel %vm248, %v208, 0
  %v835 = vsel %vm248, %v209, 0
  %v838 = vsel %vm248, %v210, 0
  %v841 = vsel %vm248, %v211, 0
  %v844 = vsel %vm248, %v212, 0
  %v847 = vsel %vm248, %v213, 0
  %v850 = vsel %vm248, %v214, 0
  %v853 = vsel %vm248, %v215, 0
  %v856 = vsel %vm248, %v216, 0
  %v859 = vsel %vm248, %v217, 0
  %v862 = vsel %vm248, %v218, 0
  %v865 = vsel %vm248, %v219, 0
  %v868 = vsel %vm248, %v220, 0
  %v871 = vsel %vm248, %v221, 0
  %v874 = vsel %vm248, %v222, 0
  %v877 = vsel %vm248, %v223, 0
  %v880 = vsel %vm248, %v224, 0
  %v883 = vsel %vm248, %v225, 0
  %v886 = vsel %vm248, %v226, 0
  %v889 = vsel %vm248, %v227, 0
  %v892 = vsel %vm248, %v228, 0
  %v895 = vsel %vm248, %v229, 0
  %v898 = vsel %vm248, %v230, 0
  %v901 = vsel %vm248, %v231, 0
  %v904 = vsel %vm248, %v232, 0
  %v907 = vsel %vm248, %v233, 0
  %v910 = vsel %vm248, %v234, 0
  %v913 = vsel %vm248, %v235, 0
  %v916 = vsel %vm248, %v236, 0
  %v919 = vsel %vm248, %v237, 0
  %v922 = vsel %vm248, %v238, 0
  %vm924 = vcmask 1040384
  %v926 = vsel %vm924, %v240, 0
  %928 = vmatprep.subr.mxu0 0.0
  %929 = vmatpush1.msra.mxu0 %v239
  %930 = vmatprep.subr.mxu0 0.0
  %931 = vmatpush1.msra.mxu0 %v926
  %932 = vmatprep.subr.mxu0 0.0
  %933 = vmatpush1.msra.mxu0 0.0
  %934 = vmatprep.subr.mxu0 0.0
  %935 = vmatpush1.msra.mxu0 0.0
  %936 = vmatprep.subr.mxu0 0.0
  %937 = vmatpush1.msra.mxu0 0.0
  %938 = vmatprep.subr.mxu0 0.0
  %939 = vmatpush1.msra.mxu0 0.0
  %940 = vmatprep.subr.mxu0 0.0
  %941 = vmatpush1.msra.mxu0 0.0
  %942 = vmatprep.subr.mxu0 0.0
  %943 = vmatpush1.msra.mxu0 0.0
  %944 = vmatprep.subr.mxu0 0.0
  %945 = vmatpush1.msra.mxu0 0.0
  %946 = vmatprep.subr.mxu0 0.0
  %947 = vmatpush1.msra.mxu0 0.0
  %948 = vmatprep.subr.mxu0 0.0
  %949 = vmatpush1.msra.mxu0 0.0
  %950 = vmatprep.subr.mxu0 0.0
  %951 = vmatpush1.msra.mxu0 0.0
  %952 = vmatprep.subr.mxu0 0.0
  %953 = vmatpush1.msra.mxu0 0.0
  %954 = vmatprep.subr.mxu0 0.0
  %955 = vmatpush1.msra.mxu0 0.0
  %956 = vmatprep.subr.mxu0 0.0
  %957 = vmatpush1.msra.mxu0 0.0
  %958 = vmatprep.subr.mxu0 0.0
  %959 = vmatpush1.msra.mxu0 0.0
  %960 = vmatprep.subr.mxu0 0.0
  %961 = vmatpush1.msra.mxu0 0.0
  %962 = vmatprep.subr.mxu0 0.0
  %963 = vmatpush1.msra.mxu0 0.0
  %964 = vmatprep.subr.mxu0 0.0
  %965 = vmatpush1.msra.mxu0 0.0
  %966 = vmatprep.subr.mxu0 0.0
  %967 = vmatpush1.msra.mxu0 0.0
  %968 = vmatprep.subr.mxu0 0.0
  %969 = vmatpush1.msra.mxu0 0.0
  %970 = vmatprep.subr.mxu0 0.0
  %971 = vmatpush1.msra.mxu0 0.0
  %972 = vmatprep.subr.mxu0 0.0
  %973 = vmatpush1.msra.mxu0 0.0
  %974 = vmatprep.subr.mxu0 0.0
  %975 = vmatpush1.msra.mxu0 0.0
  %976 = vmatprep.subr.mxu0 0.0
  %977 = vmatpush1.msra.mxu0 0.0
  %978 = vmatprep.subr.mxu0 0.0
  %979 = vmatpush1.msra.mxu0 0.0
  %980 = vmatprep.subr.mxu0 0.0
  %981 = vmatpush1.msra.mxu0 0.0
  %982 = vmatprep.subr.mxu0 0.0
  %983 = vmatpush1.msra.mxu0 0.0
  %984 = vmatprep.subr.mxu0 0.0
  %985 = vmatpush1.msra.mxu0 0.0
  %986 = vmatprep.subr.mxu0 0.0
  %987 = vmatpush1.msra.mxu0 0.0
  %988 = vmatprep.subr.mxu0 0.0
  %989 = vmatpush1.msra.mxu0 0.0
  %990 = vmatprep.subr.mxu0 0.0
  %991 = vmatpush1.msra.mxu0 0.0
  %992 = vmatprep.mubr.f32.mxu0 0.0
  %993 = vmatmul.mubr.f32.gmra.mrb[0].mxu0 %v250
  %v994 = vpop.f32.mrb[0].mxu0
  %v995 = vadd.f32 %v246, %v994
  %v996 = vpop.f32.mrb[0].mxu0
  %997 = vmatprep.mubr.f32.mxu0 0.0
  %998 = vmatmul.mubr.f32.gmra.mrb[0].mxu0 %v253
  %v999 = vpop.f32.mrb[0].mxu0
  %v1000 = vadd.f32 %v246, %v999
  %v1001 = vpop.f32.mrb[0].mxu0
  %1002 = vmatprep.mubr.f32.mxu0 0.0
  %1003 = vmatmul.mubr.f32.gmra.mrb[0].mxu0 %v256
  %v1004 = vpop.f32.mrb[0].mxu0
  %v1005 = vadd.f32 %v246, %v1004
  %v1006 = vpop.f32.mrb[0].mxu0
  %1007 = vmatprep.mubr.f32.mxu0 0.0
  %1008 = vmatmul.mubr.f32.gmra.mrb[0].mxu0 %v259
  %v1009 = vpop.f32.mrb[0].mxu0
  %v1010 = vadd.f32 %v246, %v1009
  %v1011 = vpop.f32.mrb[0].mxu0
  %1012 = vmatprep.mubr.f32.mxu0 0.0
  %1013 = vmatmul.mubr.f32.gmra.mrb[0].mxu0 %v262
  %v1014 = vpop.f32.mrb[0].mxu0
  %v1015 = vadd.f32 %v246, %v1014
  %v1016 = vpop.f32.mrb[0].mxu0
  %1017 = vmatprep.mubr.f32.mxu0 0.0
  %1018 = vmatmul.mubr.f32.gmra.mrb[0].mxu0 %v265
  %v1019 = vpop.f32.mrb[0].mxu0
  %v1020 = vadd.f32 %v246, %v1019
  %v1021 = vpop.f32.mrb[0].mxu0
  %1022 = vmatprep.mubr.f32.mxu0 0.0
  %1023 = vmatmul.mubr.f32.gmra.mrb[0].mxu0 %v268
  %v1024 = vpop.f32.mrb[0].mxu0
  %v1025 = vadd.f32 %v246, %v1024
  %v1026 = vpop.f32.mrb[0].mxu0
  %1027 = vmatprep.mubr.f32.mxu0 0.0
  %1028 = vmatmul.mubr.f32.gmra.mrb[0].mxu0 %v271
  %v1029 = vpop.f32.mrb[0].mxu0
  %v1030 = vadd.f32 %v246, %v1029
  %v1031 = vpop.f32.mrb[0].mxu0
  %1032 = vmatprep.mubr.f32.mxu0 0.0
  %1033 = vmatmul.mubr.f32.gmra.mrb[0].mxu0 %v274
  %v1034 = vpop.f32.mrb[0].mxu0
  %v1035 = vadd.f32 %v246, %v1034
  %v1036 = vpop.f32.mrb[0].mxu0
  %1037 = vmatprep.mubr.f32.mxu0 0.0
  %1038 = vmatmul.mubr.f32.gmra.mrb[0].mxu0 %v277
  %v1039 = vpop.f32.mrb[0].mxu0
  %v1040 = vadd.f32 %v246, %v1039
  %v1041 = vpop.f32.mrb[0].mxu0
  %1042 = vmatprep.mubr.f32.mxu0 0.0
  %1043 = vmatmul.mubr.f32.gmra.mrb[0].mxu0 %v280
  %v1044 = vpop.f32.mrb[0].mxu0
  %v1045 = vadd.f32 %v246, %v1044
  %v1046 = vpop.f32.mrb[0].mxu0
  %1047 = vmatprep.mubr.f32.mxu0 0.0
  %1048 = vmatmul.mubr.f32.gmra.mrb[0].mxu0 %v283
  %v1049 = vpop.f32.mrb[0].mxu0
  %v1050 = vadd.f32 %v246, %v1049
  %v1051 = vpop.f32.mrb[0].mxu0
  %1052 = vmatprep.mubr.f32.mxu0 0.0
  %1053 = vmatmul.mubr.f32.gmra.mrb[0].mxu0 %v286
  %v1054 = vpop.f32.mrb[0].mxu0
  %v1055 = vadd.f32 %v246, %v1054
  %v1056 = vpop.f32.mrb[0].mxu0
  %1057 = vmatprep.mubr.f32.mxu0 0.0
  %1058 = vmatmul.mubr.f32.gmra.mrb[0].mxu0 %v289
  %v1059 = vpop.f32.mrb[0].mxu0
  %v1060 = vadd.f32 %v246, %v1059
  %v1061 = vpop.f32.mrb[0].mxu0
  %1062 = vmatprep.mubr.f32.mxu0 0.0
  %1063 = vmatmul.mubr.f32.gmra.mrb[0].mxu0 %v292
  %v1064 = vpop.f32.mrb[0].mxu0
  %v1065 = vadd.f32 %v246, %v1064
  %v1066 = vpop.f32.mrb[0].mxu0
  %1067 = vmatprep.mubr.f32.mxu0 0.0
  %1068 = vmatmul.mubr.f32.gmra.mrb[0].mxu0 %v295
  %v1069 = vpop.f32.mrb[0].mxu0
  %v1070 = vadd.f32 %v246, %v1069
  %v1071 = vpop.f32.mrb[0].mxu0
  %1072 = vmatprep.mubr.f32.mxu0 0.0
  %1073 = vmatmul.mubr.f32.gmra.mrb[0].mxu0 %v298
  %v1074 = vpop.f32.mrb[0].mxu0
  %v1075 = vadd.f32 %v246, %v1074
  %v1076 = vpop.f32.mrb[0].mxu0
  %1077 = vmatprep.mubr.f32.mxu0 0.0
  %1078 = vmatmul.mubr.f32.gmra.mrb[0].mxu0 %v301
  %v1079 = vpop.f32.mrb[0].mxu0
  %v1080 = vadd.f32 %v246, %v1079
  %v1081 = vpop.f32.mrb[0].mxu0
  %1082 = vmatprep.mubr.f32.mxu0 0.0
  %1083 = vmatmul.mubr.f32.gmra.mrb[0].mxu0 %v304
  %v1084 = vpop.f32.mrb[0].mxu0
  %v1085 = vadd.f32 %v246, %v1084
  %v1086 = vpop.f32.mrb[0].mxu0
  %1087 = vmatprep.mubr.f32.mxu0 0.0
  %1088 = vmatmul.mubr.f32.gmra.mrb[0].mxu0 %v307
  %v1089 = vpop.f32.mrb[0].mxu0
  %v1090 = vadd.f32 %v246, %v1089
  %v1091 = vpop.f32.mrb[0].mxu0
  %1092 = vmatprep.mubr.f32.mxu0 0.0
  %1093 = vmatmul.mubr.f32.gmra.mrb[0].mxu0 %v310
  %v1094 = vpop.f32.mrb[0].mxu0
  %v1095 = vadd.f32 %v246, %v1094
  %v1096 = vpop.f32.mrb[0].mxu0
  %1097 = vmatprep.mubr.f32.mxu0 0.0
  %1098 = vmatmul.mubr.f32.gmra.mrb[0].mxu0 %v313
  %v1099 = vpop.f32.mrb[0].mxu0
  %v1100 = vadd.f32 %v246, %v1099
  %v1101 = vpop.f32.mrb[0].mxu0
  %1102 = vmatprep.mubr.f32.mxu0 0.0
  %1103 = vmatmul.mubr.f32.gmra.mrb[0].mxu0 %v316
  %v1104 = vpop.f32.mrb[0].mxu0
  %v1105 = vadd.f32 %v246, %v1104
  %v1106 = vpop.f32.mrb[0].mxu0
  %1107 = vmatprep.mubr.f32.mxu0 0.0
  %1108 = vmatmul.mubr.f32.gmra.mrb[0].mxu0 %v319
  %v1109 = vpop.f32.mrb[0].mxu0
  %v1110 = vadd.f32 %v246, %v1109
  %v1111 = vpop.f32.mrb[0].mxu0
  %1112 = vmatprep.mubr.f32.mxu0 0.0
  %1113 = vmatmul.mubr.f32.gmra.mrb[0].mxu0 %v322
  %v1114 = vpop.f32.mrb[0].mxu0
  %v1115 = vadd.f32 %v246, %v1114
  %v1116 = vpop.f32.mrb[0].mxu0
  %1117 = vmatprep.mubr.f32.mxu0 0.0
  %1118 = vmatmul.mubr.f32.gmra.mrb[0].mxu0 %v325
  %v1119 = vpop.f32.mrb[0].mxu0
  %v1120 = vadd.f32 %v246, %v1119
  %v1121 = vpop.f32.mrb[0].mxu0
  %1122 = vmatprep.mubr.f32.mxu0 0.0
  %1123 = vmatmul.mubr.f32.gmra.mrb[0].mxu0 %v328
  %v1124 = vpop.f32.mrb[0].mxu0
  %v1125 = vadd.f32 %v246, %v1124
  %v1126 = vpop.f32.mrb[0].mxu0
  %1127 = vmatprep.mubr.f32.mxu0 0.0
  %1128 = vmatmul.mubr.f32.gmra.mrb[0].mxu0 %v331
  %v1129 = vpop.f32.mrb[0].mxu0
  %v1130 = vadd.f32 %v246, %v1129
  %v1131 = vpop.f32.mrb[0].mxu0
  %1132 = vmatprep.mubr.f32.mxu0 0.0
  %1133 = vmatmul.mubr.f32.gmra.mrb[0].mxu0 %v334
  %v1134 = vpop.f32.mrb[0].mxu0
  %v1135 = vadd.f32 %v246, %v1134
  %v1136 = vpop.f32.mrb[0].mxu0
  %1137 = vmatprep.mubr.f32.mxu0 0.0
  %1138 = vmatmul.mubr.f32.gmra.mrb[0].mxu0 %v337
  %v1139 = vpop.f32.mrb[0].mxu0
  %v1140 = vadd.f32 %v246, %v1139
  %v1141 = vpop.f32.mrb[0].mxu0
  %1142 = vmatprep.mubr.f32.mxu0 0.0
  %1143 = vmatmul.mubr.f32.gmra.mrb[0].mxu0 %v340
  %v1144 = vpop.f32.mrb[0].mxu0
  %v1145 = vadd.f32 %v246, %v1144
  %v1146 = vpop.f32.mrb[0].mxu0
  %1147 = vmatprep.mubr.f32.mxu0 0.0
  %1148 = vmatmul.mubr.f32.gmra.mrb[0].mxu0 %v343
  %v1149 = vpop.f32.mrb[0].mxu0
  %v1150 = vadd.f32 %v246, %v1149
  %v1151 = vpop.f32.mrb[0].mxu0
  %1152 = vmatprep.mubr.f32.mxu0 0.0
  %1153 = vmatmul.mubr.f32.gmra.mrb[0].mxu0 %v346
  %v1154 = vpop.f32.mrb[0].mxu0
  %v1155 = vadd.f32 %v246, %v1154
  %v1156 = vpop.f32.mrb[0].mxu0
  %1157 = vmatprep.mubr.f32.mxu0 0.0
  %1158 = vmatmul.mubr.f32.gmra.mrb[0].mxu0 %v349
  %v1159 = vpop.f32.mrb[0].mxu0
  %v1160 = vadd.f32 %v246, %v1159
  %v1161 = vpop.f32.mrb[0].mxu0
  %1162 = vmatprep.mubr.f32.mxu0 0.0
  %1163 = vmatmul.mubr.f32.gmra.mrb[0].mxu0 %v352
  %v1164 = vpop.f32.mrb[0].mxu0
  %v1165 = vadd.f32 %v246, %v1164
  %v1166 = vpop.f32.mrb[0].mxu0
  %1167 = vmatprep.mubr.f32.mxu0 0.0
  %1168 = vmatmul.mubr.f32.gmra.mrb[0].mxu0 %v355
  %v1169 = vpop.f32.mrb[0].mxu0
  %v1170 = vadd.f32 %v246, %v1169
  %v1171 = vpop.f32.mrb[0].mxu0
  %1172 = vmatprep.mubr.f32.mxu0 0.0
  %1173 = vmatmul.mubr.f32.gmra.mrb[0].mxu0 %v358
  %v1174 = vpop.f32.mrb[0].mxu0
  %v1175 = vadd.f32 %v246, %v1174
  %v1176 = vpop.f32.mrb[0].mxu0
  %1177 = vmatprep.mubr.f32.mxu0 0.0
  %1178 = vmatmul.mubr.f32.gmra.mrb[0].mxu0 %v361
  %v1179 = vpop.f32.mrb[0].mxu0
  %v1180 = vadd.f32 %v246, %v1179
  %v1181 = vpop.f32.mrb[0].mxu0
  %1182 = vmatprep.mubr.f32.mxu0 0.0
  %1183 = vmatmul.mubr.f32.gmra.mrb[0].mxu0 %v364
  %v1184 = vpop.f32.mrb[0].mxu0
  %v1185 = vadd.f32 %v246, %v1184
  %v1186 = vpop.f32.mrb[0].mxu0
  %1187 = vmatprep.mubr.f32.mxu0 0.0
  %1188 = vmatmul.mubr.f32.gmra.mrb[0].mxu0 %v367
  %v1189 = vpop.f32.mrb[0].mxu0
  %v1190 = vadd.f32 %v246, %v1189
  %v1191 = vpop.f32.mrb[0].mxu0
  %1192 = vmatprep.mubr.f32.mxu0 0.0
  %1193 = vmatmul.mubr.f32.gmra.mrb[0].mxu0 %v370
  %v1194 = vpop.f32.mrb[0].mxu0
  %v1195 = vadd.f32 %v246, %v1194
  %v1196 = vpop.f32.mrb[0].mxu0
  %1197 = vmatprep.mubr.f32.mxu0 0.0
  %1198 = vmatmul.mubr.f32.gmra.mrb[0].mxu0 %v373
  %v1199 = vpop.f32.mrb[0].mxu0
  %v1200 = vadd.f32 %v246, %v1199
  %v1201 = vpop.f32.mrb[0].mxu0
  %1202 = vmatprep.mubr.f32.mxu0 0.0
  %1203 = vmatmul.mubr.f32.gmra.mrb[0].mxu0 %v376
  %v1204 = vpop.f32.mrb[0].mxu0
  %v1205 = vadd.f32 %v246, %v1204
  %v1206 = vpop.f32.mrb[0].mxu0
  %1207 = vmatprep.mubr.f32.mxu0 0.0
  %1208 = vmatmul.mubr.f32.gmra.mrb[0].mxu0 %v379
  %v1209 = vpop.f32.mrb[0].mxu0
  %v1210 = vadd.f32 %v246, %v1209
  %v1211 = vpop.f32.mrb[0].mxu0
  %1212 = vmatprep.mubr.f32.mxu0 0.0
  %1213 = vmatmul.mubr.f32.gmra.mrb[0].mxu0 %v382
  %v1214 = vpop.f32.mrb[0].mxu0
  %v1215 = vadd.f32 %v246, %v1214
  %v1216 = vpop.f32.mrb[0].mxu0
  %1217 = vmatprep.mubr.f32.mxu0 0.0
  %1218 = vmatmul.mubr.f32.gmra.mrb[0].mxu0 %v385
  %v1219 = vpop.f32.mrb[0].mxu0
  %v1220 = vadd.f32 %v246, %v1219
  %v1221 = vpop.f32.mrb[0].mxu0
  %1222 = vmatprep.mubr.f32.mxu0 0.0
  %1223 = vmatmul.mubr.f32.gmra.mrb[0].mxu0 %v388
  %v1224 = vpop.f32.mrb[0].mxu0
  %v1225 = vadd.f32 %v246, %v1224
  %v1226 = vpop.f32.mrb[0].mxu0
  %1227 = vmatprep.mubr.f32.mxu0 0.0
  %1228 = vmatmul.mubr.f32.gmra.mrb[0].mxu0 %v391
  %v1229 = vpop.f32.mrb[0].mxu0
  %v1230 = vadd.f32 %v246, %v1229
  %v1231 = vpop.f32.mrb[0].mxu0
  %1232 = vmatprep.mubr.f32.mxu0 0.0
  %1233 = vmatmul.mubr.f32.gmra.mrb[0].mxu0 %v394
  %v1234 = vpop.f32.mrb[0].mxu0
  %v1235 = vadd.f32 %v246, %v1234
  %v1236 = vpop.f32.mrb[0].mxu0
  %1237 = vmatprep.mubr.f32.mxu0 0.0
  %1238 = vmatmul.mubr.f32.gmra.mrb[0].mxu0 %v397
  %v1239 = vpop.f32.mrb[0].mxu0
  %v1240 = vadd.f32 %v246, %v1239
  %v1241 = vpop.f32.mrb[0].mxu0
  %1242 = vmatprep.mubr.f32.mxu0 0.0
  %1243 = vmatmul.mubr.f32.gmra.mrb[0].mxu0 %v400
  %v1244 = vpop.f32.mrb[0].mxu0
  %v1245 = vadd.f32 %v246, %v1244
  %v1246 = vpop.f32.mrb[0].mxu0
  %1247 = vmatprep.mubr.f32.mxu0 0.0
  %1248 = vmatmul.mubr.f32.gmra.mrb[0].mxu0 %v403
  %v1249 = vpop.f32.mrb[0].mxu0
  %v1250 = vadd.f32 %v246, %v1249
  %v1251 = vpop.f32.mrb[0].mxu0
  %1252 = vmatprep.mubr.f32.mxu0 0.0
  %1253 = vmatmul.mubr.f32.gmra.mrb[0].mxu0 %v406
  %v1254 = vpop.f32.mrb[0].mxu0
  %v1255 = vadd.f32 %v246, %v1254
  %v1256 = vpop.f32.mrb[0].mxu0
  %1257 = vmatprep.mubr.f32.mxu0 0.0
  %1258 = vmatmul.mubr.f32.gmra.mrb[0].mxu0 %v409
  %v1259 = vpop.f32.mrb[0].mxu0
  %v1260 = vadd.f32 %v246, %v1259
  %v1261 = vpop.f32.mrb[0].mxu0
  %1262 = vmatprep.mubr.f32.mxu0 0.0
  %1263 = vmatmul.mubr.f32.gmra.mrb[0].mxu0 %v412
  %v1264 = vpop.f32.mrb[0].mxu0
  %v1265 = vadd.f32 %v246, %v1264
  %v1266 = vpop.f32.mrb[0].mxu0
  %1267 = vmatprep.mubr.f32.mxu0 0.0
  %1268 = vmatmul.mubr.f32.gmra.mrb[0].mxu0 %v415
  %v1269 = vpop.f32.mrb[0].mxu0
  %v1270 = vadd.f32 %v246, %v1269
  %v1271 = vpop.f32.mrb[0].mxu0
  %1272 = vmatprep.mubr.f32.mxu0 0.0
  %1273 = vmatmul.mubr.f32.gmra.mrb[0].mxu0 %v418
  %v1274 = vpop.f32.mrb[0].mxu0
  %v1275 = vadd.f32 %v246, %v1274
  %v1276 = vpop.f32.mrb[0].mxu0
  %1277 = vmatprep.mubr.f32.mxu0 0.0
  %1278 = vmatmul.mubr.f32.gmra.mrb[0].mxu0 %v421
  %v1279 = vpop.f32.mrb[0].mxu0
  %v1280 = vadd.f32 %v246, %v1279
  %v1281 = vpop.f32.mrb[0].mxu0
  %1282 = vmatprep.mubr.f32.mxu0 0.0
  %1283 = vmatmul.mubr.f32.gmra.mrb[0].mxu0 %v424
  %v1284 = vpop.f32.mrb[0].mxu0
  %v1285 = vadd.f32 %v246, %v1284
  %v1286 = vpop.f32.mrb[0].mxu0
  %1287 = vmatprep.mubr.f32.mxu0 0.0
  %1288 = vmatmul.mubr.f32.gmra.mrb[0].mxu0 %v427
  %v1289 = vpop.f32.mrb[0].mxu0
  %v1290 = vadd.f32 %v246, %v1289
  %v1291 = vpop.f32.mrb[0].mxu0
  %1292 = vmatprep.mubr.f32.mxu0 0.0
  %1293 = vmatmul.mubr.f32.gmra.mrb[0].mxu0 %v430
  %v1294 = vpop.f32.mrb[0].mxu0
  %v1295 = vadd.f32 %v246, %v1294
  %v1296 = vpop.f32.mrb[0].mxu0
  %1297 = vmatprep.mubr.f32.mxu0 0.0
  %1298 = vmatmul.mubr.f32.gmra.mrb[0].mxu0 %v433
  %v1299 = vpop.f32.mrb[0].mxu0
  %v1300 = vadd.f32 %v246, %v1299
  %v1301 = vpop.f32.mrb[0].mxu0
  %1302 = vmatprep.mubr.f32.mxu0 0.0
  %1303 = vmatmul.mubr.f32.gmra.mrb[0].mxu0 %v436
  %v1304 = vpop.f32.mrb[0].mxu0
  %v1305 = vadd.f32 %v246, %v1304
  %v1306 = vpop.f32.mrb[0].mxu0
  %1307 = vmatprep.mubr.f32.mxu0 0.0
  %1308 = vmatmul.mubr.f32.gmra.mrb[0].mxu0 %v439
  %v1309 = vpop.f32.mrb[0].mxu0
  %v1310 = vadd.f32 %v246, %v1309
  %v1311 = vpop.f32.mrb[0].mxu0
  %1312 = vmatprep.mubr.f32.mxu0 0.0
  %1313 = vmatmul.mubr.f32.gmra.mrb[0].mxu0 %v442
  %v1314 = vpop.f32.mrb[0].mxu0
  %v1315 = vadd.f32 %v246, %v1314
  %v1316 = vpop.f32.mrb[0].mxu0
  %1317 = vmatprep.mubr.f32.mxu0 0.0
  %1318 = vmatmul.mubr.f32.gmra.mrb[0].mxu0 %v445
  %v1319 = vpop.f32.mrb[0].mxu0
  %v1320 = vadd.f32 %v246, %v1319
  %v1321 = vpop.f32.mrb[0].mxu0
  %1322 = vmatprep.mubr.f32.mxu0 0.0
  %1323 = vmatmul.mubr.f32.gmra.mrb[0].mxu0 %v448
  %v1324 = vpop.f32.mrb[0].mxu0
  %v1325 = vadd.f32 %v246, %v1324
  %v1326 = vpop.f32.mrb[0].mxu0
  %1327 = vmatprep.mubr.f32.mxu0 0.0
  %1328 = vmatmul.mubr.f32.gmra.mrb[0].mxu0 %v451
  %v1329 = vpop.f32.mrb[0].mxu0
  %v1330 = vadd.f32 %v246, %v1329
  %v1331 = vpop.f32.mrb[0].mxu0
  %1332 = vmatprep.mubr.f32.mxu0 0.0
  %1333 = vmatmul.mubr.f32.gmra.mrb[0].mxu0 %v454
  %v1334 = vpop.f32.mrb[0].mxu0
  %v1335 = vadd.f32 %v246, %v1334
  %v1336 = vpop.f32.mrb[0].mxu0
  %1337 = vmatprep.mubr.f32.mxu0 0.0
  %1338 = vmatmul.mubr.f32.gmra.mrb[0].mxu0 %v457
  %v1339 = vpop.f32.mrb[0].mxu0
  %v1340 = vadd.f32 %v246, %v1339
  %v1341 = vpop.f32.mrb[0].mxu0
  %1342 = vmatprep.mubr.f32.mxu0 0.0
  %1343 = vmatmul.mubr.f32.gmra.mrb[0].mxu0 %v460
  %v1344 = vpop.f32.mrb[0].mxu0
  %v1345 = vadd.f32 %v246, %v1344
  %v1346 = vpop.f32.mrb[0].mxu0
  %1347 = vmatprep.mubr.f32.mxu0 0.0
  %1348 = vmatmul.mubr.f32.gmra.mrb[0].mxu0 %v463
  %v1349 = vpop.f32.mrb[0].mxu0
  %v1350 = vadd.f32 %v246, %v1349
  %v1351 = vpop.f32.mrb[0].mxu0
  %1352 = vmatprep.mubr.f32.mxu0 0.0
  %1353 = vmatmul.mubr.f32.gmra.mrb[0].mxu0 %v466
  %v1354 = vpop.f32.mrb[0].mxu0
  %v1355 = vadd.f32 %v246, %v1354
  %v1356 = vpop.f32.mrb[0].mxu0
  %1357 = vmatprep.mubr.f32.mxu0 0.0
  %1358 = vmatmul.mubr.f32.gmra.mrb[0].mxu0 %v469
  %v1359 = vpop.f32.mrb[0].mxu0
  %v1360 = vadd.f32 %v246, %v1359
  %v1361 = vpop.f32.mrb[0].mxu0
  %1362 = vmatprep.mubr.f32.mxu0 0.0
  %1363 = vmatmul.mubr.f32.gmra.mrb[0].mxu0 %v472
  %v1364 = vpop.f32.mrb[0].mxu0
  %v1365 = vadd.f32 %v246, %v1364
  %v1366 = vpop.f32.mrb[0].mxu0
  %1367 = vmatprep.mubr.f32.mxu0 0.0
  %1368 = vmatmul.mubr.f32.gmra.mrb[0].mxu0 %v475
  %v1369 = vpop.f32.mrb[0].mxu0
  %v1370 = vadd.f32 %v246, %v1369
  %v1371 = vpop.f32.mrb[0].mxu0
  %1372 = vmatprep.mubr.f32.mxu0 0.0
  %1373 = vmatmul.mubr.f32.gmra.mrb[0].mxu0 %v478
  %v1374 = vpop.f32.mrb[0].mxu0
  %v1375 = vadd.f32 %v246, %v1374
  %v1376 = vpop.f32.mrb[0].mxu0
  %1377 = vmatprep.mubr.f32.mxu0 0.0
  %1378 = vmatmul.mubr.f32.gmra.mrb[0].mxu0 %v481
  %v1379 = vpop.f32.mrb[0].mxu0
  %v1380 = vadd.f32 %v246, %v1379
  %v1381 = vpop.f32.mrb[0].mxu0
  %1382 = vmatprep.mubr.f32.mxu0 0.0
  %1383 = vmatmul.mubr.f32.gmra.mrb[0].mxu0 %v484
  %v1384 = vpop.f32.mrb[0].mxu0
  %v1385 = vadd.f32 %v246, %v1384
  %v1386 = vpop.f32.mrb[0].mxu0
  %1387 = vmatprep.mubr.f32.mxu0 0.0
  %1388 = vmatmul.mubr.f32.gmra.mrb[0].mxu0 %v487
  %v1389 = vpop.f32.mrb[0].mxu0
  %v1390 = vadd.f32 %v246, %v1389
  %v1391 = vpop.f32.mrb[0].mxu0
  %1392 = vmatprep.mubr.f32.mxu0 0.0
  %1393 = vmatmul.mubr.f32.gmra.mrb[0].mxu0 %v490
  %v1394 = vpop.f32.mrb[0].mxu0
  %v1395 = vadd.f32 %v246, %v1394
  %v1396 = vpop.f32.mrb[0].mxu0
  %1397 = vmatprep.mubr.f32.mxu0 0.0
  %1398 = vmatmul.mubr.f32.gmra.mrb[0].mxu0 %v493
  %v1399 = vpop.f32.mrb[0].mxu0
  %v1400 = vadd.f32 %v246, %v1399
  %v1401 = vpop.f32.mrb[0].mxu0
  %1402 = vmatprep.mubr.f32.mxu0 0.0
  %1403 = vmatmul.mubr.f32.gmra.mrb[0].mxu0 %v496
  %v1404 = vpop.f32.mrb[0].mxu0
  %v1405 = vadd.f32 %v246, %v1404
  %v1406 = vpop.f32.mrb[0].mxu0
  %1407 = vmatprep.mubr.f32.mxu0 0.0
  %1408 = vmatmul.mubr.f32.gmra.mrb[0].mxu0 %v499
  %v1409 = vpop.f32.mrb[0].mxu0
  %v1410 = vadd.f32 %v246, %v1409
  %v1411 = vpop.f32.mrb[0].mxu0
  %1412 = vmatprep.mubr.f32.mxu0 0.0
  %1413 = vmatmul.mubr.f32.gmra.mrb[0].mxu0 %v502
  %v1414 = vpop.f32.mrb[0].mxu0
  %v1415 = vadd.f32 %v246, %v1414
  %v1416 = vpop.f32.mrb[0].mxu0
  %1417 = vmatprep.mubr.f32.mxu0 0.0
  %1418 = vmatmul.mubr.f32.gmra.mrb[0].mxu0 %v505
  %v1419 = vpop.f32.mrb[0].mxu0
  %v1420 = vadd.f32 %v246, %v1419
  %v1421 = vpop.f32.mrb[0].mxu0
  %1422 = vmatprep.mubr.f32.mxu0 0.0
  %1423 = vmatmul.mubr.f32.gmra.mrb[0].mxu0 %v508
  %v1424 = vpop.f32.mrb[0].mxu0
  %v1425 = vadd.f32 %v246, %v1424
  %v1426 = vpop.f32.mrb[0].mxu0
  %1427 = vmatprep.mubr.f32.mxu0 0.0
  %1428 = vmatmul.mubr.f32.gmra.mrb[0].mxu0 %v511
  %v1429 = vpop.f32.mrb[0].mxu0
  %v1430 = vadd.f32 %v246, %v1429
  %v1431 = vpop.f32.mrb[0].mxu0
  %1432 = vmatprep.mubr.f32.mxu0 0.0
  %1433 = vmatmul.mubr.f32.gmra.mrb[0].mxu0 %v514
  %v1434 = vpop.f32.mrb[0].mxu0
  %v1435 = vadd.f32 %v246, %v1434
  %v1436 = vpop.f32.mrb[0].mxu0
  %1437 = vmatprep.mubr.f32.mxu0 0.0
  %1438 = vmatmul.mubr.f32.gmra.mrb[0].mxu0 %v517
  %v1439 = vpop.f32.mrb[0].mxu0
  %v1440 = vadd.f32 %v246, %v1439
  %v1441 = vpop.f32.mrb[0].mxu0
  %1442 = vmatprep.mubr.f32.mxu0 0.0
  %1443 = vmatmul.mubr.f32.gmra.mrb[0].mxu0 %v520
  %v1444 = vpop.f32.mrb[0].mxu0
  %v1445 = vadd.f32 %v246, %v1444
  %v1446 = vpop.f32.mrb[0].mxu0
  %1447 = vmatprep.mubr.f32.mxu0 0.0
  %1448 = vmatmul.mubr.f32.gmra.mrb[0].mxu0 %v523
  %v1449 = vpop.f32.mrb[0].mxu0
  %v1450 = vadd.f32 %v246, %v1449
  %v1451 = vpop.f32.mrb[0].mxu0
  %1452 = vmatprep.mubr.f32.mxu0 0.0
  %1453 = vmatmul.mubr.f32.gmra.mrb[0].mxu0 %v526
  %v1454 = vpop.f32.mrb[0].mxu0
  %v1455 = vadd.f32 %v246, %v1454
  %v1456 = vpop.f32.mrb[0].mxu0
  %1457 = vmatprep.mubr.f32.mxu0 0.0
  %1458 = vmatmul.mubr.f32.gmra.mrb[0].mxu0 %v529
  %v1459 = vpop.f32.mrb[0].mxu0
  %v1460 = vadd.f32 %v246, %v1459
  %v1461 = vpop.f32.mrb[0].mxu0
  %1462 = vmatprep.mubr.f32.mxu0 0.0
  %1463 = vmatmul.mubr.f32.gmra.mrb[0].mxu0 %v532
  %v1464 = vpop.f32.mrb[0].mxu0
  %v1465 = vadd.f32 %v246, %v1464
  %v1466 = vpop.f32.mrb[0].mxu0
  %1467 = vmatprep.mubr.f32.mxu0 0.0
  %1468 = vmatmul.mubr.f32.gmra.mrb[0].mxu0 %v535
  %v1469 = vpop.f32.mrb[0].mxu0
  %v1470 = vadd.f32 %v246, %v1469
  %v1471 = vpop.f32.mrb[0].mxu0
  %1472 = vmatprep.mubr.f32.mxu0 0.0
  %1473 = vmatmul.mubr.f32.gmra.mrb[0].mxu0 %v538
  %v1474 = vpop.f32.mrb[0].mxu0
  %v1475 = vadd.f32 %v246, %v1474
  %v1476 = vpop.f32.mrb[0].mxu0
  %1477 = vmatprep.mubr.f32.mxu0 0.0
  %1478 = vmatmul.mubr.f32.gmra.mrb[0].mxu0 %v541
  %v1479 = vpop.f32.mrb[0].mxu0
  %v1480 = vadd.f32 %v246, %v1479
  %v1481 = vpop.f32.mrb[0].mxu0
  %1482 = vmatprep.mubr.f32.mxu0 0.0
  %1483 = vmatmul.mubr.f32.gmra.mrb[0].mxu0 %v544
  %v1484 = vpop.f32.mrb[0].mxu0
  %v1485 = vadd.f32 %v246, %v1484
  %v1486 = vpop.f32.mrb[0].mxu0
  %1487 = vmatprep.mubr.f32.mxu0 0.0
  %1488 = vmatmul.mubr.f32.gmra.mrb[0].mxu0 %v547
  %v1489 = vpop.f32.mrb[0].mxu0
  %v1490 = vadd.f32 %v246, %v1489
  %v1491 = vpop.f32.mrb[0].mxu0
  %1492 = vmatprep.mubr.f32.mxu0 0.0
  %1493 = vmatmul.mubr.f32.gmra.mrb[0].mxu0 %v550
  %v1494 = vpop.f32.mrb[0].mxu0
  %v1495 = vadd.f32 %v246, %v1494
  %v1496 = vpop.f32.mrb[0].mxu0
  %1497 = vmatprep.mubr.f32.mxu0 0.0
  %1498 = vmatmul.mubr.f32.gmra.mrb[0].mxu0 %v553
  %v1499 = vpop.f32.mrb[0].mxu0
  %v1500 = vadd.f32 %v246, %v1499
  %v1501 = vpop.f32.mrb[0].mxu0
  %1502 = vmatprep.mubr.f32.mxu0 0.0
  %1503 = vmatmul.mubr.f32.gmra.mrb[0].mxu0 %v556
  %v1504 = vpop.f32.mrb[0].mxu0
  %v1505 = vadd.f32 %v246, %v1504
  %v1506 = vpop.f32.mrb[0].mxu0
  %1507 = vmatprep.mubr.f32.mxu0 0.0
  %1508 = vmatmul.mubr.f32.gmra.mrb[0].mxu0 %v559
  %v1509 = vpop.f32.mrb[0].mxu0
  %v1510 = vadd.f32 %v246, %v1509
  %v1511 = vpop.f32.mrb[0].mxu0
  %1512 = vmatprep.mubr.f32.mxu0 0.0
  %1513 = vmatmul.mubr.f32.gmra.mrb[0].mxu0 %v562
  %v1514 = vpop.f32.mrb[0].mxu0
  %v1515 = vadd.f32 %v246, %v1514
  %v1516 = vpop.f32.mrb[0].mxu0
  %1517 = vmatprep.mubr.f32.mxu0 0.0
  %1518 = vmatmul.mubr.f32.gmra.mrb[0].mxu0 %v565
  %v1519 = vpop.f32.mrb[0].mxu0
  %v1520 = vadd.f32 %v246, %v1519
  %v1521 = vpop.f32.mrb[0].mxu0
  %1522 = vmatprep.mubr.f32.mxu0 0.0
  %1523 = vmatmul.mubr.f32.gmra.mrb[0].mxu0 %v568
  %v1524 = vpop.f32.mrb[0].mxu0
  %v1525 = vadd.f32 %v246, %v1524
  %v1526 = vpop.f32.mrb[0].mxu0
  %1527 = vmatprep.mubr.f32.mxu0 0.0
  %1528 = vmatmul.mubr.f32.gmra.mrb[0].mxu0 %v571
  %v1529 = vpop.f32.mrb[0].mxu0
  %v1530 = vadd.f32 %v246, %v1529
  %v1531 = vpop.f32.mrb[0].mxu0
  %1532 = vmatprep.mubr.f32.mxu0 0.0
  %1533 = vmatmul.mubr.f32.gmra.mrb[0].mxu0 %v574
  %v1534 = vpop.f32.mrb[0].mxu0
  %v1535 = vadd.f32 %v246, %v1534
  %v1536 = vpop.f32.mrb[0].mxu0
  %1537 = vmatprep.mubr.f32.mxu0 0.0
  %1538 = vmatmul.mubr.f32.gmra.mrb[0].mxu0 %v577
  %v1539 = vpop.f32.mrb[0].mxu0
  %v1540 = vadd.f32 %v246, %v1539
  %v1541 = vpop.f32.mrb[0].mxu0
  %1542 = vmatprep.mubr.f32.mxu0 0.0
  %1543 = vmatmul.mubr.f32.gmra.mrb[0].mxu0 %v580
  %v1544 = vpop.f32.mrb[0].mxu0
  %v1545 = vadd.f32 %v246, %v1544
  %v1546 = vpop.f32.mrb[0].mxu0
  %1547 = vmatprep.mubr.f32.mxu0 0.0
  %1548 = vmatmul.mubr.f32.gmra.mrb[0].mxu0 %v583
  %v1549 = vpop.f32.mrb[0].mxu0
  %v1550 = vadd.f32 %v246, %v1549
  %v1551 = vpop.f32.mrb[0].mxu0
  %1552 = vmatprep.mubr.f32.mxu0 0.0
  %1553 = vmatmul.mubr.f32.gmra.mrb[0].mxu0 %v586
  %v1554 = vpop.f32.mrb[0].mxu0
  %v1555 = vadd.f32 %v246, %v1554
  %v1556 = vpop.f32.mrb[0].mxu0
  %1557 = vmatprep.mubr.f32.mxu0 0.0
  %1558 = vmatmul.mubr.f32.gmra.mrb[0].mxu0 %v589
  %v1559 = vpop.f32.mrb[0].mxu0
  %v1560 = vadd.f32 %v246, %v1559
  %v1561 = vpop.f32.mrb[0].mxu0
  %1562 = vmatprep.mubr.f32.mxu0 0.0
  %1563 = vmatmul.mubr.f32.gmra.mrb[0].mxu0 %v592
  %v1564 = vpop.f32.mrb[0].mxu0
  %v1565 = vadd.f32 %v246, %v1564
  %v1566 = vpop.f32.mrb[0].mxu0
  %1567 = vmatprep.mubr.f32.mxu0 0.0
  %1568 = vmatmul.mubr.f32.gmra.mrb[0].mxu0 %v595
  %v1569 = vpop.f32.mrb[0].mxu0
  %v1570 = vadd.f32 %v246, %v1569
  %v1571 = vpop.f32.mrb[0].mxu0
  %1572 = vmatprep.mubr.f32.mxu0 0.0
  %1573 = vmatmul.mubr.f32.gmra.mrb[0].mxu0 %v598
  %v1574 = vpop.f32.mrb[0].mxu0
  %v1575 = vadd.f32 %v246, %v1574
  %v1576 = vpop.f32.mrb[0].mxu0
  %1577 = vmatprep.mubr.f32.mxu0 0.0
  %1578 = vmatmul.mubr.f32.gmra.mrb[0].mxu0 %v601
  %v1579 = vpop.f32.mrb[0].mxu0
  %v1580 = vadd.f32 %v246, %v1579
  %v1581 = vpop.f32.mrb[0].mxu0
  %1582 = vmatprep.mubr.f32.mxu0 0.0
  %1583 = vmatmul.mubr.f32.gmra.mrb[0].mxu0 %v604
  %v1584 = vpop.f32.mrb[0].mxu0
  %v1585 = vadd.f32 %v246, %v1584
  %v1586 = vpop.f32.mrb[0].mxu0
  %1587 = vmatprep.mubr.f32.mxu0 0.0
  %1588 = vmatmul.mubr.f32.gmra.mrb[0].mxu0 %v607
  %v1589 = vpop.f32.mrb[0].mxu0
  %v1590 = vadd.f32 %v246, %v1589
  %v1591 = vpop.f32.mrb[0].mxu0
  %1592 = vmatprep.mubr.f32.mxu0 0.0
  %1593 = vmatmul.mubr.f32.gmra.mrb[0].mxu0 %v610
  %v1594 = vpop.f32.mrb[0].mxu0
  %v1595 = vadd.f32 %v246, %v1594
  %v1596 = vpop.f32.mrb[0].mxu0
  %1597 = vmatprep.mubr.f32.mxu0 0.0
  %1598 = vmatmul.mubr.f32.gmra.mrb[0].mxu0 %v613
  %v1599 = vpop.f32.mrb[0].mxu0
  %v1600 = vadd.f32 %v246, %v1599
  %v1601 = vpop.f32.mrb[0].mxu0
  %1602 = vmatprep.mubr.f32.mxu0 0.0
  %1603 = vmatmul.mubr.f32.gmra.mrb[0].mxu0 %v616
  %v1604 = vpop.f32.mrb[0].mxu0
  %v1605 = vadd.f32 %v246, %v1604
  %v1606 = vpop.f32.mrb[0].mxu0
  %1607 = vmatprep.mubr.f32.mxu0 0.0
  %1608 = vmatmul.mubr.f32.gmra.mrb[0].mxu0 %v619
  %v1609 = vpop.f32.mrb[0].mxu0
  %v1610 = vadd.f32 %v246, %v1609
  %v1611 = vpop.f32.mrb[0].mxu0
  %1612 = vmatprep.mubr.f32.mxu0 0.0
  %1613 = vmatmul.mubr.f32.gmra.mrb[0].mxu0 %v622
  %v1614 = vpop.f32.mrb[0].mxu0
  %v1615 = vadd.f32 %v246, %v1614
  %v1616 = vpop.f32.mrb[0].mxu0
  %1617 = vmatprep.mubr.f32.mxu0 0.0
  %1618 = vmatmul.mubr.f32.gmra.mrb[0].mxu0 %v625
  %v1619 = vpop.f32.mrb[0].mxu0
  %v1620 = vadd.f32 %v246, %v1619
  %v1621 = vpop.f32.mrb[0].mxu0
  %1622 = vmatprep.mubr.f32.mxu0 0.0
  %1623 = vmatmul.mubr.f32.gmra.mrb[0].mxu0 %v628
  %v1624 = vpop.f32.mrb[0].mxu0
  %v1625 = vadd.f32 %v246, %v1624
  %v1626 = vpop.f32.mrb[0].mxu0
  %1627 = vmatprep.mubr.f32.mxu0 0.0
  %1628 = vmatmul.mubr.f32.gmra.mrb[0].mxu0 %v631
  %v1629 = vpop.f32.mrb[0].mxu0
  %v1630 = vadd.f32 %v246, %v1629
  %v1631 = vpop.f32.mrb[0].mxu0
  %1632 = vmatprep.mubr.f32.mxu0 0.0
  %1633 = vmatmul.mubr.f32.gmra.mrb[0].mxu0 %v634
  %v1634 = vpop.f32.mrb[0].mxu0
  %v1635 = vadd.f32 %v246, %v1634
  %v1636 = vpop.f32.mrb[0].mxu0
  %1637 = vmatprep.mubr.f32.mxu0 0.0
  %1638 = vmatmul.mubr.f32.gmra.mrb[0].mxu0 %v637
  %v1639 = vpop.f32.mrb[0].mxu0
  %v1640 = vadd.f32 %v246, %v1639
  %v1641 = vpop.f32.mrb[0].mxu0
  %1642 = vmatprep.mubr.f32.mxu0 0.0
  %1643 = vmatmul.mubr.f32.gmra.mrb[0].mxu0 %v640
  %v1644 = vpop.f32.mrb[0].mxu0
  %v1645 = vadd.f32 %v246, %v1644
  %v1646 = vpop.f32.mrb[0].mxu0
  %1647 = vmatprep.mubr.f32.mxu0 0.0
  %1648 = vmatmul.mubr.f32.gmra.mrb[0].mxu0 %v643
  %v1649 = vpop.f32.mrb[0].mxu0
  %v1650 = vadd.f32 %v246, %v1649
  %v1651 = vpop.f32.mrb[0].mxu0
  %1652 = vmatprep.mubr.f32.mxu0 0.0
  %1653 = vmatmul.mubr.f32.gmra.mrb[0].mxu0 %v646
  %v1654 = vpop.f32.mrb[0].mxu0
  %v1655 = vadd.f32 %v246, %v1654
  %v1656 = vpop.f32.mrb[0].mxu0
  %1657 = vmatprep.mubr.f32.mxu0 0.0
  %1658 = vmatmul.mubr.f32.gmra.mrb[0].mxu0 %v649
  %v1659 = vpop.f32.mrb[0].mxu0
  %v1660 = vadd.f32 %v246, %v1659
  %v1661 = vpop.f32.mrb[0].mxu0
  %1662 = vmatprep.mubr.f32.mxu0 0.0
  %1663 = vmatmul.mubr.f32.gmra.mrb[0].mxu0 %v652
  %v1664 = vpop.f32.mrb[0].mxu0
  %v1665 = vadd.f32 %v246, %v1664
  %v1666 = vpop.f32.mrb[0].mxu0
  %1667 = vmatprep.mubr.f32.mxu0 0.0
  %1668 = vmatmul.mubr.f32.gmra.mrb[0].mxu0 %v655
  %v1669 = vpop.f32.mrb[0].mxu0
  %v1670 = vadd.f32 %v246, %v1669
  %v1671 = vpop.f32.mrb[0].mxu0
  %1672 = vmatprep.mubr.f32.mxu0 0.0
  %1673 = vmatmul.mubr.f32.gmra.mrb[0].mxu0 %v658
  %v1674 = vpop.f32.mrb[0].mxu0
  %v1675 = vadd.f32 %v246, %v1674
  %v1676 = vpop.f32.mrb[0].mxu0
  %1677 = vmatprep.mubr.f32.mxu0 0.0
  %1678 = vmatmul.mubr.f32.gmra.mrb[0].mxu0 %v661
  %v1679 = vpop.f32.mrb[0].mxu0
  %v1680 = vadd.f32 %v246, %v1679
  %v1681 = vpop.f32.mrb[0].mxu0
  %1682 = vmatprep.mubr.f32.mxu0 0.0
  %1683 = vmatmul.mubr.f32.gmra.mrb[0].mxu0 %v664
  %v1684 = vpop.f32.mrb[0].mxu0
  %v1685 = vadd.f32 %v246, %v1684
  %v1686 = vpop.f32.mrb[0].mxu0
  %1687 = vmatprep.mubr.f32.mxu0 0.0
  %1688 = vmatmul.mubr.f32.gmra.mrb[0].mxu0 %v667
  %v1689 = vpop.f32.mrb[0].mxu0
  %v1690 = vadd.f32 %v246, %v1689
  %v1691 = vpop.f32.mrb[0].mxu0
  %1692 = vmatprep.mubr.f32.mxu0 0.0
  %1693 = vmatmul.mubr.f32.gmra.mrb[0].mxu0 %v670
  %v1694 = vpop.f32.mrb[0].mxu0
  %v1695 = vadd.f32 %v246, %v1694
  %v1696 = vpop.f32.mrb[0].mxu0
  %1697 = vmatprep.mubr.f32.mxu0 0.0
  %1698 = vmatmul.mubr.f32.gmra.mrb[0].mxu0 %v673
  %v1699 = vpop.f32.mrb[0].mxu0
  %v1700 = vadd.f32 %v246, %v1699
  %v1701 = vpop.f32.mrb[0].mxu0
  %1702 = vmatprep.mubr.f32.mxu0 0.0
  %1703 = vmatmul.mubr.f32.gmra.mrb[0].mxu0 %v676
  %v1704 = vpop.f32.mrb[0].mxu0
  %v1705 = vadd.f32 %v246, %v1704
  %v1706 = vpop.f32.mrb[0].mxu0
  %1707 = vmatprep.mubr.f32.mxu0 0.0
  %1708 = vmatmul.mubr.f32.gmra.mrb[0].mxu0 %v679
  %v1709 = vpop.f32.mrb[0].mxu0
  %v1710 = vadd.f32 %v246, %v1709
  %v1711 = vpop.f32.mrb[0].mxu0
  %1712 = vmatprep.mubr.f32.mxu0 0.0
  %1713 = vmatmul.mubr.f32.gmra.mrb[0].mxu0 %v682
  %v1714 = vpop.f32.mrb[0].mxu0
  %v1715 = vadd.f32 %v246, %v1714
  %v1716 = vpop.f32.mrb[0].mxu0
  %1717 = vmatprep.mubr.f32.mxu0 0.0
  %1718 = vmatmul.mubr.f32.gmra.mrb[0].mxu0 %v685
  %v1719 = vpop.f32.mrb[0].mxu0
  %v1720 = vadd.f32 %v246, %v1719
  %v1721 = vpop.f32.mrb[0].mxu0
  %1722 = vmatprep.mubr.f32.mxu0 0.0
  %1723 = vmatmul.mubr.f32.gmra.mrb[0].mxu0 %v688
  %v1724 = vpop.f32.mrb[0].mxu0
  %v1725 = vadd.f32 %v246, %v1724
  %v1726 = vpop.f32.mrb[0].mxu0
  %1727 = vmatprep.mubr.f32.mxu0 0.0
  %1728 = vmatmul.mubr.f32.gmra.mrb[0].mxu0 %v691
  %v1729 = vpop.f32.mrb[0].mxu0
  %v1730 = vadd.f32 %v246, %v1729
  %v1731 = vpop.f32.mrb[0].mxu0
  %1732 = vmatprep.mubr.f32.mxu0 0.0
  %1733 = vmatmul.mubr.f32.gmra.mrb[0].mxu0 %v694
  %v1734 = vpop.f32.mrb[0].mxu0
  %v1735 = vadd.f32 %v246, %v1734
  %v1736 = vpop.f32.mrb[0].mxu0
  %1737 = vmatprep.mubr.f32.mxu0 0.0
  %1738 = vmatmul.mubr.f32.gmra.mrb[0].mxu0 %v697
  %v1739 = vpop.f32.mrb[0].mxu0
  %v1740 = vadd.f32 %v246, %v1739
  %v1741 = vpop.f32.mrb[0].mxu0
  %1742 = vmatprep.mubr.f32.mxu0 0.0
  %1743 = vmatmul.mubr.f32.gmra.mrb[0].mxu0 %v700
  %v1744 = vpop.f32.mrb[0].mxu0
  %v1745 = vadd.f32 %v246, %v1744
  %v1746 = vpop.f32.mrb[0].mxu0
  %1747 = vmatprep.mubr.f32.mxu0 0.0
  %1748 = vmatmul.mubr.f32.gmra.mrb[0].mxu0 %v703
  %v1749 = vpop.f32.mrb[0].mxu0
  %v1750 = vadd.f32 %v246, %v1749
  %v1751 = vpop.f32.mrb[0].mxu0
  %1752 = vmatprep.mubr.f32.mxu0 0.0
  %1753 = vmatmul.mubr.f32.gmra.mrb[0].mxu0 %v706
  %v1754 = vpop.f32.mrb[0].mxu0
  %v1755 = vadd.f32 %v246, %v1754
  %v1756 = vpop.f32.mrb[0].mxu0
  %1757 = vmatprep.mubr.f32.mxu0 0.0
  %1758 = vmatmul.mubr.f32.gmra.mrb[0].mxu0 %v709
  %v1759 = vpop.f32.mrb[0].mxu0
  %v1760 = vadd.f32 %v246, %v1759
  %v1761 = vpop.f32.mrb[0].mxu0
  %1762 = vmatprep.mubr.f32.mxu0 0.0
  %1763 = vmatmul.mubr.f32.gmra.mrb[0].mxu0 %v712
  %v1764 = vpop.f32.mrb[0].mxu0
  %v1765 = vadd.f32 %v246, %v1764
  %v1766 = vpop.f32.mrb[0].mxu0
  %1767 = vmatprep.mubr.f32.mxu0 0.0
  %1768 = vmatmul.mubr.f32.gmra.mrb[0].mxu0 %v715
  %v1769 = vpop.f32.mrb[0].mxu0
  %v1770 = vadd.f32 %v246, %v1769
  %v1771 = vpop.f32.mrb[0].mxu0
  %1772 = vmatprep.mubr.f32.mxu0 0.0
  %1773 = vmatmul.mubr.f32.gmra.mrb[0].mxu0 %v718
  %v1774 = vpop.f32.mrb[0].mxu0
  %v1775 = vadd.f32 %v246, %v1774
  %v1776 = vpop.f32.mrb[0].mxu0
  %1777 = vmatprep.mubr.f32.mxu0 0.0
  %1778 = vmatmul.mubr.f32.gmra.mrb[0].mxu0 %v721
  %v1779 = vpop.f32.mrb[0].mxu0
  %v1780 = vadd.f32 %v246, %v1779
  %v1781 = vpop.f32.mrb[0].mxu0
  %1782 = vmatprep.mubr.f32.mxu0 0.0
  %1783 = vmatmul.mubr.f32.gmra.mrb[0].mxu0 %v724
  %v1784 = vpop.f32.mrb[0].mxu0
  %v1785 = vadd.f32 %v246, %v1784
  %v1786 = vpop.f32.mrb[0].mxu0
  %1787 = vmatprep.mubr.f32.mxu0 0.0
  %1788 = vmatmul.mubr.f32.gmra.mrb[0].mxu0 %v727
  %v1789 = vpop.f32.mrb[0].mxu0
  %v1790 = vadd.f32 %v246, %v1789
  %v1791 = vpop.f32.mrb[0].mxu0
  %1792 = vmatprep.mubr.f32.mxu0 0.0
  %1793 = vmatmul.mubr.f32.gmra.mrb[0].mxu0 %v730
  %v1794 = vpop.f32.mrb[0].mxu0
  %v1795 = vadd.f32 %v246, %v1794
  %v1796 = vpop.f32.mrb[0].mxu0
  %1797 = vmatprep.mubr.f32.mxu0 0.0
  %1798 = vmatmul.mubr.f32.gmra.mrb[0].mxu0 %v733
  %v1799 = vpop.f32.mrb[0].mxu0
  %v1800 = vadd.f32 %v246, %v1799
  %v1801 = vpop.f32.mrb[0].mxu0
  %1802 = vmatprep.mubr.f32.mxu0 0.0
  %1803 = vmatmul.mubr.f32.gmra.mrb[0].mxu0 %v736
  %v1804 = vpop.f32.mrb[0].mxu0
  %v1805 = vadd.f32 %v246, %v1804
  %v1806 = vpop.f32.mrb[0].mxu0
  %1807 = vmatprep.mubr.f32.mxu0 0.0
  %1808 = vmatmul.mubr.f32.gmra.mrb[0].mxu0 %v739
  %v1809 = vpop.f32.mrb[0].mxu0
  %v1810 = vadd.f32 %v246, %v1809
  %v1811 = vpop.f32.mrb[0].mxu0
  %1812 = vmatprep.mubr.f32.mxu0 0.0
  %1813 = vmatmul.mubr.f32.gmra.mrb[0].mxu0 %v742
  %v1814 = vpop.f32.mrb[0].mxu0
  %v1815 = vadd.f32 %v246, %v1814
  %v1816 = vpop.f32.mrb[0].mxu0
  %1817 = vmatprep.mubr.f32.mxu0 0.0
  %1818 = vmatmul.mubr.f32.gmra.mrb[0].mxu0 %v745
  %v1819 = vpop.f32.mrb[0].mxu0
  %v1820 = vadd.f32 %v246, %v1819
  %v1821 = vpop.f32.mrb[0].mxu0
  %1822 = vmatprep.mubr.f32.mxu0 0.0
  %1823 = vmatmul.mubr.f32.gmra.mrb[0].mxu0 %v748
  %v1824 = vpop.f32.mrb[0].mxu0
  %v1825 = vadd.f32 %v246, %v1824
  %v1826 = vpop.f32.mrb[0].mxu0
  %1827 = vmatprep.mubr.f32.mxu0 0.0
  %1828 = vmatmul.mubr.f32.gmra.mrb[0].mxu0 %v751
  %v1829 = vpop.f32.mrb[0].mxu0
  %v1830 = vadd.f32 %v246, %v1829
  %v1831 = vpop.f32.mrb[0].mxu0
  %1832 = vmatprep.mubr.f32.mxu0 0.0
  %1833 = vmatmul.mubr.f32.gmra.mrb[0].mxu0 %v754
  %v1834 = vpop.f32.mrb[0].mxu0
  %v1835 = vadd.f32 %v246, %v1834
  %v1836 = vpop.f32.mrb[0].mxu0
  %1837 = vmatprep.mubr.f32.mxu0 0.0
  %1838 = vmatmul.mubr.f32.gmra.mrb[0].mxu0 %v757
  %v1839 = vpop.f32.mrb[0].mxu0
  %v1840 = vadd.f32 %v246, %v1839
  %v1841 = vpop.f32.mrb[0].mxu0
  %1842 = vmatprep.mubr.f32.mxu0 0.0
  %1843 = vmatmul.mubr.f32.gmra.mrb[0].mxu0 %v760
  %v1844 = vpop.f32.mrb[0].mxu0
  %v1845 = vadd.f32 %v246, %v1844
  %v1846 = vpop.f32.mrb[0].mxu0
  %1847 = vmatprep.mubr.f32.mxu0 0.0
  %1848 = vmatmul.mubr.f32.gmra.mrb[0].mxu0 %v763
  %v1849 = vpop.f32.mrb[0].mxu0
  %v1850 = vadd.f32 %v246, %v1849
  %v1851 = vpop.f32.mrb[0].mxu0
  %1852 = vmatprep.mubr.f32.mxu0 0.0
  %1853 = vmatmul.mubr.f32.gmra.mrb[0].mxu0 %v766
  %v1854 = vpop.f32.mrb[0].mxu0
  %v1855 = vadd.f32 %v246, %v1854
  %v1856 = vpop.f32.mrb[0].mxu0
  %1857 = vmatprep.mubr.f32.mxu0 0.0
  %1858 = vmatmul.mubr.f32.gmra.mrb[0].mxu0 %v769
  %v1859 = vpop.f32.mrb[0].mxu0
  %v1860 = vadd.f32 %v246, %v1859
  %v1861 = vpop.f32.mrb[0].mxu0
  %1862 = vmatprep.mubr.f32.mxu0 0.0
  %1863 = vmatmul.mubr.f32.gmra.mrb[0].mxu0 %v772
  %v1864 = vpop.f32.mrb[0].mxu0
  %v1865 = vadd.f32 %v246, %v1864
  %v1866 = vpop.f32.mrb[0].mxu0
  %1867 = vmatprep.mubr.f32.mxu0 0.0
  %1868 = vmatmul.mubr.f32.gmra.mrb[0].mxu0 %v775
  %v1869 = vpop.f32.mrb[0].mxu0
  %v1870 = vadd.f32 %v246, %v1869
  %v1871 = vpop.f32.mrb[0].mxu0
  %1872 = vmatprep.mubr.f32.mxu0 0.0
  %1873 = vmatmul.mubr.f32.gmra.mrb[0].mxu0 %v778
  %v1874 = vpop.f32.mrb[0].mxu0
  %v1875 = vadd.f32 %v246, %v1874
  %v1876 = vpop.f32.mrb[0].mxu0
  %1877 = vmatprep.mubr.f32.mxu0 0.0
  %1878 = vmatmul.mubr.f32.gmra.mrb[0].mxu0 %v781
  %v1879 = vpop.f32.mrb[0].mxu0
  %v1880 = vadd.f32 %v246, %v1879
  %v1881 = vpop.f32.mrb[0].mxu0
  %1882 = vmatprep.mubr.f32.mxu0 0.0
  %1883 = vmatmul.mubr.f32.gmra.mrb[0].mxu0 %v784
  %v1884 = vpop.f32.mrb[0].mxu0
  %v1885 = vadd.f32 %v246, %v1884
  %v1886 = vpop.f32.mrb[0].mxu0
  %1887 = vmatprep.mubr.f32.mxu0 0.0
  %1888 = vmatmul.mubr.f32.gmra.mrb[0].mxu0 %v787
  %v1889 = vpop.f32.mrb[0].mxu0
  %v1890 = vadd.f32 %v246, %v1889
  %v1891 = vpop.f32.mrb[0].mxu0
  %1892 = vmatprep.mubr.f32.mxu0 0.0
  %1893 = vmatmul.mubr.f32.gmra.mrb[0].mxu0 %v790
  %v1894 = vpop.f32.mrb[0].mxu0
  %v1895 = vadd.f32 %v246, %v1894
  %v1896 = vpop.f32.mrb[0].mxu0
  %1897 = vmatprep.mubr.f32.mxu0 0.0
  %1898 = vmatmul.mubr.f32.gmra.mrb[0].mxu0 %v793
  %v1899 = vpop.f32.mrb[0].mxu0
  %v1900 = vadd.f32 %v246, %v1899
  %v1901 = vpop.f32.mrb[0].mxu0
  %1902 = vmatprep.mubr.f32.mxu0 0.0
  %1903 = vmatmul.mubr.f32.gmra.mrb[0].mxu0 %v796
  %v1904 = vpop.f32.mrb[0].mxu0
  %v1905 = vadd.f32 %v246, %v1904
  %v1906 = vpop.f32.mrb[0].mxu0
  %1907 = vmatprep.mubr.f32.mxu0 0.0
  %1908 = vmatmul.mubr.f32.gmra.mrb[0].mxu0 %v799
  %v1909 = vpop.f32.mrb[0].mxu0
  %v1910 = vadd.f32 %v246, %v1909
  %v1911 = vpop.f32.mrb[0].mxu0
  %1912 = vmatprep.mubr.f32.mxu0 0.0
  %1913 = vmatmul.mubr.f32.gmra.mrb[0].mxu0 %v802
  %v1914 = vpop.f32.mrb[0].mxu0
  %v1915 = vadd.f32 %v246, %v1914
  %v1916 = vpop.f32.mrb[0].mxu0
  %1917 = vmatprep.mubr.f32.mxu0 0.0
  %1918 = vmatmul.mubr.f32.gmra.mrb[0].mxu0 %v805
  %v1919 = vpop.f32.mrb[0].mxu0
  %v1920 = vadd.f32 %v246, %v1919
  %v1921 = vpop.f32.mrb[0].mxu0
  %1922 = vmatprep.mubr.f32.mxu0 0.0
  %1923 = vmatmul.mubr.f32.gmra.mrb[0].mxu0 %v808
  %v1924 = vpop.f32.mrb[0].mxu0
  %v1925 = vadd.f32 %v246, %v1924
  %v1926 = vpop.f32.mrb[0].mxu0
  %1927 = vmatprep.mubr.f32.mxu0 0.0
  %1928 = vmatmul.mubr.f32.gmra.mrb[0].mxu0 %v811
  %v1929 = vpop.f32.mrb[0].mxu0
  %v1930 = vadd.f32 %v246, %v1929
  %v1931 = vpop.f32.mrb[0].mxu0
  %1932 = vmatprep.mubr.f32.mxu0 0.0
  %1933 = vmatmul.mubr.f32.gmra.mrb[0].mxu0 %v814
  %v1934 = vpop.f32.mrb[0].mxu0
  %v1935 = vadd.f32 %v246, %v1934
  %v1936 = vpop.f32.mrb[0].mxu0
  %1937 = vmatprep.mubr.f32.mxu0 0.0
  %1938 = vmatmul.mubr.f32.gmra.mrb[0].mxu0 %v817
  %v1939 = vpop.f32.mrb[0].mxu0
  %v1940 = vadd.f32 %v246, %v1939
  %v1941 = vpop.f32.mrb[0].mxu0
  %1942 = vmatprep.mubr.f32.mxu0 0.0
  %1943 = vmatmul.mubr.f32.gmra.mrb[0].mxu0 %v820
  %v1944 = vpop.f32.mrb[0].mxu0
  %v1945 = vadd.f32 %v246, %v1944
  %v1946 = vpop.f32.mrb[0].mxu0
  %1947 = vmatprep.mubr.f32.mxu0 0.0
  %1948 = vmatmul.mubr.f32.gmra.mrb[0].mxu0 %v823
  %v1949 = vpop.f32.mrb[0].mxu0
  %v1950 = vadd.f32 %v246, %v1949
  %v1951 = vpop.f32.mrb[0].mxu0
  %1952 = vmatprep.mubr.f32.mxu0 0.0
  %1953 = vmatmul.mubr.f32.gmra.mrb[0].mxu0 %v826
  %v1954 = vpop.f32.mrb[0].mxu0
  %v1955 = vadd.f32 %v246, %v1954
  %v1956 = vpop.f32.mrb[0].mxu0
  %1957 = vmatprep.mubr.f32.mxu0 0.0
  %1958 = vmatmul.mubr.f32.gmra.mrb[0].mxu0 %v829
  %v1959 = vpop.f32.mrb[0].mxu0
  %v1960 = vadd.f32 %v246, %v1959
  %v1961 = vpop.f32.mrb[0].mxu0
  %1962 = vmatprep.mubr.f32.mxu0 0.0
  %1963 = vmatmul.mubr.f32.gmra.mrb[0].mxu0 %v832
  %v1964 = vpop.f32.mrb[0].mxu0
  %v1965 = vadd.f32 %v246, %v1964
  %v1966 = vpop.f32.mrb[0].mxu0
  %1967 = vmatprep.mubr.f32.mxu0 0.0
  %1968 = vmatmul.mubr.f32.gmra.mrb[0].mxu0 %v835
  %v1969 = vpop.f32.mrb[0].mxu0
  %v1970 = vadd.f32 %v246, %v1969
  %v1971 = vpop.f32.mrb[0].mxu0
  %1972 = vmatprep.mubr.f32.mxu0 0.0
  %1973 = vmatmul.mubr.f32.gmra.mrb[0].mxu0 %v838
  %v1974 = vpop.f32.mrb[0].mxu0
  %v1975 = vadd.f32 %v246, %v1974
  %v1976 = vpop.f32.mrb[0].mxu0
  %1977 = vmatprep.mubr.f32.mxu0 0.0
  %1978 = vmatmul.mubr.f32.gmra.mrb[0].mxu0 %v841
  %v1979 = vpop.f32.mrb[0].mxu0
  %v1980 = vadd.f32 %v246, %v1979
  %v1981 = vpop.f32.mrb[0].mxu0
  %1982 = vmatprep.mubr.f32.mxu0 0.0
  %1983 = vmatmul.mubr.f32.gmra.mrb[0].mxu0 %v844
  %v1984 = vpop.f32.mrb[0].mxu0
  %v1985 = vadd.f32 %v246, %v1984
  %v1986 = vpop.f32.mrb[0].mxu0
  %1987 = vmatprep.mubr.f32.mxu0 0.0
  %1988 = vmatmul.mubr.f32.gmra.mrb[0].mxu0 %v847
  %v1989 = vpop.f32.mrb[0].mxu0
  %v1990 = vadd.f32 %v246, %v1989
  %v1991 = vpop.f32.mrb[0].mxu0
  %1992 = vmatprep.mubr.f32.mxu0 0.0
  %1993 = vmatmul.mubr.f32.gmra.mrb[0].mxu0 %v850
  %v1994 = vpop.f32.mrb[0].mxu0
  %v1995 = vadd.f32 %v246, %v1994
  %v1996 = vpop.f32.mrb[0].mxu0
  %1997 = vmatprep.mubr.f32.mxu0 0.0
  %1998 = vmatmul.mubr.f32.gmra.mrb[0].mxu0 %v853
  %v1999 = vpop.f32.mrb[0].mxu0
  %v2000 = vadd.f32 %v246, %v1999
  %v2001 = vpop.f32.mrb[0].mxu0
  %2002 = vmatprep.mubr.f32.mxu0 0.0
  %2003 = vmatmul.mubr.f32.gmra.mrb[0].mxu0 %v856
  %v2004 = vpop.f32.mrb[0].mxu0
  %v2005 = vadd.f32 %v246, %v2004
  %v2006 = vpop.f32.mrb[0].mxu0
  %2007 = vmatprep.mubr.f32.mxu0 0.0
  %2008 = vmatmul.mubr.f32.gmra.mrb[0].mxu0 %v859
  %v2009 = vpop.f32.mrb[0].mxu0
  %v2010 = vadd.f32 %v246, %v2009
  %v2011 = vpop.f32.mrb[0].mxu0
  %2012 = vmatprep.mubr.f32.mxu0 0.0
  %2013 = vmatmul.mubr.f32.gmra.mrb[0].mxu0 %v862
  %v2014 = vpop.f32.mrb[0].mxu0
  %v2015 = vadd.f32 %v246, %v2014
  %v2016 = vpop.f32.mrb[0].mxu0
  %2017 = vmatprep.mubr.f32.mxu0 0.0
  %2018 = vmatmul.mubr.f32.gmra.mrb[0].mxu0 %v865
  %v2019 = vpop.f32.mrb[0].mxu0
  %v2020 = vadd.f32 %v246, %v2019
  %v2021 = vpop.f32.mrb[0].mxu0
  %2022 = vmatprep.mubr.f32.mxu0 0.0
  %2023 = vmatmul.mubr.f32.gmra.mrb[0].mxu0 %v868
  %v2024 = vpop.f32.mrb[0].mxu0
  %v2025 = vadd.f32 %v246, %v2024
  %v2026 = vpop.f32.mrb[0].mxu0
  %2027 = vmatprep.mubr.f32.mxu0 0.0
  %2028 = vmatmul.mubr.f32.gmra.mrb[0].mxu0 %v871
  %v2029 = vpop.f32.mrb[0].mxu0
  %v2030 = vadd.f32 %v246, %v2029
  %v2031 = vpop.f32.mrb[0].mxu0
  %2032 = vmatprep.mubr.f32.mxu0 0.0
  %2033 = vmatmul.mubr.f32.gmra.mrb[0].mxu0 %v874
  %v2034 = vpop.f32.mrb[0].mxu0
  %v2035 = vadd.f32 %v246, %v2034
  %v2036 = vpop.f32.mrb[0].mxu0
  %2037 = vmatprep.mubr.f32.mxu0 0.0
  %2038 = vmatmul.mubr.f32.gmra.mrb[0].mxu0 %v877
  %v2039 = vpop.f32.mrb[0].mxu0
  %v2040 = vadd.f32 %v246, %v2039
  %v2041 = vpop.f32.mrb[0].mxu0
  %2042 = vmatprep.mubr.f32.mxu0 0.0
  %2043 = vmatmul.mubr.f32.gmra.mrb[0].mxu0 %v880
  %v2044 = vpop.f32.mrb[0].mxu0
  %v2045 = vadd.f32 %v246, %v2044
  %v2046 = vpop.f32.mrb[0].mxu0
  %2047 = vmatprep.mubr.f32.mxu0 0.0
  %2048 = vmatmul.mubr.f32.gmra.mrb[0].mxu0 %v883
  %v2049 = vpop.f32.mrb[0].mxu0
  %v2050 = vadd.f32 %v246, %v2049
  %v2051 = vpop.f32.mrb[0].mxu0
  %2052 = vmatprep.mubr.f32.mxu0 0.0
  %2053 = vmatmul.mubr.f32.gmra.mrb[0].mxu0 %v886
  %v2054 = vpop.f32.mrb[0].mxu0
  %v2055 = vadd.f32 %v246, %v2054
  %v2056 = vpop.f32.mrb[0].mxu0
  %2057 = vmatprep.mubr.f32.mxu0 0.0
  %2058 = vmatmul.mubr.f32.gmra.mrb[0].mxu0 %v889
  %v2059 = vpop.f32.mrb[0].mxu0
  %v2060 = vadd.f32 %v246, %v2059
  %v2061 = vpop.f32.mrb[0].mxu0
  %2062 = vmatprep.mubr.f32.mxu0 0.0
  %2063 = vmatmul.mubr.f32.gmra.mrb[0].mxu0 %v892
  %v2064 = vpop.f32.mrb[0].mxu0
  %v2065 = vadd.f32 %v246, %v2064
  %v2066 = vpop.f32.mrb[0].mxu0
  %2067 = vmatprep.mubr.f32.mxu0 0.0
  %2068 = vmatmul.mubr.f32.gmra.mrb[0].mxu0 %v895
  %v2069 = vpop.f32.mrb[0].mxu0
  %v2070 = vadd.f32 %v246, %v2069
  %v2071 = vpop.f32.mrb[0].mxu0
  %2072 = vmatprep.mubr.f32.mxu0 0.0
  %2073 = vmatmul.mubr.f32.gmra.mrb[0].mxu0 %v898
  %v2074 = vpop.f32.mrb[0].mxu0
  %v2075 = vadd.f32 %v246, %v2074
  %v2076 = vpop.f32.mrb[0].mxu0
  %2077 = vmatprep.mubr.f32.mxu0 0.0
  %2078 = vmatmul.mubr.f32.gmra.mrb[0].mxu0 %v901
  %v2079 = vpop.f32.mrb[0].mxu0
  %v2080 = vadd.f32 %v246, %v2079
  %v2081 = vpop.f32.mrb[0].mxu0
  %2082 = vmatprep.mubr.f32.mxu0 0.0
  %2083 = vmatmul.mubr.f32.gmra.mrb[0].mxu0 %v904
  %v2084 = vpop.f32.mrb[0].mxu0
  %v2085 = vadd.f32 %v246, %v2084
  %v2086 = vpop.f32.mrb[0].mxu0
  %2087 = vmatprep.mubr.f32.mxu0 0.0
  %2088 = vmatmul.mubr.f32.gmra.mrb[0].mxu0 %v907
  %v2089 = vpop.f32.mrb[0].mxu0
  %v2090 = vadd.f32 %v246, %v2089
  %v2091 = vpop.f32.mrb[0].mxu0
  %2092 = vmatprep.mubr.f32.mxu0 0.0
  %2093 = vmatmul.mubr.f32.gmra.mrb[0].mxu0 %v910
  %v2094 = vpop.f32.mrb[0].mxu0
  %v2095 = vadd.f32 %v246, %v2094
  %v2096 = vpop.f32.mrb[0].mxu0
  %2097 = vmatprep.mubr.f32.mxu0 0.0
  %2098 = vmatmul.mubr.f32.gmra.mrb[0].mxu0 %v913
  %v2099 = vpop.f32.mrb[0].mxu0
  %v2100 = vadd.f32 %v246, %v2099
  %v2101 = vpop.f32.mrb[0].mxu0
  %2102 = vmatprep.mubr.f32.mxu0 0.0
  %2103 = vmatmul.mubr.f32.gmra.mrb[0].mxu0 %v916
  %v2104 = vpop.f32.mrb[0].mxu0
  %v2105 = vadd.f32 %v246, %v2104
  %v2106 = vpop.f32.mrb[0].mxu0
  %2107 = vmatprep.mubr.f32.mxu0 0.0
  %2108 = vmatmul.mubr.f32.gmra.mrb[0].mxu0 %v919
  %v2109 = vpop.f32.mrb[0].mxu0
  %v2110 = vadd.f32 %v246, %v2109
  %v2111 = vpop.f32.mrb[0].mxu0
  %2112 = vmatprep.mubr.f32.mxu0 0.0
  %2113 = vmatmul.mubr.f32.gmra.mrb[0].mxu0 %v922
  %v2114 = vpop.f32.mrb[0].mxu0
  %v2115 = vadd.f32 %v246, %v2114
  %v2116 = vpop.f32.mrb[0].mxu0
  %2117 = vdwg.mxu0
  %v2118 = vmax.f32 %v995, 0.0
  %v2119 = vmax.f32 %v1000, 0.0
  %v2120 = vmax.f32 %v1005, 0.0
  %v2121 = vmax.f32 %v1010, 0.0
  %v2122 = vmax.f32 %v1015, 0.0
  %v2123 = vmax.f32 %v1020, 0.0
  %v2124 = vmax.f32 %v1025, 0.0
  %v2125 = vmax.f32 %v1030, 0.0
  %v2126 = vmax.f32 %v1035, 0.0
  %v2127 = vmax.f32 %v1040, 0.0
  %v2128 = vmax.f32 %v1045, 0.0
  %v2129 = vmax.f32 %v1050, 0.0
  %v2130 = vmax.f32 %v1055, 0.0
  %v2131 = vmax.f32 %v1060, 0.0
  %v2132 = vmax.f32 %v1065, 0.0
  %v2133 = vmax.f32 %v1070, 0.0
  %v2134 = vmax.f32 %v1075, 0.0
  %v2135 = vmax.f32 %v1080, 0.0
  %v2136 = vmax.f32 %v1085, 0.0
  %v2137 = vmax.f32 %v1090, 0.0
  %v2138 = vmax.f32 %v1095, 0.0
  %v2139 = vmax.f32 %v1100, 0.0
  %v2140 = vmax.f32 %v1105, 0.0
  %v2141 = vmax.f32 %v1110, 0.0
  %v2142 = vmax.f32 %v1115, 0.0
  %v2143 = vmax.f32 %v1120, 0.0
  %v2144 = vmax.f32 %v1125, 0.0
  %v2145 = vmax.f32 %v1130, 0.0
  %v2146 = vmax.f32 %v1135, 0.0
  %v2147 = vmax.f32 %v1140, 0.0
  %v2148 = vmax.f32 %v1145, 0.0
  %v2149 = vmax.f32 %v1150, 0.0
  %v2150 = vmax.f32 %v1155, 0.0
  %v2151 = vmax.f32 %v1160, 0.0
  %v2152 = vmax.f32 %v1165, 0.0
  %v2153 = vmax.f32 %v1170, 0.0
  %v2154 = vmax.f32 %v1175, 0.0
  %v2155 = vmax.f32 %v1180, 0.0
  %v2156 = vmax.f32 %v1185, 0.0
  %v2157 = vmax.f32 %v1190, 0.0
  %v2158 = vmax.f32 %v1195, 0.0
  %v2159 = vmax.f32 %v1200, 0.0
  %v2160 = vmax.f32 %v1205, 0.0
  %v2161 = vmax.f32 %v1210, 0.0
  %v2162 = vmax.f32 %v1215, 0.0
  %v2163 = vmax.f32 %v1220, 0.0
  %v2164 = vmax.f32 %v1225, 0.0
  %v2165 = vmax.f32 %v1230, 0.0
  %v2166 = vmax.f32 %v1235, 0.0
  %v2167 = vmax.f32 %v1240, 0.0
  %v2168 = vmax.f32 %v1245, 0.0
  %v2169 = vmax.f32 %v1250, 0.0
  %v2170 = vmax.f32 %v1255, 0.0
  %v2171 = vmax.f32 %v1260, 0.0
  %v2172 = vmax.f32 %v1265, 0.0
  %v2173 = vmax.f32 %v1270, 0.0
  %v2174 = vmax.f32 %v1275, 0.0
  %v2175 = vmax.f32 %v1280, 0.0
  %v2176 = vmax.f32 %v1285, 0.0
  %v2177 = vmax.f32 %v1290, 0.0
  %v2178 = vmax.f32 %v1295, 0.0
  %v2179 = vmax.f32 %v1300, 0.0
  %v2180 = vmax.f32 %v1305, 0.0
  %v2181 = vmax.f32 %v1310, 0.0
  %v2182 = vmax.f32 %v1315, 0.0
  %v2183 = vmax.f32 %v1320, 0.0
  %v2184 = vmax.f32 %v1325, 0.0
  %v2185 = vmax.f32 %v1330, 0.0
  %v2186 = vmax.f32 %v1335, 0.0
  %v2187 = vmax.f32 %v1340, 0.0
  %v2188 = vmax.f32 %v1345, 0.0
  %v2189 = vmax.f32 %v1350, 0.0
  %v2190 = vmax.f32 %v1355, 0.0
  %v2191 = vmax.f32 %v1360, 0.0
  %v2192 = vmax.f32 %v1365, 0.0
  %v2193 = vmax.f32 %v1370, 0.0
  %v2194 = vmax.f32 %v1375, 0.0
  %v2195 = vmax.f32 %v1380, 0.0
  %v2196 = vmax.f32 %v1385, 0.0
  %v2197 = vmax.f32 %v1390, 0.0
  %v2198 = vmax.f32 %v1395, 0.0
  %v2199 = vmax.f32 %v1400, 0.0
  %v2200 = vmax.f32 %v1405, 0.0
  %v2201 = vmax.f32 %v1410, 0.0
  %v2202 = vmax.f32 %v1415, 0.0
  %v2203 = vmax.f32 %v1420, 0.0
  %v2204 = vmax.f32 %v1425, 0.0
  %v2205 = vmax.f32 %v1430, 0.0
  %v2206 = vmax.f32 %v1435, 0.0
  %v2207 = vmax.f32 %v1440, 0.0
  %v2208 = vmax.f32 %v1445, 0.0
  %v2209 = vmax.f32 %v1450, 0.0
  %v2210 = vmax.f32 %v1455, 0.0
  %v2211 = vmax.f32 %v1460, 0.0
  %v2212 = vmax.f32 %v1465, 0.0
  %v2213 = vmax.f32 %v1470, 0.0
  %v2214 = vmax.f32 %v1475, 0.0
  %v2215 = vmax.f32 %v1480, 0.0
  %v2216 = vmax.f32 %v1485, 0.0
  %v2217 = vmax.f32 %v1490, 0.0
  %v2218 = vmax.f32 %v1495, 0.0
  %v2219 = vmax.f32 %v1500, 0.0
  %v2220 = vmax.f32 %v1505, 0.0
  %v2221 = vmax.f32 %v1510, 0.0
  %v2222 = vmax.f32 %v1515, 0.0
  %v2223 = vmax.f32 %v1520, 0.0
  %v2224 = vmax.f32 %v1525, 0.0
  %v2225 = vmax.f32 %v1530, 0.0
  %v2226 = vmax.f32 %v1535, 0.0
  %v2227 = vmax.f32 %v1540, 0.0
  %v2228 = vmax.f32 %v1545, 0.0
  %v2229 = vmax.f32 %v1550, 0.0
  %v2230 = vmax.f32 %v1555, 0.0
  %v2231 = vmax.f32 %v1560, 0.0
  %v2232 = vmax.f32 %v1565, 0.0
  %v2233 = vmax.f32 %v1570, 0.0
  %v2234 = vmax.f32 %v1575, 0.0
  %v2235 = vmax.f32 %v1580, 0.0
  %v2236 = vmax.f32 %v1585, 0.0
  %v2237 = vmax.f32 %v1590, 0.0
  %v2238 = vmax.f32 %v1595, 0.0
  %v2239 = vmax.f32 %v1600, 0.0
  %v2240 = vmax.f32 %v1605, 0.0
  %v2241 = vmax.f32 %v1610, 0.0
  %v2242 = vmax.f32 %v1615, 0.0
  %v2243 = vmax.f32 %v1620, 0.0
  %v2244 = vmax.f32 %v1625, 0.0
  %v2245 = vmax.f32 %v1630, 0.0
  %v2246 = vmax.f32 %v1635, 0.0
  %v2247 = vmax.f32 %v1640, 0.0
  %v2248 = vmax.f32 %v1645, 0.0
  %v2249 = vmax.f32 %v1650, 0.0
  %v2250 = vmax.f32 %v1655, 0.0
  %v2251 = vmax.f32 %v1660, 0.0
  %v2252 = vmax.f32 %v1665, 0.0
  %v2253 = vmax.f32 %v1670, 0.0
  %v2254 = vmax.f32 %v1675, 0.0
  %v2255 = vmax.f32 %v1680, 0.0
  %v2256 = vmax.f32 %v1685, 0.0
  %v2257 = vmax.f32 %v1690, 0.0
  %v2258 = vmax.f32 %v1695, 0.0
  %v2259 = vmax.f32 %v1700, 0.0
  %v2260 = vmax.f32 %v1705, 0.0
  %v2261 = vmax.f32 %v1710, 0.0
  %v2262 = vmax.f32 %v1715, 0.0
  %v2263 = vmax.f32 %v1720, 0.0
  %v2264 = vmax.f32 %v1725, 0.0
  %v2265 = vmax.f32 %v1730, 0.0
  %v2266 = vmax.f32 %v1735, 0.0
  %v2267 = vmax.f32 %v1740, 0.0
  %v2268 = vmax.f32 %v1745, 0.0
  %v2269 = vmax.f32 %v1750, 0.0
  %v2270 = vmax.f32 %v1755, 0.0
  %v2271 = vmax.f32 %v1760, 0.0
  %v2272 = vmax.f32 %v1765, 0.0
  %v2273 = vmax.f32 %v1770, 0.0
  %v2274 = vmax.f32 %v1775, 0.0
  %v2275 = vmax.f32 %v1780, 0.0
  %v2276 = vmax.f32 %v1785, 0.0
  %v2277 = vmax.f32 %v1790, 0.0
  %v2278 = vmax.f32 %v1795, 0.0
  %v2279 = vmax.f32 %v1800, 0.0
  %v2280 = vmax.f32 %v1805, 0.0
  %v2281 = vmax.f32 %v1810, 0.0
  %v2282 = vmax.f32 %v1815, 0.0
  %v2283 = vmax.f32 %v1820, 0.0
  %v2284 = vmax.f32 %v1825, 0.0
  %v2285 = vmax.f32 %v1830, 0.0
  %v2286 = vmax.f32 %v1835, 0.0
  %v2287 = vmax.f32 %v1840, 0.0
  %v2288 = vmax.f32 %v1845, 0.0
  %v2289 = vmax.f32 %v1850, 0.0
  %v2290 = vmax.f32 %v1855, 0.0
  %v2291 = vmax.f32 %v1860, 0.0
  %v2292 = vmax.f32 %v1865, 0.0
  %v2293 = vmax.f32 %v1870, 0.0
  %v2294 = vmax.f32 %v1875, 0.0
  %v2295 = vmax.f32 %v1880, 0.0
  %v2296 = vmax.f32 %v1885, 0.0
  %v2297 = vmax.f32 %v1890, 0.0
  %v2298 = vmax.f32 %v1895, 0.0
  %v2299 = vmax.f32 %v1900, 0.0
  %v2300 = vmax.f32 %v1905, 0.0
  %v2301 = vmax.f32 %v1910, 0.0
  %v2302 = vmax.f32 %v1915, 0.0
  %v2303 = vmax.f32 %v1920, 0.0
  %v2304 = vmax.f32 %v1925, 0.0
  %v2305 = vmax.f32 %v1930, 0.0
  %v2306 = vmax.f32 %v1935, 0.0
  %v2307 = vmax.f32 %v1940, 0.0
  %v2308 = vmax.f32 %v1945, 0.0
  %v2309 = vmax.f32 %v1950, 0.0
  %v2310 = vmax.f32 %v1955, 0.0
  %v2311 = vmax.f32 %v1960, 0.0
  %v2312 = vmax.f32 %v1965, 0.0
  %v2313 = vmax.f32 %v1970, 0.0
  %v2314 = vmax.f32 %v1975, 0.0
  %v2315 = vmax.f32 %v1980, 0.0
  %v2316 = vmax.f32 %v1985, 0.0
  %v2317 = vmax.f32 %v1990, 0.0
  %v2318 = vmax.f32 %v1995, 0.0
  %v2319 = vmax.f32 %v2000, 0.0
  %v2320 = vmax.f32 %v2005, 0.0
  %v2321 = vmax.f32 %v2010, 0.0
  %v2322 = vmax.f32 %v2015, 0.0
  %v2323 = vmax.f32 %v2020, 0.0
  %v2324 = vmax.f32 %v2025, 0.0
  %v2325 = vmax.f32 %v2030, 0.0
  %v2326 = vmax.f32 %v2035, 0.0
  %v2327 = vmax.f32 %v2040, 0.0
  %v2328 = vmax.f32 %v2045, 0.0
  %v2329 = vmax.f32 %v2050, 0.0
  %v2330 = vmax.f32 %v2055, 0.0
  %v2331 = vmax.f32 %v2060, 0.0
  %v2332 = vmax.f32 %v2065, 0.0
  %v2333 = vmax.f32 %v2070, 0.0
  %v2334 = vmax.f32 %v2075, 0.0
  %v2335 = vmax.f32 %v2080, 0.0
  %v2336 = vmax.f32 %v2085, 0.0
  %v2337 = vmax.f32 %v2090, 0.0
  %v2338 = vmax.f32 %v2095, 0.0
  %v2339 = vmax.f32 %v2100, 0.0
  %v2340 = vmax.f32 %v2105, 0.0
  %v2341 = vmax.f32 %v2110, 0.0
  %v2342 = vmax.f32 %v2115, 0.0
  %vm2343 = vcmask 130048
  %2344 = vst.msk [vmem:[%s3] sm:$0xff] %vm2343, %v2118
  %2345 = vst.msk [vmem:[%s3 + $0x8] sm:$0xff] %vm2343, %v2119
  %2346 = vst.msk [vmem:[%s3 + $0x10] sm:$0xff] %vm2343, %v2120
  %2347 = vst.msk [vmem:[%s3 + $0x18] sm:$0xff] %vm2343, %v2121
  %2348 = vst.msk [vmem:[%s3 + $0x20] sm:$0xff] %vm2343, %v2122
  %2349 = vst.msk [vmem:[%s3 + $0x28] sm:$0xff] %vm2343, %v2123
  %2350 = vst.msk [vmem:[%s3 + $0x30] sm:$0xff] %vm2343, %v2124
  %2351 = vst.msk [vmem:[%s3 + $0x38] sm:$0xff] %vm2343, %v2125
  %2352 = vst.msk [vmem:[%s3 + $0x40] sm:$0xff] %vm2343, %v2126
  %2353 = vst.msk [vmem:[%s3 + $0x48] sm:$0xff] %vm2343, %v2127
  %2354 = vst.msk [vmem:[%s3 + $0x50] sm:$0xff] %vm2343, %v2128
  %2355 = vst.msk [vmem:[%s3 + $0x58] sm:$0xff] %vm2343, %v2129
  %2356 = vst.msk [vmem:[%s3 + $0x60] sm:$0xff] %vm2343, %v2130
  %2357 = vst.msk [vmem:[%s3 + $0x68] sm:$0xff] %vm2343, %v2131
  %2358 = vst.msk [vmem:[%s3 + $0x70] sm:$0xff] %vm2343, %v2132
  %2359 = vst.msk [vmem:[%s3 + $0x78] sm:$0xff] %vm2343, %v2133
  %2360 = vst.msk [vmem:[%s3 + $0x80] sm:$0xff] %vm2343, %v2134
  %2361 = vst.msk [vmem:[%s3 + $0x88] sm:$0xff] %vm2343, %v2135
  %2362 = vst.msk [vmem:[%s3 + $0x90] sm:$0xff] %vm2343, %v2136
  %2363 = vst.msk [vmem:[%s3 + $0x98] sm:$0xff] %vm2343, %v2137
  %2364 = vst.msk [vmem:[%s3 + $0xa0] sm:$0xff] %vm2343, %v2138
  %2365 = vst.msk [vmem:[%s3 + $0xa8] sm:$0xff] %vm2343, %v2139
  %2366 = vst.msk [vmem:[%s3 + $0xb0] sm:$0xff] %vm2343, %v2140
  %2367 = vst.msk [vmem:[%s3 + $0xb8] sm:$0xff] %vm2343, %v2141
  %2368 = vst.msk [vmem:[%s3 + $0xc0] sm:$0xff] %vm2343, %v2142
  %2369 = vst.msk [vmem:[%s3 + $0xc8] sm:$0xff] %vm2343, %v2143
  %2370 = vst.msk [vmem:[%s3 + $0xd0] sm:$0xff] %vm2343, %v2144
  %2371 = vst.msk [vmem:[%s3 + $0xd8] sm:$0xff] %vm2343, %v2145
  %2372 = vst.msk [vmem:[%s3 + $0xe0] sm:$0xff] %vm2343, %v2146
  %2373 = vst.msk [vmem:[%s3 + $0xe8] sm:$0xff] %vm2343, %v2147
  %2374 = vst.msk [vmem:[%s3 + $0xf0] sm:$0xff] %vm2343, %v2148
  %2375 = vst.msk [vmem:[%s3 + $0xf8] sm:$0xff] %vm2343, %v2149
  %2376 = vst.msk [vmem:[%s3 + $0x100] sm:$0xff] %vm2343, %v2150
  %2377 = vst.msk [vmem:[%s3 + $0x108] sm:$0xff] %vm2343, %v2151
  %2378 = vst.msk [vmem:[%s3 + $0x110] sm:$0xff] %vm2343, %v2152
  %2379 = vst.msk [vmem:[%s3 + $0x118] sm:$0xff] %vm2343, %v2153
  %2380 = vst.msk [vmem:[%s3 + $0x120] sm:$0xff] %vm2343, %v2154
  %2381 = vst.msk [vmem:[%s3 + $0x128] sm:$0xff] %vm2343, %v2155
  %2382 = vst.msk [vmem:[%s3 + $0x130] sm:$0xff] %vm2343, %v2156
  %2383 = vst.msk [vmem:[%s3 + $0x138] sm:$0xff] %vm2343, %v2157
  %2384 = vst.msk [vmem:[%s3 + $0x140] sm:$0xff] %vm2343, %v2158
  %2385 = vst.msk [vmem:[%s3 + $0x148] sm:$0xff] %vm2343, %v2159
  %2386 = vst.msk [vmem:[%s3 + $0x150] sm:$0xff] %vm2343, %v2160
  %2387 = vst.msk [vmem:[%s3 + $0x158] sm:$0xff] %vm2343, %v2161
  %2388 = vst.msk [vmem:[%s3 + $0x160] sm:$0xff] %vm2343, %v2162
  %2389 = vst.msk [vmem:[%s3 + $0x168] sm:$0xff] %vm2343, %v2163
  %2390 = vst.msk [vmem:[%s3 + $0x170] sm:$0xff] %vm2343, %v2164
  %2391 = vst.msk [vmem:[%s3 + $0x178] sm:$0xff] %vm2343, %v2165
  %2392 = vst.msk [vmem:[%s3 + $0x180] sm:$0xff] %vm2343, %v2166
  %2393 = vst.msk [vmem:[%s3 + $0x188] sm:$0xff] %vm2343, %v2167
  %2394 = vst.msk [vmem:[%s3 + $0x190] sm:$0xff] %vm2343, %v2168
  %2395 = vst.msk [vmem:[%s3 + $0x198] sm:$0xff] %vm2343, %v2169
  %2396 = vst.msk [vmem:[%s3 + $0x1a0] sm:$0xff] %vm2343, %v2170
  %2397 = vst.msk [vmem:[%s3 + $0x1a8] sm:$0xff] %vm2343, %v2171
  %2398 = vst.msk [vmem:[%s3 + $0x1b0] sm:$0xff] %vm2343, %v2172
  %2399 = vst.msk [vmem:[%s3 + $0x1b8] sm:$0xff] %vm2343, %v2173
  %2400 = vst.msk [vmem:[%s3 + $0x1c0] sm:$0xff] %vm2343, %v2174
  %2401 = vst.msk [vmem:[%s3 + $0x1c8] sm:$0xff] %vm2343, %v2175
  %2402 = vst.msk [vmem:[%s3 + $0x1d0] sm:$0xff] %vm2343, %v2176
  %2403 = vst.msk [vmem:[%s3 + $0x1d8] sm:$0xff] %vm2343, %v2177
  %2404 = vst.msk [vmem:[%s3 + $0x1e0] sm:$0xff] %vm2343, %v2178
  %2405 = vst.msk [vmem:[%s3 + $0x1e8] sm:$0xff] %vm2343, %v2179
  %2406 = vst.msk [vmem:[%s3 + $0x1f0] sm:$0xff] %vm2343, %v2180
  %2407 = vst.msk [vmem:[%s3 + $0x1f8] sm:$0xff] %vm2343, %v2181
  %2408 = vst.msk [vmem:[%s3 + $0x200] sm:$0xff] %vm2343, %v2182
  %2409 = vst.msk [vmem:[%s3 + $0x208] sm:$0xff] %vm2343, %v2183
  %2410 = vst.msk [vmem:[%s3 + $0x210] sm:$0xff] %vm2343, %v2184
  %2411 = vst.msk [vmem:[%s3 + $0x218] sm:$0xff] %vm2343, %v2185
  %2412 = vst.msk [vmem:[%s3 + $0x220] sm:$0xff] %vm2343, %v2186
  %2413 = vst.msk [vmem:[%s3 + $0x228] sm:$0xff] %vm2343, %v2187
  %2414 = vst.msk [vmem:[%s3 + $0x230] sm:$0xff] %vm2343, %v2188
  %2415 = vst.msk [vmem:[%s3 + $0x238] sm:$0xff] %vm2343, %v2189
  %2416 = vst.msk [vmem:[%s3 + $0x240] sm:$0xff] %vm2343, %v2190
  %2417 = vst.msk [vmem:[%s3 + $0x248] sm:$0xff] %vm2343, %v2191
  %2418 = vst.msk [vmem:[%s3 + $0x250] sm:$0xff] %vm2343, %v2192
  %2419 = vst.msk [vmem:[%s3 + $0x258] sm:$0xff] %vm2343, %v2193
  %2420 = vst.msk [vmem:[%s3 + $0x260] sm:$0xff] %vm2343, %v2194
  %2421 = vst.msk [vmem:[%s3 + $0x268] sm:$0xff] %vm2343, %v2195
  %2422 = vst.msk [vmem:[%s3 + $0x270] sm:$0xff] %vm2343, %v2196
  %2423 = vst.msk [vmem:[%s3 + $0x278] sm:$0xff] %vm2343, %v2197
  %2424 = vst.msk [vmem:[%s3 + $0x280] sm:$0xff] %vm2343, %v2198
  %2425 = vst.msk [vmem:[%s3 + $0x288] sm:$0xff] %vm2343, %v2199
  %2426 = vst.msk [vmem:[%s3 + $0x290] sm:$0xff] %vm2343, %v2200
  %2427 = vst.msk [vmem:[%s3 + $0x298] sm:$0xff] %vm2343, %v2201
  %2428 = vst.msk [vmem:[%s3 + $0x2a0] sm:$0xff] %vm2343, %v2202
  %2429 = vst.msk [vmem:[%s3 + $0x2a8] sm:$0xff] %vm2343, %v2203
  %2430 = vst.msk [vmem:[%s3 + $0x2b0] sm:$0xff] %vm2343, %v2204
  %2431 = vst.msk [vmem:[%s3 + $0x2b8] sm:$0xff] %vm2343, %v2205
  %2432 = vst.msk [vmem:[%s3 + $0x2c0] sm:$0xff] %vm2343, %v2206
  %2433 = vst.msk [vmem:[%s3 + $0x2c8] sm:$0xff] %vm2343, %v2207
  %2434 = vst.msk [vmem:[%s3 + $0x2d0] sm:$0xff] %vm2343, %v2208
  %2435 = vst.msk [vmem:[%s3 + $0x2d8] sm:$0xff] %vm2343, %v2209
  %2436 = vst.msk [vmem:[%s3 + $0x2e0] sm:$0xff] %vm2343, %v2210
  %2437 = vst.msk [vmem:[%s3 + $0x2e8] sm:$0xff] %vm2343, %v2211
  %2438 = vst.msk [vmem:[%s3 + $0x2f0] sm:$0xff] %vm2343, %v2212
  %2439 = vst.msk [vmem:[%s3 + $0x2f8] sm:$0xff] %vm2343, %v2213
  %2440 = vst.msk [vmem:[%s3 + $0x300] sm:$0xff] %vm2343, %v2214
  %2441 = vst.msk [vmem:[%s3 + $0x308] sm:$0xff] %vm2343, %v2215
  %2442 = vst.msk [vmem:[%s3 + $0x310] sm:$0xff] %vm2343, %v2216
  %2443 = vst.msk [vmem:[%s3 + $0x318] sm:$0xff] %vm2343, %v2217
  %2444 = vst.msk [vmem:[%s3 + $0x320] sm:$0xff] %vm2343, %v2218
  %2445 = vst.msk [vmem:[%s3 + $0x328] sm:$0xff] %vm2343, %v2219
  %2446 = vst.msk [vmem:[%s3 + $0x330] sm:$0xff] %vm2343, %v2220
  %2447 = vst.msk [vmem:[%s3 + $0x338] sm:$0xff] %vm2343, %v2221
  %2448 = vst.msk [vmem:[%s3 + $0x340] sm:$0xff] %vm2343, %v2222
  %2449 = vst.msk [vmem:[%s3 + $0x348] sm:$0xff] %vm2343, %v2223
  %2450 = vst.msk [vmem:[%s3 + $0x350] sm:$0xff] %vm2343, %v2224
  %2451 = vst.msk [vmem:[%s3 + $0x358] sm:$0xff] %vm2343, %v2225
  %2452 = vst.msk [vmem:[%s3 + $0x360] sm:$0xff] %vm2343, %v2226
  %2453 = vst.msk [vmem:[%s3 + $0x368] sm:$0xff] %vm2343, %v2227
  %2454 = vst.msk [vmem:[%s3 + $0x370] sm:$0xff] %vm2343, %v2228
  %2455 = vst.msk [vmem:[%s3 + $0x378] sm:$0xff] %vm2343, %v2229
  %2456 = vst.msk [vmem:[%s3 + $0x380] sm:$0xff] %vm2343, %v2230
  %2457 = vst.msk [vmem:[%s3 + $0x388] sm:$0xff] %vm2343, %v2231
  %2458 = vst.msk [vmem:[%s3 + $0x390] sm:$0xff] %vm2343, %v2232
  %2459 = vst.msk [vmem:[%s3 + $0x398] sm:$0xff] %vm2343, %v2233
  %2460 = vst.msk [vmem:[%s3 + $0x3a0] sm:$0xff] %vm2343, %v2234
  %2461 = vst.msk [vmem:[%s3 + $0x3a8] sm:$0xff] %vm2343, %v2235
  %2462 = vst.msk [vmem:[%s3 + $0x3b0] sm:$0xff] %vm2343, %v2236
  %2463 = vst.msk [vmem:[%s3 + $0x3b8] sm:$0xff] %vm2343, %v2237
  %2464 = vst.msk [vmem:[%s3 + $0x3c0] sm:$0xff] %vm2343, %v2238
  %2465 = vst.msk [vmem:[%s3 + $0x3c8] sm:$0xff] %vm2343, %v2239
  %2466 = vst.msk [vmem:[%s3 + $0x3d0] sm:$0xff] %vm2343, %v2240
  %2467 = vst.msk [vmem:[%s3 + $0x3d8] sm:$0xff] %vm2343, %v2241
  %2468 = vst.msk [vmem:[%s3 + $0x3e0] sm:$0xff] %vm2343, %v2242
  %2469 = vst.msk [vmem:[%s3 + $0x3e8] sm:$0xff] %vm2343, %v2243
  %2470 = vst.msk [vmem:[%s3 + $0x3f0] sm:$0xff] %vm2343, %v2244
  %2471 = vst.msk [vmem:[%s3 + $0x3f8] sm:$0xff] %vm2343, %v2245
  %2472 = vst.msk [vmem:[%s3 + $0x400] sm:$0xff] %vm2343, %v2246
  %2473 = vst.msk [vmem:[%s3 + $0x408] sm:$0xff] %vm2343, %v2247
  %2474 = vst.msk [vmem:[%s3 + $0x410] sm:$0xff] %vm2343, %v2248
  %2475 = vst.msk [vmem:[%s3 + $0x418] sm:$0xff] %vm2343, %v2249
  %2476 = vst.msk [vmem:[%s3 + $0x420] sm:$0xff] %vm2343, %v2250
  %2477 = vst.msk [vmem:[%s3 + $0x428] sm:$0xff] %vm2343, %v2251
  %2478 = vst.msk [vmem:[%s3 + $0x430] sm:$0xff] %vm2343, %v2252
  %2479 = vst.msk [vmem:[%s3 + $0x438] sm:$0xff] %vm2343, %v2253
  %2480 = vst.msk [vmem:[%s3 + $0x440] sm:$0xff] %vm2343, %v2254
  %2481 = vst.msk [vmem:[%s3 + $0x448] sm:$0xff] %vm2343, %v2255
  %2482 = vst.msk [vmem:[%s3 + $0x450] sm:$0xff] %vm2343, %v2256
  %2483 = vst.msk [vmem:[%s3 + $0x458] sm:$0xff] %vm2343, %v2257
  %2484 = vst.msk [vmem:[%s3 + $0x460] sm:$0xff] %vm2343, %v2258
  %2485 = vst.msk [vmem:[%s3 + $0x468] sm:$0xff] %vm2343, %v2259
  %2486 = vst.msk [vmem:[%s3 + $0x470] sm:$0xff] %vm2343, %v2260
  %2487 = vst.msk [vmem:[%s3 + $0x478] sm:$0xff] %vm2343, %v2261
  %2488 = vst.msk [vmem:[%s3 + $0x480] sm:$0xff] %vm2343, %v2262
  %2489 = vst.msk [vmem:[%s3 + $0x488] sm:$0xff] %vm2343, %v2263
  %2490 = vst.msk [vmem:[%s3 + $0x490] sm:$0xff] %vm2343, %v2264
  %2491 = vst.msk [vmem:[%s3 + $0x498] sm:$0xff] %vm2343, %v2265
  %2492 = vst.msk [vmem:[%s3 + $0x4a0] sm:$0xff] %vm2343, %v2266
  %2493 = vst.msk [vmem:[%s3 + $0x4a8] sm:$0xff] %vm2343, %v2267
  %2494 = vst.msk [vmem:[%s3 + $0x4b0] sm:$0xff] %vm2343, %v2268
  %2495 = vst.msk [vmem:[%s3 + $0x4b8] sm:$0xff] %vm2343, %v2269
  %2496 = vst.msk [vmem:[%s3 + $0x4c0] sm:$0xff] %vm2343, %v2270
  %2497 = vst.msk [vmem:[%s3 + $0x4c8] sm:$0xff] %vm2343, %v2271
  %2498 = vst.msk [vmem:[%s3 + $0x4d0] sm:$0xff] %vm2343, %v2272
  %2499 = vst.msk [vmem:[%s3 + $0x4d8] sm:$0xff] %vm2343, %v2273
  %2500 = vst.msk [vmem:[%s3 + $0x4e0] sm:$0xff] %vm2343, %v2274
  %2501 = vst.msk [vmem:[%s3 + $0x4e8] sm:$0xff] %vm2343, %v2275
  %2502 = vst.msk [vmem:[%s3 + $0x4f0] sm:$0xff] %vm2343, %v2276
  %2503 = vst.msk [vmem:[%s3 + $0x4f8] sm:$0xff] %vm2343, %v2277
  %2504 = vst.msk [vmem:[%s3 + $0x500] sm:$0xff] %vm2343, %v2278
  %2505 = vst.msk [vmem:[%s3 + $0x508] sm:$0xff] %vm2343, %v2279
  %2506 = vst.msk [vmem:[%s3 + $0x510] sm:$0xff] %vm2343, %v2280
  %2507 = vst.msk [vmem:[%s3 + $0x518] sm:$0xff] %vm2343, %v2281
  %2508 = vst.msk [vmem:[%s3 + $0x520] sm:$0xff] %vm2343, %v2282
  %2509 = vst.msk [vmem:[%s3 + $0x528] sm:$0xff] %vm2343, %v2283
  %2510 = vst.msk [vmem:[%s3 + $0x530] sm:$0xff] %vm2343, %v2284
  %2511 = vst.msk [vmem:[%s3 + $0x538] sm:$0xff] %vm2343, %v2285
  %2512 = vst.msk [vmem:[%s3 + $0x540] sm:$0xff] %vm2343, %v2286
  %2513 = vst.msk [vmem:[%s3 + $0x548] sm:$0xff] %vm2343, %v2287
  %2514 = vst.msk [vmem:[%s3 + $0x550] sm:$0xff] %vm2343, %v2288
  %2515 = vst.msk [vmem:[%s3 + $0x558] sm:$0xff] %vm2343, %v2289
  %2516 = vst.msk [vmem:[%s3 + $0x560] sm:$0xff] %vm2343, %v2290
  %2517 = vst.msk [vmem:[%s3 + $0x568] sm:$0xff] %vm2343, %v2291
  %2518 = vst.msk [vmem:[%s3 + $0x570] sm:$0xff] %vm2343, %v2292
  %2519 = vst.msk [vmem:[%s3 + $0x578] sm:$0xff] %vm2343, %v2293
  %2520 = vst.msk [vmem:[%s3 + $0x580] sm:$0xff] %vm2343, %v2294
  %2521 = vst.msk [vmem:[%s3 + $0x588] sm:$0xff] %vm2343, %v2295
  %2522 = vst.msk [vmem:[%s3 + $0x590] sm:$0xff] %vm2343, %v2296
  %2523 = vst.msk [vmem:[%s3 + $0x598] sm:$0xff] %vm2343, %v2297
  %2524 = vst.msk [vmem:[%s3 + $0x5a0] sm:$0xff] %vm2343, %v2298
  %2525 = vst.msk [vmem:[%s3 + $0x5a8] sm:$0xff] %vm2343, %v2299
  %2526 = vst.msk [vmem:[%s3 + $0x5b0] sm:$0xff] %vm2343, %v2300
  %2527 = vst.msk [vmem:[%s3 + $0x5b8] sm:$0xff] %vm2343, %v2301
  %2528 = vst.msk [vmem:[%s3 + $0x5c0] sm:$0xff] %vm2343, %v2302
  %2529 = vst.msk [vmem:[%s3 + $0x5c8] sm:$0xff] %vm2343, %v2303
  %2530 = vst.msk [vmem:[%s3 + $0x5d0] sm:$0xff] %vm2343, %v2304
  %2531 = vst.msk [vmem:[%s3 + $0x5d8] sm:$0xff] %vm2343, %v2305
  %2532 = vst.msk [vmem:[%s3 + $0x5e0] sm:$0xff] %vm2343, %v2306
  %2533 = vst.msk [vmem:[%s3 + $0x5e8] sm:$0xff] %vm2343, %v2307
  %2534 = vst.msk [vmem:[%s3 + $0x5f0] sm:$0xff] %vm2343, %v2308
  %2535 = vst.msk [vmem:[%s3 + $0x5f8] sm:$0xff] %vm2343, %v2309
  %2536 = vst.msk [vmem:[%s3 + $0x600] sm:$0xff] %vm2343, %v2310
  %2537 = vst.msk [vmem:[%s3 + $0x608] sm:$0xff] %vm2343, %v2311
  %2538 = vst.msk [vmem:[%s3 + $0x610] sm:$0xff] %vm2343, %v2312
  %2539 = vst.msk [vmem:[%s3 + $0x618] sm:$0xff] %vm2343, %v2313
  %2540 = vst.msk [vmem:[%s3 + $0x620] sm:$0xff] %vm2343, %v2314
  %2541 = vst.msk [vmem:[%s3 + $0x628] sm:$0xff] %vm2343, %v2315
  %2542 = vst.msk [vmem:[%s3 + $0x630] sm:$0xff] %vm2343, %v2316
  %2543 = vst.msk [vmem:[%s3 + $0x638] sm:$0xff] %vm2343, %v2317
  %2544 = vst.msk [vmem:[%s3 + $0x640] sm:$0xff] %vm2343, %v2318
  %2545 = vst.msk [vmem:[%s3 + $0x648] sm:$0xff] %vm2343, %v2319
  %2546 = vst.msk [vmem:[%s3 + $0x650] sm:$0xff] %vm2343, %v2320
  %2547 = vst.msk [vmem:[%s3 + $0x658] sm:$0xff] %vm2343, %v2321
  %2548 = vst.msk [vmem:[%s3 + $0x660] sm:$0xff] %vm2343, %v2322
  %2549 = vst.msk [vmem:[%s3 + $0x668] sm:$0xff] %vm2343, %v2323
  %2550 = vst.msk [vmem:[%s3 + $0x670] sm:$0xff] %vm2343, %v2324
  %2551 = vst.msk [vmem:[%s3 + $0x678] sm:$0xff] %vm2343, %v2325
  %2552 = vst.msk [vmem:[%s3 + $0x680] sm:$0xff] %vm2343, %v2326
  %2553 = vst.msk [vmem:[%s3 + $0x688] sm:$0xff] %vm2343, %v2327
  %2554 = vst.msk [vmem:[%s3 + $0x690] sm:$0xff] %vm2343, %v2328
  %2555 = vst.msk [vmem:[%s3 + $0x698] sm:$0xff] %vm2343, %v2329
  %2556 = vst.msk [vmem:[%s3 + $0x6a0] sm:$0xff] %vm2343, %v2330
  %2557 = vst.msk [vmem:[%s3 + $0x6a8] sm:$0xff] %vm2343, %v2331
  %2558 = vst.msk [vmem:[%s3 + $0x6b0] sm:$0xff] %vm2343, %v2332
  %2559 = vst.msk [vmem:[%s3 + $0x6b8] sm:$0xff] %vm2343, %v2333
  %2560 = vst.msk [vmem:[%s3 + $0x6c0] sm:$0xff] %vm2343, %v2334
  %2561 = vst.msk [vmem:[%s3 + $0x6c8] sm:$0xff] %vm2343, %v2335
  %2562 = vst.msk [vmem:[%s3 + $0x6d0] sm:$0xff] %vm2343, %v2336
  %2563 = vst.msk [vmem:[%s3 + $0x6d8] sm:$0xff] %vm2343, %v2337
  %2564 = vst.msk [vmem:[%s3 + $0x6e0] sm:$0xff] %vm2343, %v2338
  %2565 = vst.msk [vmem:[%s3 + $0x6e8] sm:$0xff] %vm2343, %v2339
  %2566 = vst.msk [vmem:[%s3 + $0x6f0] sm:$0xff] %vm2343, %v2340
  %2567 = vst.msk [vmem:[%s3 + $0x6f8] sm:$0xff] %vm2343, %v2341
  %2568 = vst.msk [vmem:[%s3 + $0x700] sm:$0xff] %vm2343, %v2342
  // Predicated region
  $region14: #{forward.5} parent=0 // pred_check
    _
  $region15: #{forward.5} parent=0 // pred_check_branch
    %2570 = sbr.rel (0) target = $region17
  $region16: #{forward.5} parent=0 // pred_region
    _
  $region17: #{forward.5} parent=0 // pred_fallthru
    _
  // Predicated region
  $region18: #{forward.5} parent=0 // pred_check
    _
  $region19: #{forward.5} parent=0 // pred_check_branch
    %2572 = sbr.rel (0) target = $region21
  $region20: #{forward.5} parent=0 // pred_region
    _
  $region21: #{forward.5} parent=0 // pred_fallthru
    _

// kernel: forward.6
$region0: #{forward.6}
  #allocation0 [shape = 'u32[]', space=smem, size = 0x4, offset = 0x4, fixed_abs, tag = 'smem constant byte address 0x4 - core index']
  #allocation1 [shape = 'u32[144,128]{1,0:T(1,128)}', space=vmem, size = 0x12000, scoped, tag = 'internal scratch']
  %s0 = inlined_call_operand.vmem [shape: f32[512,144], index: 0, kind: input, shape index: {}]
  %s1 = inlined_call_operand.vmem [shape: f32[144,32], index: 1, kind: input, shape index: {}]
  %s2 = inlined_call_operand.vmem [shape: f32[1,32], index: 2, kind: input, shape index: {}]
  %s3 = inlined_call_operand.vmem [shape: f32[512,32], index: 3, kind: output, shape index: {}]
  %s4 = sld [smem:[#allocation0]]
  $region22: #{forward.6} parent=0
    _
  %s6 = ssub.s32 1, %s4
  %s7 = scalar_select 0, %s6, %s4
  // Predicated region
  $region2: #{forward.6} parent=0 // pred_check
    _
  $region3: #{forward.6} parent=0 // pred_check_branch
    %9 = sbr.rel (0) target = $region5
  $region4: #{forward.6} parent=0 // pred_region
    _
  $region5: #{forward.6} parent=0 // pred_fallthru
    _
  // Predicated region
  $region6: #{forward.6} parent=0 // pred_check
    _
  $region7: #{forward.6} parent=0 // pred_check_branch
    %11 = sbr.rel (0) target = $region9
  $region8: #{forward.6} parent=0 // pred_region
    _
  $region9: #{forward.6} parent=0 // pred_fallthru
    _
  // Predicated region
  $region10: #{forward.6} parent=0 // pred_check
    _
  $region11: #{forward.6} parent=0 // pred_check_branch
    %13 = sbr.rel (0) target = $region13
  $region12: #{forward.6} parent=0 // pred_region
    _
  $region13: #{forward.6} parent=0 // pred_fallthru
    _
  %v14 = vld [vmem:[%s0] sm:$0xff]
  %v15 = vld [vmem:[%s0 + $0x8] sm:$0xff]
  %v16 = vld [vmem:[%s0 + $0x10] sm:$0xff]
  %v17 = vld [vmem:[%s0 + $0x18] sm:$0xff]
  %v18 = vld [vmem:[%s0 + $0x20] sm:$0xff]
  %v19 = vld [vmem:[%s0 + $0x28] sm:$0xff]
  %v20 = vld [vmem:[%s0 + $0x30] sm:$0xff]
  %v21 = vld [vmem:[%s0 + $0x38] sm:$0xff]
  %v22 = vld [vmem:[%s0 + $0x40] sm:$0xff]
  %v23 = vld [vmem:[%s0 + $0x48] sm:$0xff]
  %v24 = vld [vmem:[%s0 + $0x50] sm:$0xff]
  %v25 = vld [vmem:[%s0 + $0x58] sm:$0xff]
  %v26 = vld [vmem:[%s0 + $0x60] sm:$0xff]
  %v27 = vld [vmem:[%s0 + $0x68] sm:$0xff]
  %v28 = vld [vmem:[%s0 + $0x70] sm:$0xff]
  %v29 = vld [vmem:[%s0 + $0x78] sm:$0xff]
  %v30 = vld [vmem:[%s0 + $0x80] sm:$0xff]
  %v31 = vld [vmem:[%s0 + $0x88] sm:$0xff]
  %v32 = vld [vmem:[%s0 + $0x90] sm:$0xff]
  %v33 = vld [vmem:[%s0 + $0x98] sm:$0xff]
  %v34 = vld [vmem:[%s0 + $0xa0] sm:$0xff]
  %v35 = vld [vmem:[%s0 + $0xa8] sm:$0xff]
  %v36 = vld [vmem:[%s0 + $0xb0] sm:$0xff]
  %v37 = vld [vmem:[%s0 + $0xb8] sm:$0xff]
  %v38 = vld [vmem:[%s0 + $0xc0] sm:$0xff]
  %v39 = vld [vmem:[%s0 + $0xc8] sm:$0xff]
  %v40 = vld [vmem:[%s0 + $0xd0] sm:$0xff]
  %v41 = vld [vmem:[%s0 + $0xd8] sm:$0xff]
  %v42 = vld [vmem:[%s0 + $0xe0] sm:$0xff]
  %v43 = vld [vmem:[%s0 + $0xe8] sm:$0xff]
  %v44 = vld [vmem:[%s0 + $0xf0] sm:$0xff]
  %v45 = vld [vmem:[%s0 + $0xf8] sm:$0xff]
  %v46 = vld [vmem:[%s0 + $0x100] sm:$0xff]
  %v47 = vld [vmem:[%s0 + $0x108] sm:$0xff]
  %v48 = vld [vmem:[%s0 + $0x110] sm:$0xff]
  %v49 = vld [vmem:[%s0 + $0x118] sm:$0xff]
  %v50 = vld [vmem:[%s0 + $0x120] sm:$0xff]
  %v51 = vld [vmem:[%s0 + $0x128] sm:$0xff]
  %v52 = vld [vmem:[%s0 + $0x130] sm:$0xff]
  %v53 = vld [vmem:[%s0 + $0x138] sm:$0xff]
  %v54 = vld [vmem:[%s0 + $0x140] sm:$0xff]
  %v55 = vld [vmem:[%s0 + $0x148] sm:$0xff]
  %v56 = vld [vmem:[%s0 + $0x150] sm:$0xff]
  %v57 = vld [vmem:[%s0 + $0x158] sm:$0xff]
  %v58 = vld [vmem:[%s0 + $0x160] sm:$0xff]
  %v59 = vld [vmem:[%s0 + $0x168] sm:$0xff]
  %v60 = vld [vmem:[%s0 + $0x170] sm:$0xff]
  %v61 = vld [vmem:[%s0 + $0x178] sm:$0xff]
  %v62 = vld [vmem:[%s0 + $0x180] sm:$0xff]
  %v63 = vld [vmem:[%s0 + $0x188] sm:$0xff]
  %v64 = vld [vmem:[%s0 + $0x190] sm:$0xff]
  %v65 = vld [vmem:[%s0 + $0x198] sm:$0xff]
  %v66 = vld [vmem:[%s0 + $0x1a0] sm:$0xff]
  %v67 = vld [vmem:[%s0 + $0x1a8] sm:$0xff]
  %v68 = vld [vmem:[%s0 + $0x1b0] sm:$0xff]
  %v69 = vld [vmem:[%s0 + $0x1b8] sm:$0xff]
  %v70 = vld [vmem:[%s0 + $0x1c0] sm:$0xff]
  %v71 = vld [vmem:[%s0 + $0x1c8] sm:$0xff]
  %v72 = vld [vmem:[%s0 + $0x1d0] sm:$0xff]
  %v73 = vld [vmem:[%s0 + $0x1d8] sm:$0xff]
  %v74 = vld [vmem:[%s0 + $0x1e0] sm:$0xff]
  %v75 = vld [vmem:[%s0 + $0x1e8] sm:$0xff]
  %v76 = vld [vmem:[%s0 + $0x1f0] sm:$0xff]
  %v77 = vld [vmem:[%s0 + $0x1f8] sm:$0xff]
  %v78 = vld [vmem:[%s0 + $0x200] sm:$0xff]
  %v79 = vld [vmem:[%s0 + $0x208] sm:$0xff]
  %v80 = vld [vmem:[%s0 + $0x210] sm:$0xff]
  %v81 = vld [vmem:[%s0 + $0x218] sm:$0xff]
  %v82 = vld [vmem:[%s0 + $0x220] sm:$0xff]
  %v83 = vld [vmem:[%s0 + $0x228] sm:$0xff]
  %v84 = vld [vmem:[%s0 + $0x230] sm:$0xff]
  %v85 = vld [vmem:[%s0 + $0x238] sm:$0xff]
  %v86 = vld [vmem:[%s0 + $0x240] sm:$0xff]
  %v87 = vld [vmem:[%s0 + $0x248] sm:$0xff]
  %v88 = vld [vmem:[%s0 + $0x250] sm:$0xff]
  %v89 = vld [vmem:[%s0 + $0x258] sm:$0xff]
  %v90 = vld [vmem:[%s0 + $0x260] sm:$0xff]
  %v91 = vld [vmem:[%s0 + $0x268] sm:$0xff]
  %v92 = vld [vmem:[%s0 + $0x270] sm:$0xff]
  %v93 = vld [vmem:[%s0 + $0x278] sm:$0xff]
  %v94 = vld [vmem:[%s0 + $0x280] sm:$0xff]
  %v95 = vld [vmem:[%s0 + $0x288] sm:$0xff]
  %v96 = vld [vmem:[%s0 + $0x290] sm:$0xff]
  %v97 = vld [vmem:[%s0 + $0x298] sm:$0xff]
  %v98 = vld [vmem:[%s0 + $0x2a0] sm:$0xff]
  %v99 = vld [vmem:[%s0 + $0x2a8] sm:$0xff]
  %v100 = vld [vmem:[%s0 + $0x2b0] sm:$0xff]
  %v101 = vld [vmem:[%s0 + $0x2b8] sm:$0xff]
  %v102 = vld [vmem:[%s0 + $0x2c0] sm:$0xff]
  %v103 = vld [vmem:[%s0 + $0x2c8] sm:$0xff]
  %v104 = vld [vmem:[%s0 + $0x2d0] sm:$0xff]
  %v105 = vld [vmem:[%s0 + $0x2d8] sm:$0xff]
  %v106 = vld [vmem:[%s0 + $0x2e0] sm:$0xff]
  %v107 = vld [vmem:[%s0 + $0x2e8] sm:$0xff]
  %v108 = vld [vmem:[%s0 + $0x2f0] sm:$0xff]
  %v109 = vld [vmem:[%s0 + $0x2f8] sm:$0xff]
  %v110 = vld [vmem:[%s0 + $0x300] sm:$0xff]
  %v111 = vld [vmem:[%s0 + $0x308] sm:$0xff]
  %v112 = vld [vmem:[%s0 + $0x310] sm:$0xff]
  %v113 = vld [vmem:[%s0 + $0x318] sm:$0xff]
  %v114 = vld [vmem:[%s0 + $0x320] sm:$0xff]
  %v115 = vld [vmem:[%s0 + $0x328] sm:$0xff]
  %v116 = vld [vmem:[%s0 + $0x330] sm:$0xff]
  %v117 = vld [vmem:[%s0 + $0x338] sm:$0xff]
  %v118 = vld [vmem:[%s0 + $0x340] sm:$0xff]
  %v119 = vld [vmem:[%s0 + $0x348] sm:$0xff]
  %v120 = vld [vmem:[%s0 + $0x350] sm:$0xff]
  %v121 = vld [vmem:[%s0 + $0x358] sm:$0xff]
  %v122 = vld [vmem:[%s0 + $0x360] sm:$0xff]
  %v123 = vld [vmem:[%s0 + $0x368] sm:$0xff]
  %v124 = vld [vmem:[%s0 + $0x370] sm:$0xff]
  %v125 = vld [vmem:[%s0 + $0x378] sm:$0xff]
  %v126 = vld [vmem:[%s0 + $0x380] sm:$0xff]
  %v127 = vld [vmem:[%s0 + $0x388] sm:$0xff]
  %v128 = vld [vmem:[%s0 + $0x390] sm:$0xff]
  %v129 = vld [vmem:[%s0 + $0x398] sm:$0xff]
  %v130 = vld [vmem:[%s0 + $0x3a0] sm:$0xff]
  %v131 = vld [vmem:[%s0 + $0x3a8] sm:$0xff]
  %v132 = vld [vmem:[%s0 + $0x3b0] sm:$0xff]
  %v133 = vld [vmem:[%s0 + $0x3b8] sm:$0xff]
  %v134 = vld [vmem:[%s0 + $0x3c0] sm:$0xff]
  %v135 = vld [vmem:[%s0 + $0x3c8] sm:$0xff]
  %v136 = vld [vmem:[%s0 + $0x3d0] sm:$0xff]
  %v137 = vld [vmem:[%s0 + $0x3d8] sm:$0xff]
  %v138 = vld [vmem:[%s0 + $0x3e0] sm:$0xff]
  %v139 = vld [vmem:[%s0 + $0x3e8] sm:$0xff]
  %v140 = vld [vmem:[%s0 + $0x3f0] sm:$0xff]
  %v141 = vld [vmem:[%s0 + $0x3f8] sm:$0xff]
  %v142 = vld [vmem:[%s1] sm:$0xff]
  %v143 = vld [vmem:[%s1 + $0x8] sm:$0xff]
  %v144 = vld [vmem:[%s1 + $0x10] sm:$0xff]
  %v145 = vld [vmem:[%s1 + $0x18] sm:$0xff]
  %v146 = vld [vmem:[%s1 + $0x20] sm:$0xff]
  %v147 = vld [vmem:[%s1 + $0x28] sm:$0xff]
  %v148 = vld [vmem:[%s1 + $0x30] sm:$0xff]
  %v149 = vld [vmem:[%s1 + $0x38] sm:$0xff]
  %v150 = vld [vmem:[%s1 + $0x40] sm:$0xff]
  %v151 = vld [vmem:[%s1 + $0x48] sm:$0xff]
  %v152 = vld [vmem:[%s1 + $0x50] sm:$0xff]
  %v153 = vld [vmem:[%s1 + $0x58] sm:$0xff]
  %v154 = vld [vmem:[%s1 + $0x60] sm:$0xff]
  %v155 = vld [vmem:[%s1 + $0x68] sm:$0xff]
  %v156 = vld [vmem:[%s1 + $0x70] sm:$0xff]
  %v157 = vld [vmem:[%s1 + $0x78] sm:$0xff]
  %v158 = vld [vmem:[%s1 + $0x80] sm:$0xff]
  %v159 = vld [vmem:[%s1 + $0x88] sm:$0xff]
  %v160 = vld [vmem:[%s2] sm:$0x1]
  %v162 = vlaneseq
  %v163 = vshrl.u32 %v162, 7
  %v164 = vsub.s32 0, %v163
  %v165 = vrot.slane %v160, %v164
  %vm167 = vcmask 130048
  %v169 = vsel %vm167, %v15, 0
  %v172 = vsel %vm167, %v17, 0
  %v175 = vsel %vm167, %v19, 0
  %v178 = vsel %vm167, %v21, 0
  %v181 = vsel %vm167, %v23, 0
  %v184 = vsel %vm167, %v25, 0
  %v187 = vsel %vm167, %v27, 0
  %v190 = vsel %vm167, %v29, 0
  %v193 = vsel %vm167, %v31, 0
  %v196 = vsel %vm167, %v33, 0
  %v199 = vsel %vm167, %v35, 0
  %v202 = vsel %vm167, %v37, 0
  %v205 = vsel %vm167, %v39, 0
  %v208 = vsel %vm167, %v41, 0
  %v211 = vsel %vm167, %v43, 0
  %v214 = vsel %vm167, %v45, 0
  %v217 = vsel %vm167, %v47, 0
  %v220 = vsel %vm167, %v49, 0
  %v223 = vsel %vm167, %v51, 0
  %v226 = vsel %vm167, %v53, 0
  %v229 = vsel %vm167, %v55, 0
  %v232 = vsel %vm167, %v57, 0
  %v235 = vsel %vm167, %v59, 0
  %v238 = vsel %vm167, %v61, 0
  %v241 = vsel %vm167, %v63, 0
  %v244 = vsel %vm167, %v65, 0
  %v247 = vsel %vm167, %v67, 0
  %v250 = vsel %vm167, %v69, 0
  %v253 = vsel %vm167, %v71, 0
  %v256 = vsel %vm167, %v73, 0
  %v259 = vsel %vm167, %v75, 0
  %v262 = vsel %vm167, %v77, 0
  %v265 = vsel %vm167, %v79, 0
  %v268 = vsel %vm167, %v81, 0
  %v271 = vsel %vm167, %v83, 0
  %v274 = vsel %vm167, %v85, 0
  %v277 = vsel %vm167, %v87, 0
  %v280 = vsel %vm167, %v89, 0
  %v283 = vsel %vm167, %v91, 0
  %v286 = vsel %vm167, %v93, 0
  %v289 = vsel %vm167, %v95, 0
  %v292 = vsel %vm167, %v97, 0
  %v295 = vsel %vm167, %v99, 0
  %v298 = vsel %vm167, %v101, 0
  %v301 = vsel %vm167, %v103, 0
  %v304 = vsel %vm167, %v105, 0
  %v307 = vsel %vm167, %v107, 0
  %v310 = vsel %vm167, %v109, 0
  %v313 = vsel %vm167, %v111, 0
  %v316 = vsel %vm167, %v113, 0
  %v319 = vsel %vm167, %v115, 0
  %v322 = vsel %vm167, %v117, 0
  %v325 = vsel %vm167, %v119, 0
  %v328 = vsel %vm167, %v121, 0
  %v331 = vsel %vm167, %v123, 0
  %v334 = vsel %vm167, %v125, 0
  %v337 = vsel %vm167, %v127, 0
  %v340 = vsel %vm167, %v129, 0
  %v343 = vsel %vm167, %v131, 0
  %v346 = vsel %vm167, %v133, 0
  %v349 = vsel %vm167, %v135, 0
  %v352 = vsel %vm167, %v137, 0
  %v355 = vsel %vm167, %v139, 0
  %v358 = vsel %vm167, %v141, 0
  %360 = vmatprep.subr.mxu0 0.0
  %361 = vmatpush1.msra.mxu0 %v142
  %362 = vmatprep.subr.mxu0 0.0
  %363 = vmatpush1.msra.mxu0 %v143
  %364 = vmatprep.subr.mxu0 0.0
  %365 = vmatpush1.msra.mxu0 %v144
  %366 = vmatprep.subr.mxu0 0.0
  %367 = vmatpush1.msra.mxu0 %v145
  %368 = vmatprep.subr.mxu0 0.0
  %369 = vmatpush1.msra.mxu0 %v146
  %370 = vmatprep.subr.mxu0 0.0
  %371 = vmatpush1.msra.mxu0 %v147
  %372 = vmatprep.subr.mxu0 0.0
  %373 = vmatpush1.msra.mxu0 %v148
  %374 = vmatprep.subr.mxu0 0.0
  %375 = vmatpush1.msra.mxu0 %v149
  %376 = vmatprep.subr.mxu0 0.0
  %377 = vmatpush1.msra.mxu0 %v150
  %378 = vmatprep.subr.mxu0 0.0
  %379 = vmatpush1.msra.mxu0 %v151
  %380 = vmatprep.subr.mxu0 0.0
  %381 = vmatpush1.msra.mxu0 %v152
  %382 = vmatprep.subr.mxu0 0.0
  %383 = vmatpush1.msra.mxu0 %v153
  %384 = vmatprep.subr.mxu0 0.0
  %385 = vmatpush1.msra.mxu0 %v154
  %386 = vmatprep.subr.mxu0 0.0
  %387 = vmatpush1.msra.mxu0 %v155
  %388 = vmatprep.subr.mxu0 0.0
  %389 = vmatpush1.msra.mxu0 %v156
  %390 = vmatprep.subr.mxu0 0.0
  %391 = vmatpush1.msra.mxu0 %v157
  %392 = vmatprep.subr.mxu0 0.0
  %393 = vmatpush1.msra.mxu0 %v158
  %394 = vmatprep.subr.mxu0 0.0
  %395 = vmatpush1.msra.mxu0 %v159
  %396 = vmatprep.subr.mxu0 0.0
  %397 = vmatpush1.msra.mxu0 0.0
  %398 = vmatprep.subr.mxu0 0.0
  %399 = vmatpush1.msra.mxu0 0.0
  %400 = vmatprep.subr.mxu0 0.0
  %401 = vmatpush1.msra.mxu0 0.0
  %402 = vmatprep.subr.mxu0 0.0
  %403 = vmatpush1.msra.mxu0 0.0
  %404 = vmatprep.subr.mxu0 0.0
  %405 = vmatpush1.msra.mxu0 0.0
  %406 = vmatprep.subr.mxu0 0.0
  %407 = vmatpush1.msra.mxu0 0.0
  %408 = vmatprep.subr.mxu0 0.0
  %409 = vmatpush1.msra.mxu0 0.0
  %410 = vmatprep.subr.mxu0 0.0
  %411 = vmatpush1.msra.mxu0 0.0
  %412 = vmatprep.subr.mxu0 0.0
  %413 = vmatpush1.msra.mxu0 0.0
  %414 = vmatprep.subr.mxu0 0.0
  %415 = vmatpush1.msra.mxu0 0.0
  %416 = vmatprep.subr.mxu0 0.0
  %417 = vmatpush1.msra.mxu0 0.0
  %418 = vmatprep.subr.mxu0 0.0
  %419 = vmatpush1.msra.mxu0 0.0
  %420 = vmatprep.subr.mxu0 0.0
  %421 = vmatpush1.msra.mxu0 0.0
  %422 = vmatprep.subr.mxu0 0.0
  %423 = vmatpush1.msra.mxu0 0.0
  %424 = vmatprep.mubr.f32.mxu0 %v169
  %425 = vmatmul.mubr.f32.gmra.mrb[0].mxu0 %v14
  %v426 = vpop.f32.mrb[0].mxu0
  %v427 = vadd.f32 %v165, %v426
  %v428 = vpop.f32.mrb[0].mxu0
  %429 = vmatprep.mubr.f32.mxu0 %v172
  %430 = vmatmul.mubr.f32.gmra.mrb[0].mxu0 %v16
  %v431 = vpop.f32.mrb[0].mxu0
  %v432 = vadd.f32 %v165, %v431
  %v433 = vpop.f32.mrb[0].mxu0
  %434 = vmatprep.mubr.f32.mxu0 %v175
  %435 = vmatmul.mubr.f32.gmra.mrb[0].mxu0 %v18
  %v436 = vpop.f32.mrb[0].mxu0
  %v437 = vadd.f32 %v165, %v436
  %v438 = vpop.f32.mrb[0].mxu0
  %439 = vmatprep.mubr.f32.mxu0 %v178
  %440 = vmatmul.mubr.f32.gmra.mrb[0].mxu0 %v20
  %v441 = vpop.f32.mrb[0].mxu0
  %v442 = vadd.f32 %v165, %v441
  %v443 = vpop.f32.mrb[0].mxu0
  %444 = vmatprep.mubr.f32.mxu0 %v181
  %445 = vmatmul.mubr.f32.gmra.mrb[0].mxu0 %v22
  %v446 = vpop.f32.mrb[0].mxu0
  %v447 = vadd.f32 %v165, %v446
  %v448 = vpop.f32.mrb[0].mxu0
  %449 = vmatprep.mubr.f32.mxu0 %v184
  %450 = vmatmul.mubr.f32.gmra.mrb[0].mxu0 %v24
  %v451 = vpop.f32.mrb[0].mxu0
  %v452 = vadd.f32 %v165, %v451
  %v453 = vpop.f32.mrb[0].mxu0
  %454 = vmatprep.mubr.f32.mxu0 %v187
  %455 = vmatmul.mubr.f32.gmra.mrb[0].mxu0 %v26
  %v456 = vpop.f32.mrb[0].mxu0
  %v457 = vadd.f32 %v165, %v456
  %v458 = vpop.f32.mrb[0].mxu0
  %459 = vmatprep.mubr.f32.mxu0 %v190
  %460 = vmatmul.mubr.f32.gmra.mrb[0].mxu0 %v28
  %v461 = vpop.f32.mrb[0].mxu0
  %v462 = vadd.f32 %v165, %v461
  %v463 = vpop.f32.mrb[0].mxu0
  %464 = vmatprep.mubr.f32.mxu0 %v193
  %465 = vmatmul.mubr.f32.gmra.mrb[0].mxu0 %v30
  %v466 = vpop.f32.mrb[0].mxu0
  %v467 = vadd.f32 %v165, %v466
  %v468 = vpop.f32.mrb[0].mxu0
  %469 = vmatprep.mubr.f32.mxu0 %v196
  %470 = vmatmul.mubr.f32.gmra.mrb[0].mxu0 %v32
  %v471 = vpop.f32.mrb[0].mxu0
  %v472 = vadd.f32 %v165, %v471
  %v473 = vpop.f32.mrb[0].mxu0
  %474 = vmatprep.mubr.f32.mxu0 %v199
  %475 = vmatmul.mubr.f32.gmra.mrb[0].mxu0 %v34
  %v476 = vpop.f32.mrb[0].mxu0
  %v477 = vadd.f32 %v165, %v476
  %v478 = vpop.f32.mrb[0].mxu0
  %479 = vmatprep.mubr.f32.mxu0 %v202
  %480 = vmatmul.mubr.f32.gmra.mrb[0].mxu0 %v36
  %v481 = vpop.f32.mrb[0].mxu0
  %v482 = vadd.f32 %v165, %v481
  %v483 = vpop.f32.mrb[0].mxu0
  %484 = vmatprep.mubr.f32.mxu0 %v205
  %485 = vmatmul.mubr.f32.gmra.mrb[0].mxu0 %v38
  %v486 = vpop.f32.mrb[0].mxu0
  %v487 = vadd.f32 %v165, %v486
  %v488 = vpop.f32.mrb[0].mxu0
  %489 = vmatprep.mubr.f32.mxu0 %v208
  %490 = vmatmul.mubr.f32.gmra.mrb[0].mxu0 %v40
  %v491 = vpop.f32.mrb[0].mxu0
  %v492 = vadd.f32 %v165, %v491
  %v493 = vpop.f32.mrb[0].mxu0
  %494 = vmatprep.mubr.f32.mxu0 %v211
  %495 = vmatmul.mubr.f32.gmra.mrb[0].mxu0 %v42
  %v496 = vpop.f32.mrb[0].mxu0
  %v497 = vadd.f32 %v165, %v496
  %v498 = vpop.f32.mrb[0].mxu0
  %499 = vmatprep.mubr.f32.mxu0 %v214
  %500 = vmatmul.mubr.f32.gmra.mrb[0].mxu0 %v44
  %v501 = vpop.f32.mrb[0].mxu0
  %v502 = vadd.f32 %v165, %v501
  %v503 = vpop.f32.mrb[0].mxu0
  %504 = vmatprep.mubr.f32.mxu0 %v217
  %505 = vmatmul.mubr.f32.gmra.mrb[0].mxu0 %v46
  %v506 = vpop.f32.mrb[0].mxu0
  %v507 = vadd.f32 %v165, %v506
  %v508 = vpop.f32.mrb[0].mxu0
  %509 = vmatprep.mubr.f32.mxu0 %v220
  %510 = vmatmul.mubr.f32.gmra.mrb[0].mxu0 %v48
  %v511 = vpop.f32.mrb[0].mxu0
  %v512 = vadd.f32 %v165, %v511
  %v513 = vpop.f32.mrb[0].mxu0
  %514 = vmatprep.mubr.f32.mxu0 %v223
  %515 = vmatmul.mubr.f32.gmra.mrb[0].mxu0 %v50
  %v516 = vpop.f32.mrb[0].mxu0
  %v517 = vadd.f32 %v165, %v516
  %v518 = vpop.f32.mrb[0].mxu0
  %519 = vmatprep.mubr.f32.mxu0 %v226
  %520 = vmatmul.mubr.f32.gmra.mrb[0].mxu0 %v52
  %v521 = vpop.f32.mrb[0].mxu0
  %v522 = vadd.f32 %v165, %v521
  %v523 = vpop.f32.mrb[0].mxu0
  %524 = vmatprep.mubr.f32.mxu0 %v229
  %525 = vmatmul.mubr.f32.gmra.mrb[0].mxu0 %v54
  %v526 = vpop.f32.mrb[0].mxu0
  %v527 = vadd.f32 %v165, %v526
  %v528 = vpop.f32.mrb[0].mxu0
  %529 = vmatprep.mubr.f32.mxu0 %v232
  %530 = vmatmul.mubr.f32.gmra.mrb[0].mxu0 %v56
  %v531 = vpop.f32.mrb[0].mxu0
  %v532 = vadd.f32 %v165, %v531
  %v533 = vpop.f32.mrb[0].mxu0
  %534 = vmatprep.mubr.f32.mxu0 %v235
  %535 = vmatmul.mubr.f32.gmra.mrb[0].mxu0 %v58
  %v536 = vpop.f32.mrb[0].mxu0
  %v537 = vadd.f32 %v165, %v536
  %v538 = vpop.f32.mrb[0].mxu0
  %539 = vmatprep.mubr.f32.mxu0 %v238
  %540 = vmatmul.mubr.f32.gmra.mrb[0].mxu0 %v60
  %v541 = vpop.f32.mrb[0].mxu0
  %v542 = vadd.f32 %v165, %v541
  %v543 = vpop.f32.mrb[0].mxu0
  %544 = vmatprep.mubr.f32.mxu0 %v241
  %545 = vmatmul.mubr.f32.gmra.mrb[0].mxu0 %v62
  %v546 = vpop.f32.mrb[0].mxu0
  %v547 = vadd.f32 %v165, %v546
  %v548 = vpop.f32.mrb[0].mxu0
  %549 = vmatprep.mubr.f32.mxu0 %v244
  %550 = vmatmul.mubr.f32.gmra.mrb[0].mxu0 %v64
  %v551 = vpop.f32.mrb[0].mxu0
  %v552 = vadd.f32 %v165, %v551
  %v553 = vpop.f32.mrb[0].mxu0
  %554 = vmatprep.mubr.f32.mxu0 %v247
  %555 = vmatmul.mubr.f32.gmra.mrb[0].mxu0 %v66
  %v556 = vpop.f32.mrb[0].mxu0
  %v557 = vadd.f32 %v165, %v556
  %v558 = vpop.f32.mrb[0].mxu0
  %559 = vmatprep.mubr.f32.mxu0 %v250
  %560 = vmatmul.mubr.f32.gmra.mrb[0].mxu0 %v68
  %v561 = vpop.f32.mrb[0].mxu0
  %v562 = vadd.f32 %v165, %v561
  %v563 = vpop.f32.mrb[0].mxu0
  %564 = vmatprep.mubr.f32.mxu0 %v253
  %565 = vmatmul.mubr.f32.gmra.mrb[0].mxu0 %v70
  %v566 = vpop.f32.mrb[0].mxu0
  %v567 = vadd.f32 %v165, %v566
  %v568 = vpop.f32.mrb[0].mxu0
  %569 = vmatprep.mubr.f32.mxu0 %v256
  %570 = vmatmul.mubr.f32.gmra.mrb[0].mxu0 %v72
  %v571 = vpop.f32.mrb[0].mxu0
  %v572 = vadd.f32 %v165, %v571
  %v573 = vpop.f32.mrb[0].mxu0
  %574 = vmatprep.mubr.f32.mxu0 %v259
  %575 = vmatmul.mubr.f32.gmra.mrb[0].mxu0 %v74
  %v576 = vpop.f32.mrb[0].mxu0
  %v577 = vadd.f32 %v165, %v576
  %v578 = vpop.f32.mrb[0].mxu0
  %579 = vmatprep.mubr.f32.mxu0 %v262
  %580 = vmatmul.mubr.f32.gmra.mrb[0].mxu0 %v76
  %v581 = vpop.f32.mrb[0].mxu0
  %v582 = vadd.f32 %v165, %v581
  %v583 = vpop.f32.mrb[0].mxu0
  %584 = vmatprep.mubr.f32.mxu0 %v265
  %585 = vmatmul.mubr.f32.gmra.mrb[0].mxu0 %v78
  %v586 = vpop.f32.mrb[0].mxu0
  %v587 = vadd.f32 %v165, %v586
  %v588 = vpop.f32.mrb[0].mxu0
  %589 = vmatprep.mubr.f32.mxu0 %v268
  %590 = vmatmul.mubr.f32.gmra.mrb[0].mxu0 %v80
  %v591 = vpop.f32.mrb[0].mxu0
  %v592 = vadd.f32 %v165, %v591
  %v593 = vpop.f32.mrb[0].mxu0
  %594 = vmatprep.mubr.f32.mxu0 %v271
  %595 = vmatmul.mubr.f32.gmra.mrb[0].mxu0 %v82
  %v596 = vpop.f32.mrb[0].mxu0
  %v597 = vadd.f32 %v165, %v596
  %v598 = vpop.f32.mrb[0].mxu0
  %599 = vmatprep.mubr.f32.mxu0 %v274
  %600 = vmatmul.mubr.f32.gmra.mrb[0].mxu0 %v84
  %v601 = vpop.f32.mrb[0].mxu0
  %v602 = vadd.f32 %v165, %v601
  %v603 = vpop.f32.mrb[0].mxu0
  %604 = vmatprep.mubr.f32.mxu0 %v277
  %605 = vmatmul.mubr.f32.gmra.mrb[0].mxu0 %v86
  %v606 = vpop.f32.mrb[0].mxu0
  %v607 = vadd.f32 %v165, %v606
  %v608 = vpop.f32.mrb[0].mxu0
  %609 = vmatprep.mubr.f32.mxu0 %v280
  %610 = vmatmul.mubr.f32.gmra.mrb[0].mxu0 %v88
  %v611 = vpop.f32.mrb[0].mxu0
  %v612 = vadd.f32 %v165, %v611
  %v613 = vpop.f32.mrb[0].mxu0
  %614 = vmatprep.mubr.f32.mxu0 %v283
  %615 = vmatmul.mubr.f32.gmra.mrb[0].mxu0 %v90
  %v616 = vpop.f32.mrb[0].mxu0
  %v617 = vadd.f32 %v165, %v616
  %v618 = vpop.f32.mrb[0].mxu0
  %619 = vmatprep.mubr.f32.mxu0 %v286
  %620 = vmatmul.mubr.f32.gmra.mrb[0].mxu0 %v92
  %v621 = vpop.f32.mrb[0].mxu0
  %v622 = vadd.f32 %v165, %v621
  %v623 = vpop.f32.mrb[0].mxu0
  %624 = vmatprep.mubr.f32.mxu0 %v289
  %625 = vmatmul.mubr.f32.gmra.mrb[0].mxu0 %v94
  %v626 = vpop.f32.mrb[0].mxu0
  %v627 = vadd.f32 %v165, %v626
  %v628 = vpop.f32.mrb[0].mxu0
  %629 = vmatprep.mubr.f32.mxu0 %v292
  %630 = vmatmul.mubr.f32.gmra.mrb[0].mxu0 %v96
  %v631 = vpop.f32.mrb[0].mxu0
  %v632 = vadd.f32 %v165, %v631
  %v633 = vpop.f32.mrb[0].mxu0
  %634 = vmatprep.mubr.f32.mxu0 %v295
  %635 = vmatmul.mubr.f32.gmra.mrb[0].mxu0 %v98
  %v636 = vpop.f32.mrb[0].mxu0
  %v637 = vadd.f32 %v165, %v636
  %v638 = vpop.f32.mrb[0].mxu0
  %639 = vmatprep.mubr.f32.mxu0 %v298
  %640 = vmatmul.mubr.f32.gmra.mrb[0].mxu0 %v100
  %v641 = vpop.f32.mrb[0].mxu0
  %v642 = vadd.f32 %v165, %v641
  %v643 = vpop.f32.mrb[0].mxu0
  %644 = vmatprep.mubr.f32.mxu0 %v301
  %645 = vmatmul.mubr.f32.gmra.mrb[0].mxu0 %v102
  %v646 = vpop.f32.mrb[0].mxu0
  %v647 = vadd.f32 %v165, %v646
  %v648 = vpop.f32.mrb[0].mxu0
  %649 = vmatprep.mubr.f32.mxu0 %v304
  %650 = vmatmul.mubr.f32.gmra.mrb[0].mxu0 %v104
  %v651 = vpop.f32.mrb[0].mxu0
  %v652 = vadd.f32 %v165, %v651
  %v653 = vpop.f32.mrb[0].mxu0
  %654 = vmatprep.mubr.f32.mxu0 %v307
  %655 = vmatmul.mubr.f32.gmra.mrb[0].mxu0 %v106
  %v656 = vpop.f32.mrb[0].mxu0
  %v657 = vadd.f32 %v165, %v656
  %v658 = vpop.f32.mrb[0].mxu0
  %659 = vmatprep.mubr.f32.mxu0 %v310
  %660 = vmatmul.mubr.f32.gmra.mrb[0].mxu0 %v108
  %v661 = vpop.f32.mrb[0].mxu0
  %v662 = vadd.f32 %v165, %v661
  %v663 = vpop.f32.mrb[0].mxu0
  %664 = vmatprep.mubr.f32.mxu0 %v313
  %665 = vmatmul.mubr.f32.gmra.mrb[0].mxu0 %v110
  %v666 = vpop.f32.mrb[0].mxu0
  %v667 = vadd.f32 %v165, %v666
  %v668 = vpop.f32.mrb[0].mxu0
  %669 = vmatprep.mubr.f32.mxu0 %v316
  %670 = vmatmul.mubr.f32.gmra.mrb[0].mxu0 %v112
  %v671 = vpop.f32.mrb[0].mxu0
  %v672 = vadd.f32 %v165, %v671
  %v673 = vpop.f32.mrb[0].mxu0
  %674 = vmatprep.mubr.f32.mxu0 %v319
  %675 = vmatmul.mubr.f32.gmra.mrb[0].mxu0 %v114
  %v676 = vpop.f32.mrb[0].mxu0
  %v677 = vadd.f32 %v165, %v676
  %v678 = vpop.f32.mrb[0].mxu0
  %679 = vmatprep.mubr.f32.mxu0 %v322
  %680 = vmatmul.mubr.f32.gmra.mrb[0].mxu0 %v116
  %v681 = vpop.f32.mrb[0].mxu0
  %v682 = vadd.f32 %v165, %v681
  %v683 = vpop.f32.mrb[0].mxu0
  %684 = vmatprep.mubr.f32.mxu0 %v325
  %685 = vmatmul.mubr.f32.gmra.mrb[0].mxu0 %v118
  %v686 = vpop.f32.mrb[0].mxu0
  %v687 = vadd.f32 %v165, %v686
  %v688 = vpop.f32.mrb[0].mxu0
  %689 = vmatprep.mubr.f32.mxu0 %v328
  %690 = vmatmul.mubr.f32.gmra.mrb[0].mxu0 %v120
  %v691 = vpop.f32.mrb[0].mxu0
  %v692 = vadd.f32 %v165, %v691
  %v693 = vpop.f32.mrb[0].mxu0
  %694 = vmatprep.mubr.f32.mxu0 %v331
  %695 = vmatmul.mubr.f32.gmra.mrb[0].mxu0 %v122
  %v696 = vpop.f32.mrb[0].mxu0
  %v697 = vadd.f32 %v165, %v696
  %v698 = vpop.f32.mrb[0].mxu0
  %699 = vmatprep.mubr.f32.mxu0 %v334
  %700 = vmatmul.mubr.f32.gmra.mrb[0].mxu0 %v124
  %v701 = vpop.f32.mrb[0].mxu0
  %v702 = vadd.f32 %v165, %v701
  %v703 = vpop.f32.mrb[0].mxu0
  %704 = vmatprep.mubr.f32.mxu0 %v337
  %705 = vmatmul.mubr.f32.gmra.mrb[0].mxu0 %v126
  %v706 = vpop.f32.mrb[0].mxu0
  %v707 = vadd.f32 %v165, %v706
  %v708 = vpop.f32.mrb[0].mxu0
  %709 = vmatprep.mubr.f32.mxu0 %v340
  %710 = vmatmul.mubr.f32.gmra.mrb[0].mxu0 %v128
  %v711 = vpop.f32.mrb[0].mxu0
  %v712 = vadd.f32 %v165, %v711
  %v713 = vpop.f32.mrb[0].mxu0
  %714 = vmatprep.mubr.f32.mxu0 %v343
  %715 = vmatmul.mubr.f32.gmra.mrb[0].mxu0 %v130
  %v716 = vpop.f32.mrb[0].mxu0
  %v717 = vadd.f32 %v165, %v716
  %v718 = vpop.f32.mrb[0].mxu0
  %719 = vmatprep.mubr.f32.mxu0 %v346
  %720 = vmatmul.mubr.f32.gmra.mrb[0].mxu0 %v132
  %v721 = vpop.f32.mrb[0].mxu0
  %v722 = vadd.f32 %v165, %v721
  %v723 = vpop.f32.mrb[0].mxu0
  %724 = vmatprep.mubr.f32.mxu0 %v349
  %725 = vmatmul.mubr.f32.gmra.mrb[0].mxu0 %v134
  %v726 = vpop.f32.mrb[0].mxu0
  %v727 = vadd.f32 %v165, %v726
  %v728 = vpop.f32.mrb[0].mxu0
  %729 = vmatprep.mubr.f32.mxu0 %v352
  %730 = vmatmul.mubr.f32.gmra.mrb[0].mxu0 %v136
  %v731 = vpop.f32.mrb[0].mxu0
  %v732 = vadd.f32 %v165, %v731
  %v733 = vpop.f32.mrb[0].mxu0
  %734 = vmatprep.mubr.f32.mxu0 %v355
  %735 = vmatmul.mubr.f32.gmra.mrb[0].mxu0 %v138
  %v736 = vpop.f32.mrb[0].mxu0
  %v737 = vadd.f32 %v165, %v736
  %v738 = vpop.f32.mrb[0].mxu0
  %739 = vmatprep.mubr.f32.mxu0 %v358
  %740 = vmatmul.mubr.f32.gmra.mrb[0].mxu0 %v140
  %v741 = vpop.f32.mrb[0].mxu0
  %v742 = vadd.f32 %v165, %v741
  %v743 = vpop.f32.mrb[0].mxu0
  %744 = vdwg.mxu0
  %v745 = vmax.f32 %v427, 0.0
  %v746 = vmax.f32 %v432, 0.0
  %v747 = vmax.f32 %v437, 0.0
  %v748 = vmax.f32 %v442, 0.0
  %v749 = vmax.f32 %v447, 0.0
  %v750 = vmax.f32 %v452, 0.0
  %v751 = vmax.f32 %v457, 0.0
  %v752 = vmax.f32 %v462, 0.0
  %v753 = vmax.f32 %v467, 0.0
  %v754 = vmax.f32 %v472, 0.0
  %v755 = vmax.f32 %v477, 0.0
  %v756 = vmax.f32 %v482, 0.0
  %v757 = vmax.f32 %v487, 0.0
  %v758 = vmax.f32 %v492, 0.0
  %v759 = vmax.f32 %v497, 0.0
  %v760 = vmax.f32 %v502, 0.0
  %v761 = vmax.f32 %v507, 0.0
  %v762 = vmax.f32 %v512, 0.0
  %v763 = vmax.f32 %v517, 0.0
  %v764 = vmax.f32 %v522, 0.0
  %v765 = vmax.f32 %v527, 0.0
  %v766 = vmax.f32 %v532, 0.0
  %v767 = vmax.f32 %v537, 0.0
  %v768 = vmax.f32 %v542, 0.0
  %v769 = vmax.f32 %v547, 0.0
  %v770 = vmax.f32 %v552, 0.0
  %v771 = vmax.f32 %v557, 0.0
  %v772 = vmax.f32 %v562, 0.0
  %v773 = vmax.f32 %v567, 0.0
  %v774 = vmax.f32 %v572, 0.0
  %v775 = vmax.f32 %v577, 0.0
  %v776 = vmax.f32 %v582, 0.0
  %v777 = vmax.f32 %v587, 0.0
  %v778 = vmax.f32 %v592, 0.0
  %v779 = vmax.f32 %v597, 0.0
  %v780 = vmax.f32 %v602, 0.0
  %v781 = vmax.f32 %v607, 0.0
  %v782 = vmax.f32 %v612, 0.0
  %v783 = vmax.f32 %v617, 0.0
  %v784 = vmax.f32 %v622, 0.0
  %v785 = vmax.f32 %v627, 0.0
  %v786 = vmax.f32 %v632, 0.0
  %v787 = vmax.f32 %v637, 0.0
  %v788 = vmax.f32 %v642, 0.0
  %v789 = vmax.f32 %v647, 0.0
  %v790 = vmax.f32 %v652, 0.0
  %v791 = vmax.f32 %v657, 0.0
  %v792 = vmax.f32 %v662, 0.0
  %v793 = vmax.f32 %v667, 0.0
  %v794 = vmax.f32 %v672, 0.0
  %v795 = vmax.f32 %v677, 0.0
  %v796 = vmax.f32 %v682, 0.0
  %v797 = vmax.f32 %v687, 0.0
  %v798 = vmax.f32 %v692, 0.0
  %v799 = vmax.f32 %v697, 0.0
  %v800 = vmax.f32 %v702, 0.0
  %v801 = vmax.f32 %v707, 0.0
  %v802 = vmax.f32 %v712, 0.0
  %v803 = vmax.f32 %v717, 0.0
  %v804 = vmax.f32 %v722, 0.0
  %v805 = vmax.f32 %v727, 0.0
  %v806 = vmax.f32 %v732, 0.0
  %v807 = vmax.f32 %v737, 0.0
  %v808 = vmax.f32 %v742, 0.0
  %vm809 = vcmask 261120
  %810 = vst.msk [vmem:[%s3] sm:$0xff] %vm809, %v745
  %811 = vst.msk [vmem:[%s3 + $0x8] sm:$0xff] %vm809, %v746
  %812 = vst.msk [vmem:[%s3 + $0x10] sm:$0xff] %vm809, %v747
  %813 = vst.msk [vmem:[%s3 + $0x18] sm:$0xff] %vm809, %v748
  %814 = vst.msk [vmem:[%s3 + $0x20] sm:$0xff] %vm809, %v749
  %815 = vst.msk [vmem:[%s3 + $0x28] sm:$0xff] %vm809, %v750
  %816 = vst.msk [vmem:[%s3 + $0x30] sm:$0xff] %vm809, %v751
  %817 = vst.msk [vmem:[%s3 + $0x38] sm:$0xff] %vm809, %v752
  %818 = vst.msk [vmem:[%s3 + $0x40] sm:$0xff] %vm809, %v753
  %819 = vst.msk [vmem:[%s3 + $0x48] sm:$0xff] %vm809, %v754
  %820 = vst.msk [vmem:[%s3 + $0x50] sm:$0xff] %vm809, %v755
  %821 = vst.msk [vmem:[%s3 + $0x58] sm:$0xff] %vm809, %v756
  %822 = vst.msk [vmem:[%s3 + $0x60] sm:$0xff] %vm809, %v757
  %823 = vst.msk [vmem:[%s3 + $0x68] sm:$0xff] %vm809, %v758
  %824 = vst.msk [vmem:[%s3 + $0x70] sm:$0xff] %vm809, %v759
  %825 = vst.msk [vmem:[%s3 + $0x78] sm:$0xff] %vm809, %v760
  %826 = vst.msk [vmem:[%s3 + $0x80] sm:$0xff] %vm809, %v761
  %827 = vst.msk [vmem:[%s3 + $0x88] sm:$0xff] %vm809, %v762
  %828 = vst.msk [vmem:[%s3 + $0x90] sm:$0xff] %vm809, %v763
  %829 = vst.msk [vmem:[%s3 + $0x98] sm:$0xff] %vm809, %v764
  %830 = vst.msk [vmem:[%s3 + $0xa0] sm:$0xff] %vm809, %v765
  %831 = vst.msk [vmem:[%s3 + $0xa8] sm:$0xff] %vm809, %v766
  %832 = vst.msk [vmem:[%s3 + $0xb0] sm:$0xff] %vm809, %v767
  %833 = vst.msk [vmem:[%s3 + $0xb8] sm:$0xff] %vm809, %v768
  %834 = vst.msk [vmem:[%s3 + $0xc0] sm:$0xff] %vm809, %v769
  %835 = vst.msk [vmem:[%s3 + $0xc8] sm:$0xff] %vm809, %v770
  %836 = vst.msk [vmem:[%s3 + $0xd0] sm:$0xff] %vm809, %v771
  %837 = vst.msk [vmem:[%s3 + $0xd8] sm:$0xff] %vm809, %v772
  %838 = vst.msk [vmem:[%s3 + $0xe0] sm:$0xff] %vm809, %v773
  %839 = vst.msk [vmem:[%s3 + $0xe8] sm:$0xff] %vm809, %v774
  %840 = vst.msk [vmem:[%s3 + $0xf0] sm:$0xff] %vm809, %v775
  %841 = vst.msk [vmem:[%s3 + $0xf8] sm:$0xff] %vm809, %v776
  %842 = vst.msk [vmem:[%s3 + $0x100] sm:$0xff] %vm809, %v777
  %843 = vst.msk [vmem:[%s3 + $0x108] sm:$0xff] %vm809, %v778
  %844 = vst.msk [vmem:[%s3 + $0x110] sm:$0xff] %vm809, %v779
  %845 = vst.msk [vmem:[%s3 + $0x118] sm:$0xff] %vm809, %v780
  %846 = vst.msk [vmem:[%s3 + $0x120] sm:$0xff] %vm809, %v781
  %847 = vst.msk [vmem:[%s3 + $0x128] sm:$0xff] %vm809, %v782
  %848 = vst.msk [vmem:[%s3 + $0x130] sm:$0xff] %vm809, %v783
  %849 = vst.msk [vmem:[%s3 + $0x138] sm:$0xff] %vm809, %v784
  %850 = vst.msk [vmem:[%s3 + $0x140] sm:$0xff] %vm809, %v785
  %851 = vst.msk [vmem:[%s3 + $0x148] sm:$0xff] %vm809, %v786
  %852 = vst.msk [vmem:[%s3 + $0x150] sm:$0xff] %vm809, %v787
  %853 = vst.msk [vmem:[%s3 + $0x158] sm:$0xff] %vm809, %v788
  %854 = vst.msk [vmem:[%s3 + $0x160] sm:$0xff] %vm809, %v789
  %855 = vst.msk [vmem:[%s3 + $0x168] sm:$0xff] %vm809, %v790
  %856 = vst.msk [vmem:[%s3 + $0x170] sm:$0xff] %vm809, %v791
  %857 = vst.msk [vmem:[%s3 + $0x178] sm:$0xff] %vm809, %v792
  %858 = vst.msk [vmem:[%s3 + $0x180] sm:$0xff] %vm809, %v793
  %859 = vst.msk [vmem:[%s3 + $0x188] sm:$0xff] %vm809, %v794
  %860 = vst.msk [vmem:[%s3 + $0x190] sm:$0xff] %vm809, %v795
  %861 = vst.msk [vmem:[%s3 + $0x198] sm:$0xff] %vm809, %v796
  %862 = vst.msk [vmem:[%s3 + $0x1a0] sm:$0xff] %vm809, %v797
  %863 = vst.msk [vmem:[%s3 + $0x1a8] sm:$0xff] %vm809, %v798
  %864 = vst.msk [vmem:[%s3 + $0x1b0] sm:$0xff] %vm809, %v799
  %865 = vst.msk [vmem:[%s3 + $0x1b8] sm:$0xff] %vm809, %v800
  %866 = vst.msk [vmem:[%s3 + $0x1c0] sm:$0xff] %vm809, %v801
  %867 = vst.msk [vmem:[%s3 + $0x1c8] sm:$0xff] %vm809, %v802
  %868 = vst.msk [vmem:[%s3 + $0x1d0] sm:$0xff] %vm809, %v803
  %869 = vst.msk [vmem:[%s3 + $0x1d8] sm:$0xff] %vm809, %v804
  %870 = vst.msk [vmem:[%s3 + $0x1e0] sm:$0xff] %vm809, %v805
  %871 = vst.msk [vmem:[%s3 + $0x1e8] sm:$0xff] %vm809, %v806
  %872 = vst.msk [vmem:[%s3 + $0x1f0] sm:$0xff] %vm809, %v807
  %873 = vst.msk [vmem:[%s3 + $0x1f8] sm:$0xff] %vm809, %v808
  // Predicated region
  $region14: #{forward.6} parent=0 // pred_check
    _
  $region15: #{forward.6} parent=0 // pred_check_branch
    %875 = sbr.rel (0) target = $region17
  $region16: #{forward.6} parent=0 // pred_region
    _
  $region17: #{forward.6} parent=0 // pred_fallthru
    _
  // Predicated region
  $region18: #{forward.6} parent=0 // pred_check
    _
  $region19: #{forward.6} parent=0 // pred_check_branch
    %877 = sbr.rel (0) target = $region21
  $region20: #{forward.6} parent=0 // pred_region
    _
  $region21: #{forward.6} parent=0 // pred_fallthru
    _

// kernel: forward.7
$region0: #{forward.7}
  #allocation0 [shape = 'u32[]', space=smem, size = 0x4, offset = 0x4, fixed_abs, tag = 'smem constant byte address 0x4 - core index']
  #allocation1 [shape = 'u32[144,128]{1,0:T(1,128)}', space=vmem, size = 0x12000, scoped, tag = 'internal scratch']
  %s0 = inlined_call_operand.vmem [shape: f32[128,800], index: 0, kind: input, shape index: {}]
  %s1 = inlined_call_operand.vmem [shape: f32[800,64], index: 1, kind: input, shape index: {}]
  %s2 = inlined_call_operand.vmem [shape: f32[1,64], index: 2, kind: input, shape index: {}]
  %s3 = inlined_call_operand.vmem [shape: f32[128,64], index: 3, kind: output, shape index: {}]
  %s4 = sld [smem:[#allocation0]]
  $region22: #{forward.7} parent=0
    _
  %s6 = ssub.s32 1, %s4
  %s7 = scalar_select 0, %s6, %s4
  // Predicated region
  $region2: #{forward.7} parent=0 // pred_check
    _
  $region3: #{forward.7} parent=0 // pred_check_branch
    %9 = sbr.rel (0) target = $region5
  $region4: #{forward.7} parent=0 // pred_region
    _
  $region5: #{forward.7} parent=0 // pred_fallthru
    _
  // Predicated region
  $region6: #{forward.7} parent=0 // pred_check
    _
  $region7: #{forward.7} parent=0 // pred_check_branch
    %11 = sbr.rel (0) target = $region9
  $region8: #{forward.7} parent=0 // pred_region
    _
  $region9: #{forward.7} parent=0 // pred_fallthru
    _
  // Predicated region
  $region10: #{forward.7} parent=0 // pred_check
    _
  $region11: #{forward.7} parent=0 // pred_check_branch
    %13 = sbr.rel (0) target = $region13
  $region12: #{forward.7} parent=0 // pred_region
    _
  $region13: #{forward.7} parent=0 // pred_fallthru
    _
  %v14 = vld [vmem:[%s0] sm:$0xff]
  %v15 = vld [vmem:[%s0 + $0x8] sm:$0xff]
  %v16 = vld [vmem:[%s0 + $0x10] sm:$0xff]
  %v17 = vld [vmem:[%s0 + $0x18] sm:$0xff]
  %v18 = vld [vmem:[%s0 + $0x20] sm:$0xff]
  %v19 = vld [vmem:[%s0 + $0x28] sm:$0xff]
  %v20 = vld [vmem:[%s0 + $0x30] sm:$0xff]
  %v21 = vld [vmem:[%s0 + $0x38] sm:$0xff]
  %v22 = vld [vmem:[%s0 + $0x40] sm:$0xff]
  %v23 = vld [vmem:[%s0 + $0x48] sm:$0xff]
  %v24 = vld [vmem:[%s0 + $0x50] sm:$0xff]
  %v25 = vld [vmem:[%s0 + $0x58] sm:$0xff]
  %v26 = vld [vmem:[%s0 + $0x60] sm:$0xff]
  %v27 = vld [vmem:[%s0 + $0x68] sm:$0xff]
  %v28 = vld [vmem:[%s0 + $0x70] sm:$0xff]
  %v29 = vld [vmem:[%s0 + $0x78] sm:$0xff]
  %v30 = vld [vmem:[%s0 + $0x80] sm:$0xff]
  %v31 = vld [vmem:[%s0 + $0x88] sm:$0xff]
  %v32 = vld [vmem:[%s0 + $0x90] sm:$0xff]
  %v33 = vld [vmem:[%s0 + $0x98] sm:$0xff]
  %v34 = vld [vmem:[%s0 + $0xa0] sm:$0xff]
  %v35 = vld [vmem:[%s0 + $0xa8] sm:$0xff]
  %v36 = vld [vmem:[%s0 + $0xb0] sm:$0xff]
  %v37 = vld [vmem:[%s0 + $0xb8] sm:$0xff]
  %v38 = vld [vmem:[%s0 + $0xc0] sm:$0xff]
  %v39 = vld [vmem:[%s0 + $0xc8] sm:$0xff]
  %v40 = vld [vmem:[%s0 + $0xd0] sm:$0xff]
  %v41 = vld [vmem:[%s0 + $0xd8] sm:$0xff]
  %v42 = vld [vmem:[%s0 + $0xe0] sm:$0xff]
  %v43 = vld [vmem:[%s0 + $0xe8] sm:$0xff]
  %v44 = vld [vmem:[%s0 + $0xf0] sm:$0xff]
  %v45 = vld [vmem:[%s0 + $0xf8] sm:$0xff]
  %v46 = vld [vmem:[%s0 + $0x100] sm:$0xff]
  %v47 = vld [vmem:[%s0 + $0x108] sm:$0xff]
  %v48 = vld [vmem:[%s0 + $0x110] sm:$0xff]
  %v49 = vld [vmem:[%s0 + $0x118] sm:$0xff]
  %v50 = vld [vmem:[%s0 + $0x120] sm:$0xff]
  %v51 = vld [vmem:[%s0 + $0x128] sm:$0xff]
  %v52 = vld [vmem:[%s0 + $0x130] sm:$0xff]
  %v53 = vld [vmem:[%s0 + $0x138] sm:$0xff]
  %v54 = vld [vmem:[%s0 + $0x140] sm:$0xff]
  %v55 = vld [vmem:[%s0 + $0x148] sm:$0xff]
  %v56 = vld [vmem:[%s0 + $0x150] sm:$0xff]
  %v57 = vld [vmem:[%s0 + $0x158] sm:$0xff]
  %v58 = vld [vmem:[%s0 + $0x160] sm:$0xff]
  %v59 = vld [vmem:[%s0 + $0x168] sm:$0xff]
  %v60 = vld [vmem:[%s0 + $0x170] sm:$0xff]
  %v61 = vld [vmem:[%s0 + $0x178] sm:$0xff]
  %v62 = vld [vmem:[%s0 + $0x180] sm:$0xff]
  %v63 = vld [vmem:[%s0 + $0x188] sm:$0xff]
  %v64 = vld [vmem:[%s0 + $0x190] sm:$0xff]
  %v65 = vld [vmem:[%s0 + $0x198] sm:$0xff]
  %v66 = vld [vmem:[%s0 + $0x1a0] sm:$0xff]
  %v67 = vld [vmem:[%s0 + $0x1a8] sm:$0xff]
  %v68 = vld [vmem:[%s0 + $0x1b0] sm:$0xff]
  %v69 = vld [vmem:[%s0 + $0x1b8] sm:$0xff]
  %v70 = vld [vmem:[%s0 + $0x1c0] sm:$0xff]
  %v71 = vld [vmem:[%s0 + $0x1c8] sm:$0xff]
  %v72 = vld [vmem:[%s0 + $0x1d0] sm:$0xff]
  %v73 = vld [vmem:[%s0 + $0x1d8] sm:$0xff]
  %v74 = vld [vmem:[%s0 + $0x1e0] sm:$0xff]
  %v75 = vld [vmem:[%s0 + $0x1e8] sm:$0xff]
  %v76 = vld [vmem:[%s0 + $0x1f0] sm:$0xff]
  %v77 = vld [vmem:[%s0 + $0x1f8] sm:$0xff]
  %v78 = vld [vmem:[%s0 + $0x200] sm:$0xff]
  %v79 = vld [vmem:[%s0 + $0x208] sm:$0xff]
  %v80 = vld [vmem:[%s0 + $0x210] sm:$0xff]
  %v81 = vld [vmem:[%s0 + $0x218] sm:$0xff]
  %v82 = vld [vmem:[%s0 + $0x220] sm:$0xff]
  %v83 = vld [vmem:[%s0 + $0x228] sm:$0xff]
  %v84 = vld [vmem:[%s0 + $0x230] sm:$0xff]
  %v85 = vld [vmem:[%s0 + $0x238] sm:$0xff]
  %v86 = vld [vmem:[%s0 + $0x240] sm:$0xff]
  %v87 = vld [vmem:[%s0 + $0x248] sm:$0xff]
  %v88 = vld [vmem:[%s0 + $0x250] sm:$0xff]
  %v89 = vld [vmem:[%s0 + $0x258] sm:$0xff]
  %v90 = vld [vmem:[%s0 + $0x260] sm:$0xff]
  %v91 = vld [vmem:[%s0 + $0x268] sm:$0xff]
  %v92 = vld [vmem:[%s0 + $0x270] sm:$0xff]
  %v93 = vld [vmem:[%s0 + $0x278] sm:$0xff]
  %v94 = vld [vmem:[%s0 + $0x280] sm:$0xff]
  %v95 = vld [vmem:[%s0 + $0x288] sm:$0xff]
  %v96 = vld [vmem:[%s0 + $0x290] sm:$0xff]
  %v97 = vld [vmem:[%s0 + $0x298] sm:$0xff]
  %v98 = vld [vmem:[%s0 + $0x2a0] sm:$0xff]
  %v99 = vld [vmem:[%s0 + $0x2a8] sm:$0xff]
  %v100 = vld [vmem:[%s0 + $0x2b0] sm:$0xff]
  %v101 = vld [vmem:[%s0 + $0x2b8] sm:$0xff]
  %v102 = vld [vmem:[%s0 + $0x2c0] sm:$0xff]
  %v103 = vld [vmem:[%s0 + $0x2c8] sm:$0xff]
  %v104 = vld [vmem:[%s0 + $0x2d0] sm:$0xff]
  %v105 = vld [vmem:[%s0 + $0x2d8] sm:$0xff]
  %v106 = vld [vmem:[%s0 + $0x2e0] sm:$0xff]
  %v107 = vld [vmem:[%s0 + $0x2e8] sm:$0xff]
  %v108 = vld [vmem:[%s0 + $0x2f0] sm:$0xff]
  %v109 = vld [vmem:[%s0 + $0x2f8] sm:$0xff]
  %v110 = vld [vmem:[%s0 + $0x300] sm:$0xff]
  %v111 = vld [vmem:[%s0 + $0x308] sm:$0xff]
  %v112 = vld [vmem:[%s0 + $0x310] sm:$0xff]
  %v113 = vld [vmem:[%s0 + $0x318] sm:$0xff]
  %v114 = vld [vmem:[%s0 + $0x320] sm:$0xff]
  %v115 = vld [vmem:[%s0 + $0x328] sm:$0xff]
  %v116 = vld [vmem:[%s0 + $0x330] sm:$0xff]
  %v117 = vld [vmem:[%s0 + $0x338] sm:$0xff]
  %v118 = vld [vmem:[%s0 + $0x340] sm:$0xff]
  %v119 = vld [vmem:[%s0 + $0x348] sm:$0xff]
  %v120 = vld [vmem:[%s0 + $0x350] sm:$0xff]
  %v121 = vld [vmem:[%s0 + $0x358] sm:$0xff]
  %v122 = vld [vmem:[%s0 + $0x360] sm:$0xff]
  %v123 = vld [vmem:[%s0 + $0x368] sm:$0xff]
  %v124 = vld [vmem:[%s0 + $0x370] sm:$0xff]
  %v125 = vld [vmem:[%s0 + $0x378] sm:$0xff]
  %v126 = vld [vmem:[%s1] sm:$0xff]
  %v127 = vld [vmem:[%s1 + $0x8] sm:$0xff]
  %v128 = vld [vmem:[%s1 + $0x10] sm:$0xff]
  %v129 = vld [vmem:[%s1 + $0x18] sm:$0xff]
  %v130 = vld [vmem:[%s1 + $0x20] sm:$0xff]
  %v131 = vld [vmem:[%s1 + $0x28] sm:$0xff]
  %v132 = vld [vmem:[%s1 + $0x30] sm:$0xff]
  %v133 = vld [vmem:[%s1 + $0x38] sm:$0xff]
  %v134 = vld [vmem:[%s1 + $0x40] sm:$0xff]
  %v135 = vld [vmem:[%s1 + $0x48] sm:$0xff]
  %v136 = vld [vmem:[%s1 + $0x50] sm:$0xff]
  %v137 = vld [vmem:[%s1 + $0x58] sm:$0xff]
  %v138 = vld [vmem:[%s1 + $0x60] sm:$0xff]
  %v139 = vld [vmem:[%s1 + $0x68] sm:$0xff]
  %v140 = vld [vmem:[%s1 + $0x70] sm:$0xff]
  %v141 = vld [vmem:[%s1 + $0x78] sm:$0xff]
  %v142 = vld [vmem:[%s1 + $0x80] sm:$0xff]
  %v143 = vld [vmem:[%s1 + $0x88] sm:$0xff]
  %v144 = vld [vmem:[%s1 + $0x90] sm:$0xff]
  %v145 = vld [vmem:[%s1 + $0x98] sm:$0xff]
  %v146 = vld [vmem:[%s1 + $0xa0] sm:$0xff]
  %v147 = vld [vmem:[%s1 + $0xa8] sm:$0xff]
  %v148 = vld [vmem:[%s1 + $0xb0] sm:$0xff]
  %v149 = vld [vmem:[%s1 + $0xb8] sm:$0xff]
  %v150 = vld [vmem:[%s1 + $0xc0] sm:$0xff]
  %v151 = vld [vmem:[%s1 + $0xc8] sm:$0xff]
  %v152 = vld [vmem:[%s1 + $0xd0] sm:$0xff]
  %v153 = vld [vmem:[%s1 + $0xd8] sm:$0xff]
  %v154 = vld [vmem:[%s1 + $0xe0] sm:$0xff]
  %v155 = vld [vmem:[%s1 + $0xe8] sm:$0xff]
  %v156 = vld [vmem:[%s1 + $0xf0] sm:$0xff]
  %v157 = vld [vmem:[%s1 + $0xf8] sm:$0xff]
  %v158 = vld [vmem:[%s1 + $0x100] sm:$0xff]
  %v159 = vld [vmem:[%s1 + $0x108] sm:$0xff]
  %v160 = vld [vmem:[%s1 + $0x110] sm:$0xff]
  %v161 = vld [vmem:[%s1 + $0x118] sm:$0xff]
  %v162 = vld [vmem:[%s1 + $0x120] sm:$0xff]
  %v163 = vld [vmem:[%s1 + $0x128] sm:$0xff]
  %v164 = vld [vmem:[%s1 + $0x130] sm:$0xff]
  %v165 = vld [vmem:[%s1 + $0x138] sm:$0xff]
  %v166 = vld [vmem:[%s1 + $0x140] sm:$0xff]
  %v167 = vld [vmem:[%s1 + $0x148] sm:$0xff]
  %v168 = vld [vmem:[%s1 + $0x150] sm:$0xff]
  %v169 = vld [vmem:[%s1 + $0x158] sm:$0xff]
  %v170 = vld [vmem:[%s1 + $0x160] sm:$0xff]
  %v171 = vld [vmem:[%s1 + $0x168] sm:$0xff]
  %v172 = vld [vmem:[%s1 + $0x170] sm:$0xff]
  %v173 = vld [vmem:[%s1 + $0x178] sm:$0xff]
  %v174 = vld [vmem:[%s1 + $0x180] sm:$0xff]
  %v175 = vld [vmem:[%s1 + $0x188] sm:$0xff]
  %v176 = vld [vmem:[%s1 + $0x190] sm:$0xff]
  %v177 = vld [vmem:[%s1 + $0x198] sm:$0xff]
  %v178 = vld [vmem:[%s1 + $0x1a0] sm:$0xff]
  %v179 = vld [vmem:[%s1 + $0x1a8] sm:$0xff]
  %v180 = vld [vmem:[%s1 + $0x1b0] sm:$0xff]
  %v181 = vld [vmem:[%s1 + $0x1b8] sm:$0xff]
  %v182 = vld [vmem:[%s1 + $0x1c0] sm:$0xff]
  %v183 = vld [vmem:[%s1 + $0x1c8] sm:$0xff]
  %v184 = vld [vmem:[%s1 + $0x1d0] sm:$0xff]
  %v185 = vld [vmem:[%s1 + $0x1d8] sm:$0xff]
  %v186 = vld [vmem:[%s1 + $0x1e0] sm:$0xff]
  %v187 = vld [vmem:[%s1 + $0x1e8] sm:$0xff]
  %v188 = vld [vmem:[%s1 + $0x1f0] sm:$0xff]
  %v189 = vld [vmem:[%s1 + $0x1f8] sm:$0xff]
  %v190 = vld [vmem:[%s1 + $0x200] sm:$0xff]
  %v191 = vld [vmem:[%s1 + $0x208] sm:$0xff]
  %v192 = vld [vmem:[%s1 + $0x210] sm:$0xff]
  %v193 = vld [vmem:[%s1 + $0x218] sm:$0xff]
  %v194 = vld [vmem:[%s1 + $0x220] sm:$0xff]
  %v195 = vld [vmem:[%s1 + $0x228] sm:$0xff]
  %v196 = vld [vmem:[%s1 + $0x230] sm:$0xff]
  %v197 = vld [vmem:[%s1 + $0x238] sm:$0xff]
  %v198 = vld [vmem:[%s1 + $0x240] sm:$0xff]
  %v199 = vld [vmem:[%s1 + $0x248] sm:$0xff]
  %v200 = vld [vmem:[%s1 + $0x250] sm:$0xff]
  %v201 = vld [vmem:[%s1 + $0x258] sm:$0xff]
  %v202 = vld [vmem:[%s1 + $0x260] sm:$0xff]
  %v203 = vld [vmem:[%s1 + $0x268] sm:$0xff]
  %v204 = vld [vmem:[%s1 + $0x270] sm:$0xff]
  %v205 = vld [vmem:[%s1 + $0x278] sm:$0xff]
  %v206 = vld [vmem:[%s1 + $0x280] sm:$0xff]
  %v207 = vld [vmem:[%s1 + $0x288] sm:$0xff]
  %v208 = vld [vmem:[%s1 + $0x290] sm:$0xff]
  %v209 = vld [vmem:[%s1 + $0x298] sm:$0xff]
  %v210 = vld [vmem:[%s1 + $0x2a0] sm:$0xff]
  %v211 = vld [vmem:[%s1 + $0x2a8] sm:$0xff]
  %v212 = vld [vmem:[%s1 + $0x2b0] sm:$0xff]
  %v213 = vld [vmem:[%s1 + $0x2b8] sm:$0xff]
  %v214 = vld [vmem:[%s1 + $0x2c0] sm:$0xff]
  %v215 = vld [vmem:[%s1 + $0x2c8] sm:$0xff]
  %v216 = vld [vmem:[%s1 + $0x2d0] sm:$0xff]
  %v217 = vld [vmem:[%s1 + $0x2d8] sm:$0xff]
  %v218 = vld [vmem:[%s1 + $0x2e0] sm:$0xff]
  %v219 = vld [vmem:[%s1 + $0x2e8] sm:$0xff]
  %v220 = vld [vmem:[%s1 + $0x2f0] sm:$0xff]
  %v221 = vld [vmem:[%s1 + $0x2f8] sm:$0xff]
  %v222 = vld [vmem:[%s1 + $0x300] sm:$0xff]
  %v223 = vld [vmem:[%s1 + $0x308] sm:$0xff]
  %v224 = vld [vmem:[%s1 + $0x310] sm:$0xff]
  %v225 = vld [vmem:[%s1 + $0x318] sm:$0xff]
  %v226 = vld [vmem:[%s2] sm:$0x1]
  %v228 = vlaneseq
  %v229 = vshrl.u32 %v228, 7
  %v230 = vsub.s32 0, %v229
  %v231 = vrot.slane %v226, %v230
  %vm233 = vcmask 261120
  %v235 = vsel %vm233, %v20, 0
  %v238 = vsel %vm233, %v27, 0
  %v241 = vsel %vm233, %v34, 0
  %v244 = vsel %vm233, %v41, 0
  %v247 = vsel %vm233, %v48, 0
  %v250 = vsel %vm233, %v55, 0
  %v253 = vsel %vm233, %v62, 0
  %v256 = vsel %vm233, %v69, 0
  %v259 = vsel %vm233, %v76, 0
  %v262 = vsel %vm233, %v83, 0
  %v265 = vsel %vm233, %v90, 0
  %v268 = vsel %vm233, %v97, 0
  %v271 = vsel %vm233, %v104, 0
  %v274 = vsel %vm233, %v111, 0
  %v277 = vsel %vm233, %v118, 0
  %v280 = vsel %vm233, %v125, 0
  %282 = vmatprep.subr.mxu0 0.0
  %283 = vmatpush1.msra.mxu0 %v126
  %284 = vmatprep.subr.mxu0 0.0
  %285 = vmatpush1.msra.mxu0 %v127
  %286 = vmatprep.subr.mxu0 0.0
  %287 = vmatpush1.msra.mxu0 %v128
  %288 = vmatprep.subr.mxu0 0.0
  %289 = vmatpush1.msra.mxu0 %v129
  %290 = vmatprep.subr.mxu0 0.0
  %291 = vmatpush1.msra.mxu0 %v130
  %292 = vmatprep.subr.mxu0 0.0
  %293 = vmatpush1.msra.mxu0 %v131
  %294 = vmatprep.subr.mxu0 0.0
  %295 = vmatpush1.msra.mxu0 %v132
  %296 = vmatprep.subr.mxu0 0.0
  %297 = vmatpush1.msra.mxu0 %v133
  %298 = vmatprep.subr.mxu0 0.0
  %299 = vmatpush1.msra.mxu0 %v134
  %300 = vmatprep.subr.mxu0 0.0
  %301 = vmatpush1.msra.mxu0 %v135
  %302 = vmatprep.subr.mxu0 0.0
  %303 = vmatpush1.msra.mxu0 %v136
  %304 = vmatprep.subr.mxu0 0.0
  %305 = vmatpush1.msra.mxu0 %v137
  %306 = vmatprep.subr.mxu0 0.0
  %307 = vmatpush1.msra.mxu0 %v138
  %308 = vmatprep.subr.mxu0 0.0
  %309 = vmatpush1.msra.mxu0 %v139
  %310 = vmatprep.subr.mxu0 0.0
  %311 = vmatpush1.msra.mxu0 %v140
  %312 = vmatprep.subr.mxu0 0.0
  %313 = vmatpush1.msra.mxu0 %v141
  %314 = vmatprep.subr.mxu0 0.0
  %315 = vmatpush1.msra.mxu0 %v142
  %316 = vmatprep.subr.mxu0 0.0
  %317 = vmatpush1.msra.mxu0 %v143
  %318 = vmatprep.subr.mxu0 0.0
  %319 = vmatpush1.msra.mxu0 %v144
  %320 = vmatprep.subr.mxu0 0.0
  %321 = vmatpush1.msra.mxu0 %v145
  %322 = vmatprep.subr.mxu0 0.0
  %323 = vmatpush1.msra.mxu0 %v146
  %324 = vmatprep.subr.mxu0 0.0
  %325 = vmatpush1.msra.mxu0 %v147
  %326 = vmatprep.subr.mxu0 0.0
  %327 = vmatpush1.msra.mxu0 %v148
  %328 = vmatprep.subr.mxu0 0.0
  %329 = vmatpush1.msra.mxu0 %v149
  %330 = vmatprep.subr.mxu0 0.0
  %331 = vmatpush1.msra.mxu0 %v150
  %332 = vmatprep.subr.mxu0 0.0
  %333 = vmatpush1.msra.mxu0 %v151
  %334 = vmatprep.subr.mxu0 0.0
  %335 = vmatpush1.msra.mxu0 %v152
  %336 = vmatprep.subr.mxu0 0.0
  %337 = vmatpush1.msra.mxu0 %v153
  %338 = vmatprep.subr.mxu0 0.0
  %339 = vmatpush1.msra.mxu0 %v154
  %340 = vmatprep.subr.mxu0 0.0
  %341 = vmatpush1.msra.mxu0 %v155
  %342 = vmatprep.subr.mxu0 0.0
  %343 = vmatpush1.msra.mxu0 %v156
  %344 = vmatprep.subr.mxu0 0.0
  %345 = vmatpush1.msra.mxu0 %v157
  %346 = vmatprep.mubr.f32.mxu0 %v15
  %347 = vmatmul.mubr.f32.gmra.mrb[0].mxu0 %v14
  %v348 = vpop.f32.mrb[0].mxu0
  %v349 = vadd.f32 %v231, %v348
  %v350 = vpop.f32.mrb[0].mxu0
  %351 = vmatprep.mubr.f32.mxu0 %v22
  %352 = vmatmul.mubr.f32.gmra.mrb[0].mxu0 %v21
  %v353 = vpop.f32.mrb[0].mxu0
  %v354 = vadd.f32 %v231, %v353
  %v355 = vpop.f32.mrb[0].mxu0
  %356 = vmatprep.mubr.f32.mxu0 %v29
  %357 = vmatmul.mubr.f32.gmra.mrb[0].mxu0 %v28
  %v358 = vpop.f32.mrb[0].mxu0
  %v359 = vadd.f32 %v231, %v358
  %v360 = vpop.f32.mrb[0].mxu0
  %361 = vmatprep.mubr.f32.mxu0 %v36
  %362 = vmatmul.mubr.f32.gmra.mrb[0].mxu0 %v35
  %v363 = vpop.f32.mrb[0].mxu0
  %v364 = vadd.f32 %v231, %v363
  %v365 = vpop.f32.mrb[0].mxu0
  %366 = vmatprep.mubr.f32.mxu0 %v43
  %367 = vmatmul.mubr.f32.gmra.mrb[0].mxu0 %v42
  %v368 = vpop.f32.mrb[0].mxu0
  %v369 = vadd.f32 %v231, %v368
  %v370 = vpop.f32.mrb[0].mxu0
  %371 = vmatprep.mubr.f32.mxu0 %v50
  %372 = vmatmul.mubr.f32.gmra.mrb[0].mxu0 %v49
  %v373 = vpop.f32.mrb[0].mxu0
  %v374 = vadd.f32 %v231, %v373
  %v375 = vpop.f32.mrb[0].mxu0
  %376 = vmatprep.mubr.f32.mxu0 %v57
  %377 = vmatmul.mubr.f32.gmra.mrb[0].mxu0 %v56
  %v378 = vpop.f32.mrb[0].mxu0
  %v379 = vadd.f32 %v231, %v378
  %v380 = vpop.f32.mrb[0].mxu0
  %381 = vmatprep.mubr.f32.mxu0 %v64
  %382 = vmatmul.mubr.f32.gmra.mrb[0].mxu0 %v63
  %v383 = vpop.f32.mrb[0].mxu0
  %v384 = vadd.f32 %v231, %v383
  %v385 = vpop.f32.mrb[0].mxu0
  %386 = vmatprep.mubr.f32.mxu0 %v71
  %387 = vmatmul.mubr.f32.gmra.mrb[0].mxu0 %v70
  %v388 = vpop.f32.mrb[0].mxu0
  %v389 = vadd.f32 %v231, %v388
  %v390 = vpop.f32.mrb[0].mxu0
  %391 = vmatprep.mubr.f32.mxu0 %v78
  %392 = vmatmul.mubr.f32.gmra.mrb[0].mxu0 %v77
  %v393 = vpop.f32.mrb[0].mxu0
  %v394 = vadd.f32 %v231, %v393
  %v395 = vpop.f32.mrb[0].mxu0
  %396 = vmatprep.mubr.f32.mxu0 %v85
  %397 = vmatmul.mubr.f32.gmra.mrb[0].mxu0 %v84
  %v398 = vpop.f32.mrb[0].mxu0
  %v399 = vadd.f32 %v231, %v398
  %v400 = vpop.f32.mrb[0].mxu0
  %401 = vmatprep.mubr.f32.mxu0 %v92
  %402 = vmatmul.mubr.f32.gmra.mrb[0].mxu0 %v91
  %v403 = vpop.f32.mrb[0].mxu0
  %v404 = vadd.f32 %v231, %v403
  %v405 = vpop.f32.mrb[0].mxu0
  %406 = vmatprep.mubr.f32.mxu0 %v99
  %407 = vmatmul.mubr.f32.gmra.mrb[0].mxu0 %v98
  %v408 = vpop.f32.mrb[0].mxu0
  %v409 = vadd.f32 %v231, %v408
  %v410 = vpop.f32.mrb[0].mxu0
  %411 = vmatprep.mubr.f32.mxu0 %v106
  %412 = vmatmul.mubr.f32.gmra.mrb[0].mxu0 %v105
  %v413 = vpop.f32.mrb[0].mxu0
  %v414 = vadd.f32 %v231, %v413
  %v415 = vpop.f32.mrb[0].mxu0
  %416 = vmatprep.mubr.f32.mxu0 %v113
  %417 = vmatmul.mubr.f32.gmra.mrb[0].mxu0 %v112
  %v418 = vpop.f32.mrb[0].mxu0
  %v419 = vadd.f32 %v231, %v418
  %v420 = vpop.f32.mrb[0].mxu0
  %421 = vmatprep.mubr.f32.mxu0 %v120
  %422 = vmatmul.mubr.f32.gmra.mrb[0].mxu0 %v119
  %v423 = vpop.f32.mrb[0].mxu0
  %v424 = vadd.f32 %v231, %v423
  %v425 = vpop.f32.mrb[0].mxu0
  %426 = vdwg.mxu0
  %427 = vmatprep.subr.mxu0 0.0
  %428 = vmatpush1.msra.mxu0 %v158
  %429 = vmatprep.subr.mxu0 0.0
  %430 = vmatpush1.msra.mxu0 %v159
  %431 = vmatprep.subr.mxu0 0.0
  %432 = vmatpush1.msra.mxu0 %v160
  %433 = vmatprep.subr.mxu0 0.0
  %434 = vmatpush1.msra.mxu0 %v161
  %435 = vmatprep.subr.mxu0 0.0
  %436 = vmatpush1.msra.mxu0 %v162
  %437 = vmatprep.subr.mxu0 0.0
  %438 = vmatpush1.msra.mxu0 %v163
  %439 = vmatprep.subr.mxu0 0.0
  %440 = vmatpush1.msra.mxu0 %v164
  %441 = vmatprep.subr.mxu0 0.0
  %442 = vmatpush1.msra.mxu0 %v165
  %443 = vmatprep.subr.mxu0 0.0
  %444 = vmatpush1.msra.mxu0 %v166
  %445 = vmatprep.subr.mxu0 0.0
  %446 = vmatpush1.msra.mxu0 %v167
  %447 = vmatprep.subr.mxu0 0.0
  %448 = vmatpush1.msra.mxu0 %v168
  %449 = vmatprep.subr.mxu0 0.0
  %450 = vmatpush1.msra.mxu0 %v169
  %451 = vmatprep.subr.mxu0 0.0
  %452 = vmatpush1.msra.mxu0 %v170
  %453 = vmatprep.subr.mxu0 0.0
  %454 = vmatpush1.msra.mxu0 %v171
  %455 = vmatprep.subr.mxu0 0.0
  %456 = vmatpush1.msra.mxu0 %v172
  %457 = vmatprep.subr.mxu0 0.0
  %458 = vmatpush1.msra.mxu0 %v173
  %459 = vmatprep.subr.mxu0 0.0
  %460 = vmatpush1.msra.mxu0 %v174
  %461 = vmatprep.subr.mxu0 0.0
  %462 = vmatpush1.msra.mxu0 %v175
  %463 = vmatprep.subr.mxu0 0.0
  %464 = vmatpush1.msra.mxu0 %v176
  %465 = vmatprep.subr.mxu0 0.0
  %466 = vmatpush1.msra.mxu0 %v177
  %467 = vmatprep.subr.mxu0 0.0
  %468 = vmatpush1.msra.mxu0 %v178
  %469 = vmatprep.subr.mxu0 0.0
  %470 = vmatpush1.msra.mxu0 %v179
  %471 = vmatprep.subr.mxu0 0.0
  %472 = vmatpush1.msra.mxu0 %v180
  %473 = vmatprep.subr.mxu0 0.0
  %474 = vmatpush1.msra.mxu0 %v181
  %475 = vmatprep.subr.mxu0 0.0
  %476 = vmatpush1.msra.mxu0 %v182
  %477 = vmatprep.subr.mxu0 0.0
  %478 = vmatpush1.msra.mxu0 %v183
  %479 = vmatprep.subr.mxu0 0.0
  %480 = vmatpush1.msra.mxu0 %v184
  %481 = vmatprep.subr.mxu0 0.0
  %482 = vmatpush1.msra.mxu0 %v185
  %483 = vmatprep.subr.mxu0 0.0
  %484 = vmatpush1.msra.mxu0 %v186
  %485 = vmatprep.subr.mxu0 0.0
  %486 = vmatpush1.msra.mxu0 %v187
  %487 = vmatprep.subr.mxu0 0.0
  %488 = vmatpush1.msra.mxu0 %v188
  %489 = vmatprep.subr.mxu0 0.0
  %490 = vmatpush1.msra.mxu0 %v189
  %491 = vmatprep.mubr.f32.mxu0 %v17
  %492 = vmatmul.mubr.f32.gmra.mrb[0].mxu0 %v16
  %v493 = vpop.f32.mrb[0].mxu0
  %v494 = vadd.f32 %v349, %v493
  %v495 = vpop.f32.mrb[0].mxu0
  %496 = vmatprep.mubr.f32.mxu0 %v24
  %497 = vmatmul.mubr.f32.gmra.mrb[0].mxu0 %v23
  %v498 = vpop.f32.mrb[0].mxu0
  %v499 = vadd.f32 %v354, %v498
  %v500 = vpop.f32.mrb[0].mxu0
  %501 = vmatprep.mubr.f32.mxu0 %v31
  %502 = vmatmul.mubr.f32.gmra.mrb[0].mxu0 %v30
  %v503 = vpop.f32.mrb[0].mxu0
  %v504 = vadd.f32 %v359, %v503
  %v505 = vpop.f32.mrb[0].mxu0
  %506 = vmatprep.mubr.f32.mxu0 %v38
  %507 = vmatmul.mubr.f32.gmra.mrb[0].mxu0 %v37
  %v508 = vpop.f32.mrb[0].mxu0
  %v509 = vadd.f32 %v364, %v508
  %v510 = vpop.f32.mrb[0].mxu0
  %511 = vmatprep.mubr.f32.mxu0 %v45
  %512 = vmatmul.mubr.f32.gmra.mrb[0].mxu0 %v44
  %v513 = vpop.f32.mrb[0].mxu0
  %v514 = vadd.f32 %v369, %v513
  %v515 = vpop.f32.mrb[0].mxu0
  %516 = vmatprep.mubr.f32.mxu0 %v52
  %517 = vmatmul.mubr.f32.gmra.mrb[0].mxu0 %v51
  %v518 = vpop.f32.mrb[0].mxu0
  %v519 = vadd.f32 %v374, %v518
  %v520 = vpop.f32.mrb[0].mxu0
  %521 = vmatprep.mubr.f32.mxu0 %v59
  %522 = vmatmul.mubr.f32.gmra.mrb[0].mxu0 %v58
  %v523 = vpop.f32.mrb[0].mxu0
  %v524 = vadd.f32 %v379, %v523
  %v525 = vpop.f32.mrb[0].mxu0
  %526 = vmatprep.mubr.f32.mxu0 %v66
  %527 = vmatmul.mubr.f32.gmra.mrb[0].mxu0 %v65
  %v528 = vpop.f32.mrb[0].mxu0
  %v529 = vadd.f32 %v384, %v528
  %v530 = vpop.f32.mrb[0].mxu0
  %531 = vmatprep.mubr.f32.mxu0 %v73
  %532 = vmatmul.mubr.f32.gmra.mrb[0].mxu0 %v72
  %v533 = vpop.f32.mrb[0].mxu0
  %v534 = vadd.f32 %v389, %v533
  %v535 = vpop.f32.mrb[0].mxu0
  %536 = vmatprep.mubr.f32.mxu0 %v80
  %537 = vmatmul.mubr.f32.gmra.mrb[0].mxu0 %v79
  %v538 = vpop.f32.mrb[0].mxu0
  %v539 = vadd.f32 %v394, %v538
  %v540 = vpop.f32.mrb[0].mxu0
  %541 = vmatprep.mubr.f32.mxu0 %v87
  %542 = vmatmul.mubr.f32.gmra.mrb[0].mxu0 %v86
  %v543 = vpop.f32.mrb[0].mxu0
  %v544 = vadd.f32 %v399, %v543
  %v545 = vpop.f32.mrb[0].mxu0
  %546 = vmatprep.mubr.f32.mxu0 %v94
  %547 = vmatmul.mubr.f32.gmra.mrb[0].mxu0 %v93
  %v548 = vpop.f32.mrb[0].mxu0
  %v549 = vadd.f32 %v404, %v548
  %v550 = vpop.f32.mrb[0].mxu0
  %551 = vmatprep.mubr.f32.mxu0 %v101
  %552 = vmatmul.mubr.f32.gmra.mrb[0].mxu0 %v100
  %v553 = vpop.f32.mrb[0].mxu0
  %v554 = vadd.f32 %v409, %v553
  %v555 = vpop.f32.mrb[0].mxu0
  %556 = vmatprep.mubr.f32.mxu0 %v108
  %557 = vmatmul.mubr.f32.gmra.mrb[0].mxu0 %v107
  %v558 = vpop.f32.mrb[0].mxu0
  %v559 = vadd.f32 %v414, %v558
  %v560 = vpop.f32.mrb[0].mxu0
  %561 = vmatprep.mubr.f32.mxu0 %v115
  %562 = vmatmul.mubr.f32.gmra.mrb[0].mxu0 %v114
  %v563 = vpop.f32.mrb[0].mxu0
  %v564 = vadd.f32 %v419, %v563
  %v565 = vpop.f32.mrb[0].mxu0
  %566 = vmatprep.mubr.f32.mxu0 %v122
  %567 = vmatmul.mubr.f32.gmra.mrb[0].mxu0 %v121
  %v568 = vpop.f32.mrb[0].mxu0
  %v569 = vadd.f32 %v424, %v568
  %v570 = vpop.f32.mrb[0].mxu0
  %571 = vdwg.mxu0
  %572 = vmatprep.subr.mxu0 0.0
  %573 = vmatpush1.msra.mxu0 %v190
  %574 = vmatprep.subr.mxu0 0.0
  %575 = vmatpush1.msra.mxu0 %v191
  %576 = vmatprep.subr.mxu0 0.0
  %577 = vmatpush1.msra.mxu0 %v192
  %578 = vmatprep.subr.mxu0 0.0
  %579 = vmatpush1.msra.mxu0 %v193
  %580 = vmatprep.subr.mxu0 0.0
  %581 = vmatpush1.msra.mxu0 %v194
  %582 = vmatprep.subr.mxu0 0.0
  %583 = vmatpush1.msra.mxu0 %v195
  %584 = vmatprep.subr.mxu0 0.0
  %585 = vmatpush1.msra.mxu0 %v196
  %586 = vmatprep.subr.mxu0 0.0
  %587 = vmatpush1.msra.mxu0 %v197
  %588 = vmatprep.subr.mxu0 0.0
  %589 = vmatpush1.msra.mxu0 %v198
  %590 = vmatprep.subr.mxu0 0.0
  %591 = vmatpush1.msra.mxu0 %v199
  %592 = vmatprep.subr.mxu0 0.0
  %593 = vmatpush1.msra.mxu0 %v200
  %594 = vmatprep.subr.mxu0 0.0
  %595 = vmatpush1.msra.mxu0 %v201
  %596 = vmatprep.subr.mxu0 0.0
  %597 = vmatpush1.msra.mxu0 %v202
  %598 = vmatprep.subr.mxu0 0.0
  %599 = vmatpush1.msra.mxu0 %v203
  %600 = vmatprep.subr.mxu0 0.0
  %601 = vmatpush1.msra.mxu0 %v204
  %602 = vmatprep.subr.mxu0 0.0
  %603 = vmatpush1.msra.mxu0 %v205
  %604 = vmatprep.subr.mxu0 0.0
  %605 = vmatpush1.msra.mxu0 %v206
  %606 = vmatprep.subr.mxu0 0.0
  %607 = vmatpush1.msra.mxu0 %v207
  %608 = vmatprep.subr.mxu0 0.0
  %609 = vmatpush1.msra.mxu0 %v208
  %610 = vmatprep.subr.mxu0 0.0
  %611 = vmatpush1.msra.mxu0 %v209
  %612 = vmatprep.subr.mxu0 0.0
  %613 = vmatpush1.msra.mxu0 %v210
  %614 = vmatprep.subr.mxu0 0.0
  %615 = vmatpush1.msra.mxu0 %v211
  %616 = vmatprep.subr.mxu0 0.0
  %617 = vmatpush1.msra.mxu0 %v212
  %618 = vmatprep.subr.mxu0 0.0
  %619 = vmatpush1.msra.mxu0 %v213
  %620 = vmatprep.subr.mxu0 0.0
  %621 = vmatpush1.msra.mxu0 %v214
  %622 = vmatprep.subr.mxu0 0.0
  %623 = vmatpush1.msra.mxu0 %v215
  %624 = vmatprep.subr.mxu0 0.0
  %625 = vmatpush1.msra.mxu0 %v216
  %626 = vmatprep.subr.mxu0 0.0
  %627 = vmatpush1.msra.mxu0 %v217
  %628 = vmatprep.subr.mxu0 0.0
  %629 = vmatpush1.msra.mxu0 %v218
  %630 = vmatprep.subr.mxu0 0.0
  %631 = vmatpush1.msra.mxu0 %v219
  %632 = vmatprep.subr.mxu0 0.0
  %633 = vmatpush1.msra.mxu0 %v220
  %634 = vmatprep.subr.mxu0 0.0
  %635 = vmatpush1.msra.mxu0 %v221
  %636 = vmatprep.mubr.f32.mxu0 %v19
  %637 = vmatmul.mubr.f32.gmra.mrb[0].mxu0 %v18
  %v638 = vpop.f32.mrb[0].mxu0
  %v639 = vadd.f32 %v494, %v638
  %v640 = vpop.f32.mrb[0].mxu0
  %641 = vmatprep.mubr.f32.mxu0 %v26
  %642 = vmatmul.mubr.f32.gmra.mrb[0].mxu0 %v25
  %v643 = vpop.f32.mrb[0].mxu0
  %v644 = vadd.f32 %v499, %v643
  %v645 = vpop.f32.mrb[0].mxu0
  %646 = vmatprep.mubr.f32.mxu0 %v33
  %647 = vmatmul.mubr.f32.gmra.mrb[0].mxu0 %v32
  %v648 = vpop.f32.mrb[0].mxu0
  %v649 = vadd.f32 %v504, %v648
  %v650 = vpop.f32.mrb[0].mxu0
  %651 = vmatprep.mubr.f32.mxu0 %v40
  %652 = vmatmul.mubr.f32.gmra.mrb[0].mxu0 %v39
  %v653 = vpop.f32.mrb[0].mxu0
  %v654 = vadd.f32 %v509, %v653
  %v655 = vpop.f32.mrb[0].mxu0
  %656 = vmatprep.mubr.f32.mxu0 %v47
  %657 = vmatmul.mubr.f32.gmra.mrb[0].mxu0 %v46
  %v658 = vpop.f32.mrb[0].mxu0
  %v659 = vadd.f32 %v514, %v658
  %v660 = vpop.f32.mrb[0].mxu0
  %661 = vmatprep.mubr.f32.mxu0 %v54
  %662 = vmatmul.mubr.f32.gmra.mrb[0].mxu0 %v53
  %v663 = vpop.f32.mrb[0].mxu0
  %v664 = vadd.f32 %v519, %v663
  %v665 = vpop.f32.mrb[0].mxu0
  %666 = vmatprep.mubr.f32.mxu0 %v61
  %667 = vmatmul.mubr.f32.gmra.mrb[0].mxu0 %v60
  %v668 = vpop.f32.mrb[0].mxu0
  %v669 = vadd.f32 %v524, %v668
  %v670 = vpop.f32.mrb[0].mxu0
  %671 = vmatprep.mubr.f32.mxu0 %v68
  %672 = vmatmul.mubr.f32.gmra.mrb[0].mxu0 %v67
  %v673 = vpop.f32.mrb[0].mxu0
  %v674 = vadd.f32 %v529, %v673
  %v675 = vpop.f32.mrb[0].mxu0
  %676 = vmatprep.mubr.f32.mxu0 %v75
  %677 = vmatmul.mubr.f32.gmra.mrb[0].mxu0 %v74
  %v678 = vpop.f32.mrb[0].mxu0
  %v679 = vadd.f32 %v534, %v678
  %v680 = vpop.f32.mrb[0].mxu0
  %681 = vmatprep.mubr.f32.mxu0 %v82
  %682 = vmatmul.mubr.f32.gmra.mrb[0].mxu0 %v81
  %v683 = vpop.f32.mrb[0].mxu0
  %v684 = vadd.f32 %v539, %v683
  %v685 = vpop.f32.mrb[0].mxu0
  %686 = vmatprep.mubr.f32.mxu0 %v89
  %687 = vmatmul.mubr.f32.gmra.mrb[0].mxu0 %v88
  %v688 = vpop.f32.mrb[0].mxu0
  %v689 = vadd.f32 %v544, %v688
  %v690 = vpop.f32.mrb[0].mxu0
  %691 = vmatprep.mubr.f32.mxu0 %v96
  %692 = vmatmul.mubr.f32.gmra.mrb[0].mxu0 %v95
  %v693 = vpop.f32.mrb[0].mxu0
  %v694 = vadd.f32 %v549, %v693
  %v695 = vpop.f32.mrb[0].mxu0
  %696 = vmatprep.mubr.f32.mxu0 %v103
  %697 = vmatmul.mubr.f32.gmra.mrb[0].mxu0 %v102
  %v698 = vpop.f32.mrb[0].mxu0
  %v699 = vadd.f32 %v554, %v698
  %v700 = vpop.f32.mrb[0].mxu0
  %701 = vmatprep.mubr.f32.mxu0 %v110
  %702 = vmatmul.mubr.f32.gmra.mrb[0].mxu0 %v109
  %v703 = vpop.f32.mrb[0].mxu0
  %v704 = vadd.f32 %v559, %v703
  %v705 = vpop.f32.mrb[0].mxu0
  %706 = vmatprep.mubr.f32.mxu0 %v117
  %707 = vmatmul.mubr.f32.gmra.mrb[0].mxu0 %v116
  %v708 = vpop.f32.mrb[0].mxu0
  %v709 = vadd.f32 %v564, %v708
  %v710 = vpop.f32.mrb[0].mxu0
  %711 = vmatprep.mubr.f32.mxu0 %v124
  %712 = vmatmul.mubr.f32.gmra.mrb[0].mxu0 %v123
  %v713 = vpop.f32.mrb[0].mxu0
  %v714 = vadd.f32 %v569, %v713
  %v715 = vpop.f32.mrb[0].mxu0
  %716 = vdwg.mxu0
  %717 = vmatprep.subr.mxu0 0.0
  %718 = vmatpush1.msra.mxu0 %v222
  %719 = vmatprep.subr.mxu0 0.0
  %720 = vmatpush1.msra.mxu0 %v223
  %721 = vmatprep.subr.mxu0 0.0
  %722 = vmatpush1.msra.mxu0 %v224
  %723 = vmatprep.subr.mxu0 0.0
  %724 = vmatpush1.msra.mxu0 %v225
  %725 = vmatprep.subr.mxu0 0.0
  %726 = vmatpush1.msra.mxu0 0.0
  %727 = vmatprep.subr.mxu0 0.0
  %728 = vmatpush1.msra.mxu0 0.0
  %729 = vmatprep.subr.mxu0 0.0
  %730 = vmatpush1.msra.mxu0 0.0
  %731 = vmatprep.subr.mxu0 0.0
  %732 = vmatpush1.msra.mxu0 0.0
  %733 = vmatprep.subr.mxu0 0.0
  %734 = vmatpush1.msra.mxu0 0.0
  %735 = vmatprep.subr.mxu0 0.0
  %736 = vmatpush1.msra.mxu0 0.0
  %737 = vmatprep.subr.mxu0 0.0
  %738 = vmatpush1.msra.mxu0 0.0
  %739 = vmatprep.subr.mxu0 0.0
  %740 = vmatpush1.msra.mxu0 0.0
  %741 = vmatprep.subr.mxu0 0.0
  %742 = vmatpush1.msra.mxu0 0.0
  %743 = vmatprep.subr.mxu0 0.0
  %744 = vmatpush1.msra.mxu0 0.0
  %745 = vmatprep.subr.mxu0 0.0
  %746 = vmatpush1.msra.mxu0 0.0
  %747 = vmatprep.subr.mxu0 0.0
  %748 = vmatpush1.msra.mxu0 0.0
  %749 = vmatprep.subr.mxu0 0.0
  %750 = vmatpush1.msra.mxu0 0.0
  %751 = vmatprep.subr.mxu0 0.0
  %752 = vmatpush1.msra.mxu0 0.0
  %753 = vmatprep.subr.mxu0 0.0
  %754 = vmatpush1.msra.mxu0 0.0
  %755 = vmatprep.subr.mxu0 0.0
  %756 = vmatpush1.msra.mxu0 0.0
  %757 = vmatprep.subr.mxu0 0.0
  %758 = vmatpush1.msra.mxu0 0.0
  %759 = vmatprep.subr.mxu0 0.0
  %760 = vmatpush1.msra.mxu0 0.0
  %761 = vmatprep.subr.mxu0 0.0
  %762 = vmatpush1.msra.mxu0 0.0
  %763 = vmatprep.subr.mxu0 0.0
  %764 = vmatpush1.msra.mxu0 0.0
  %765 = vmatprep.subr.mxu0 0.0
  %766 = vmatpush1.msra.mxu0 0.0
  %767 = vmatprep.subr.mxu0 0.0
  %768 = vmatpush1.msra.mxu0 0.0
  %769 = vmatprep.subr.mxu0 0.0
  %770 = vmatpush1.msra.mxu0 0.0
  %771 = vmatprep.subr.mxu0 0.0
  %772 = vmatpush1.msra.mxu0 0.0
  %773 = vmatprep.subr.mxu0 0.0
  %774 = vmatpush1.msra.mxu0 0.0
  %775 = vmatprep.subr.mxu0 0.0
  %776 = vmatpush1.msra.mxu0 0.0
  %777 = vmatprep.subr.mxu0 0.0
  %778 = vmatpush1.msra.mxu0 0.0
  %779 = vmatprep.subr.mxu0 0.0
  %780 = vmatpush1.msra.mxu0 0.0
  %781 = vmatprep.mubr.f32.mxu0 0.0
  %782 = vmatmul.mubr.f32.gmra.mrb[0].mxu0 %v235
  %v783 = vpop.f32.mrb[0].mxu0
  %v784 = vadd.f32 %v639, %v783
  %v785 = vpop.f32.mrb[0].mxu0
  %786 = vmatprep.mubr.f32.mxu0 0.0
  %787 = vmatmul.mubr.f32.gmra.mrb[0].mxu0 %v238
  %v788 = vpop.f32.mrb[0].mxu0
  %v789 = vadd.f32 %v644, %v788
  %v790 = vpop.f32.mrb[0].mxu0
  %791 = vmatprep.mubr.f32.mxu0 0.0
  %792 = vmatmul.mubr.f32.gmra.mrb[0].mxu0 %v241
  %v793 = vpop.f32.mrb[0].mxu0
  %v794 = vadd.f32 %v649, %v793
  %v795 = vpop.f32.mrb[0].mxu0
  %796 = vmatprep.mubr.f32.mxu0 0.0
  %797 = vmatmul.mubr.f32.gmra.mrb[0].mxu0 %v244
  %v798 = vpop.f32.mrb[0].mxu0
  %v799 = vadd.f32 %v654, %v798
  %v800 = vpop.f32.mrb[0].mxu0
  %801 = vmatprep.mubr.f32.mxu0 0.0
  %802 = vmatmul.mubr.f32.gmra.mrb[0].mxu0 %v247
  %v803 = vpop.f32.mrb[0].mxu0
  %v804 = vadd.f32 %v659, %v803
  %v805 = vpop.f32.mrb[0].mxu0
  %806 = vmatprep.mubr.f32.mxu0 0.0
  %807 = vmatmul.mubr.f32.gmra.mrb[0].mxu0 %v250
  %v808 = vpop.f32.mrb[0].mxu0
  %v809 = vadd.f32 %v664, %v808
  %v810 = vpop.f32.mrb[0].mxu0
  %811 = vmatprep.mubr.f32.mxu0 0.0
  %812 = vmatmul.mubr.f32.gmra.mrb[0].mxu0 %v253
  %v813 = vpop.f32.mrb[0].mxu0
  %v814 = vadd.f32 %v669, %v813
  %v815 = vpop.f32.mrb[0].mxu0
  %816 = vmatprep.mubr.f32.mxu0 0.0
  %817 = vmatmul.mubr.f32.gmra.mrb[0].mxu0 %v256
  %v818 = vpop.f32.mrb[0].mxu0
  %v819 = vadd.f32 %v674, %v818
  %v820 = vpop.f32.mrb[0].mxu0
  %821 = vmatprep.mubr.f32.mxu0 0.0
  %822 = vmatmul.mubr.f32.gmra.mrb[0].mxu0 %v259
  %v823 = vpop.f32.mrb[0].mxu0
  %v824 = vadd.f32 %v679, %v823
  %v825 = vpop.f32.mrb[0].mxu0
  %826 = vmatprep.mubr.f32.mxu0 0.0
  %827 = vmatmul.mubr.f32.gmra.mrb[0].mxu0 %v262
  %v828 = vpop.f32.mrb[0].mxu0
  %v829 = vadd.f32 %v684, %v828
  %v830 = vpop.f32.mrb[0].mxu0
  %831 = vmatprep.mubr.f32.mxu0 0.0
  %832 = vmatmul.mubr.f32.gmra.mrb[0].mxu0 %v265
  %v833 = vpop.f32.mrb[0].mxu0
  %v834 = vadd.f32 %v689, %v833
  %v835 = vpop.f32.mrb[0].mxu0
  %836 = vmatprep.mubr.f32.mxu0 0.0
  %837 = vmatmul.mubr.f32.gmra.mrb[0].mxu0 %v268
  %v838 = vpop.f32.mrb[0].mxu0
  %v839 = vadd.f32 %v694, %v838
  %v840 = vpop.f32.mrb[0].mxu0
  %841 = vmatprep.mubr.f32.mxu0 0.0
  %842 = vmatmul.mubr.f32.gmra.mrb[0].mxu0 %v271
  %v843 = vpop.f32.mrb[0].mxu0
  %v844 = vadd.f32 %v699, %v843
  %v845 = vpop.f32.mrb[0].mxu0
  %846 = vmatprep.mubr.f32.mxu0 0.0
  %847 = vmatmul.mubr.f32.gmra.mrb[0].mxu0 %v274
  %v848 = vpop.f32.mrb[0].mxu0
  %v849 = vadd.f32 %v704, %v848
  %v850 = vpop.f32.mrb[0].mxu0
  %851 = vmatprep.mubr.f32.mxu0 0.0
  %852 = vmatmul.mubr.f32.gmra.mrb[0].mxu0 %v277
  %v853 = vpop.f32.mrb[0].mxu0
  %v854 = vadd.f32 %v709, %v853
  %v855 = vpop.f32.mrb[0].mxu0
  %856 = vmatprep.mubr.f32.mxu0 0.0
  %857 = vmatmul.mubr.f32.gmra.mrb[0].mxu0 %v280
  %v858 = vpop.f32.mrb[0].mxu0
  %v859 = vadd.f32 %v714, %v858
  %v860 = vpop.f32.mrb[0].mxu0
  %861 = vdwg.mxu0
  %v862 = vmax.f32 %v784, 0.0
  %v863 = vmax.f32 %v789, 0.0
  %v864 = vmax.f32 %v794, 0.0
  %v865 = vmax.f32 %v799, 0.0
  %v866 = vmax.f32 %v804, 0.0
  %v867 = vmax.f32 %v809, 0.0
  %v868 = vmax.f32 %v814, 0.0
  %v869 = vmax.f32 %v819, 0.0
  %v870 = vmax.f32 %v824, 0.0
  %v871 = vmax.f32 %v829, 0.0
  %v872 = vmax.f32 %v834, 0.0
  %v873 = vmax.f32 %v839, 0.0
  %v874 = vmax.f32 %v844, 0.0
  %v875 = vmax.f32 %v849, 0.0
  %v876 = vmax.f32 %v854, 0.0
  %v877 = vmax.f32 %v859, 0.0
  %vm878 = vcmask 523264
  %879 = vst.msk [vmem:[%s3] sm:$0xff] %vm878, %v862
  %880 = vst.msk [vmem:[%s3 + $0x8] sm:$0xff] %vm878, %v863
  %881 = vst.msk [vmem:[%s3 + $0x10] sm:$0xff] %vm878, %v864
  %882 = vst.msk [vmem:[%s3 + $0x18] sm:$0xff] %vm878, %v865
  %883 = vst.msk [vmem:[%s3 + $0x20] sm:$0xff] %vm878, %v866
  %884 = vst.msk [vmem:[%s3 + $0x28] sm:$0xff] %vm878, %v867
  %885 = vst.msk [vmem:[%s3 + $0x30] sm:$0xff] %vm878, %v868
  %886 = vst.msk [vmem:[%s3 + $0x38] sm:$0xff] %vm878, %v869
  %887 = vst.msk [vmem:[%s3 + $0x40] sm:$0xff] %vm878, %v870
  %888 = vst.msk [vmem:[%s3 + $0x48] sm:$0xff] %vm878, %v871
  %889 = vst.msk [vmem:[%s3 + $0x50] sm:$0xff] %vm878, %v872
  %890 = vst.msk [vmem:[%s3 + $0x58] sm:$0xff] %vm878, %v873
  %891 = vst.msk [vmem:[%s3 + $0x60] sm:$0xff] %vm878, %v874
  %892 = vst.msk [vmem:[%s3 + $0x68] sm:$0xff] %vm878, %v875
  %893 = vst.msk [vmem:[%s3 + $0x70] sm:$0xff] %vm878, %v876
  %894 = vst.msk [vmem:[%s3 + $0x78] sm:$0xff] %vm878, %v877
  // Predicated region
  $region14: #{forward.7} parent=0 // pred_check
    _
  $region15: #{forward.7} parent=0 // pred_check_branch
    %896 = sbr.rel (0) target = $region17
  $region16: #{forward.7} parent=0 // pred_region
    _
  $region17: #{forward.7} parent=0 // pred_fallthru
    _
  // Predicated region
  $region18: #{forward.7} parent=0 // pred_check
    _
  $region19: #{forward.7} parent=0 // pred_check_branch
    %898 = sbr.rel (0) target = $region21
  $region20: #{forward.7} parent=0 // pred_region
    _
  $region21: #{forward.7} parent=0 // pred_fallthru
    _

// kernel: forward.8
$region0: #{forward.8}
  #allocation0 [shape = 'u32[]', space=smem, size = 0x4, offset = 0x4, fixed_abs, tag = 'smem constant byte address 0x4 - core index']
  #allocation1 [shape = 'u32[144,128]{1,0:T(1,128)}', space=vmem, size = 0x12000, scoped, tag = 'internal scratch']
  %s0 = inlined_call_operand.vmem [shape: f32[32,1600], index: 0, kind: input, shape index: {}]
  %s1 = inlined_call_operand.vmem [shape: f32[1600,128], index: 1, kind: input, shape index: {}]
  %s2 = inlined_call_operand.vmem [shape: f32[1,128], index: 2, kind: input, shape index: {}]
  %s3 = inlined_call_operand.vmem [shape: f32[32,128], index: 3, kind: output, shape index: {}]
  %s4 = sld [smem:[#allocation0]]
  $region22: #{forward.8} parent=0
    _
  %s6 = ssub.s32 1, %s4
  %s7 = scalar_select 0, %s6, %s4
  // Predicated region
  $region2: #{forward.8} parent=0 // pred_check
    _
  $region3: #{forward.8} parent=0 // pred_check_branch
    %9 = sbr.rel (0) target = $region5
  $region4: #{forward.8} parent=0 // pred_region
    _
  $region5: #{forward.8} parent=0 // pred_fallthru
    _
  // Predicated region
  $region6: #{forward.8} parent=0 // pred_check
    _
  $region7: #{forward.8} parent=0 // pred_check_branch
    %11 = sbr.rel (0) target = $region9
  $region8: #{forward.8} parent=0 // pred_region
    _
  $region9: #{forward.8} parent=0 // pred_fallthru
    _
  // Predicated region
  $region10: #{forward.8} parent=0 // pred_check
    _
  $region11: #{forward.8} parent=0 // pred_check_branch
    %13 = sbr.rel (0) target = $region13
  $region12: #{forward.8} parent=0 // pred_region
    _
  $region13: #{forward.8} parent=0 // pred_fallthru
    _
  %v14 = vld [vmem:[%s0] sm:$0xff]
  %v15 = vld [vmem:[%s0 + $0x8] sm:$0xff]
  %v16 = vld [vmem:[%s0 + $0x10] sm:$0xff]
  %v17 = vld [vmem:[%s0 + $0x18] sm:$0xff]
  %v18 = vld [vmem:[%s0 + $0x20] sm:$0xff]
  %v19 = vld [vmem:[%s0 + $0x28] sm:$0xff]
  %v20 = vld [vmem:[%s0 + $0x30] sm:$0xff]
  %v21 = vld [vmem:[%s0 + $0x38] sm:$0xff]
  %v22 = vld [vmem:[%s0 + $0x40] sm:$0xff]
  %v23 = vld [vmem:[%s0 + $0x48] sm:$0xff]
  %v24 = vld [vmem:[%s0 + $0x50] sm:$0xff]
  %v25 = vld [vmem:[%s0 + $0x58] sm:$0xff]
  %v26 = vld [vmem:[%s0 + $0x60] sm:$0xff]
  %v27 = vld [vmem:[%s0 + $0x68] sm:$0xff]
  %v28 = vld [vmem:[%s0 + $0x70] sm:$0xff]
  %v29 = vld [vmem:[%s0 + $0x78] sm:$0xff]
  %v30 = vld [vmem:[%s0 + $0x80] sm:$0xff]
  %v31 = vld [vmem:[%s0 + $0x88] sm:$0xff]
  %v32 = vld [vmem:[%s0 + $0x90] sm:$0xff]
  %v33 = vld [vmem:[%s0 + $0x98] sm:$0xff]
  %v34 = vld [vmem:[%s0 + $0xa0] sm:$0xff]
  %v35 = vld [vmem:[%s0 + $0xa8] sm:$0xff]
  %v36 = vld [vmem:[%s0 + $0xb0] sm:$0xff]
  %v37 = vld [vmem:[%s0 + $0xb8] sm:$0xff]
  %v38 = vld [vmem:[%s0 + $0xc0] sm:$0xff]
  %v39 = vld [vmem:[%s0 + $0xc8] sm:$0xff]
  %v40 = vld [vmem:[%s0 + $0xd0] sm:$0xff]
  %v41 = vld [vmem:[%s0 + $0xd8] sm:$0xff]
  %v42 = vld [vmem:[%s0 + $0xe0] sm:$0xff]
  %v43 = vld [vmem:[%s0 + $0xe8] sm:$0xff]
  %v44 = vld [vmem:[%s0 + $0xf0] sm:$0xff]
  %v45 = vld [vmem:[%s0 + $0xf8] sm:$0xff]
  %v46 = vld [vmem:[%s0 + $0x100] sm:$0xff]
  %v47 = vld [vmem:[%s0 + $0x108] sm:$0xff]
  %v48 = vld [vmem:[%s0 + $0x110] sm:$0xff]
  %v49 = vld [vmem:[%s0 + $0x118] sm:$0xff]
  %v50 = vld [vmem:[%s0 + $0x120] sm:$0xff]
  %v51 = vld [vmem:[%s0 + $0x128] sm:$0xff]
  %v52 = vld [vmem:[%s0 + $0x130] sm:$0xff]
  %v53 = vld [vmem:[%s0 + $0x138] sm:$0xff]
  %v54 = vld [vmem:[%s0 + $0x140] sm:$0xff]
  %v55 = vld [vmem:[%s0 + $0x148] sm:$0xff]
  %v56 = vld [vmem:[%s0 + $0x150] sm:$0xff]
  %v57 = vld [vmem:[%s0 + $0x158] sm:$0xff]
  %v58 = vld [vmem:[%s0 + $0x160] sm:$0xff]
  %v59 = vld [vmem:[%s0 + $0x168] sm:$0xff]
  %v60 = vld [vmem:[%s0 + $0x170] sm:$0xff]
  %v61 = vld [vmem:[%s0 + $0x178] sm:$0xff]
  %v62 = vld [vmem:[%s0 + $0x180] sm:$0xff]
  %v63 = vld [vmem:[%s0 + $0x188] sm:$0xff]
  %v64 = vld [vmem:[%s0 + $0x190] sm:$0xff]
  %v65 = vld [vmem:[%s0 + $0x198] sm:$0xff]
  %v66 = vld [vmem:[%s1] sm:$0xff]
  %v67 = vld [vmem:[%s1 + $0x8] sm:$0xff]
  %v68 = vld [vmem:[%s1 + $0x10] sm:$0xff]
  %v69 = vld [vmem:[%s1 + $0x18] sm:$0xff]
  %v70 = vld [vmem:[%s1 + $0x20] sm:$0xff]
  %v71 = vld [vmem:[%s1 + $0x28] sm:$0xff]
  %v72 = vld [vmem:[%s1 + $0x30] sm:$0xff]
  %v73 = vld [vmem:[%s1 + $0x38] sm:$0xff]
  %v74 = vld [vmem:[%s1 + $0x40] sm:$0xff]
  %v75 = vld [vmem:[%s1 + $0x48] sm:$0xff]
  %v76 = vld [vmem:[%s1 + $0x50] sm:$0xff]
  %v77 = vld [vmem:[%s1 + $0x58] sm:$0xff]
  %v78 = vld [vmem:[%s1 + $0x60] sm:$0xff]
  %v79 = vld [vmem:[%s1 + $0x68] sm:$0xff]
  %v80 = vld [vmem:[%s1 + $0x70] sm:$0xff]
  %v81 = vld [vmem:[%s1 + $0x78] sm:$0xff]
  %v82 = vld [vmem:[%s1 + $0x80] sm:$0xff]
  %v83 = vld [vmem:[%s1 + $0x88] sm:$0xff]
  %v84 = vld [vmem:[%s1 + $0x90] sm:$0xff]
  %v85 = vld [vmem:[%s1 + $0x98] sm:$0xff]
  %v86 = vld [vmem:[%s1 + $0xa0] sm:$0xff]
  %v87 = vld [vmem:[%s1 + $0xa8] sm:$0xff]
  %v88 = vld [vmem:[%s1 + $0xb0] sm:$0xff]
  %v89 = vld [vmem:[%s1 + $0xb8] sm:$0xff]
  %v90 = vld [vmem:[%s1 + $0xc0] sm:$0xff]
  %v91 = vld [vmem:[%s1 + $0xc8] sm:$0xff]
  %v92 = vld [vmem:[%s1 + $0xd0] sm:$0xff]
  %v93 = vld [vmem:[%s1 + $0xd8] sm:$0xff]
  %v94 = vld [vmem:[%s1 + $0xe0] sm:$0xff]
  %v95 = vld [vmem:[%s1 + $0xe8] sm:$0xff]
  %v96 = vld [vmem:[%s1 + $0xf0] sm:$0xff]
  %v97 = vld [vmem:[%s1 + $0xf8] sm:$0xff]
  %v98 = vld [vmem:[%s1 + $0x100] sm:$0xff]
  %v99 = vld [vmem:[%s1 + $0x108] sm:$0xff]
  %v100 = vld [vmem:[%s1 + $0x110] sm:$0xff]
  %v101 = vld [vmem:[%s1 + $0x118] sm:$0xff]
  %v102 = vld [vmem:[%s1 + $0x120] sm:$0xff]
  %v103 = vld [vmem:[%s1 + $0x128] sm:$0xff]
  %v104 = vld [vmem:[%s1 + $0x130] sm:$0xff]
  %v105 = vld [vmem:[%s1 + $0x138] sm:$0xff]
  %v106 = vld [vmem:[%s1 + $0x140] sm:$0xff]
  %v107 = vld [vmem:[%s1 + $0x148] sm:$0xff]
  %v108 = vld [vmem:[%s1 + $0x150] sm:$0xff]
  %v109 = vld [vmem:[%s1 + $0x158] sm:$0xff]
  %v110 = vld [vmem:[%s1 + $0x160] sm:$0xff]
  %v111 = vld [vmem:[%s1 + $0x168] sm:$0xff]
  %v112 = vld [vmem:[%s1 + $0x170] sm:$0xff]
  %v113 = vld [vmem:[%s1 + $0x178] sm:$0xff]
  %v114 = vld [vmem:[%s1 + $0x180] sm:$0xff]
  %v115 = vld [vmem:[%s1 + $0x188] sm:$0xff]
  %v116 = vld [vmem:[%s1 + $0x190] sm:$0xff]
  %v117 = vld [vmem:[%s1 + $0x198] sm:$0xff]
  %v118 = vld [vmem:[%s1 + $0x1a0] sm:$0xff]
  %v119 = vld [vmem:[%s1 + $0x1a8] sm:$0xff]
  %v120 = vld [vmem:[%s1 + $0x1b0] sm:$0xff]
  %v121 = vld [vmem:[%s1 + $0x1b8] sm:$0xff]
  %v122 = vld [vmem:[%s1 + $0x1c0] sm:$0xff]
  %v123 = vld [vmem:[%s1 + $0x1c8] sm:$0xff]
  %v124 = vld [vmem:[%s1 + $0x1d0] sm:$0xff]
  %v125 = vld [vmem:[%s1 + $0x1d8] sm:$0xff]
  %v126 = vld [vmem:[%s1 + $0x1e0] sm:$0xff]
  %v127 = vld [vmem:[%s1 + $0x1e8] sm:$0xff]
  %v128 = vld [vmem:[%s1 + $0x1f0] sm:$0xff]
  %v129 = vld [vmem:[%s1 + $0x1f8] sm:$0xff]
  %v130 = vld [vmem:[%s1 + $0x200] sm:$0xff]
  %v131 = vld [vmem:[%s1 + $0x208] sm:$0xff]
  %v132 = vld [vmem:[%s1 + $0x210] sm:$0xff]
  %v133 = vld [vmem:[%s1 + $0x218] sm:$0xff]
  %v134 = vld [vmem:[%s1 + $0x220] sm:$0xff]
  %v135 = vld [vmem:[%s1 + $0x228] sm:$0xff]
  %v136 = vld [vmem:[%s1 + $0x230] sm:$0xff]
  %v137 = vld [vmem:[%s1 + $0x238] sm:$0xff]
  %v138 = vld [vmem:[%s1 + $0x240] sm:$0xff]
  %v139 = vld [vmem:[%s1 + $0x248] sm:$0xff]
  %v140 = vld [vmem:[%s1 + $0x250] sm:$0xff]
  %v141 = vld [vmem:[%s1 + $0x258] sm:$0xff]
  %v142 = vld [vmem:[%s1 + $0x260] sm:$0xff]
  %v143 = vld [vmem:[%s1 + $0x268] sm:$0xff]
  %v144 = vld [vmem:[%s1 + $0x270] sm:$0xff]
  %v145 = vld [vmem:[%s1 + $0x278] sm:$0xff]
  %v146 = vld [vmem:[%s1 + $0x280] sm:$0xff]
  %v147 = vld [vmem:[%s1 + $0x288] sm:$0xff]
  %v148 = vld [vmem:[%s1 + $0x290] sm:$0xff]
  %v149 = vld [vmem:[%s1 + $0x298] sm:$0xff]
  %v150 = vld [vmem:[%s1 + $0x2a0] sm:$0xff]
  %v151 = vld [vmem:[%s1 + $0x2a8] sm:$0xff]
  %v152 = vld [vmem:[%s1 + $0x2b0] sm:$0xff]
  %v153 = vld [vmem:[%s1 + $0x2b8] sm:$0xff]
  %v154 = vld [vmem:[%s1 + $0x2c0] sm:$0xff]
  %v155 = vld [vmem:[%s1 + $0x2c8] sm:$0xff]
  %v156 = vld [vmem:[%s1 + $0x2d0] sm:$0xff]
  %v157 = vld [vmem:[%s1 + $0x2d8] sm:$0xff]
  %v158 = vld [vmem:[%s1 + $0x2e0] sm:$0xff]
  %v159 = vld [vmem:[%s1 + $0x2e8] sm:$0xff]
  %v160 = vld [vmem:[%s1 + $0x2f0] sm:$0xff]
  %v161 = vld [vmem:[%s1 + $0x2f8] sm:$0xff]
  %v162 = vld [vmem:[%s1 + $0x300] sm:$0xff]
  %v163 = vld [vmem:[%s1 + $0x308] sm:$0xff]
  %v164 = vld [vmem:[%s1 + $0x310] sm:$0xff]
  %v165 = vld [vmem:[%s1 + $0x318] sm:$0xff]
  %v166 = vld [vmem:[%s1 + $0x320] sm:$0xff]
  %v167 = vld [vmem:[%s1 + $0x328] sm:$0xff]
  %v168 = vld [vmem:[%s1 + $0x330] sm:$0xff]
  %v169 = vld [vmem:[%s1 + $0x338] sm:$0xff]
  %v170 = vld [vmem:[%s1 + $0x340] sm:$0xff]
  %v171 = vld [vmem:[%s1 + $0x348] sm:$0xff]
  %v172 = vld [vmem:[%s1 + $0x350] sm:$0xff]
  %v173 = vld [vmem:[%s1 + $0x358] sm:$0xff]
  %v174 = vld [vmem:[%s1 + $0x360] sm:$0xff]
  %v175 = vld [vmem:[%s1 + $0x368] sm:$0xff]
  %v176 = vld [vmem:[%s1 + $0x370] sm:$0xff]
  %v177 = vld [vmem:[%s1 + $0x378] sm:$0xff]
  %v178 = vld [vmem:[%s1 + $0x380] sm:$0xff]
  %v179 = vld [vmem:[%s1 + $0x388] sm:$0xff]
  %v180 = vld [vmem:[%s1 + $0x390] sm:$0xff]
  %v181 = vld [vmem:[%s1 + $0x398] sm:$0xff]
  %v182 = vld [vmem:[%s1 + $0x3a0] sm:$0xff]
  %v183 = vld [vmem:[%s1 + $0x3a8] sm:$0xff]
  %v184 = vld [vmem:[%s1 + $0x3b0] sm:$0xff]
  %v185 = vld [vmem:[%s1 + $0x3b8] sm:$0xff]
  %v186 = vld [vmem:[%s1 + $0x3c0] sm:$0xff]
  %v187 = vld [vmem:[%s1 + $0x3c8] sm:$0xff]
  %v188 = vld [vmem:[%s1 + $0x3d0] sm:$0xff]
  %v189 = vld [vmem:[%s1 + $0x3d8] sm:$0xff]
  %v190 = vld [vmem:[%s1 + $0x3e0] sm:$0xff]
  %v191 = vld [vmem:[%s1 + $0x3e8] sm:$0xff]
  %v192 = vld [vmem:[%s1 + $0x3f0] sm:$0xff]
  %v193 = vld [vmem:[%s1 + $0x3f8] sm:$0xff]
  %v194 = vld [vmem:[%s1 + $0x400] sm:$0xff]
  %v195 = vld [vmem:[%s1 + $0x408] sm:$0xff]
  %v196 = vld [vmem:[%s1 + $0x410] sm:$0xff]
  %v197 = vld [vmem:[%s1 + $0x418] sm:$0xff]
  %v198 = vld [vmem:[%s1 + $0x420] sm:$0xff]
  %v199 = vld [vmem:[%s1 + $0x428] sm:$0xff]
  %v200 = vld [vmem:[%s1 + $0x430] sm:$0xff]
  %v201 = vld [vmem:[%s1 + $0x438] sm:$0xff]
  %v202 = vld [vmem:[%s1 + $0x440] sm:$0xff]
  %v203 = vld [vmem:[%s1 + $0x448] sm:$0xff]
  %v204 = vld [vmem:[%s1 + $0x450] sm:$0xff]
  %v205 = vld [vmem:[%s1 + $0x458] sm:$0xff]
  %v206 = vld [vmem:[%s1 + $0x460] sm:$0xff]
  %v207 = vld [vmem:[%s1 + $0x468] sm:$0xff]
  %v208 = vld [vmem:[%s1 + $0x470] sm:$0xff]
  %v209 = vld [vmem:[%s1 + $0x478] sm:$0xff]
  %v210 = vld [vmem:[%s1 + $0x480] sm:$0xff]
  %v211 = vld [vmem:[%s1 + $0x488] sm:$0xff]
  %v212 = vld [vmem:[%s1 + $0x490] sm:$0xff]
  %v213 = vld [vmem:[%s1 + $0x498] sm:$0xff]
  %v214 = vld [vmem:[%s1 + $0x4a0] sm:$0xff]
  %v215 = vld [vmem:[%s1 + $0x4a8] sm:$0xff]
  %v216 = vld [vmem:[%s1 + $0x4b0] sm:$0xff]
  %v217 = vld [vmem:[%s1 + $0x4b8] sm:$0xff]
  %v218 = vld [vmem:[%s1 + $0x4c0] sm:$0xff]
  %v219 = vld [vmem:[%s1 + $0x4c8] sm:$0xff]
  %v220 = vld [vmem:[%s1 + $0x4d0] sm:$0xff]
  %v221 = vld [vmem:[%s1 + $0x4d8] sm:$0xff]
  %v222 = vld [vmem:[%s1 + $0x4e0] sm:$0xff]
  %v223 = vld [vmem:[%s1 + $0x4e8] sm:$0xff]
  %v224 = vld [vmem:[%s1 + $0x4f0] sm:$0xff]
  %v225 = vld [vmem:[%s1 + $0x4f8] sm:$0xff]
  %v226 = vld [vmem:[%s1 + $0x500] sm:$0xff]
  %v227 = vld [vmem:[%s1 + $0x508] sm:$0xff]
  %v228 = vld [vmem:[%s1 + $0x510] sm:$0xff]
  %v229 = vld [vmem:[%s1 + $0x518] sm:$0xff]
  %v230 = vld [vmem:[%s1 + $0x520] sm:$0xff]
  %v231 = vld [vmem:[%s1 + $0x528] sm:$0xff]
  %v232 = vld [vmem:[%s1 + $0x530] sm:$0xff]
  %v233 = vld [vmem:[%s1 + $0x538] sm:$0xff]
  %v234 = vld [vmem:[%s1 + $0x540] sm:$0xff]
  %v235 = vld [vmem:[%s1 + $0x548] sm:$0xff]
  %v236 = vld [vmem:[%s1 + $0x550] sm:$0xff]
  %v237 = vld [vmem:[%s1 + $0x558] sm:$0xff]
  %v238 = vld [vmem:[%s1 + $0x560] sm:$0xff]
  %v239 = vld [vmem:[%s1 + $0x568] sm:$0xff]
  %v240 = vld [vmem:[%s1 + $0x570] sm:$0xff]
  %v241 = vld [vmem:[%s1 + $0x578] sm:$0xff]
  %v242 = vld [vmem:[%s1 + $0x580] sm:$0xff]
  %v243 = vld [vmem:[%s1 + $0x588] sm:$0xff]
  %v244 = vld [vmem:[%s1 + $0x590] sm:$0xff]
  %v245 = vld [vmem:[%s1 + $0x598] sm:$0xff]
  %v246 = vld [vmem:[%s1 + $0x5a0] sm:$0xff]
  %v247 = vld [vmem:[%s1 + $0x5a8] sm:$0xff]
  %v248 = vld [vmem:[%s1 + $0x5b0] sm:$0xff]
  %v249 = vld [vmem:[%s1 + $0x5b8] sm:$0xff]
  %v250 = vld [vmem:[%s1 + $0x5c0] sm:$0xff]
  %v251 = vld [vmem:[%s1 + $0x5c8] sm:$0xff]
  %v252 = vld [vmem:[%s1 + $0x5d0] sm:$0xff]
  %v253 = vld [vmem:[%s1 + $0x5d8] sm:$0xff]
  %v254 = vld [vmem:[%s1 + $0x5e0] sm:$0xff]
  %v255 = vld [vmem:[%s1 + $0x5e8] sm:$0xff]
  %v256 = vld [vmem:[%s1 + $0x5f0] sm:$0xff]
  %v257 = vld [vmem:[%s1 + $0x5f8] sm:$0xff]
  %v258 = vld [vmem:[%s1 + $0x600] sm:$0xff]
  %v259 = vld [vmem:[%s1 + $0x608] sm:$0xff]
  %v260 = vld [vmem:[%s1 + $0x610] sm:$0xff]
  %v261 = vld [vmem:[%s1 + $0x618] sm:$0xff]
  %v262 = vld [vmem:[%s1 + $0x620] sm:$0xff]
  %v263 = vld [vmem:[%s1 + $0x628] sm:$0xff]
  %v264 = vld [vmem:[%s1 + $0x630] sm:$0xff]
  %v265 = vld [vmem:[%s1 + $0x638] sm:$0xff]
  %v266 = vld [vmem:[%s2] sm:$0x1]
  %v268 = vlaneseq
  %v269 = vshrl.u32 %v268, 7
  %v270 = vsub.s32 0, %v269
  %v271 = vrot.slane %v266, %v270
  %vm273 = vcmask 523264
  %v275 = vsel %vm273, %v26, 0
  %v278 = vsel %vm273, %v39, 0
  %v281 = vsel %vm273, %v52, 0
  %v284 = vsel %vm273, %v65, 0
  %286 = vmatprep.subr.mxu0 0.0
  %287 = vmatpush1.msra.mxu0 %v66
  %288 = vmatprep.subr.mxu0 0.0
  %289 = vmatpush1.msra.mxu0 %v67
  %290 = vmatprep.subr.mxu0 0.0
  %291 = vmatpush1.msra.mxu0 %v68
  %292 = vmatprep.subr.mxu0 0.0
  %293 = vmatpush1.msra.mxu0 %v69
  %294 = vmatprep.subr.mxu0 0.0
  %295 = vmatpush1.msra.mxu0 %v70
  %296 = vmatprep.subr.mxu0 0.0
  %297 = vmatpush1.msra.mxu0 %v71
  %298 = vmatprep.subr.mxu0 0.0
  %299 = vmatpush1.msra.mxu0 %v72
  %300 = vmatprep.subr.mxu0 0.0
  %301 = vmatpush1.msra.mxu0 %v73
  %302 = vmatprep.subr.mxu0 0.0
  %303 = vmatpush1.msra.mxu0 %v74
  %304 = vmatprep.subr.mxu0 0.0
  %305 = vmatpush1.msra.mxu0 %v75
  %306 = vmatprep.subr.mxu0 0.0
  %307 = vmatpush1.msra.mxu0 %v76
  %308 = vmatprep.subr.mxu0 0.0
  %309 = vmatpush1.msra.mxu0 %v77
  %310 = vmatprep.subr.mxu0 0.0
  %311 = vmatpush1.msra.mxu0 %v78
  %312 = vmatprep.subr.mxu0 0.0
  %313 = vmatpush1.msra.mxu0 %v79
  %314 = vmatprep.subr.mxu0 0.0
  %315 = vmatpush1.msra.mxu0 %v80
  %316 = vmatprep.subr.mxu0 0.0
  %317 = vmatpush1.msra.mxu0 %v81
  %318 = vmatprep.subr.mxu0 0.0
  %319 = vmatpush1.msra.mxu0 %v82
  %320 = vmatprep.subr.mxu0 0.0
  %321 = vmatpush1.msra.mxu0 %v83
  %322 = vmatprep.subr.mxu0 0.0
  %323 = vmatpush1.msra.mxu0 %v84
  %324 = vmatprep.subr.mxu0 0.0
  %325 = vmatpush1.msra.mxu0 %v85
  %326 = vmatprep.subr.mxu0 0.0
  %327 = vmatpush1.msra.mxu0 %v86
  %328 = vmatprep.subr.mxu0 0.0
  %329 = vmatpush1.msra.mxu0 %v87
  %330 = vmatprep.subr.mxu0 0.0
  %331 = vmatpush1.msra.mxu0 %v88
  %332 = vmatprep.subr.mxu0 0.0
  %333 = vmatpush1.msra.mxu0 %v89
  %334 = vmatprep.subr.mxu0 0.0
  %335 = vmatpush1.msra.mxu0 %v90
  %336 = vmatprep.subr.mxu0 0.0
  %337 = vmatpush1.msra.mxu0 %v91
  %338 = vmatprep.subr.mxu0 0.0
  %339 = vmatpush1.msra.mxu0 %v92
  %340 = vmatprep.subr.mxu0 0.0
  %341 = vmatpush1.msra.mxu0 %v93
  %342 = vmatprep.subr.mxu0 0.0
  %343 = vmatpush1.msra.mxu0 %v94
  %344 = vmatprep.subr.mxu0 0.0
  %345 = vmatpush1.msra.mxu0 %v95
  %346 = vmatprep.subr.mxu0 0.0
  %347 = vmatpush1.msra.mxu0 %v96
  %348 = vmatprep.subr.mxu0 0.0
  %349 = vmatpush1.msra.mxu0 %v97
  %350 = vmatprep.mubr.f32.mxu0 %v15
  %351 = vmatmul.mubr.f32.gmra.mrb[0].mxu0 %v14
  %v352 = vpop.f32.mrb[0].mxu0
  %v353 = vadd.f32 %v271, %v352
  %v354 = vpop.f32.mrb[0].mxu0
  %355 = vmatprep.mubr.f32.mxu0 %v28
  %356 = vmatmul.mubr.f32.gmra.mrb[0].mxu0 %v27
  %v357 = vpop.f32.mrb[0].mxu0
  %v358 = vadd.f32 %v271, %v357
  %v359 = vpop.f32.mrb[0].mxu0
  %360 = vmatprep.mubr.f32.mxu0 %v41
  %361 = vmatmul.mubr.f32.gmra.mrb[0].mxu0 %v40
  %v362 = vpop.f32.mrb[0].mxu0
  %v363 = vadd.f32 %v271, %v362
  %v364 = vpop.f32.mrb[0].mxu0
  %365 = vmatprep.mubr.f32.mxu0 %v54
  %366 = vmatmul.mubr.f32.gmra.mrb[0].mxu0 %v53
  %v367 = vpop.f32.mrb[0].mxu0
  %v368 = vadd.f32 %v271, %v367
  %v369 = vpop.f32.mrb[0].mxu0
  %370 = vdwg.mxu0
  %371 = vmatprep.subr.mxu0 0.0
  %372 = vmatpush1.msra.mxu0 %v98
  %373 = vmatprep.subr.mxu0 0.0
  %374 = vmatpush1.msra.mxu0 %v99
  %375 = vmatprep.subr.mxu0 0.0
  %376 = vmatpush1.msra.mxu0 %v100
  %377 = vmatprep.subr.mxu0 0.0
  %378 = vmatpush1.msra.mxu0 %v101
  %379 = vmatprep.subr.mxu0 0.0
  %380 = vmatpush1.msra.mxu0 %v102
  %381 = vmatprep.subr.mxu0 0.0
  %382 = vmatpush1.msra.mxu0 %v103
  %383 = vmatprep.subr.mxu0 0.0
  %384 = vmatpush1.msra.mxu0 %v104
  %385 = vmatprep.subr.mxu0 0.0
  %386 = vmatpush1.msra.mxu0 %v105
  %387 = vmatprep.subr.mxu0 0.0
  %388 = vmatpush1.msra.mxu0 %v106
  %389 = vmatprep.subr.mxu0 0.0
  %390 = vmatpush1.msra.mxu0 %v107
  %391 = vmatprep.subr.mxu0 0.0
  %392 = vmatpush1.msra.mxu0 %v108
  %393 = vmatprep.subr.mxu0 0.0
  %394 = vmatpush1.msra.mxu0 %v109
  %395 = vmatprep.subr.mxu0 0.0
  %396 = vmatpush1.msra.mxu0 %v110
  %397 = vmatprep.subr.mxu0 0.0
  %398 = vmatpush1.msra.mxu0 %v111
  %399 = vmatprep.subr.mxu0 0.0
  %400 = vmatpush1.msra.mxu0 %v112
  %401 = vmatprep.subr.mxu0 0.0
  %402 = vmatpush1.msra.mxu0 %v113
  %403 = vmatprep.subr.mxu0 0.0
  %404 = vmatpush1.msra.mxu0 %v114
  %405 = vmatprep.subr.mxu0 0.0
  %406 = vmatpush1.msra.mxu0 %v115
  %407 = vmatprep.subr.mxu0 0.0
  %408 = vmatpush1.msra.mxu0 %v116
  %409 = vmatprep.subr.mxu0 0.0
  %410 = vmatpush1.msra.mxu0 %v117
  %411 = vmatprep.subr.mxu0 0.0
  %412 = vmatpush1.msra.mxu0 %v118
  %413 = vmatprep.subr.mxu0 0.0
  %414 = vmatpush1.msra.mxu0 %v119
  %415 = vmatprep.subr.mxu0 0.0
  %416 = vmatpush1.msra.mxu0 %v120
  %417 = vmatprep.subr.mxu0 0.0
  %418 = vmatpush1.msra.mxu0 %v121
  %419 = vmatprep.subr.mxu0 0.0
  %420 = vmatpush1.msra.mxu0 %v122
  %421 = vmatprep.subr.mxu0 0.0
  %422 = vmatpush1.msra.mxu0 %v123
  %423 = vmatprep.subr.mxu0 0.0
  %424 = vmatpush1.msra.mxu0 %v124
  %425 = vmatprep.subr.mxu0 0.0
  %426 = vmatpush1.msra.mxu0 %v125
  %427 = vmatprep.subr.mxu0 0.0
  %428 = vmatpush1.msra.mxu0 %v126
  %429 = vmatprep.subr.mxu0 0.0
  %430 = vmatpush1.msra.mxu0 %v127
  %431 = vmatprep.subr.mxu0 0.0
  %432 = vmatpush1.msra.mxu0 %v128
  %433 = vmatprep.subr.mxu0 0.0
  %434 = vmatpush1.msra.mxu0 %v129
  %435 = vmatprep.mubr.f32.mxu0 %v17
  %436 = vmatmul.mubr.f32.gmra.mrb[0].mxu0 %v16
  %v437 = vpop.f32.mrb[0].mxu0
  %v438 = vadd.f32 %v353, %v437
  %v439 = vpop.f32.mrb[0].mxu0
  %440 = vmatprep.mubr.f32.mxu0 %v30
  %441 = vmatmul.mubr.f32.gmra.mrb[0].mxu0 %v29
  %v442 = vpop.f32.mrb[0].mxu0
  %v443 = vadd.f32 %v358, %v442
  %v444 = vpop.f32.mrb[0].mxu0
  %445 = vmatprep.mubr.f32.mxu0 %v43
  %446 = vmatmul.mubr.f32.gmra.mrb[0].mxu0 %v42
  %v447 = vpop.f32.mrb[0].mxu0
  %v448 = vadd.f32 %v363, %v447
  %v449 = vpop.f32.mrb[0].mxu0
  %450 = vmatprep.mubr.f32.mxu0 %v56
  %451 = vmatmul.mubr.f32.gmra.mrb[0].mxu0 %v55
  %v452 = vpop.f32.mrb[0].mxu0
  %v453 = vadd.f32 %v368, %v452
  %v454 = vpop.f32.mrb[0].mxu0
  %455 = vdwg.mxu0
  %456 = vmatprep.subr.mxu0 0.0
  %457 = vmatpush1.msra.mxu0 %v130
  %458 = vmatprep.subr.mxu0 0.0
  %459 = vmatpush1.msra.mxu0 %v131
  %460 = vmatprep.subr.mxu0 0.0
  %461 = vmatpush1.msra.mxu0 %v132
  %462 = vmatprep.subr.mxu0 0.0
  %463 = vmatpush1.msra.mxu0 %v133
  %464 = vmatprep.subr.mxu0 0.0
  %465 = vmatpush1.msra.mxu0 %v134
  %466 = vmatprep.subr.mxu0 0.0
  %467 = vmatpush1.msra.mxu0 %v135
  %468 = vmatprep.subr.mxu0 0.0
  %469 = vmatpush1.msra.mxu0 %v136
  %470 = vmatprep.subr.mxu0 0.0
  %471 = vmatpush1.msra.mxu0 %v137
  %472 = vmatprep.subr.mxu0 0.0
  %473 = vmatpush1.msra.mxu0 %v138
  %474 = vmatprep.subr.mxu0 0.0
  %475 = vmatpush1.msra.mxu0 %v139
  %476 = vmatprep.subr.mxu0 0.0
  %477 = vmatpush1.msra.mxu0 %v140
  %478 = vmatprep.subr.mxu0 0.0
  %479 = vmatpush1.msra.mxu0 %v141
  %480 = vmatprep.subr.mxu0 0.0
  %481 = vmatpush1.msra.mxu0 %v142
  %482 = vmatprep.subr.mxu0 0.0
  %483 = vmatpush1.msra.mxu0 %v143
  %484 = vmatprep.subr.mxu0 0.0
  %485 = vmatpush1.msra.mxu0 %v144
  %486 = vmatprep.subr.mxu0 0.0
  %487 = vmatpush1.msra.mxu0 %v145
  %488 = vmatprep.subr.mxu0 0.0
  %489 = vmatpush1.msra.mxu0 %v146
  %490 = vmatprep.subr.mxu0 0.0
  %491 = vmatpush1.msra.mxu0 %v147
  %492 = vmatprep.subr.mxu0 0.0
  %493 = vmatpush1.msra.mxu0 %v148
  %494 = vmatprep.subr.mxu0 0.0
  %495 = vmatpush1.msra.mxu0 %v149
  %496 = vmatprep.subr.mxu0 0.0
  %497 = vmatpush1.msra.mxu0 %v150
  %498 = vmatprep.subr.mxu0 0.0
  %499 = vmatpush1.msra.mxu0 %v151
  %500 = vmatprep.subr.mxu0 0.0
  %501 = vmatpush1.msra.mxu0 %v152
  %502 = vmatprep.subr.mxu0 0.0
  %503 = vmatpush1.msra.mxu0 %v153
  %504 = vmatprep.subr.mxu0 0.0
  %505 = vmatpush1.msra.mxu0 %v154
  %506 = vmatprep.subr.mxu0 0.0
  %507 = vmatpush1.msra.mxu0 %v155
  %508 = vmatprep.subr.mxu0 0.0
  %509 = vmatpush1.msra.mxu0 %v156
  %510 = vmatprep.subr.mxu0 0.0
  %511 = vmatpush1.msra.mxu0 %v157
  %512 = vmatprep.subr.mxu0 0.0
  %513 = vmatpush1.msra.mxu0 %v158
  %514 = vmatprep.subr.mxu0 0.0
  %515 = vmatpush1.msra.mxu0 %v159
  %516 = vmatprep.subr.mxu0 0.0
  %517 = vmatpush1.msra.mxu0 %v160
  %518 = vmatprep.subr.mxu0 0.0
  %519 = vmatpush1.msra.mxu0 %v161
  %520 = vmatprep.mubr.f32.mxu0 %v19
  %521 = vmatmul.mubr.f32.gmra.mrb[0].mxu0 %v18
  %v522 = vpop.f32.mrb[0].mxu0
  %v523 = vadd.f32 %v438, %v522
  %v524 = vpop.f32.mrb[0].mxu0
  %525 = vmatprep.mubr.f32.mxu0 %v32
  %526 = vmatmul.mubr.f32.gmra.mrb[0].mxu0 %v31
  %v527 = vpop.f32.mrb[0].mxu0
  %v528 = vadd.f32 %v443, %v527
  %v529 = vpop.f32.mrb[0].mxu0
  %530 = vmatprep.mubr.f32.mxu0 %v45
  %531 = vmatmul.mubr.f32.gmra.mrb[0].mxu0 %v44
  %v532 = vpop.f32.mrb[0].mxu0
  %v533 = vadd.f32 %v448, %v532
  %v534 = vpop.f32.mrb[0].mxu0
  %535 = vmatprep.mubr.f32.mxu0 %v58
  %536 = vmatmul.mubr.f32.gmra.mrb[0].mxu0 %v57
  %v537 = vpop.f32.mrb[0].mxu0
  %v538 = vadd.f32 %v453, %v537
  %v539 = vpop.f32.mrb[0].mxu0
  %540 = vdwg.mxu0
  %541 = vmatprep.subr.mxu0 0.0
  %542 = vmatpush1.msra.mxu0 %v162
  %543 = vmatprep.subr.mxu0 0.0
  %544 = vmatpush1.msra.mxu0 %v163
  %545 = vmatprep.subr.mxu0 0.0
  %546 = vmatpush1.msra.mxu0 %v164
  %547 = vmatprep.subr.mxu0 0.0
  %548 = vmatpush1.msra.mxu0 %v165
  %549 = vmatprep.subr.mxu0 0.0
  %550 = vmatpush1.msra.mxu0 %v166
  %551 = vmatprep.subr.mxu0 0.0
  %552 = vmatpush1.msra.mxu0 %v167
  %553 = vmatprep.subr.mxu0 0.0
  %554 = vmatpush1.msra.mxu0 %v168
  %555 = vmatprep.subr.mxu0 0.0
  %556 = vmatpush1.msra.mxu0 %v169
  %557 = vmatprep.subr.mxu0 0.0
  %558 = vmatpush1.msra.mxu0 %v170
  %559 = vmatprep.subr.mxu0 0.0
  %560 = vmatpush1.msra.mxu0 %v171
  %561 = vmatprep.subr.mxu0 0.0
  %562 = vmatpush1.msra.mxu0 %v172
  %563 = vmatprep.subr.mxu0 0.0
  %564 = vmatpush1.msra.mxu0 %v173
  %565 = vmatprep.subr.mxu0 0.0
  %566 = vmatpush1.msra.mxu0 %v174
  %567 = vmatprep.subr.mxu0 0.0
  %568 = vmatpush1.msra.mxu0 %v175
  %569 = vmatprep.subr.mxu0 0.0
  %570 = vmatpush1.msra.mxu0 %v176
  %571 = vmatprep.subr.mxu0 0.0
  %572 = vmatpush1.msra.mxu0 %v177
  %573 = vmatprep.subr.mxu0 0.0
  %574 = vmatpush1.msra.mxu0 %v178
  %575 = vmatprep.subr.mxu0 0.0
  %576 = vmatpush1.msra.mxu0 %v179
  %577 = vmatprep.subr.mxu0 0.0
  %578 = vmatpush1.msra.mxu0 %v180
  %579 = vmatprep.subr.mxu0 0.0
  %580 = vmatpush1.msra.mxu0 %v181
  %581 = vmatprep.subr.mxu0 0.0
  %582 = vmatpush1.msra.mxu0 %v182
  %583 = vmatprep.subr.mxu0 0.0
  %584 = vmatpush1.msra.mxu0 %v183
  %585 = vmatprep.subr.mxu0 0.0
  %586 = vmatpush1.msra.mxu0 %v184
  %587 = vmatprep.subr.mxu0 0.0
  %588 = vmatpush1.msra.mxu0 %v185
  %589 = vmatprep.subr.mxu0 0.0
  %590 = vmatpush1.msra.mxu0 %v186
  %591 = vmatprep.subr.mxu0 0.0
  %592 = vmatpush1.msra.mxu0 %v187
  %593 = vmatprep.subr.mxu0 0.0
  %594 = vmatpush1.msra.mxu0 %v188
  %595 = vmatprep.subr.mxu0 0.0
  %596 = vmatpush1.msra.mxu0 %v189
  %597 = vmatprep.subr.mxu0 0.0
  %598 = vmatpush1.msra.mxu0 %v190
  %599 = vmatprep.subr.mxu0 0.0
  %600 = vmatpush1.msra.mxu0 %v191
  %601 = vmatprep.subr.mxu0 0.0
  %602 = vmatpush1.msra.mxu0 %v192
  %603 = vmatprep.subr.mxu0 0.0
  %604 = vmatpush1.msra.mxu0 %v193
  %605 = vmatprep.mubr.f32.mxu0 %v21
  %606 = vmatmul.mubr.f32.gmra.mrb[0].mxu0 %v20
  %v607 = vpop.f32.mrb[0].mxu0
  %v608 = vadd.f32 %v523, %v607
  %v609 = vpop.f32.mrb[0].mxu0
  %610 = vmatprep.mubr.f32.mxu0 %v34
  %611 = vmatmul.mubr.f32.gmra.mrb[0].mxu0 %v33
  %v612 = vpop.f32.mrb[0].mxu0
  %v613 = vadd.f32 %v528, %v612
  %v614 = vpop.f32.mrb[0].mxu0
  %615 = vmatprep.mubr.f32.mxu0 %v47
  %616 = vmatmul.mubr.f32.gmra.mrb[0].mxu0 %v46
  %v617 = vpop.f32.mrb[0].mxu0
  %v618 = vadd.f32 %v533, %v617
  %v619 = vpop.f32.mrb[0].mxu0
  %620 = vmatprep.mubr.f32.mxu0 %v60
  %621 = vmatmul.mubr.f32.gmra.mrb[0].mxu0 %v59
  %v622 = vpop.f32.mrb[0].mxu0
  %v623 = vadd.f32 %v538, %v622
  %v624 = vpop.f32.mrb[0].mxu0
  %625 = vdwg.mxu0
  %626 = vmatprep.subr.mxu0 0.0
  %627 = vmatpush1.msra.mxu0 %v194
  %628 = vmatprep.subr.mxu0 0.0
  %629 = vmatpush1.msra.mxu0 %v195
  %630 = vmatprep.subr.mxu0 0.0
  %631 = vmatpush1.msra.mxu0 %v196
  %632 = vmatprep.subr.mxu0 0.0
  %633 = vmatpush1.msra.mxu0 %v197
  %634 = vmatprep.subr.mxu0 0.0
  %635 = vmatpush1.msra.mxu0 %v198
  %636 = vmatprep.subr.mxu0 0.0
  %637 = vmatpush1.msra.mxu0 %v199
  %638 = vmatprep.subr.mxu0 0.0
  %639 = vmatpush1.msra.mxu0 %v200
  %640 = vmatprep.subr.mxu0 0.0
  %641 = vmatpush1.msra.mxu0 %v201
  %642 = vmatprep.subr.mxu0 0.0
  %643 = vmatpush1.msra.mxu0 %v202
  %644 = vmatprep.subr.mxu0 0.0
  %645 = vmatpush1.msra.mxu0 %v203
  %646 = vmatprep.subr.mxu0 0.0
  %647 = vmatpush1.msra.mxu0 %v204
  %648 = vmatprep.subr.mxu0 0.0
  %649 = vmatpush1.msra.mxu0 %v205
  %650 = vmatprep.subr.mxu0 0.0
  %651 = vmatpush1.msra.mxu0 %v206
  %652 = vmatprep.subr.mxu0 0.0
  %653 = vmatpush1.msra.mxu0 %v207
  %654 = vmatprep.subr.mxu0 0.0
  %655 = vmatpush1.msra.mxu0 %v208
  %656 = vmatprep.subr.mxu0 0.0
  %657 = vmatpush1.msra.mxu0 %v209
  %658 = vmatprep.subr.mxu0 0.0
  %659 = vmatpush1.msra.mxu0 %v210
  %660 = vmatprep.subr.mxu0 0.0
  %661 = vmatpush1.msra.mxu0 %v211
  %662 = vmatprep.subr.mxu0 0.0
  %663 = vmatpush1.msra.mxu0 %v212
  %664 = vmatprep.subr.mxu0 0.0
  %665 = vmatpush1.msra.mxu0 %v213
  %666 = vmatprep.subr.mxu0 0.0
  %667 = vmatpush1.msra.mxu0 %v214
  %668 = vmatprep.subr.mxu0 0.0
  %669 = vmatpush1.msra.mxu0 %v215
  %670 = vmatprep.subr.mxu0 0.0
  %671 = vmatpush1.msra.mxu0 %v216
  %672 = vmatprep.subr.mxu0 0.0
  %673 = vmatpush1.msra.mxu0 %v217
  %674 = vmatprep.subr.mxu0 0.0
  %675 = vmatpush1.msra.mxu0 %v218
  %676 = vmatprep.subr.mxu0 0.0
  %677 = vmatpush1.msra.mxu0 %v219
  %678 = vmatprep.subr.mxu0 0.0
  %679 = vmatpush1.msra.mxu0 %v220
  %680 = vmatprep.subr.mxu0 0.0
  %681 = vmatpush1.msra.mxu0 %v221
  %682 = vmatprep.subr.mxu0 0.0
  %683 = vmatpush1.msra.mxu0 %v222
  %684 = vmatprep.subr.mxu0 0.0
  %685 = vmatpush1.msra.mxu0 %v223
  %686 = vmatprep.subr.mxu0 0.0
  %687 = vmatpush1.msra.mxu0 %v224
  %688 = vmatprep.subr.mxu0 0.0
  %689 = vmatpush1.msra.mxu0 %v225
  %690 = vmatprep.mubr.f32.mxu0 %v23
  %691 = vmatmul.mubr.f32.gmra.mrb[0].mxu0 %v22
  %v692 = vpop.f32.mrb[0].mxu0
  %v693 = vadd.f32 %v608, %v692
  %v694 = vpop.f32.mrb[0].mxu0
  %695 = vmatprep.mubr.f32.mxu0 %v36
  %696 = vmatmul.mubr.f32.gmra.mrb[0].mxu0 %v35
  %v697 = vpop.f32.mrb[0].mxu0
  %v698 = vadd.f32 %v613, %v697
  %v699 = vpop.f32.mrb[0].mxu0
  %700 = vmatprep.mubr.f32.mxu0 %v49
  %701 = vmatmul.mubr.f32.gmra.mrb[0].mxu0 %v48
  %v702 = vpop.f32.mrb[0].mxu0
  %v703 = vadd.f32 %v618, %v702
  %v704 = vpop.f32.mrb[0].mxu0
  %705 = vmatprep.mubr.f32.mxu0 %v62
  %706 = vmatmul.mubr.f32.gmra.mrb[0].mxu0 %v61
  %v707 = vpop.f32.mrb[0].mxu0
  %v708 = vadd.f32 %v623, %v707
  %v709 = vpop.f32.mrb[0].mxu0
  %710 = vdwg.mxu0
  %711 = vmatprep.subr.mxu0 0.0
  %712 = vmatpush1.msra.mxu0 %v226
  %713 = vmatprep.subr.mxu0 0.0
  %714 = vmatpush1.msra.mxu0 %v227
  %715 = vmatprep.subr.mxu0 0.0
  %716 = vmatpush1.msra.mxu0 %v228
  %717 = vmatprep.subr.mxu0 0.0
  %718 = vmatpush1.msra.mxu0 %v229
  %719 = vmatprep.subr.mxu0 0.0
  %720 = vmatpush1.msra.mxu0 %v230
  %721 = vmatprep.subr.mxu0 0.0
  %722 = vmatpush1.msra.mxu0 %v231
  %723 = vmatprep.subr.mxu0 0.0
  %724 = vmatpush1.msra.mxu0 %v232
  %725 = vmatprep.subr.mxu0 0.0
  %726 = vmatpush1.msra.mxu0 %v233
  %727 = vmatprep.subr.mxu0 0.0
  %728 = vmatpush1.msra.mxu0 %v234
  %729 = vmatprep.subr.mxu0 0.0
  %730 = vmatpush1.msra.mxu0 %v235
  %731 = vmatprep.subr.mxu0 0.0
  %732 = vmatpush1.msra.mxu0 %v236
  %733 = vmatprep.subr.mxu0 0.0
  %734 = vmatpush1.msra.mxu0 %v237
  %735 = vmatprep.subr.mxu0 0.0
  %736 = vmatpush1.msra.mxu0 %v238
  %737 = vmatprep.subr.mxu0 0.0
  %738 = vmatpush1.msra.mxu0 %v239
  %739 = vmatprep.subr.mxu0 0.0
  %740 = vmatpush1.msra.mxu0 %v240
  %741 = vmatprep.subr.mxu0 0.0
  %742 = vmatpush1.msra.mxu0 %v241
  %743 = vmatprep.subr.mxu0 0.0
  %744 = vmatpush1.msra.mxu0 %v242
  %745 = vmatprep.subr.mxu0 0.0
  %746 = vmatpush1.msra.mxu0 %v243
  %747 = vmatprep.subr.mxu0 0.0
  %748 = vmatpush1.msra.mxu0 %v244
  %749 = vmatprep.subr.mxu0 0.0
  %750 = vmatpush1.msra.mxu0 %v245
  %751 = vmatprep.subr.mxu0 0.0
  %752 = vmatpush1.msra.mxu0 %v246
  %753 = vmatprep.subr.mxu0 0.0
  %754 = vmatpush1.msra.mxu0 %v247
  %755 = vmatprep.subr.mxu0 0.0
  %756 = vmatpush1.msra.mxu0 %v248
  %757 = vmatprep.subr.mxu0 0.0
  %758 = vmatpush1.msra.mxu0 %v249
  %759 = vmatprep.subr.mxu0 0.0
  %760 = vmatpush1.msra.mxu0 %v250
  %761 = vmatprep.subr.mxu0 0.0
  %762 = vmatpush1.msra.mxu0 %v251
  %763 = vmatprep.subr.mxu0 0.0
  %764 = vmatpush1.msra.mxu0 %v252
  %765 = vmatprep.subr.mxu0 0.0
  %766 = vmatpush1.msra.mxu0 %v253
  %767 = vmatprep.subr.mxu0 0.0
  %768 = vmatpush1.msra.mxu0 %v254
  %769 = vmatprep.subr.mxu0 0.0
  %770 = vmatpush1.msra.mxu0 %v255
  %771 = vmatprep.subr.mxu0 0.0
  %772 = vmatpush1.msra.mxu0 %v256
  %773 = vmatprep.subr.mxu0 0.0
  %774 = vmatpush1.msra.mxu0 %v257
  %775 = vmatprep.mubr.f32.mxu0 %v25
  %776 = vmatmul.mubr.f32.gmra.mrb[0].mxu0 %v24
  %v777 = vpop.f32.mrb[0].mxu0
  %v778 = vadd.f32 %v693, %v777
  %v779 = vpop.f32.mrb[0].mxu0
  %780 = vmatprep.mubr.f32.mxu0 %v38
  %781 = vmatmul.mubr.f32.gmra.mrb[0].mxu0 %v37
  %v782 = vpop.f32.mrb[0].mxu0
  %v783 = vadd.f32 %v698, %v782
  %v784 = vpop.f32.mrb[0].mxu0
  %785 = vmatprep.mubr.f32.mxu0 %v51
  %786 = vmatmul.mubr.f32.gmra.mrb[0].mxu0 %v50
  %v787 = vpop.f32.mrb[0].mxu0
  %v788 = vadd.f32 %v703, %v787
  %v789 = vpop.f32.mrb[0].mxu0
  %790 = vmatprep.mubr.f32.mxu0 %v64
  %791 = vmatmul.mubr.f32.gmra.mrb[0].mxu0 %v63
  %v792 = vpop.f32.mrb[0].mxu0
  %v793 = vadd.f32 %v708, %v792
  %v794 = vpop.f32.mrb[0].mxu0
  %795 = vdwg.mxu0
  %796 = vmatprep.subr.mxu0 0.0
  %797 = vmatpush1.msra.mxu0 %v258
  %798 = vmatprep.subr.mxu0 0.0
  %799 = vmatpush1.msra.mxu0 %v259
  %800 = vmatprep.subr.mxu0 0.0
  %801 = vmatpush1.msra.mxu0 %v260
  %802 = vmatprep.subr.mxu0 0.0
  %803 = vmatpush1.msra.mxu0 %v261
  %804 = vmatprep.subr.mxu0 0.0
  %805 = vmatpush1.msra.mxu0 %v262
  %806 = vmatprep.subr.mxu0 0.0
  %807 = vmatpush1.msra.mxu0 %v263
  %808 = vmatprep.subr.mxu0 0.0
  %809 = vmatpush1.msra.mxu0 %v264
  %810 = vmatprep.subr.mxu0 0.0
  %811 = vmatpush1.msra.mxu0 %v265
  %812 = vmatprep.subr.mxu0 0.0
  %813 = vmatpush1.msra.mxu0 0.0
  %814 = vmatprep.subr.mxu0 0.0
  %815 = vmatpush1.msra.mxu0 0.0
  %816 = vmatprep.subr.mxu0 0.0
  %817 = vmatpush1.msra.mxu0 0.0
  %818 = vmatprep.subr.mxu0 0.0
  %819 = vmatpush1.msra.mxu0 0.0
  %820 = vmatprep.subr.mxu0 0.0
  %821 = vmatpush1.msra.mxu0 0.0
  %822 = vmatprep.subr.mxu0 0.0
  %823 = vmatpush1.msra.mxu0 0.0
  %824 = vmatprep.subr.mxu0 0.0
  %825 = vmatpush1.msra.mxu0 0.0
  %826 = vmatprep.subr.mxu0 0.0
  %827 = vmatpush1.msra.mxu0 0.0
  %828 = vmatprep.subr.mxu0 0.0
  %829 = vmatpush1.msra.mxu0 0.0
  %830 = vmatprep.subr.mxu0 0.0
  %831 = vmatpush1.msra.mxu0 0.0
  %832 = vmatprep.subr.mxu0 0.0
  %833 = vmatpush1.msra.mxu0 0.0
  %834 = vmatprep.subr.mxu0 0.0
  %835 = vmatpush1.msra.mxu0 0.0
  %836 = vmatprep.subr.mxu0 0.0
  %837 = vmatpush1.msra.mxu0 0.0
  %838 = vmatprep.subr.mxu0 0.0
  %839 = vmatpush1.msra.mxu0 0.0
  %840 = vmatprep.subr.mxu0 0.0
  %841 = vmatpush1.msra.mxu0 0.0
  %842 = vmatprep.subr.mxu0 0.0
  %843 = vmatpush1.msra.mxu0 0.0
  %844 = vmatprep.subr.mxu0 0.0
  %845 = vmatpush1.msra.mxu0 0.0
  %846 = vmatprep.subr.mxu0 0.0
  %847 = vmatpush1.msra.mxu0 0.0
  %848 = vmatprep.subr.mxu0 0.0
  %849 = vmatpush1.msra.mxu0 0.0
  %850 = vmatprep.subr.mxu0 0.0
  %851 = vmatpush1.msra.mxu0 0.0
  %852 = vmatprep.subr.mxu0 0.0
  %853 = vmatpush1.msra.mxu0 0.0
  %854 = vmatprep.subr.mxu0 0.0
  %855 = vmatpush1.msra.mxu0 0.0
  %856 = vmatprep.subr.mxu0 0.0
  %857 = vmatpush1.msra.mxu0 0.0
  %858 = vmatprep.subr.mxu0 0.0
  %859 = vmatpush1.msra.mxu0 0.0
  %860 = vmatprep.mubr.f32.mxu0 0.0
  %861 = vmatmul.mubr.f32.gmra.mrb[0].mxu0 %v275
  %v862 = vpop.f32.mrb[0].mxu0
  %v863 = vadd.f32 %v778, %v862
  %v864 = vpop.f32.mrb[0].mxu0
  %865 = vmatprep.mubr.f32.mxu0 0.0
  %866 = vmatmul.mubr.f32.gmra.mrb[0].mxu0 %v278
  %v867 = vpop.f32.mrb[0].mxu0
  %v868 = vadd.f32 %v783, %v867
  %v869 = vpop.f32.mrb[0].mxu0
  %870 = vmatprep.mubr.f32.mxu0 0.0
  %871 = vmatmul.mubr.f32.gmra.mrb[0].mxu0 %v281
  %v872 = vpop.f32.mrb[0].mxu0
  %v873 = vadd.f32 %v788, %v872
  %v874 = vpop.f32.mrb[0].mxu0
  %875 = vmatprep.mubr.f32.mxu0 0.0
  %876 = vmatmul.mubr.f32.gmra.mrb[0].mxu0 %v284
  %v877 = vpop.f32.mrb[0].mxu0
  %v878 = vadd.f32 %v793, %v877
  %v879 = vpop.f32.mrb[0].mxu0
  %880 = vdwg.mxu0
  %v881 = vmax.f32 %v863, 0.0
  %v882 = vmax.f32 %v868, 0.0
  %v883 = vmax.f32 %v873, 0.0
  %v884 = vmax.f32 %v878, 0.0
  %885 = vst [vmem:[%s3] sm:$0xff] %v881
  %886 = vst [vmem:[%s3 + $0x8] sm:$0xff] %v882
  %887 = vst [vmem:[%s3 + $0x10] sm:$0xff] %v883
  %888 = vst [vmem:[%s3 + $0x18] sm:$0xff] %v884
  // Predicated region
  $region14: #{forward.8} parent=0 // pred_check
    _
  $region15: #{forward.8} parent=0 // pred_check_branch
    %890 = sbr.rel (0) target = $region17
  $region16: #{forward.8} parent=0 // pred_region
    _
  $region17: #{forward.8} parent=0 // pred_fallthru
    _
  // Predicated region
  $region18: #{forward.8} parent=0 // pred_check
    _
  $region19: #{forward.8} parent=0 // pred_check_branch
    %892 = sbr.rel (0) target = $region21
  $region20: #{forward.8} parent=0 // pred_region
    _
  $region21: #{forward.8} parent=0 // pred_fallthru
    _

// kernel: forward.9
$region0: #{forward.9}
  #allocation0 [shape = 'u32[]', space=smem, size = 0x4, offset = 0x4, fixed_abs, tag = 'smem constant byte address 0x4 - core index']
  #allocation1 [shape = 'u32[144,128]{1,0:T(1,128)}', space=vmem, size = 0x12000, scoped, tag = 'internal scratch']
  #allocation2 [shape = 'f32[32,38]{1,0:T(8,128)}', space=vmem, size = 0x4000, scoped, tag = 'scratch operand']
  %s0 = inlined_call_operand.vmem [shape: f32[2,32,16], index: 0, kind: input, shape index: {}]
  %s1 = inlined_call_operand.vmem [shape: f32[1,16], index: 1, kind: input, shape index: {}]
  %s2 = inlined_call_operand.vmem [shape: f32[1,16], index: 2, kind: input, shape index: {}]
  %s3 = inlined_call_operand.vmem [shape: f32[16,38], index: 3, kind: input, shape index: {}]
  %s4 = inlined_call_operand.vmem [shape: f32[16,38], index: 4, kind: input, shape index: {}]
  %s5 = inlined_call_operand.vmem [shape: f32[16,38], index: 5, kind: input, shape index: {}]
  %s6 = inlined_call_operand.vmem [shape: f32[19,38], index: 6, kind: input, shape index: {}]
  %s7 = inlined_call_operand.vmem [shape: f32[19,38], index: 7, kind: input, shape index: {}]
  %s8 = inlined_call_operand.vmem [shape: f32[19,38], index: 8, kind: input, shape index: {}]
  %s9 = inlined_call_operand.vmem [shape: f32[1,19], index: 9, kind: input, shape index: {}]
  %s10 = inlined_call_operand.vmem [shape: f32[1,19], index: 10, kind: input, shape index: {}]
  %s11 = inlined_call_operand.vmem [shape: f32[1,19], index: 11, kind: input, shape index: {}]
  %s12 = inlined_call_operand.vmem [shape: f32[1,2], index: 12, kind: input, shape index: {}]
  %s13 = inlined_call_operand.vmem [shape: f32[1,2], index: 13, kind: input, shape index: {}]
  %s14 = inlined_call_operand.hbm [shape: f32[2,1,2], index: 14, kind: output, shape index: {}]
  %s15 = sld [smem:[#allocation0]]
  $region96: #{forward.9} parent=0
    _
  %s17 = ssub.s32 1, %s15
  %s18 = scalar_select 0, %s17, %s15
  $region1: #{forward.9} parent=0
    #allocation3 [shape = 'u8[1024]{0}', space=vmem, size = 0x400, scoped, tag = 'output window, operand 0']
    #allocation4 [shape = 's32[2]{0}', space=sflag, size = 0x8, scoped, tag = 'scoped memory for forward.9']
    %19 = vsyncpa [#allocation4], 0
    %s20 = scalar_lea.sflag [#allocation4], 1
    %21 = vsyncpa %s20, 0
    loop: start=0, step=1, limit=4
    $region2: #{forward.9} parent=1 // loop_pre_header
      _
    $region3: #{forward.9} parent=1 // loop_header
      %s23 = sphi 0, %s27
      %p24 = scmp.ge.s32.totalorder %s23, 4
      %s33 = sphi 0, %s35
      %s36 = sphi 0, %s33
      %s37 = sphi 0, %s36
      %s53 = sphi 0, %s37
      %s57 = sphi 0, %s57
      %s59 = sphi 0, %s57
      %s60 = sphi 0, %s59
      %s74 = sphi 0, %s60
      %s78 = sphi 0, %s78
      %s80 = sphi 0, %s78
      %s81 = sphi 0, %s80
      %s95 = sphi 0, %s81
      %s99 = sphi 0, %s99
      %s101 = sphi 0, %s99
      %s102 = sphi 0, %s101
      %s116 = sphi 0, %s102
      %s120 = sphi 0, %s120
      %s122 = sphi 0, %s120
      %s123 = sphi 0, %s122
      %s137 = sphi 0, %s123
      %s141 = sphi 0, %s141
      %s143 = sphi 0, %s141
      %s144 = sphi 0, %s143
      %s158 = sphi 0, %s144
      %s162 = sphi 0, %s162
      %s164 = sphi 0, %s162
      %s165 = sphi 0, %s164
      %s179 = sphi 0, %s165
      %s183 = sphi 0, %s183
      %s185 = sphi 0, %s183
      %s186 = sphi 0, %s185
      %s200 = sphi 0, %s186
      %s204 = sphi 0, %s204
      %s206 = sphi 0, %s204
      %s207 = sphi 0, %s206
      %s221 = sphi 0, %s207
      %s225 = sphi 0, %s225
      %s227 = sphi 0, %s225
      %s228 = sphi 0, %s227
      %s242 = sphi 0, %s228
      %s246 = sphi 0, %s246
      %s248 = sphi 0, %s246
      %s249 = sphi 0, %s248
      %s263 = sphi 0, %s249
      %s267 = sphi 0, %s267
      %s269 = sphi 0, %s267
      %s270 = sphi 0, %s269
      %s284 = sphi 0, %s270
      %s288 = sphi 0, %s288
      %s290 = sphi 0, %s288
      %s291 = sphi 0, %s290
      %s305 = sphi 0, %s291
      %s309 = sphi 0, %s309
      %s311 = sphi 0, %s309
      %s312 = sphi 0, %s311
      %s326 = sphi 0, %s312
      %s332 = sphi 0, %s334
      %s335 = sphi 0, %s332
      %s336 = sphi 0, %s335
      %s352 = sphi 0, %s336
    $region4: #{forward.9} parent=1 // loop_header_branch
      %26 = sbr.rel (%p24) target = $region8
    $region5: #{forward.9} parent=1 // loop_body
      %s28 = ssub.s32 %s23, 1
      %s29 = ssub.s32 %s23, 2
      %s30 = sadd.s32 %s23, 1
      %s31 = ssub.s32 %s23, %s30
      %p32 = scmp.eq.s32.totalorder %s31, 0
      %s34 = sadd.s32 %s33, 1
      %s35 = scalar_select %p32, %s33, %s34
      %p38 = pneg %p32
      %p39 = scmp.eq.s32.totalorder %s23, 1
      %p40 = por %p38, %p39
      %p41 = scmp.ne.s32.totalorder %s33, %s36
      %p42 = scmp.eq.s32.totalorder %s23, 0
      %p43 = por %p41, %p42
      %p44 = scmp.ne.s32.totalorder %s33, %s36
      %p45 = scmp.eq.s32.totalorder %s28, 1
      %p46 = por %p44, %p45
      %p47 = scmp.ne.s32.totalorder %s36, %s37
      %p48 = scmp.eq.s32.totalorder %s28, 0
      %p49 = por %p47, %p48
      %p50 = scmp.ne.s32.totalorder %s36, %s37
      %p51 = scmp.eq.s32.totalorder %s29, 1
      %p52 = por %p50, %p51
      %p54 = scmp.ne.s32.totalorder %s37, %s53
      %p55 = scmp.eq.s32.totalorder %s29, 0
      %p56 = por %p54, %p55
      %s58 = sadd.s32 %s57, 1
      %p61 = scmp.eq.s32.totalorder %s23, 1
      %p62 = scmp.ne.s32.totalorder %s57, %s59
      %p63 = scmp.eq.s32.totalorder %s23, 0
      %p64 = por %p62, %p63
      %p65 = scmp.ne.s32.totalorder %s57, %s59
      %p66 = scmp.eq.s32.totalorder %s28, 1
      %p67 = por %p65, %p66
      %p68 = scmp.ne.s32.totalorder %s59, %s60
      %p69 = scmp.eq.s32.totalorder %s28, 0
      %p70 = por %p68, %p69
      %p71 = scmp.ne.s32.totalorder %s59, %s60
      %p72 = scmp.eq.s32.totalorder %s29, 1
      %p73 = por %p71, %p72
      %p75 = scmp.ne.s32.totalorder %s60, %s74
      %p76 = scmp.eq.s32.totalorder %s29, 0
      %p77 = por %p75, %p76
      %s79 = sadd.s32 %s78, 1
      %p82 = scmp.eq.s32.totalorder %s23, 1
      %p83 = scmp.ne.s32.totalorder %s78, %s80
      %p84 = scmp.eq.s32.totalorder %s23, 0
      %p85 = por %p83, %p84
      %p86 = scmp.ne.s32.totalorder %s78, %s80
      %p87 = scmp.eq.s32.totalorder %s28, 1
      %p88 = por %p86, %p87
      %p89 = scmp.ne.s32.totalorder %s80, %s81
      %p90 = scmp.eq.s32.totalorder %s28, 0
      %p91 = por %p89, %p90
      %p92 = scmp.ne.s32.totalorder %s80, %s81
      %p93 = scmp.eq.s32.totalorder %s29, 1
      %p94 = por %p92, %p93
      %p96 = scmp.ne.s32.totalorder %s81, %s95
      %p97 = scmp.eq.s32.totalorder %s29, 0
      %p98 = por %p96, %p97
      %s100 = sadd.s32 %s99, 1
      %p103 = scmp.eq.s32.totalorder %s23, 1
      %p104 = scmp.ne.s32.totalorder %s99, %s101
      %p105 = scmp.eq.s32.totalorder %s23, 0
      %p106 = por %p104, %p105
      %p107 = scmp.ne.s32.totalorder %s99, %s101
      %p108 = scmp.eq.s32.totalorder %s28, 1
      %p109 = por %p107, %p108
      %p110 = scmp.ne.s32.totalorder %s101, %s102
      %p111 = scmp.eq.s32.totalorder %s28, 0
      %p112 = por %p110, %p111
      %p113 = scmp.ne.s32.totalorder %s101, %s102
      %p114 = scmp.eq.s32.totalorder %s29, 1
      %p115 = por %p113, %p114
      %p117 = scmp.ne.s32.totalorder %s102, %s116
      %p118 = scmp.eq.s32.totalorder %s29, 0
      %p119 = por %p117, %p118
      %s121 = sadd.s32 %s120, 1
      %p124 = scmp.eq.s32.totalorder %s23, 1
      %p125 = scmp.ne.s32.totalorder %s120, %s122
      %p126 = scmp.eq.s32.totalorder %s23, 0
      %p127 = por %p125, %p126
      %p128 = scmp.ne.s32.totalorder %s120, %s122
      %p129 = scmp.eq.s32.totalorder %s28, 1
      %p130 = por %p128, %p129
      %p131 = scmp.ne.s32.totalorder %s122, %s123
      %p132 = scmp.eq.s32.totalorder %s28, 0
      %p133 = por %p131, %p132
      %p134 = scmp.ne.s32.totalorder %s122, %s123
      %p135 = scmp.eq.s32.totalorder %s29, 1
      %p136 = por %p134, %p135
      %p138 = scmp.ne.s32.totalorder %s123, %s137
      %p139 = scmp.eq.s32.totalorder %s29, 0
      %p140 = por %p138, %p139
      %s142 = sadd.s32 %s141, 1
      %p145 = scmp.eq.s32.totalorder %s23, 1
      %p146 = scmp.ne.s32.totalorder %s141, %s143
      %p147 = scmp.eq.s32.totalorder %s23, 0
      %p148 = por %p146, %p147
      %p149 = scmp.ne.s32.totalorder %s141, %s143
      %p150 = scmp.eq.s32.totalorder %s28, 1
      %p151 = por %p149, %p150
      %p152 = scmp.ne.s32.totalorder %s143, %s144
      %p153 = scmp.eq.s32.totalorder %s28, 0
      %p154 = por %p152, %p153
      %p155 = scmp.ne.s32.totalorder %s143, %s144
      %p156 = scmp.eq.s32.totalorder %s29, 1
      %p157 = por %p155, %p156
      %p159 = scmp.ne.s32.totalorder %s144, %s158
      %p160 = scmp.eq.s32.totalorder %s29, 0
      %p161 = por %p159, %p160
      %s163 = sadd.s32 %s162, 1
      %p166 = scmp.eq.s32.totalorder %s23, 1
      %p167 = scmp.ne.s32.totalorder %s162, %s164
      %p168 = scmp.eq.s32.totalorder %s23, 0
      %p169 = por %p167, %p168
      %p170 = scmp.ne.s32.totalorder %s162, %s164
      %p171 = scmp.eq.s32.totalorder %s28, 1
      %p172 = por %p170, %p171
      %p173 = scmp.ne.s32.totalorder %s164, %s165
      %p174 = scmp.eq.s32.totalorder %s28, 0
      %p175 = por %p173, %p174
      %p176 = scmp.ne.s32.totalorder %s164, %s165
      %p177 = scmp.eq.s32.totalorder %s29, 1
      %p178 = por %p176, %p177
      %p180 = scmp.ne.s32.totalorder %s165, %s179
      %p181 = scmp.eq.s32.totalorder %s29, 0
      %p182 = por %p180, %p181
      %s184 = sadd.s32 %s183, 1
      %p187 = scmp.eq.s32.totalorder %s23, 1
      %p188 = scmp.ne.s32.totalorder %s183, %s185
      %p189 = scmp.eq.s32.totalorder %s23, 0
      %p190 = por %p188, %p189
      %p191 = scmp.ne.s32.totalorder %s183, %s185
      %p192 = scmp.eq.s32.totalorder %s28, 1
      %p193 = por %p191, %p192
      %p194 = scmp.ne.s32.totalorder %s185, %s186
      %p195 = scmp.eq.s32.totalorder %s28, 0
      %p196 = por %p194, %p195
      %p197 = scmp.ne.s32.totalorder %s185, %s186
      %p198 = scmp.eq.s32.totalorder %s29, 1
      %p199 = por %p197, %p198
      %p201 = scmp.ne.s32.totalorder %s186, %s200
      %p202 = scmp.eq.s32.totalorder %s29, 0
      %p203 = por %p201, %p202
      %s205 = sadd.s32 %s204, 1
      %p208 = scmp.eq.s32.totalorder %s23, 1
      %p209 = scmp.ne.s32.totalorder %s204, %s206
      %p210 = scmp.eq.s32.totalorder %s23, 0
      %p211 = por %p209, %p210
      %p212 = scmp.ne.s32.totalorder %s204, %s206
      %p213 = scmp.eq.s32.totalorder %s28, 1
      %p214 = por %p212, %p213
      %p215 = scmp.ne.s32.totalorder %s206, %s207
      %p216 = scmp.eq.s32.totalorder %s28, 0
      %p217 = por %p215, %p216
      %p218 = scmp.ne.s32.totalorder %s206, %s207
      %p219 = scmp.eq.s32.totalorder %s29, 1
      %p220 = por %p218, %p219
      %p222 = scmp.ne.s32.totalorder %s207, %s221
      %p223 = scmp.eq.s32.totalorder %s29, 0
      %p224 = por %p222, %p223
      %s226 = sadd.s32 %s225, 1
      %p229 = scmp.eq.s32.totalorder %s23, 1
      %p230 = scmp.ne.s32.totalorder %s225, %s227
      %p231 = scmp.eq.s32.totalorder %s23, 0
      %p232 = por %p230, %p231
      %p233 = scmp.ne.s32.totalorder %s225, %s227
      %p234 = scmp.eq.s32.totalorder %s28, 1
      %p235 = por %p233, %p234
      %p236 = scmp.ne.s32.totalorder %s227, %s228
      %p237 = scmp.eq.s32.totalorder %s28, 0
      %p238 = por %p236, %p237
      %p239 = scmp.ne.s32.totalorder %s227, %s228
      %p240 = scmp.eq.s32.totalorder %s29, 1
      %p241 = por %p239, %p240
      %p243 = scmp.ne.s32.totalorder %s228, %s242
      %p244 = scmp.eq.s32.totalorder %s29, 0
      %p245 = por %p243, %p244
      %s247 = sadd.s32 %s246, 1
      %p250 = scmp.eq.s32.totalorder %s23, 1
      %p251 = scmp.ne.s32.totalorder %s246, %s248
      %p252 = scmp.eq.s32.totalorder %s23, 0
      %p253 = por %p251, %p252
      %p254 = scmp.ne.s32.totalorder %s246, %s248
      %p255 = scmp.eq.s32.totalorder %s28, 1
      %p256 = por %p254, %p255
      %p257 = scmp.ne.s32.totalorder %s248, %s249
      %p258 = scmp.eq.s32.totalorder %s28, 0
      %p259 = por %p257, %p258
      %p260 = scmp.ne.s32.totalorder %s248, %s249
      %p261 = scmp.eq.s32.totalorder %s29, 1
      %p262 = por %p260, %p261
      %p264 = scmp.ne.s32.totalorder %s249, %s263
      %p265 = scmp.eq.s32.totalorder %s29, 0
      %p266 = por %p264, %p265
      %s268 = sadd.s32 %s267, 1
      %p271 = scmp.eq.s32.totalorder %s23, 1
      %p272 = scmp.ne.s32.totalorder %s267, %s269
      %p273 = scmp.eq.s32.totalorder %s23, 0
      %p274 = por %p272, %p273
      %p275 = scmp.ne.s32.totalorder %s267, %s269
      %p276 = scmp.eq.s32.totalorder %s28, 1
      %p277 = por %p275, %p276
      %p278 = scmp.ne.s32.totalorder %s269, %s270
      %p279 = scmp.eq.s32.totalorder %s28, 0
      %p280 = por %p278, %p279
      %p281 = scmp.ne.s32.totalorder %s269, %s270
      %p282 = scmp.eq.s32.totalorder %s29, 1
      %p283 = por %p281, %p282
      %p285 = scmp.ne.s32.totalorder %s270, %s284
      %p286 = scmp.eq.s32.totalorder %s29, 0
      %p287 = por %p285, %p286
      %s289 = sadd.s32 %s288, 1
      %p292 = scmp.eq.s32.totalorder %s23, 1
      %p293 = scmp.ne.s32.totalorder %s288, %s290
      %p294 = scmp.eq.s32.totalorder %s23, 0
      %p295 = por %p293, %p294
      %p296 = scmp.ne.s32.totalorder %s288, %s290
      %p297 = scmp.eq.s32.totalorder %s28, 1
      %p298 = por %p296, %p297
      %p299 = scmp.ne.s32.totalorder %s290, %s291
      %p300 = scmp.eq.s32.totalorder %s28, 0
      %p301 = por %p299, %p300
      %p302 = scmp.ne.s32.totalorder %s290, %s291
      %p303 = scmp.eq.s32.totalorder %s29, 1
      %p304 = por %p302, %p303
      %p306 = scmp.ne.s32.totalorder %s291, %s305
      %p307 = scmp.eq.s32.totalorder %s29, 0
      %p308 = por %p306, %p307
      %s310 = sadd.s32 %s309, 1
      %p313 = scmp.eq.s32.totalorder %s23, 1
      %p314 = scmp.ne.s32.totalorder %s309, %s311
      %p315 = scmp.eq.s32.totalorder %s23, 0
      %p316 = por %p314, %p315
      %p317 = scmp.ne.s32.totalorder %s309, %s311
      %p318 = scmp.eq.s32.totalorder %s28, 1
      %p319 = por %p317, %p318
      %p320 = scmp.ne.s32.totalorder %s311, %s312
      %p321 = scmp.eq.s32.totalorder %s28, 0
      %p322 = por %p320, %p321
      %p323 = scmp.ne.s32.totalorder %s311, %s312
      %p324 = scmp.eq.s32.totalorder %s29, 1
      %p325 = por %p323, %p324
      %p327 = scmp.ne.s32.totalorder %s312, %s326
      %p328 = scmp.eq.s32.totalorder %s29, 0
      %p329 = por %p327, %p328
      %s330 = ssub.s32 %s23, %s30
      %p331 = scmp.eq.s32.totalorder %s330, 0
      %s333 = sadd.s32 %s332, 1
      %s334 = scalar_select %p331, %s332, %s333
      %p337 = pneg %p331
      %p338 = scmp.eq.s32.totalorder %s23, 1
      %p339 = por %p337, %p338
      %p340 = scmp.ne.s32.totalorder %s332, %s335
      %p341 = scmp.eq.s32.totalorder %s23, 0
      %p342 = por %p340, %p341
      %p343 = scmp.ne.s32.totalorder %s332, %s335
      %p344 = scmp.eq.s32.totalorder %s28, 1
      %p345 = por %p343, %p344
      %p346 = scmp.ne.s32.totalorder %s335, %s336
      %p347 = scmp.eq.s32.totalorder %s28, 0
      %p348 = por %p346, %p347
      %p349 = scmp.ne.s32.totalorder %s335, %s336
      %p350 = scmp.eq.s32.totalorder %s29, 1
      %p351 = por %p349, %p350
      %p353 = scmp.ne.s32.totalorder %s336, %s352
      %p354 = scmp.eq.s32.totalorder %s29, 0
      %p355 = por %p353, %p354
      %p356 = scmp.le.s32.totalorder 1, %s23
      %p357 = scmp.lt.s32.totalorder %s23, 3
      %p358 = pnand %p356, %p357
      %p359 = pneg %p358
      // Predicated region
      $region9: #{forward.9} parent=5 // pred_check
        _
      $region10: #{forward.9} parent=5 // pred_check_branch
        %361 = sbr.rel (%p358) target = $region12
      $region11: #{forward.9} parent=5 // pred_region
        %s362 = ssub.s32 %s23, 1
        // Predicated region
        $region13: #{forward.9} parent=11 // pred_check
          %p363 = pneg %p70
        $region14: #{forward.9} parent=11 // pred_check_branch
          %365 = sbr.rel (%p363) target = $region16
        $region15: #{forward.9} parent=11 // pred_region
          _
        $region16: #{forward.9} parent=11 // pred_fallthru
          _
        // Predicated region
        $region17: #{forward.9} parent=11 // pred_check
          %p366 = pneg %p91
        $region18: #{forward.9} parent=11 // pred_check_branch
          %368 = sbr.rel (%p366) target = $region20
        $region19: #{forward.9} parent=11 // pred_region
          _
        $region20: #{forward.9} parent=11 // pred_fallthru
          _
        // Predicated region
        $region21: #{forward.9} parent=11 // pred_check
          %p369 = pneg %p112
        $region22: #{forward.9} parent=11 // pred_check_branch
          %371 = sbr.rel (%p369) target = $region24
        $region23: #{forward.9} parent=11 // pred_region
          _
        $region24: #{forward.9} parent=11 // pred_fallthru
          _
        // Predicated region
        $region25: #{forward.9} parent=11 // pred_check
          %p372 = pneg %p133
        $region26: #{forward.9} parent=11 // pred_check_branch
          %374 = sbr.rel (%p372) target = $region28
        $region27: #{forward.9} parent=11 // pred_region
          _
        $region28: #{forward.9} parent=11 // pred_fallthru
          _
        // Predicated region
        $region29: #{forward.9} parent=11 // pred_check
          %p375 = pneg %p154
        $region30: #{forward.9} parent=11 // pred_check_branch
          %377 = sbr.rel (%p375) target = $region32
        $region31: #{forward.9} parent=11 // pred_region
          _
        $region32: #{forward.9} parent=11 // pred_fallthru
          _
        // Predicated region
        $region33: #{forward.9} parent=11 // pred_check
          %p378 = pneg %p175
        $region34: #{forward.9} parent=11 // pred_check_branch
          %380 = sbr.rel (%p378) target = $region36
        $region35: #{forward.9} parent=11 // pred_region
          _
        $region36: #{forward.9} parent=11 // pred_fallthru
          _
        // Predicated region
        $region37: #{forward.9} parent=11 // pred_check
          %p381 = pneg %p196
        $region38: #{forward.9} parent=11 // pred_check_branch
          %383 = sbr.rel (%p381) target = $region40
        $region39: #{forward.9} parent=11 // pred_region
          _
        $region40: #{forward.9} parent=11 // pred_fallthru
          _
        // Predicated region
        $region41: #{forward.9} parent=11 // pred_check
          %p384 = pneg %p217
        $region42: #{forward.9} parent=11 // pred_check_branch
          %386 = sbr.rel (%p384) target = $region44
        $region43: #{forward.9} parent=11 // pred_region
          _
        $region44: #{forward.9} parent=11 // pred_fallthru
          _
        // Predicated region
        $region45: #{forward.9} parent=11 // pred_check
          %p387 = pneg %p238
        $region46: #{forward.9} parent=11 // pred_check_branch
          %389 = sbr.rel (%p387) target = $region48
        $region47: #{forward.9} parent=11 // pred_region
          _
        $region48: #{forward.9} parent=11 // pred_fallthru
          _
        // Predicated region
        $region49: #{forward.9} parent=11 // pred_check
          %p390 = pneg %p259
        $region50: #{forward.9} parent=11 // pred_check_branch
          %392 = sbr.rel (%p390) target = $region52
        $region51: #{forward.9} parent=11 // pred_region
          _
        $region52: #{forward.9} parent=11 // pred_fallthru
          _
        // Predicated region
        $region53: #{forward.9} parent=11 // pred_check
          %p393 = pneg %p280
        $region54: #{forward.9} parent=11 // pred_check_branch
          %395 = sbr.rel (%p393) target = $region56
        $region55: #{forward.9} parent=11 // pred_region
          _
        $region56: #{forward.9} parent=11 // pred_fallthru
          _
        // Predicated region
        $region57: #{forward.9} parent=11 // pred_check
          %p396 = pneg %p301
        $region58: #{forward.9} parent=11 // pred_check_branch
          %398 = sbr.rel (%p396) target = $region60
        $region59: #{forward.9} parent=11 // pred_region
          _
        $region60: #{forward.9} parent=11 // pred_fallthru
          _
        // Predicated region
        $region61: #{forward.9} parent=11 // pred_check
          %p399 = pneg %p322
        $region62: #{forward.9} parent=11 // pred_check_branch
          %401 = sbr.rel (%p399) target = $region64
        $region63: #{forward.9} parent=11 // pred_region
          _
        $region64: #{forward.9} parent=11 // pred_fallthru
          _
      $region12: #{forward.9} parent=5 // pred_fallthru
        _
      %p402 = scmp.lt.s32.totalorder %s23, 2
      // Predicated region
      $region65: #{forward.9} parent=5 // pred_check
        %p403 = pneg %p402
      $region66: #{forward.9} parent=5 // pred_check_branch
        %405 = sbr.rel (%p403) target = $region68
      $region67: #{forward.9} parent=5 // pred_region
        // Predicated region
        $region69: #{forward.9} parent=67 // pred_check
          %p406 = pneg %p43
        $region70: #{forward.9} parent=67 // pred_check_branch
          %408 = sbr.rel (%p406) target = $region72
        $region71: #{forward.9} parent=67 // pred_region
          %p409 = scmp.lt.s32.totalorder %s23, 1
          %s410 = scalar_select %p409, %s23, 1
          %s411 = smul.addr %s410, 4
          %s412 = smul.addr %s411, 8
          %s413 = scalar_lea.vmem %s0, %s412
        $region72: #{forward.9} parent=67 // pred_fallthru
          _
      $region68: #{forward.9} parent=5 // pred_fallthru
        _
      %p414 = scmp.le.s32.totalorder 1, %s23
      %p415 = scmp.lt.s32.totalorder %s23, 3
      %p416 = pnand %p414, %p415
      %p417 = pneg %p416
      // Predicated region
      $region73: #{forward.9} parent=5 // pred_check
        _
      $region74: #{forward.9} parent=5 // pred_check_branch
        %419 = sbr.rel (%p416) target = $region76
      $region75: #{forward.9} parent=5 // pred_region
        %s420 = ssub.s32 %s23, 1
        %p421 = scmp.lt.s32.totalorder %s28, 1
        %s422 = scalar_select %p421, %s28, 1
        %s423 = smul.addr %s422, 4
        %s424 = smul.addr %s423, 8
        %s425 = scalar_lea.vmem %s0, %s424
        %p426 = pneg %p49
        %p427 = pneg %p46
        %p428 = pneg %p70
        %p429 = pneg %p67
        %p430 = pneg %p91
        %p431 = pneg %p88
        %p432 = pneg %p112
        %p433 = pneg %p109
        %p434 = pneg %p133
        %p435 = pneg %p130
        %p436 = pneg %p154
        %p437 = pneg %p151
        %p438 = pneg %p175
        %p439 = pneg %p172
        %p440 = pneg %p196
        %p441 = pneg %p193
        %p442 = pneg %p217
        %p443 = pneg %p214
        %p444 = pneg %p238
        %p445 = pneg %p235
        %p446 = pneg %p259
        %p447 = pneg %p256
        %p448 = pneg %p280
        %p449 = pneg %p277
        %p450 = pneg %p301
        %p451 = pneg %p298
        %p452 = pneg %p322
        %p453 = pneg %p319
        %p454 = pneg %p348
        %p455 = pneg %p345
        %s456 = sand.u32 %s335, 1
        %s457 = scalar_lea.sflag [#allocation4], %s456
        %s458 = sand.u32 %s335, 1
        %s459 = scalar_lea.vmem [#allocation3], %s458
        %p460 = scmp.lt.s32.totalorder %s28, 1
        %s461 = scalar_select %p460, %s28, 1
        %s462 = smul.addr %s461, 4
        %s463 = smul.addr %s462, 8
        %s464 = scalar_lea.vmem %s0, %s463
        %v465 = vld [vmem:[%s464] sm:$0xff]
        %v466 = vld [vmem:[%s464 + $0x8] sm:$0xff]
        %v467 = vld [vmem:[%s464 + $0x10] sm:$0xff]
        %v468 = vld [vmem:[%s464 + $0x18] sm:$0xff]
        %v469 = vld [vmem:[%s1] sm:$0x1]
        %v471 = vlaneseq
        %v472 = vshrl.u32 %v471, 7
        %v473 = vsub.s32 0, %v472
        %v474 = vrot.slane %v469, %v473
        %v476 = vmul.f32 %v465, %v474
        %v477 = vmul.f32 %v466, %v474
        %v478 = vmul.f32 %v467, %v474
        %v479 = vmul.f32 %v468, %v474
        %v480 = vld [vmem:[%s2] sm:$0x1]
        %v482 = vlaneseq
        %v483 = vshrl.u32 %v482, 7
        %v484 = vsub.s32 0, %v483
        %v485 = vrot.slane %v480, %v484
        %v487 = vadd.f32 %v476, %v485
        %v488 = vadd.f32 %v477, %v485
        %v489 = vadd.f32 %v478, %v485
        %v490 = vadd.f32 %v479, %v485
        %v491 = vld [vmem:[%s3] sm:$0x1]
        %493 = vset.pattern.permute.xlu0 0
        %494 = vperm.xlu0 %493, %v487
        %v495 = vpop.permute.xlu0 %494
        %498 = vset.pattern.permute.xlu0 0
        %499 = vperm.xlu0 %498, %v488
        %v500 = vpop.permute.xlu0 %499
        %503 = vset.pattern.permute.xlu0 0
        %504 = vperm.xlu0 %503, %v489
        %v505 = vpop.permute.xlu0 %504
        %508 = vset.pattern.permute.xlu0 0
        %509 = vperm.xlu0 %508, %v490
        %v510 = vpop.permute.xlu0 %509
        %v512 = vlaneseq
        %v513 = vshrl.u32 %v512, 7
        %v514 = vsub.s32 0, %v513
        %v515 = vrot.slane %v491, %v514
        %v516 = vsub.f32 %v495, %v515
        %v517 = vsub.f32 %v500, %v515
        %v518 = vsub.f32 %v505, %v515
        %v519 = vsub.f32 %v510, %v515
        %v520 = vld [vmem:[%s4] sm:$0x1]
        %v521 = vlaneseq
        %v522 = vshrl.u32 %v521, 7
        %v523 = vsub.s32 0, %v522
        %v524 = vrot.slane %v520, %v523
        %v525 = vmul.f32 %v516, %v524
        %v526 = vmul.f32 %v517, %v524
        %v527 = vmul.f32 %v518, %v524
        %v528 = vmul.f32 %v519, %v524
        %v529 = vxor.u32 %v525, 2147483648
        %v530 = vxor.u32 %v526, 2147483648
        %v531 = vxor.u32 %v527, 2147483648
        %v532 = vxor.u32 %v528, 2147483648
        %v533 = vmul.f32 %v529, 1.442695
        %v534 = vpow.pop %v533
        %v535 = vmul.f32 %v530, 1.442695
        %v536 = vpow.pop %v535
        %v537 = vmul.f32 %v531, 1.442695
        %v538 = vpow.pop %v537
        %v539 = vmul.f32 %v532, 1.442695
        %v540 = vpow.pop %v539
        %v541 = vadd.f32 %v534, 1.0
        %v542 = vadd.f32 %v536, 1.0
        %v543 = vadd.f32 %v538, 1.0
        %v544 = vadd.f32 %v540, 1.0
        %v545 = vrcp.pop %v541
        %v546 = vmul.f32 1.0, %v545
        %v547 = vrcp.pop %v542
        %v548 = vmul.f32 1.0, %v547
        %v549 = vrcp.pop %v543
        %v550 = vmul.f32 1.0, %v549
        %v551 = vrcp.pop %v544
        %v552 = vmul.f32 1.0, %v551
        %v553 = vld [vmem:[%s5] sm:$0x1]
        %v554 = vlaneseq
        %v555 = vshrl.u32 %v554, 7
        %v556 = vsub.s32 0, %v555
        %v557 = vrot.slane %v553, %v556
        %v558 = vmul.f32 %v557, %v546
        %v559 = vmul.f32 %v557, %v548
        %v560 = vmul.f32 %v557, %v550
        %v561 = vmul.f32 %v557, %v552
        %v562 = vadd.f32 %v558, 0.0
        %v563 = vadd.f32 %v559, 0.0
        %v564 = vadd.f32 %v560, 0.0
        %v565 = vadd.f32 %v561, 0.0
        %v566 = vld [vmem:[%s3 + $0x1] sm:$0x1]
        %567 = vset.pattern.permute.xlu0 1
        %568 = vperm.xlu0 %567, %v487
        %v569 = vpop.permute.xlu0 %568
        %571 = vset.pattern.permute.xlu0 1
        %572 = vperm.xlu0 %571, %v488
        %v573 = vpop.permute.xlu0 %572
        %575 = vset.pattern.permute.xlu0 1
        %576 = vperm.xlu0 %575, %v489
        %v577 = vpop.permute.xlu0 %576
        %579 = vset.pattern.permute.xlu0 1
        %580 = vperm.xlu0 %579, %v490
        %v581 = vpop.permute.xlu0 %580
        %v583 = vlaneseq
        %v584 = vshrl.u32 %v583, 7
        %v585 = vsub.s32 0, %v584
        %v586 = vrot.slane %v566, %v585
        %v587 = vsub.f32 %v569, %v586
        %v588 = vsub.f32 %v573, %v586
        %v589 = vsub.f32 %v577, %v586
        %v590 = vsub.f32 %v581, %v586
        %v591 = vld [vmem:[%s4 + $0x1] sm:$0x1]
        %v592 = vlaneseq
        %v593 = vshrl.u32 %v592, 7
        %v594 = vsub.s32 0, %v593
        %v595 = vrot.slane %v591, %v594
        %v596 = vmul.f32 %v587, %v595
        %v597 = vmul.f32 %v588, %v595
        %v598 = vmul.f32 %v589, %v595
        %v599 = vmul.f32 %v590, %v595
        %v600 = vxor.u32 %v596, 2147483648
        %v601 = vxor.u32 %v597, 2147483648
        %v602 = vxor.u32 %v598, 2147483648
        %v603 = vxor.u32 %v599, 2147483648
        %v604 = vmul.f32 %v600, 1.442695
        %v605 = vpow.pop %v604
        %v606 = vmul.f32 %v601, 1.442695
        %v607 = vpow.pop %v606
        %v608 = vmul.f32 %v602, 1.442695
        %v609 = vpow.pop %v608
        %v610 = vmul.f32 %v603, 1.442695
        %v611 = vpow.pop %v610
        %v612 = vadd.f32 %v605, 1.0
        %v613 = vadd.f32 %v607, 1.0
        %v614 = vadd.f32 %v609, 1.0
        %v615 = vadd.f32 %v611, 1.0
        %v616 = vrcp.pop %v612
        %v617 = vmul.f32 1.0, %v616
        %v618 = vrcp.pop %v613
        %v619 = vmul.f32 1.0, %v618
        %v620 = vrcp.pop %v614
        %v621 = vmul.f32 1.0, %v620
        %v622 = vrcp.pop %v615
        %v623 = vmul.f32 1.0, %v622
        %v624 = vld [vmem:[%s5 + $0x1] sm:$0x1]
        %v625 = vlaneseq
        %v626 = vshrl.u32 %v625, 7
        %v627 = vsub.s32 0, %v626
        %v628 = vrot.slane %v624, %v627
        %v629 = vmul.f32 %v628, %v617
        %v630 = vmul.f32 %v628, %v619
        %v631 = vmul.f32 %v628, %v621
        %v632 = vmul.f32 %v628, %v623
        %v633 = vadd.f32 %v562, %v629
        %v634 = vadd.f32 %v563, %v630
        %v635 = vadd.f32 %v564, %v631
        %v636 = vadd.f32 %v565, %v632
        %v637 = vld [vmem:[%s3 + $0x2] sm:$0x1]
        %638 = vset.pattern.permute.xlu0 2
        %639 = vperm.xlu0 %638, %v487
        %v640 = vpop.permute.xlu0 %639
        %642 = vset.pattern.permute.xlu0 2
        %643 = vperm.xlu0 %642, %v488
        %v644 = vpop.permute.xlu0 %643
        %646 = vset.pattern.permute.xlu0 2
        %647 = vperm.xlu0 %646, %v489
        %v648 = vpop.permute.xlu0 %647
        %650 = vset.pattern.permute.xlu0 2
        %651 = vperm.xlu0 %650, %v490
        %v652 = vpop.permute.xlu0 %651
        %v654 = vlaneseq
        %v655 = vshrl.u32 %v654, 7
        %v656 = vsub.s32 0, %v655
        %v657 = vrot.slane %v637, %v656
        %v658 = vsub.f32 %v640, %v657
        %v659 = vsub.f32 %v644, %v657
        %v660 = vsub.f32 %v648, %v657
        %v661 = vsub.f32 %v652, %v657
        %v662 = vld [vmem:[%s4 + $0x2] sm:$0x1]
        %v663 = vlaneseq
        %v664 = vshrl.u32 %v663, 7
        %v665 = vsub.s32 0, %v664
        %v666 = vrot.slane %v662, %v665
        %v667 = vmul.f32 %v658, %v666
        %v668 = vmul.f32 %v659, %v666
        %v669 = vmul.f32 %v660, %v666
        %v670 = vmul.f32 %v661, %v666
        %v671 = vxor.u32 %v667, 2147483648
        %v672 = vxor.u32 %v668, 2147483648
        %v673 = vxor.u32 %v669, 2147483648
        %v674 = vxor.u32 %v670, 2147483648
        %v675 = vmul.f32 %v671, 1.442695
        %v676 = vpow.pop %v675
        %v677 = vmul.f32 %v672, 1.442695
        %v678 = vpow.pop %v677
        %v679 = vmul.f32 %v673, 1.442695
        %v680 = vpow.pop %v679
        %v681 = vmul.f32 %v674, 1.442695
        %v682 = vpow.pop %v681
        %v683 = vadd.f32 %v676, 1.0
        %v684 = vadd.f32 %v678, 1.0
        %v685 = vadd.f32 %v680, 1.0
        %v686 = vadd.f32 %v682, 1.0
        %v687 = vrcp.pop %v683
        %v688 = vmul.f32 1.0, %v687
        %v689 = vrcp.pop %v684
        %v690 = vmul.f32 1.0, %v689
        %v691 = vrcp.pop %v685
        %v692 = vmul.f32 1.0, %v691
        %v693 = vrcp.pop %v686
        %v694 = vmul.f32 1.0, %v693
        %v695 = vld [vmem:[%s5 + $0x2] sm:$0x1]
        %v696 = vlaneseq
        %v697 = vshrl.u32 %v696, 7
        %v698 = vsub.s32 0, %v697
        %v699 = vrot.slane %v695, %v698
        %v700 = vmul.f32 %v699, %v688
        %v701 = vmul.f32 %v699, %v690
        %v702 = vmul.f32 %v699, %v692
        %v703 = vmul.f32 %v699, %v694
        %v704 = vadd.f32 %v633, %v700
        %v705 = vadd.f32 %v634, %v701
        %v706 = vadd.f32 %v635, %v702
        %v707 = vadd.f32 %v636, %v703
        %v708 = vld [vmem:[%s3 + $0x3] sm:$0x1]
        %709 = vset.pattern.permute.xlu0 3
        %710 = vperm.xlu0 %709, %v487
        %v711 = vpop.permute.xlu0 %710
        %713 = vset.pattern.permute.xlu0 3
        %714 = vperm.xlu0 %713, %v488
        %v715 = vpop.permute.xlu0 %714
        %717 = vset.pattern.permute.xlu0 3
        %718 = vperm.xlu0 %717, %v489
        %v719 = vpop.permute.xlu0 %718
        %721 = vset.pattern.permute.xlu0 3
        %722 = vperm.xlu0 %721, %v490
        %v723 = vpop.permute.xlu0 %722
        %v725 = vlaneseq
        %v726 = vshrl.u32 %v725, 7
        %v727 = vsub.s32 0, %v726
        %v728 = vrot.slane %v708, %v727
        %v729 = vsub.f32 %v711, %v728
        %v730 = vsub.f32 %v715, %v728
        %v731 = vsub.f32 %v719, %v728
        %v732 = vsub.f32 %v723, %v728
        %v733 = vld [vmem:[%s4 + $0x3] sm:$0x1]
        %v734 = vlaneseq
        %v735 = vshrl.u32 %v734, 7
        %v736 = vsub.s32 0, %v735
        %v737 = vrot.slane %v733, %v736
        %v738 = vmul.f32 %v729, %v737
        %v739 = vmul.f32 %v730, %v737
        %v740 = vmul.f32 %v731, %v737
        %v741 = vmul.f32 %v732, %v737
        %v742 = vxor.u32 %v738, 2147483648
        %v743 = vxor.u32 %v739, 2147483648
        %v744 = vxor.u32 %v740, 2147483648
        %v745 = vxor.u32 %v741, 2147483648
        %v746 = vmul.f32 %v742, 1.442695
        %v747 = vpow.pop %v746
        %v748 = vmul.f32 %v743, 1.442695
        %v749 = vpow.pop %v748
        %v750 = vmul.f32 %v744, 1.442695
        %v751 = vpow.pop %v750
        %v752 = vmul.f32 %v745, 1.442695
        %v753 = vpow.pop %v752
        %v754 = vadd.f32 %v747, 1.0
        %v755 = vadd.f32 %v749, 1.0
        %v756 = vadd.f32 %v751, 1.0
        %v757 = vadd.f32 %v753, 1.0
        %v758 = vrcp.pop %v754
        %v759 = vmul.f32 1.0, %v758
        %v760 = vrcp.pop %v755
        %v761 = vmul.f32 1.0, %v760
        %v762 = vrcp.pop %v756
        %v763 = vmul.f32 1.0, %v762
        %v764 = vrcp.pop %v757
        %v765 = vmul.f32 1.0, %v764
        %v766 = vld [vmem:[%s5 + $0x3] sm:$0x1]
        %v767 = vlaneseq
        %v768 = vshrl.u32 %v767, 7
        %v769 = vsub.s32 0, %v768
        %v770 = vrot.slane %v766, %v769
        %v771 = vmul.f32 %v770, %v759
        %v772 = vmul.f32 %v770, %v761
        %v773 = vmul.f32 %v770, %v763
        %v774 = vmul.f32 %v770, %v765
        %v775 = vadd.f32 %v704, %v771
        %v776 = vadd.f32 %v705, %v772
        %v777 = vadd.f32 %v706, %v773
        %v778 = vadd.f32 %v707, %v774
        %v779 = vld [vmem:[%s3 + $0x4] sm:$0x1]
        %780 = vset.pattern.permute.xlu0 4
        %781 = vperm.xlu0 %780, %v487
        %v782 = vpop.permute.xlu0 %781
        %784 = vset.pattern.permute.xlu0 4
        %785 = vperm.xlu0 %784, %v488
        %v786 = vpop.permute.xlu0 %785
        %788 = vset.pattern.permute.xlu0 4
        %789 = vperm.xlu0 %788, %v489
        %v790 = vpop.permute.xlu0 %789
        %792 = vset.pattern.permute.xlu0 4
        %793 = vperm.xlu0 %792, %v490
        %v794 = vpop.permute.xlu0 %793
        %v796 = vlaneseq
        %v797 = vshrl.u32 %v796, 7
        %v798 = vsub.s32 0, %v797
        %v799 = vrot.slane %v779, %v798
        %v800 = vsub.f32 %v782, %v799
        %v801 = vsub.f32 %v786, %v799
        %v802 = vsub.f32 %v790, %v799
        %v803 = vsub.f32 %v794, %v799
        %v804 = vld [vmem:[%s4 + $0x4] sm:$0x1]
        %v805 = vlaneseq
        %v806 = vshrl.u32 %v805, 7
        %v807 = vsub.s32 0, %v806
        %v808 = vrot.slane %v804, %v807
        %v809 = vmul.f32 %v800, %v808
        %v810 = vmul.f32 %v801, %v808
        %v811 = vmul.f32 %v802, %v808
        %v812 = vmul.f32 %v803, %v808
        %v813 = vxor.u32 %v809, 2147483648
        %v814 = vxor.u32 %v810, 2147483648
        %v815 = vxor.u32 %v811, 2147483648
        %v816 = vxor.u32 %v812, 2147483648
        %v817 = vmul.f32 %v813, 1.442695
        %v818 = vpow.pop %v817
        %v819 = vmul.f32 %v814, 1.442695
        %v820 = vpow.pop %v819
        %v821 = vmul.f32 %v815, 1.442695
        %v822 = vpow.pop %v821
        %v823 = vmul.f32 %v816, 1.442695
        %v824 = vpow.pop %v823
        %v825 = vadd.f32 %v818, 1.0
        %v826 = vadd.f32 %v820, 1.0
        %v827 = vadd.f32 %v822, 1.0
        %v828 = vadd.f32 %v824, 1.0
        %v829 = vrcp.pop %v825
        %v830 = vmul.f32 1.0, %v829
        %v831 = vrcp.pop %v826
        %v832 = vmul.f32 1.0, %v831
        %v833 = vrcp.pop %v827
        %v834 = vmul.f32 1.0, %v833
        %v835 = vrcp.pop %v828
        %v836 = vmul.f32 1.0, %v835
        %v837 = vld [vmem:[%s5 + $0x4] sm:$0x1]
        %v838 = vlaneseq
        %v839 = vshrl.u32 %v838, 7
        %v840 = vsub.s32 0, %v839
        %v841 = vrot.slane %v837, %v840
        %v842 = vmul.f32 %v841, %v830
        %v843 = vmul.f32 %v841, %v832
        %v844 = vmul.f32 %v841, %v834
        %v845 = vmul.f32 %v841, %v836
        %v846 = vadd.f32 %v775, %v842
        %v847 = vadd.f32 %v776, %v843
        %v848 = vadd.f32 %v777, %v844
        %v849 = vadd.f32 %v778, %v845
        %v850 = vld [vmem:[%s3 + $0x5] sm:$0x1]
        %851 = vset.pattern.permute.xlu0 5
        %852 = vperm.xlu0 %851, %v487
        %v853 = vpop.permute.xlu0 %852
        %855 = vset.pattern.permute.xlu0 5
        %856 = vperm.xlu0 %855, %v488
        %v857 = vpop.permute.xlu0 %856
        %859 = vset.pattern.permute.xlu0 5
        %860 = vperm.xlu0 %859, %v489
        %v861 = vpop.permute.xlu0 %860
        %863 = vset.pattern.permute.xlu0 5
        %864 = vperm.xlu0 %863, %v490
        %v865 = vpop.permute.xlu0 %864
        %v867 = vlaneseq
        %v868 = vshrl.u32 %v867, 7
        %v869 = vsub.s32 0, %v868
        %v870 = vrot.slane %v850, %v869
        %v871 = vsub.f32 %v853, %v870
        %v872 = vsub.f32 %v857, %v870
        %v873 = vsub.f32 %v861, %v870
        %v874 = vsub.f32 %v865, %v870
        %v875 = vld [vmem:[%s4 + $0x5] sm:$0x1]
        %v876 = vlaneseq
        %v877 = vshrl.u32 %v876, 7
        %v878 = vsub.s32 0, %v877
        %v879 = vrot.slane %v875, %v878
        %v880 = vmul.f32 %v871, %v879
        %v881 = vmul.f32 %v872, %v879
        %v882 = vmul.f32 %v873, %v879
        %v883 = vmul.f32 %v874, %v879
        %v884 = vxor.u32 %v880, 2147483648
        %v885 = vxor.u32 %v881, 2147483648
        %v886 = vxor.u32 %v882, 2147483648
        %v887 = vxor.u32 %v883, 2147483648
        %v888 = vmul.f32 %v884, 1.442695
        %v889 = vpow.pop %v888
        %v890 = vmul.f32 %v885, 1.442695
        %v891 = vpow.pop %v890
        %v892 = vmul.f32 %v886, 1.442695
        %v893 = vpow.pop %v892
        %v894 = vmul.f32 %v887, 1.442695
        %v895 = vpow.pop %v894
        %v896 = vadd.f32 %v889, 1.0
        %v897 = vadd.f32 %v891, 1.0
        %v898 = vadd.f32 %v893, 1.0
        %v899 = vadd.f32 %v895, 1.0
        %v900 = vrcp.pop %v896
        %v901 = vmul.f32 1.0, %v900
        %v902 = vrcp.pop %v897
        %v903 = vmul.f32 1.0, %v902
        %v904 = vrcp.pop %v898
        %v905 = vmul.f32 1.0, %v904
        %v906 = vrcp.pop %v899
        %v907 = vmul.f32 1.0, %v906
        %v908 = vld [vmem:[%s5 + $0x5] sm:$0x1]
        %v909 = vlaneseq
        %v910 = vshrl.u32 %v909, 7
        %v911 = vsub.s32 0, %v910
        %v912 = vrot.slane %v908, %v911
        %v913 = vmul.f32 %v912, %v901
        %v914 = vmul.f32 %v912, %v903
        %v915 = vmul.f32 %v912, %v905
        %v916 = vmul.f32 %v912, %v907
        %v917 = vadd.f32 %v846, %v913
        %v918 = vadd.f32 %v847, %v914
        %v919 = vadd.f32 %v848, %v915
        %v920 = vadd.f32 %v849, %v916
        %v921 = vld [vmem:[%s3 + $0x6] sm:$0x1]
        %922 = vset.pattern.permute.xlu0 6
        %923 = vperm.xlu0 %922, %v487
        %v924 = vpop.permute.xlu0 %923
        %926 = vset.pattern.permute.xlu0 6
        %927 = vperm.xlu0 %926, %v488
        %v928 = vpop.permute.xlu0 %927
        %930 = vset.pattern.permute.xlu0 6
        %931 = vperm.xlu0 %930, %v489
        %v932 = vpop.permute.xlu0 %931
        %934 = vset.pattern.permute.xlu0 6
        %935 = vperm.xlu0 %934, %v490
        %v936 = vpop.permute.xlu0 %935
        %v938 = vlaneseq
        %v939 = vshrl.u32 %v938, 7
        %v940 = vsub.s32 0, %v939
        %v941 = vrot.slane %v921, %v940
        %v942 = vsub.f32 %v924, %v941
        %v943 = vsub.f32 %v928, %v941
        %v944 = vsub.f32 %v932, %v941
        %v945 = vsub.f32 %v936, %v941
        %v946 = vld [vmem:[%s4 + $0x6] sm:$0x1]
        %v947 = vlaneseq
        %v948 = vshrl.u32 %v947, 7
        %v949 = vsub.s32 0, %v948
        %v950 = vrot.slane %v946, %v949
        %v951 = vmul.f32 %v942, %v950
        %v952 = vmul.f32 %v943, %v950
        %v953 = vmul.f32 %v944, %v950
        %v954 = vmul.f32 %v945, %v950
        %v955 = vxor.u32 %v951, 2147483648
        %v956 = vxor.u32 %v952, 2147483648
        %v957 = vxor.u32 %v953, 2147483648
        %v958 = vxor.u32 %v954, 2147483648
        %v959 = vmul.f32 %v955, 1.442695
        %v960 = vpow.pop %v959
        %v961 = vmul.f32 %v956, 1.442695
        %v962 = vpow.pop %v961
        %v963 = vmul.f32 %v957, 1.442695
        %v964 = vpow.pop %v963
        %v965 = vmul.f32 %v958, 1.442695
        %v966 = vpow.pop %v965
        %v967 = vadd.f32 %v960, 1.0
        %v968 = vadd.f32 %v962, 1.0
        %v969 = vadd.f32 %v964, 1.0
        %v970 = vadd.f32 %v966, 1.0
        %v971 = vrcp.pop %v967
        %v972 = vmul.f32 1.0, %v971
        %v973 = vrcp.pop %v968
        %v974 = vmul.f32 1.0, %v973
        %v975 = vrcp.pop %v969
        %v976 = vmul.f32 1.0, %v975
        %v977 = vrcp.pop %v970
        %v978 = vmul.f32 1.0, %v977
        %v979 = vld [vmem:[%s5 + $0x6] sm:$0x1]
        %v980 = vlaneseq
        %v981 = vshrl.u32 %v980, 7
        %v982 = vsub.s32 0, %v981
        %v983 = vrot.slane %v979, %v982
        %v984 = vmul.f32 %v983, %v972
        %v985 = vmul.f32 %v983, %v974
        %v986 = vmul.f32 %v983, %v976
        %v987 = vmul.f32 %v983, %v978
        %v988 = vadd.f32 %v917, %v984
        %v989 = vadd.f32 %v918, %v985
        %v990 = vadd.f32 %v919, %v986
        %v991 = vadd.f32 %v920, %v987
        %v992 = vld [vmem:[%s3 + $0x7] sm:$0x1]
        %993 = vset.pattern.permute.xlu0 7
        %994 = vperm.xlu0 %993, %v487
        %v995 = vpop.permute.xlu0 %994
        %997 = vset.pattern.permute.xlu0 7
        %998 = vperm.xlu0 %997, %v488
        %v999 = vpop.permute.xlu0 %998
        %1001 = vset.pattern.permute.xlu0 7
        %1002 = vperm.xlu0 %1001, %v489
        %v1003 = vpop.permute.xlu0 %1002
        %1005 = vset.pattern.permute.xlu0 7
        %1006 = vperm.xlu0 %1005, %v490
        %v1007 = vpop.permute.xlu0 %1006
        %v1009 = vlaneseq
        %v1010 = vshrl.u32 %v1009, 7
        %v1011 = vsub.s32 0, %v1010
        %v1012 = vrot.slane %v992, %v1011
        %v1013 = vsub.f32 %v995, %v1012
        %v1014 = vsub.f32 %v999, %v1012
        %v1015 = vsub.f32 %v1003, %v1012
        %v1016 = vsub.f32 %v1007, %v1012
        %v1017 = vld [vmem:[%s4 + $0x7] sm:$0x1]
        %v1018 = vlaneseq
        %v1019 = vshrl.u32 %v1018, 7
        %v1020 = vsub.s32 0, %v1019
        %v1021 = vrot.slane %v1017, %v1020
        %v1022 = vmul.f32 %v1013, %v1021
        %v1023 = vmul.f32 %v1014, %v1021
        %v1024 = vmul.f32 %v1015, %v1021
        %v1025 = vmul.f32 %v1016, %v1021
        %v1026 = vxor.u32 %v1022, 2147483648
        %v1027 = vxor.u32 %v1023, 2147483648
        %v1028 = vxor.u32 %v1024, 2147483648
        %v1029 = vxor.u32 %v1025, 2147483648
        %v1030 = vmul.f32 %v1026, 1.442695
        %v1031 = vpow.pop %v1030
        %v1032 = vmul.f32 %v1027, 1.442695
        %v1033 = vpow.pop %v1032
        %v1034 = vmul.f32 %v1028, 1.442695
        %v1035 = vpow.pop %v1034
        %v1036 = vmul.f32 %v1029, 1.442695
        %v1037 = vpow.pop %v1036
        %v1038 = vadd.f32 %v1031, 1.0
        %v1039 = vadd.f32 %v1033, 1.0
        %v1040 = vadd.f32 %v1035, 1.0
        %v1041 = vadd.f32 %v1037, 1.0
        %v1042 = vrcp.pop %v1038
        %v1043 = vmul.f32 1.0, %v1042
        %v1044 = vrcp.pop %v1039
        %v1045 = vmul.f32 1.0, %v1044
        %v1046 = vrcp.pop %v1040
        %v1047 = vmul.f32 1.0, %v1046
        %v1048 = vrcp.pop %v1041
        %v1049 = vmul.f32 1.0, %v1048
        %v1050 = vld [vmem:[%s5 + $0x7] sm:$0x1]
        %v1051 = vlaneseq
        %v1052 = vshrl.u32 %v1051, 7
        %v1053 = vsub.s32 0, %v1052
        %v1054 = vrot.slane %v1050, %v1053
        %v1055 = vmul.f32 %v1054, %v1043
        %v1056 = vmul.f32 %v1054, %v1045
        %v1057 = vmul.f32 %v1054, %v1047
        %v1058 = vmul.f32 %v1054, %v1049
        %v1059 = vadd.f32 %v988, %v1055
        %v1060 = vadd.f32 %v989, %v1056
        %v1061 = vadd.f32 %v990, %v1057
        %v1062 = vadd.f32 %v991, %v1058
        %v1063 = vld [vmem:[%s3 + $0x8] sm:$0x1]
        %1064 = vset.pattern.permute.xlu0 8
        %1065 = vperm.xlu0 %1064, %v487
        %v1066 = vpop.permute.xlu0 %1065
        %1068 = vset.pattern.permute.xlu0 8
        %1069 = vperm.xlu0 %1068, %v488
        %v1070 = vpop.permute.xlu0 %1069
        %1072 = vset.pattern.permute.xlu0 8
        %1073 = vperm.xlu0 %1072, %v489
        %v1074 = vpop.permute.xlu0 %1073
        %1076 = vset.pattern.permute.xlu0 8
        %1077 = vperm.xlu0 %1076, %v490
        %v1078 = vpop.permute.xlu0 %1077
        %v1080 = vlaneseq
        %v1081 = vshrl.u32 %v1080, 7
        %v1082 = vsub.s32 0, %v1081
        %v1083 = vrot.slane %v1063, %v1082
        %v1084 = vsub.f32 %v1066, %v1083
        %v1085 = vsub.f32 %v1070, %v1083
        %v1086 = vsub.f32 %v1074, %v1083
        %v1087 = vsub.f32 %v1078, %v1083
        %v1088 = vld [vmem:[%s4 + $0x8] sm:$0x1]
        %v1089 = vlaneseq
        %v1090 = vshrl.u32 %v1089, 7
        %v1091 = vsub.s32 0, %v1090
        %v1092 = vrot.slane %v1088, %v1091
        %v1093 = vmul.f32 %v1084, %v1092
        %v1094 = vmul.f32 %v1085, %v1092
        %v1095 = vmul.f32 %v1086, %v1092
        %v1096 = vmul.f32 %v1087, %v1092
        %v1097 = vxor.u32 %v1093, 2147483648
        %v1098 = vxor.u32 %v1094, 2147483648
        %v1099 = vxor.u32 %v1095, 2147483648
        %v1100 = vxor.u32 %v1096, 2147483648
        %v1101 = vmul.f32 %v1097, 1.442695
        %v1102 = vpow.pop %v1101
        %v1103 = vmul.f32 %v1098, 1.442695
        %v1104 = vpow.pop %v1103
        %v1105 = vmul.f32 %v1099, 1.442695
        %v1106 = vpow.pop %v1105
        %v1107 = vmul.f32 %v1100, 1.442695
        %v1108 = vpow.pop %v1107
        %v1109 = vadd.f32 %v1102, 1.0
        %v1110 = vadd.f32 %v1104, 1.0
        %v1111 = vadd.f32 %v1106, 1.0
        %v1112 = vadd.f32 %v1108, 1.0
        %v1113 = vrcp.pop %v1109
        %v1114 = vmul.f32 1.0, %v1113
        %v1115 = vrcp.pop %v1110
        %v1116 = vmul.f32 1.0, %v1115
        %v1117 = vrcp.pop %v1111
        %v1118 = vmul.f32 1.0, %v1117
        %v1119 = vrcp.pop %v1112
        %v1120 = vmul.f32 1.0, %v1119
        %v1121 = vld [vmem:[%s5 + $0x8] sm:$0x1]
        %v1122 = vlaneseq
        %v1123 = vshrl.u32 %v1122, 7
        %v1124 = vsub.s32 0, %v1123
        %v1125 = vrot.slane %v1121, %v1124
        %v1126 = vmul.f32 %v1125, %v1114
        %v1127 = vmul.f32 %v1125, %v1116
        %v1128 = vmul.f32 %v1125, %v1118
        %v1129 = vmul.f32 %v1125, %v1120
        %v1130 = vadd.f32 %v1059, %v1126
        %v1131 = vadd.f32 %v1060, %v1127
        %v1132 = vadd.f32 %v1061, %v1128
        %v1133 = vadd.f32 %v1062, %v1129
        %v1134 = vld [vmem:[%s3 + $0x9] sm:$0x1]
        %1135 = vset.pattern.permute.xlu0 9
        %1136 = vperm.xlu0 %1135, %v487
        %v1137 = vpop.permute.xlu0 %1136
        %1139 = vset.pattern.permute.xlu0 9
        %1140 = vperm.xlu0 %1139, %v488
        %v1141 = vpop.permute.xlu0 %1140
        %1143 = vset.pattern.permute.xlu0 9
        %1144 = vperm.xlu0 %1143, %v489
        %v1145 = vpop.permute.xlu0 %1144
        %1147 = vset.pattern.permute.xlu0 9
        %1148 = vperm.xlu0 %1147, %v490
        %v1149 = vpop.permute.xlu0 %1148
        %v1151 = vlaneseq
        %v1152 = vshrl.u32 %v1151, 7
        %v1153 = vsub.s32 0, %v1152
        %v1154 = vrot.slane %v1134, %v1153
        %v1155 = vsub.f32 %v1137, %v1154
        %v1156 = vsub.f32 %v1141, %v1154
        %v1157 = vsub.f32 %v1145, %v1154
        %v1158 = vsub.f32 %v1149, %v1154
        %v1159 = vld [vmem:[%s4 + $0x9] sm:$0x1]
        %v1160 = vlaneseq
        %v1161 = vshrl.u32 %v1160, 7
        %v1162 = vsub.s32 0, %v1161
        %v1163 = vrot.slane %v1159, %v1162
        %v1164 = vmul.f32 %v1155, %v1163
        %v1165 = vmul.f32 %v1156, %v1163
        %v1166 = vmul.f32 %v1157, %v1163
        %v1167 = vmul.f32 %v1158, %v1163
        %v1168 = vxor.u32 %v1164, 2147483648
        %v1169 = vxor.u32 %v1165, 2147483648
        %v1170 = vxor.u32 %v1166, 2147483648
        %v1171 = vxor.u32 %v1167, 2147483648
        %v1172 = vmul.f32 %v1168, 1.442695
        %v1173 = vpow.pop %v1172
        %v1174 = vmul.f32 %v1169, 1.442695
        %v1175 = vpow.pop %v1174
        %v1176 = vmul.f32 %v1170, 1.442695
        %v1177 = vpow.pop %v1176
        %v1178 = vmul.f32 %v1171, 1.442695
        %v1179 = vpow.pop %v1178
        %v1180 = vadd.f32 %v1173, 1.0
        %v1181 = vadd.f32 %v1175, 1.0
        %v1182 = vadd.f32 %v1177, 1.0
        %v1183 = vadd.f32 %v1179, 1.0
        %v1184 = vrcp.pop %v1180
        %v1185 = vmul.f32 1.0, %v1184
        %v1186 = vrcp.pop %v1181
        %v1187 = vmul.f32 1.0, %v1186
        %v1188 = vrcp.pop %v1182
        %v1189 = vmul.f32 1.0, %v1188
        %v1190 = vrcp.pop %v1183
        %v1191 = vmul.f32 1.0, %v1190
        %v1192 = vld [vmem:[%s5 + $0x9] sm:$0x1]
        %v1193 = vlaneseq
        %v1194 = vshrl.u32 %v1193, 7
        %v1195 = vsub.s32 0, %v1194
        %v1196 = vrot.slane %v1192, %v1195
        %v1197 = vmul.f32 %v1196, %v1185
        %v1198 = vmul.f32 %v1196, %v1187
        %v1199 = vmul.f32 %v1196, %v1189
        %v1200 = vmul.f32 %v1196, %v1191
        %v1201 = vadd.f32 %v1130, %v1197
        %v1202 = vadd.f32 %v1131, %v1198
        %v1203 = vadd.f32 %v1132, %v1199
        %v1204 = vadd.f32 %v1133, %v1200
        %v1205 = vld [vmem:[%s3 + $0xa] sm:$0x1]
        %1206 = vset.pattern.permute.xlu0 10
        %1207 = vperm.xlu0 %1206, %v487
        %v1208 = vpop.permute.xlu0 %1207
        %1210 = vset.pattern.permute.xlu0 10
        %1211 = vperm.xlu0 %1210, %v488
        %v1212 = vpop.permute.xlu0 %1211
        %1214 = vset.pattern.permute.xlu0 10
        %1215 = vperm.xlu0 %1214, %v489
        %v1216 = vpop.permute.xlu0 %1215
        %1218 = vset.pattern.permute.xlu0 10
        %1219 = vperm.xlu0 %1218, %v490
        %v1220 = vpop.permute.xlu0 %1219
        %v1222 = vlaneseq
        %v1223 = vshrl.u32 %v1222, 7
        %v1224 = vsub.s32 0, %v1223
        %v1225 = vrot.slane %v1205, %v1224
        %v1226 = vsub.f32 %v1208, %v1225
        %v1227 = vsub.f32 %v1212, %v1225
        %v1228 = vsub.f32 %v1216, %v1225
        %v1229 = vsub.f32 %v1220, %v1225
        %v1230 = vld [vmem:[%s4 + $0xa] sm:$0x1]
        %v1231 = vlaneseq
        %v1232 = vshrl.u32 %v1231, 7
        %v1233 = vsub.s32 0, %v1232
        %v1234 = vrot.slane %v1230, %v1233
        %v1235 = vmul.f32 %v1226, %v1234
        %v1236 = vmul.f32 %v1227, %v1234
        %v1237 = vmul.f32 %v1228, %v1234
        %v1238 = vmul.f32 %v1229, %v1234
        %v1239 = vxor.u32 %v1235, 2147483648
        %v1240 = vxor.u32 %v1236, 2147483648
        %v1241 = vxor.u32 %v1237, 2147483648
        %v1242 = vxor.u32 %v1238, 2147483648
        %v1243 = vmul.f32 %v1239, 1.442695
        %v1244 = vpow.pop %v1243
        %v1245 = vmul.f32 %v1240, 1.442695
        %v1246 = vpow.pop %v1245
        %v1247 = vmul.f32 %v1241, 1.442695
        %v1248 = vpow.pop %v1247
        %v1249 = vmul.f32 %v1242, 1.442695
        %v1250 = vpow.pop %v1249
        %v1251 = vadd.f32 %v1244, 1.0
        %v1252 = vadd.f32 %v1246, 1.0
        %v1253 = vadd.f32 %v1248, 1.0
        %v1254 = vadd.f32 %v1250, 1.0
        %v1255 = vrcp.pop %v1251
        %v1256 = vmul.f32 1.0, %v1255
        %v1257 = vrcp.pop %v1252
        %v1258 = vmul.f32 1.0, %v1257
        %v1259 = vrcp.pop %v1253
        %v1260 = vmul.f32 1.0, %v1259
        %v1261 = vrcp.pop %v1254
        %v1262 = vmul.f32 1.0, %v1261
        %v1263 = vld [vmem:[%s5 + $0xa] sm:$0x1]
        %v1264 = vlaneseq
        %v1265 = vshrl.u32 %v1264, 7
        %v1266 = vsub.s32 0, %v1265
        %v1267 = vrot.slane %v1263, %v1266
        %v1268 = vmul.f32 %v1267, %v1256
        %v1269 = vmul.f32 %v1267, %v1258
        %v1270 = vmul.f32 %v1267, %v1260
        %v1271 = vmul.f32 %v1267, %v1262
        %v1272 = vadd.f32 %v1201, %v1268
        %v1273 = vadd.f32 %v1202, %v1269
        %v1274 = vadd.f32 %v1203, %v1270
        %v1275 = vadd.f32 %v1204, %v1271
        %v1276 = vld [vmem:[%s3 + $0xb] sm:$0x1]
        %1277 = vset.pattern.permute.xlu0 11
        %1278 = vperm.xlu0 %1277, %v487
        %v1279 = vpop.permute.xlu0 %1278
        %1281 = vset.pattern.permute.xlu0 11
        %1282 = vperm.xlu0 %1281, %v488
        %v1283 = vpop.permute.xlu0 %1282
        %1285 = vset.pattern.permute.xlu0 11
        %1286 = vperm.xlu0 %1285, %v489
        %v1287 = vpop.permute.xlu0 %1286
        %1289 = vset.pattern.permute.xlu0 11
        %1290 = vperm.xlu0 %1289, %v490
        %v1291 = vpop.permute.xlu0 %1290
        %v1293 = vlaneseq
        %v1294 = vshrl.u32 %v1293, 7
        %v1295 = vsub.s32 0, %v1294
        %v1296 = vrot.slane %v1276, %v1295
        %v1297 = vsub.f32 %v1279, %v1296
        %v1298 = vsub.f32 %v1283, %v1296
        %v1299 = vsub.f32 %v1287, %v1296
        %v1300 = vsub.f32 %v1291, %v1296
        %v1301 = vld [vmem:[%s4 + $0xb] sm:$0x1]
        %v1302 = vlaneseq
        %v1303 = vshrl.u32 %v1302, 7
        %v1304 = vsub.s32 0, %v1303
        %v1305 = vrot.slane %v1301, %v1304
        %v1306 = vmul.f32 %v1297, %v1305
        %v1307 = vmul.f32 %v1298, %v1305
        %v1308 = vmul.f32 %v1299, %v1305
        %v1309 = vmul.f32 %v1300, %v1305
        %v1310 = vxor.u32 %v1306, 2147483648
        %v1311 = vxor.u32 %v1307, 2147483648
        %v1312 = vxor.u32 %v1308, 2147483648
        %v1313 = vxor.u32 %v1309, 2147483648
        %v1314 = vmul.f32 %v1310, 1.442695
        %v1315 = vpow.pop %v1314
        %v1316 = vmul.f32 %v1311, 1.442695
        %v1317 = vpow.pop %v1316
        %v1318 = vmul.f32 %v1312, 1.442695
        %v1319 = vpow.pop %v1318
        %v1320 = vmul.f32 %v1313, 1.442695
        %v1321 = vpow.pop %v1320
        %v1322 = vadd.f32 %v1315, 1.0
        %v1323 = vadd.f32 %v1317, 1.0
        %v1324 = vadd.f32 %v1319, 1.0
        %v1325 = vadd.f32 %v1321, 1.0
        %v1326 = vrcp.pop %v1322
        %v1327 = vmul.f32 1.0, %v1326
        %v1328 = vrcp.pop %v1323
        %v1329 = vmul.f32 1.0, %v1328
        %v1330 = vrcp.pop %v1324
        %v1331 = vmul.f32 1.0, %v1330
        %v1332 = vrcp.pop %v1325
        %v1333 = vmul.f32 1.0, %v1332
        %v1334 = vld [vmem:[%s5 + $0xb] sm:$0x1]
        %v1335 = vlaneseq
        %v1336 = vshrl.u32 %v1335, 7
        %v1337 = vsub.s32 0, %v1336
        %v1338 = vrot.slane %v1334, %v1337
        %v1339 = vmul.f32 %v1338, %v1327
        %v1340 = vmul.f32 %v1338, %v1329
        %v1341 = vmul.f32 %v1338, %v1331
        %v1342 = vmul.f32 %v1338, %v1333
        %v1343 = vadd.f32 %v1272, %v1339
        %v1344 = vadd.f32 %v1273, %v1340
        %v1345 = vadd.f32 %v1274, %v1341
        %v1346 = vadd.f32 %v1275, %v1342
        %v1347 = vld [vmem:[%s3 + $0xc] sm:$0x1]
        %1348 = vset.pattern.permute.xlu0 12
        %1349 = vperm.xlu0 %1348, %v487
        %v1350 = vpop.permute.xlu0 %1349
        %1352 = vset.pattern.permute.xlu0 12
        %1353 = vperm.xlu0 %1352, %v488
        %v1354 = vpop.permute.xlu0 %1353
        %1356 = vset.pattern.permute.xlu0 12
        %1357 = vperm.xlu0 %1356, %v489
        %v1358 = vpop.permute.xlu0 %1357
        %1360 = vset.pattern.permute.xlu0 12
        %1361 = vperm.xlu0 %1360, %v490
        %v1362 = vpop.permute.xlu0 %1361
        %v1364 = vlaneseq
        %v1365 = vshrl.u32 %v1364, 7
        %v1366 = vsub.s32 0, %v1365
        %v1367 = vrot.slane %v1347, %v1366
        %v1368 = vsub.f32 %v1350, %v1367
        %v1369 = vsub.f32 %v1354, %v1367
        %v1370 = vsub.f32 %v1358, %v1367
        %v1371 = vsub.f32 %v1362, %v1367
        %v1372 = vld [vmem:[%s4 + $0xc] sm:$0x1]
        %v1373 = vlaneseq
        %v1374 = vshrl.u32 %v1373, 7
        %v1375 = vsub.s32 0, %v1374
        %v1376 = vrot.slane %v1372, %v1375
        %v1377 = vmul.f32 %v1368, %v1376
        %v1378 = vmul.f32 %v1369, %v1376
        %v1379 = vmul.f32 %v1370, %v1376
        %v1380 = vmul.f32 %v1371, %v1376
        %v1381 = vxor.u32 %v1377, 2147483648
        %v1382 = vxor.u32 %v1378, 2147483648
        %v1383 = vxor.u32 %v1379, 2147483648
        %v1384 = vxor.u32 %v1380, 2147483648
        %v1385 = vmul.f32 %v1381, 1.442695
        %v1386 = vpow.pop %v1385
        %v1387 = vmul.f32 %v1382, 1.442695
        %v1388 = vpow.pop %v1387
        %v1389 = vmul.f32 %v1383, 1.442695
        %v1390 = vpow.pop %v1389
        %v1391 = vmul.f32 %v1384, 1.442695
        %v1392 = vpow.pop %v1391
        %v1393 = vadd.f32 %v1386, 1.0
        %v1394 = vadd.f32 %v1388, 1.0
        %v1395 = vadd.f32 %v1390, 1.0
        %v1396 = vadd.f32 %v1392, 1.0
        %v1397 = vrcp.pop %v1393
        %v1398 = vmul.f32 1.0, %v1397
        %v1399 = vrcp.pop %v1394
        %v1400 = vmul.f32 1.0, %v1399
        %v1401 = vrcp.pop %v1395
        %v1402 = vmul.f32 1.0, %v1401
        %v1403 = vrcp.pop %v1396
        %v1404 = vmul.f32 1.0, %v1403
        %v1405 = vld [vmem:[%s5 + $0xc] sm:$0x1]
        %v1406 = vlaneseq
        %v1407 = vshrl.u32 %v1406, 7
        %v1408 = vsub.s32 0, %v1407
        %v1409 = vrot.slane %v1405, %v1408
        %v1410 = vmul.f32 %v1409, %v1398
        %v1411 = vmul.f32 %v1409, %v1400
        %v1412 = vmul.f32 %v1409, %v1402
        %v1413 = vmul.f32 %v1409, %v1404
        %v1414 = vadd.f32 %v1343, %v1410
        %v1415 = vadd.f32 %v1344, %v1411
        %v1416 = vadd.f32 %v1345, %v1412
        %v1417 = vadd.f32 %v1346, %v1413
        %v1418 = vld [vmem:[%s3 + $0xd] sm:$0x1]
        %1419 = vset.pattern.permute.xlu0 13
        %1420 = vperm.xlu0 %1419, %v487
        %v1421 = vpop.permute.xlu0 %1420
        %1423 = vset.pattern.permute.xlu0 13
        %1424 = vperm.xlu0 %1423, %v488
        %v1425 = vpop.permute.xlu0 %1424
        %1427 = vset.pattern.permute.xlu0 13
        %1428 = vperm.xlu0 %1427, %v489
        %v1429 = vpop.permute.xlu0 %1428
        %1431 = vset.pattern.permute.xlu0 13
        %1432 = vperm.xlu0 %1431, %v490
        %v1433 = vpop.permute.xlu0 %1432
        %v1435 = vlaneseq
        %v1436 = vshrl.u32 %v1435, 7
        %v1437 = vsub.s32 0, %v1436
        %v1438 = vrot.slane %v1418, %v1437
        %v1439 = vsub.f32 %v1421, %v1438
        %v1440 = vsub.f32 %v1425, %v1438
        %v1441 = vsub.f32 %v1429, %v1438
        %v1442 = vsub.f32 %v1433, %v1438
        %v1443 = vld [vmem:[%s4 + $0xd] sm:$0x1]
        %v1444 = vlaneseq
        %v1445 = vshrl.u32 %v1444, 7
        %v1446 = vsub.s32 0, %v1445
        %v1447 = vrot.slane %v1443, %v1446
        %v1448 = vmul.f32 %v1439, %v1447
        %v1449 = vmul.f32 %v1440, %v1447
        %v1450 = vmul.f32 %v1441, %v1447
        %v1451 = vmul.f32 %v1442, %v1447
        %v1452 = vxor.u32 %v1448, 2147483648
        %v1453 = vxor.u32 %v1449, 2147483648
        %v1454 = vxor.u32 %v1450, 2147483648
        %v1455 = vxor.u32 %v1451, 2147483648
        %v1456 = vmul.f32 %v1452, 1.442695
        %v1457 = vpow.pop %v1456
        %v1458 = vmul.f32 %v1453, 1.442695
        %v1459 = vpow.pop %v1458
        %v1460 = vmul.f32 %v1454, 1.442695
        %v1461 = vpow.pop %v1460
        %v1462 = vmul.f32 %v1455, 1.442695
        %v1463 = vpow.pop %v1462
        %v1464 = vadd.f32 %v1457, 1.0
        %v1465 = vadd.f32 %v1459, 1.0
        %v1466 = vadd.f32 %v1461, 1.0
        %v1467 = vadd.f32 %v1463, 1.0
        %v1468 = vrcp.pop %v1464
        %v1469 = vmul.f32 1.0, %v1468
        %v1470 = vrcp.pop %v1465
        %v1471 = vmul.f32 1.0, %v1470
        %v1472 = vrcp.pop %v1466
        %v1473 = vmul.f32 1.0, %v1472
        %v1474 = vrcp.pop %v1467
        %v1475 = vmul.f32 1.0, %v1474
        %v1476 = vld [vmem:[%s5 + $0xd] sm:$0x1]
        %v1477 = vlaneseq
        %v1478 = vshrl.u32 %v1477, 7
        %v1479 = vsub.s32 0, %v1478
        %v1480 = vrot.slane %v1476, %v1479
        %v1481 = vmul.f32 %v1480, %v1469
        %v1482 = vmul.f32 %v1480, %v1471
        %v1483 = vmul.f32 %v1480, %v1473
        %v1484 = vmul.f32 %v1480, %v1475
        %v1485 = vadd.f32 %v1414, %v1481
        %v1486 = vadd.f32 %v1415, %v1482
        %v1487 = vadd.f32 %v1416, %v1483
        %v1488 = vadd.f32 %v1417, %v1484
        %v1489 = vld [vmem:[%s3 + $0xe] sm:$0x1]
        %1490 = vset.pattern.permute.xlu0 14
        %1491 = vperm.xlu0 %1490, %v487
        %v1492 = vpop.permute.xlu0 %1491
        %1494 = vset.pattern.permute.xlu0 14
        %1495 = vperm.xlu0 %1494, %v488
        %v1496 = vpop.permute.xlu0 %1495
        %1498 = vset.pattern.permute.xlu0 14
        %1499 = vperm.xlu0 %1498, %v489
        %v1500 = vpop.permute.xlu0 %1499
        %1502 = vset.pattern.permute.xlu0 14
        %1503 = vperm.xlu0 %1502, %v490
        %v1504 = vpop.permute.xlu0 %1503
        %v1506 = vlaneseq
        %v1507 = vshrl.u32 %v1506, 7
        %v1508 = vsub.s32 0, %v1507
        %v1509 = vrot.slane %v1489, %v1508
        %v1510 = vsub.f32 %v1492, %v1509
        %v1511 = vsub.f32 %v1496, %v1509
        %v1512 = vsub.f32 %v1500, %v1509
        %v1513 = vsub.f32 %v1504, %v1509
        %v1514 = vld [vmem:[%s4 + $0xe] sm:$0x1]
        %v1515 = vlaneseq
        %v1516 = vshrl.u32 %v1515, 7
        %v1517 = vsub.s32 0, %v1516
        %v1518 = vrot.slane %v1514, %v1517
        %v1519 = vmul.f32 %v1510, %v1518
        %v1520 = vmul.f32 %v1511, %v1518
        %v1521 = vmul.f32 %v1512, %v1518
        %v1522 = vmul.f32 %v1513, %v1518
        %v1523 = vxor.u32 %v1519, 2147483648
        %v1524 = vxor.u32 %v1520, 2147483648
        %v1525 = vxor.u32 %v1521, 2147483648
        %v1526 = vxor.u32 %v1522, 2147483648
        %v1527 = vmul.f32 %v1523, 1.442695
        %v1528 = vpow.pop %v1527
        %v1529 = vmul.f32 %v1524, 1.442695
        %v1530 = vpow.pop %v1529
        %v1531 = vmul.f32 %v1525, 1.442695
        %v1532 = vpow.pop %v1531
        %v1533 = vmul.f32 %v1526, 1.442695
        %v1534 = vpow.pop %v1533
        %v1535 = vadd.f32 %v1528, 1.0
        %v1536 = vadd.f32 %v1530, 1.0
        %v1537 = vadd.f32 %v1532, 1.0
        %v1538 = vadd.f32 %v1534, 1.0
        %v1539 = vrcp.pop %v1535
        %v1540 = vmul.f32 1.0, %v1539
        %v1541 = vrcp.pop %v1536
        %v1542 = vmul.f32 1.0, %v1541
        %v1543 = vrcp.pop %v1537
        %v1544 = vmul.f32 1.0, %v1543
        %v1545 = vrcp.pop %v1538
        %v1546 = vmul.f32 1.0, %v1545
        %v1547 = vld [vmem:[%s5 + $0xe] sm:$0x1]
        %v1548 = vlaneseq
        %v1549 = vshrl.u32 %v1548, 7
        %v1550 = vsub.s32 0, %v1549
        %v1551 = vrot.slane %v1547, %v1550
        %v1552 = vmul.f32 %v1551, %v1540
        %v1553 = vmul.f32 %v1551, %v1542
        %v1554 = vmul.f32 %v1551, %v1544
        %v1555 = vmul.f32 %v1551, %v1546
        %v1556 = vadd.f32 %v1485, %v1552
        %v1557 = vadd.f32 %v1486, %v1553
        %v1558 = vadd.f32 %v1487, %v1554
        %v1559 = vadd.f32 %v1488, %v1555
        %v1560 = vld [vmem:[%s3 + $0xf] sm:$0x1]
        %1561 = vset.pattern.permute.xlu0 15
        %1562 = vperm.xlu0 %1561, %v487
        %v1563 = vpop.permute.xlu0 %1562
        %1565 = vset.pattern.permute.xlu0 15
        %1566 = vperm.xlu0 %1565, %v488
        %v1567 = vpop.permute.xlu0 %1566
        %1569 = vset.pattern.permute.xlu0 15
        %1570 = vperm.xlu0 %1569, %v489
        %v1571 = vpop.permute.xlu0 %1570
        %1573 = vset.pattern.permute.xlu0 15
        %1574 = vperm.xlu0 %1573, %v490
        %v1575 = vpop.permute.xlu0 %1574
        %v1577 = vlaneseq
        %v1578 = vshrl.u32 %v1577, 7
        %v1579 = vsub.s32 0, %v1578
        %v1580 = vrot.slane %v1560, %v1579
        %v1581 = vsub.f32 %v1563, %v1580
        %v1582 = vsub.f32 %v1567, %v1580
        %v1583 = vsub.f32 %v1571, %v1580
        %v1584 = vsub.f32 %v1575, %v1580
        %v1585 = vld [vmem:[%s4 + $0xf] sm:$0x1]
        %v1586 = vlaneseq
        %v1587 = vshrl.u32 %v1586, 7
        %v1588 = vsub.s32 0, %v1587
        %v1589 = vrot.slane %v1585, %v1588
        %v1590 = vmul.f32 %v1581, %v1589
        %v1591 = vmul.f32 %v1582, %v1589
        %v1592 = vmul.f32 %v1583, %v1589
        %v1593 = vmul.f32 %v1584, %v1589
        %v1594 = vxor.u32 %v1590, 2147483648
        %v1595 = vxor.u32 %v1591, 2147483648
        %v1596 = vxor.u32 %v1592, 2147483648
        %v1597 = vxor.u32 %v1593, 2147483648
        %v1598 = vmul.f32 %v1594, 1.442695
        %v1599 = vpow.pop %v1598
        %v1600 = vmul.f32 %v1595, 1.442695
        %v1601 = vpow.pop %v1600
        %v1602 = vmul.f32 %v1596, 1.442695
        %v1603 = vpow.pop %v1602
        %v1604 = vmul.f32 %v1597, 1.442695
        %v1605 = vpow.pop %v1604
        %v1606 = vadd.f32 %v1599, 1.0
        %v1607 = vadd.f32 %v1601, 1.0
        %v1608 = vadd.f32 %v1603, 1.0
        %v1609 = vadd.f32 %v1605, 1.0
        %v1610 = vrcp.pop %v1606
        %v1611 = vmul.f32 1.0, %v1610
        %v1612 = vrcp.pop %v1607
        %v1613 = vmul.f32 1.0, %v1612
        %v1614 = vrcp.pop %v1608
        %v1615 = vmul.f32 1.0, %v1614
        %v1616 = vrcp.pop %v1609
        %v1617 = vmul.f32 1.0, %v1616
        %v1618 = vld [vmem:[%s5 + $0xf] sm:$0x1]
        %v1619 = vlaneseq
        %v1620 = vshrl.u32 %v1619, 7
        %v1621 = vsub.s32 0, %v1620
        %v1622 = vrot.slane %v1618, %v1621
        %v1623 = vmul.f32 %v1622, %v1611
        %v1624 = vmul.f32 %v1622, %v1613
        %v1625 = vmul.f32 %v1622, %v1615
        %v1626 = vmul.f32 %v1622, %v1617
        %v1627 = vadd.f32 %v1556, %v1623
        %v1628 = vadd.f32 %v1557, %v1624
        %v1629 = vadd.f32 %v1558, %v1625
        %v1630 = vadd.f32 %v1559, %v1626
        %vm1631 = vcmask 310272
        %1632 = vst.msk [vmem:[#allocation2] sm:$0xff] %vm1631, %v1627
        %1633 = vst.msk [vmem:[#allocation2 + $0x8] sm:$0xff] %vm1631, %v1628
        %1634 = vst.msk [vmem:[#allocation2 + $0x10] sm:$0xff] %vm1631, %v1629
        %1635 = vst.msk [vmem:[#allocation2 + $0x18] sm:$0xff] %vm1631, %v1630
        %v1636 = vld [vmem:[%s6] sm:$0xff]
        %v1637 = vld [vmem:[%s6 + $0x8] sm:$0xff]
        %v1638 = vld [vmem:[%s6 + $0x10] sm:$0x7]
        %v1639 = vld [vmem:[%s7] sm:$0xff]
        %v1640 = vld [vmem:[%s7 + $0x8] sm:$0xff]
        %v1641 = vld [vmem:[%s7 + $0x10] sm:$0x7]
        %v1642 = vld [vmem:[%s8] sm:$0xff]
        %v1643 = vld [vmem:[%s8 + $0x8] sm:$0xff]
        %v1644 = vld [vmem:[%s8 + $0x10] sm:$0x7]
        %v1645 = vld [vmem:[%s9] sm:$0x1]
        %v1646 = vld [vmem:[%s10] sm:$0x1]
        %v1647 = vld [vmem:[%s11] sm:$0x1]
        %v1648 = vlaneseq
        %v1649 = vshrl.u32 %v1648, 7
        %v1650 = vadd.s32 %v1649, 8
        %v1651 = vadd.s32 %v1649, 16
        %v1652 = vlaneseq
        %v1653 = vand.u32 %v1652, 127
        %vm1654 = vcmp.eq.s32.totalorder %v1649, %v1653
        %vm1655 = vcmp.eq.s32.totalorder %v1650, %v1653
        %vm1656 = vcmp.eq.s32.totalorder %v1651, %v1653
        %v1657 = vsel %vm1654, 1, 0
        %v1658 = vsel %vm1655, 1, 0
        %v1659 = vsel %vm1656, 1, 0
        %v1660 = vcvt.s32.f32 %v1657
        %v1661 = vcvt.s32.f32 %v1658
        %v1662 = vcvt.s32.f32 %v1659
        loop: start=0, step=1, limit=32
        $region77: #{forward.9} parent=75 // loop_pre_header
          _
        $region78: #{forward.9} parent=75 // loop_header
          %s1664 = sphi 0, %s1668
          %p1665 = scmp.ge.s32.totalorder %s1664, 32
          %v1669 = vphi 0.0, %v2178
        $region79: #{forward.9} parent=75 // loop_header_branch
          %1667 = sbr.rel (%p1665) target = $region83
        $region80: #{forward.9} parent=75 // loop_body
          %s1670 = scalar_lea.vmem [#allocation2], %s1664
          %v1671 = vld [vmem:[%s1670] sm:$0x1]
          %v1673 = vlaneseq
          %v1674 = vshrl.u32 %v1673, 7
          %v1675 = vsub.s32 0, %v1674
          %v1676 = vrot.slane %v1669, %v1675
          %v1678 = vmul.f32 %v1676, %v1660
          %v1679 = vmul.f32 %v1676, %v1661
          %v1680 = vmul.f32 %v1676, %v1662
          %vm1681 = vcmask 154624
          %v1682 = vsel %vm1681, %v1678, 0.0
          %1683 = vadd.xlane.f32.xlu0 %v1682
          %v1684 = vpop.xlane.xlu0 %1683
          %v1685 = vsel %vm1681, %v1679, 0.0
          %1686 = vadd.xlane.f32.xlu0 %v1685
          %v1687 = vpop.xlane.xlu0 %1686
          %vm1688 = vcmask 149504
          %v1689 = vsel %vm1688, %v1680, 0.0
          %1690 = vadd.xlane.f32.xlu0 %v1689
          %v1691 = vpop.xlane.xlu0 %1690
          %v1692 = vsub.f32 %v1684, %v1636
          %v1693 = vsub.f32 %v1687, %v1637
          %v1694 = vsub.f32 %v1691, %v1638
          %v1695 = vmul.f32 %v1692, %v1639
          %v1696 = vmul.f32 %v1693, %v1640
          %v1697 = vmul.f32 %v1694, %v1641
          %v1698 = vxor.u32 %v1695, 2147483648
          %v1699 = vxor.u32 %v1696, 2147483648
          %v1700 = vxor.u32 %v1697, 2147483648
          %v1701 = vmul.f32 %v1698, 1.442695
          %v1702 = vpow.pop %v1701
          %v1703 = vmul.f32 %v1699, 1.442695
          %v1704 = vpow.pop %v1703
          %v1705 = vmul.f32 %v1700, 1.442695
          %v1706 = vpow.pop %v1705
          %v1707 = vadd.f32 %v1702, 1.0
          %v1708 = vadd.f32 %v1704, 1.0
          %v1709 = vadd.f32 %v1706, 1.0
          %v1710 = vrcp.pop %v1707
          %v1711 = vmul.f32 1.0, %v1710
          %v1712 = vrcp.pop %v1708
          %v1713 = vmul.f32 1.0, %v1712
          %v1714 = vrcp.pop %v1709
          %v1715 = vmul.f32 1.0, %v1714
          %v1716 = vmul.f32 %v1642, %v1711
          %v1717 = vmul.f32 %v1643, %v1713
          %v1718 = vmul.f32 %v1644, %v1715
          %v1719 = vsel %vm1631, %v1716, 0.0
          %v1720 = vsel %vm1631, %v1717, 0.0
          %v1721 = vadd.f32 %v1719, %v1720
          %vm1722 = vcmask 305152
          %v1723 = vsel %vm1722, %v1718, 0.0
          %v1724 = vadd.f32 %v1721, %v1723
          %v1725 = vrot.slane %v1724, 4
          %v1726 = vadd.f32 %v1724, %v1725
          %v1727 = vrot.slane %v1726, 2
          %v1728 = vadd.f32 %v1726, %v1727
          %v1729 = vrot.slane %v1728, 1
          %v1730 = vadd.f32 %v1728, %v1729
          %v1731 = vadd.f32 %v1730, %v1671
          %v1732 = vmul.f32 %v1645, %v1669
          %v1733 = vadd.f32 %v1732, %v1646
          %v1734 = vadd.f32 %v1733, %v1731
          %v1737 = vunpack.c.l.s4 1966171168
          %v1738 = vunpack.c.0.s8 %v1737
          %v1739 = vlaneseq
          %v1740 = vshrl.u32 %v1739, 7
          %v1741 = vsub.s32 %v1738, %v1740
          %v1742 = vrot.slane %v1731, %v1741
          %v1744 = vunpack.c.l.s4 1966171168
          %v1745 = vunpack.c.0.s8 %v1744
          %v1746 = vlaneseq
          %v1747 = vshrl.u32 %v1746, 7
          %v1748 = vsub.s32 %v1745, %v1747
          %v1749 = vrot.slane %v1742, %v1748
          %1750 = vrot.lane.b32.xlu0 %v1749, 109
          %v1751 = vpop.permute.xlu0 %1750
          %v1753 = vadd.f32 %v1647, %v1751
          %v1754 = vrcp.pop %v1753
          %v1755 = vmul.f32 %v1753, %v1754
          %v1756 = vsub.f32 2.0, %v1755
          %v1757 = vmul.f32 %v1754, %v1756
          %v1758 = vmul.f32 %v1734, %v1757
          %v1760 = vlaneseq
          %v1761 = vshrl.u32 %v1760, 7
          %v1762 = vsub.s32 0, %v1761
          %v1763 = vrot.slane %v1758, %v1762
          %v1765 = vmul.f32 %v1763, %v1660
          %v1766 = vmul.f32 %v1763, %v1661
          %v1767 = vmul.f32 %v1763, %v1662
          %v1768 = vsel %vm1681, %v1765, 0.0
          %1769 = vadd.xlane.f32.xlu0 %v1768
          %v1770 = vpop.xlane.xlu0 %1769
          %v1771 = vsel %vm1681, %v1766, 0.0
          %1772 = vadd.xlane.f32.xlu0 %v1771
          %v1773 = vpop.xlane.xlu0 %1772
          %v1774 = vsel %vm1688, %v1767, 0.0
          %1775 = vadd.xlane.f32.xlu0 %v1774
          %v1776 = vpop.xlane.xlu0 %1775
          %v1777 = vsub.f32 %v1770, %v1636
          %v1778 = vsub.f32 %v1773, %v1637
          %v1779 = vsub.f32 %v1776, %v1638
          %v1780 = vmul.f32 %v1777, %v1639
          %v1781 = vmul.f32 %v1778, %v1640
          %v1782 = vmul.f32 %v1779, %v1641
          %v1783 = vxor.u32 %v1780, 2147483648
          %v1784 = vxor.u32 %v1781, 2147483648
          %v1785 = vxor.u32 %v1782, 2147483648
          %v1786 = vmul.f32 %v1783, 1.442695
          %v1787 = vpow.pop %v1786
          %v1788 = vmul.f32 %v1784, 1.442695
          %v1789 = vpow.pop %v1788
          %v1790 = vmul.f32 %v1785, 1.442695
          %v1791 = vpow.pop %v1790
          %v1792 = vadd.f32 %v1787, 1.0
          %v1793 = vadd.f32 %v1789, 1.0
          %v1794 = vadd.f32 %v1791, 1.0
          %v1795 = vrcp.pop %v1792
          %v1796 = vmul.f32 1.0, %v1795
          %v1797 = vrcp.pop %v1793
          %v1798 = vmul.f32 1.0, %v1797
          %v1799 = vrcp.pop %v1794
          %v1800 = vmul.f32 1.0, %v1799
          %v1801 = vmul.f32 %v1642, %v1796
          %v1802 = vmul.f32 %v1643, %v1798
          %v1803 = vmul.f32 %v1644, %v1800
          %v1804 = vsel %vm1631, %v1801, 0.0
          %v1805 = vsel %vm1631, %v1802, 0.0
          %v1806 = vadd.f32 %v1804, %v1805
          %v1807 = vsel %vm1722, %v1803, 0.0
          %v1808 = vadd.f32 %v1806, %v1807
          %v1809 = vrot.slane %v1808, 4
          %v1810 = vadd.f32 %v1808, %v1809
          %v1811 = vrot.slane %v1810, 2
          %v1812 = vadd.f32 %v1810, %v1811
          %v1813 = vrot.slane %v1812, 1
          %v1814 = vadd.f32 %v1812, %v1813
          %v1815 = vadd.f32 %v1814, %v1671
          %v1816 = vmul.f32 %v1645, %v1758
          %v1817 = vadd.f32 %v1816, %v1646
          %v1818 = vadd.f32 %v1817, %v1815
          %v1821 = vunpack.c.l.s4 1966171168
          %v1822 = vunpack.c.0.s8 %v1821
          %v1823 = vlaneseq
          %v1824 = vshrl.u32 %v1823, 7
          %v1825 = vsub.s32 %v1822, %v1824
          %v1826 = vrot.slane %v1815, %v1825
          %v1828 = vunpack.c.l.s4 1966171168
          %v1829 = vunpack.c.0.s8 %v1828
          %v1830 = vlaneseq
          %v1831 = vshrl.u32 %v1830, 7
          %v1832 = vsub.s32 %v1829, %v1831
          %v1833 = vrot.slane %v1826, %v1832
          %1834 = vrot.lane.b32.xlu0 %v1833, 109
          %v1835 = vpop.permute.xlu0 %1834
          %v1837 = vadd.f32 %v1647, %v1835
          %v1838 = vrcp.pop %v1837
          %v1839 = vmul.f32 %v1837, %v1838
          %v1840 = vsub.f32 2.0, %v1839
          %v1841 = vmul.f32 %v1838, %v1840
          %v1842 = vmul.f32 %v1818, %v1841
          %v1844 = vlaneseq
          %v1845 = vshrl.u32 %v1844, 7
          %v1846 = vsub.s32 0, %v1845
          %v1847 = vrot.slane %v1842, %v1846
          %v1849 = vmul.f32 %v1847, %v1660
          %v1850 = vmul.f32 %v1847, %v1661
          %v1851 = vmul.f32 %v1847, %v1662
          %v1852 = vsel %vm1681, %v1849, 0.0
          %1853 = vadd.xlane.f32.xlu0 %v1852
          %v1854 = vpop.xlane.xlu0 %1853
          %v1855 = vsel %vm1681, %v1850, 0.0
          %1856 = vadd.xlane.f32.xlu0 %v1855
          %v1857 = vpop.xlane.xlu0 %1856
          %v1858 = vsel %vm1688, %v1851, 0.0
          %1859 = vadd.xlane.f32.xlu0 %v1858
          %v1860 = vpop.xlane.xlu0 %1859
          %v1861 = vsub.f32 %v1854, %v1636
          %v1862 = vsub.f32 %v1857, %v1637
          %v1863 = vsub.f32 %v1860, %v1638
          %v1864 = vmul.f32 %v1861, %v1639
          %v1865 = vmul.f32 %v1862, %v1640
          %v1866 = vmul.f32 %v1863, %v1641
          %v1867 = vxor.u32 %v1864, 2147483648
          %v1868 = vxor.u32 %v1865, 2147483648
          %v1869 = vxor.u32 %v1866, 2147483648
          %v1870 = vmul.f32 %v1867, 1.442695
          %v1871 = vpow.pop %v1870
          %v1872 = vmul.f32 %v1868, 1.442695
          %v1873 = vpow.pop %v1872
          %v1874 = vmul.f32 %v1869, 1.442695
          %v1875 = vpow.pop %v1874
          %v1876 = vadd.f32 %v1871, 1.0
          %v1877 = vadd.f32 %v1873, 1.0
          %v1878 = vadd.f32 %v1875, 1.0
          %v1879 = vrcp.pop %v1876
          %v1880 = vmul.f32 1.0, %v1879
          %v1881 = vrcp.pop %v1877
          %v1882 = vmul.f32 1.0, %v1881
          %v1883 = vrcp.pop %v1878
          %v1884 = vmul.f32 1.0, %v1883
          %v1885 = vmul.f32 %v1642, %v1880
          %v1886 = vmul.f32 %v1643, %v1882
          %v1887 = vmul.f32 %v1644, %v1884
          %v1888 = vsel %vm1631, %v1885, 0.0
          %v1889 = vsel %vm1631, %v1886, 0.0
          %v1890 = vadd.f32 %v1888, %v1889
          %v1891 = vsel %vm1722, %v1887, 0.0
          %v1892 = vadd.f32 %v1890, %v1891
          %v1893 = vrot.slane %v1892, 4
          %v1894 = vadd.f32 %v1892, %v1893
          %v1895 = vrot.slane %v1894, 2
          %v1896 = vadd.f32 %v1894, %v1895
          %v1897 = vrot.slane %v1896, 1
          %v1898 = vadd.f32 %v1896, %v1897
          %v1899 = vadd.f32 %v1898, %v1671
          %v1900 = vmul.f32 %v1645, %v1842
          %v1901 = vadd.f32 %v1900, %v1646
          %v1902 = vadd.f32 %v1901, %v1899
          %v1905 = vunpack.c.l.s4 1966171168
          %v1906 = vunpack.c.0.s8 %v1905
          %v1907 = vlaneseq
          %v1908 = vshrl.u32 %v1907, 7
          %v1909 = vsub.s32 %v1906, %v1908
          %v1910 = vrot.slane %v1899, %v1909
          %v1912 = vunpack.c.l.s4 1966171168
          %v1913 = vunpack.c.0.s8 %v1912
          %v1914 = vlaneseq
          %v1915 = vshrl.u32 %v1914, 7
          %v1916 = vsub.s32 %v1913, %v1915
          %v1917 = vrot.slane %v1910, %v1916
          %1918 = vrot.lane.b32.xlu0 %v1917, 109
          %v1919 = vpop.permute.xlu0 %1918
          %v1921 = vadd.f32 %v1647, %v1919
          %v1922 = vrcp.pop %v1921
          %v1923 = vmul.f32 %v1921, %v1922
          %v1924 = vsub.f32 2.0, %v1923
          %v1925 = vmul.f32 %v1922, %v1924
          %v1926 = vmul.f32 %v1902, %v1925
          %v1928 = vlaneseq
          %v1929 = vshrl.u32 %v1928, 7
          %v1930 = vsub.s32 0, %v1929
          %v1931 = vrot.slane %v1926, %v1930
          %v1933 = vmul.f32 %v1931, %v1660
          %v1934 = vmul.f32 %v1931, %v1661
          %v1935 = vmul.f32 %v1931, %v1662
          %v1936 = vsel %vm1681, %v1933, 0.0
          %1937 = vadd.xlane.f32.xlu0 %v1936
          %v1938 = vpop.xlane.xlu0 %1937
          %v1939 = vsel %vm1681, %v1934, 0.0
          %1940 = vadd.xlane.f32.xlu0 %v1939
          %v1941 = vpop.xlane.xlu0 %1940
          %v1942 = vsel %vm1688, %v1935, 0.0
          %1943 = vadd.xlane.f32.xlu0 %v1942
          %v1944 = vpop.xlane.xlu0 %1943
          %v1945 = vsub.f32 %v1938, %v1636
          %v1946 = vsub.f32 %v1941, %v1637
          %v1947 = vsub.f32 %v1944, %v1638
          %v1948 = vmul.f32 %v1945, %v1639
          %v1949 = vmul.f32 %v1946, %v1640
          %v1950 = vmul.f32 %v1947, %v1641
          %v1951 = vxor.u32 %v1948, 2147483648
          %v1952 = vxor.u32 %v1949, 2147483648
          %v1953 = vxor.u32 %v1950, 2147483648
          %v1954 = vmul.f32 %v1951, 1.442695
          %v1955 = vpow.pop %v1954
          %v1956 = vmul.f32 %v1952, 1.442695
          %v1957 = vpow.pop %v1956
          %v1958 = vmul.f32 %v1953, 1.442695
          %v1959 = vpow.pop %v1958
          %v1960 = vadd.f32 %v1955, 1.0
          %v1961 = vadd.f32 %v1957, 1.0
          %v1962 = vadd.f32 %v1959, 1.0
          %v1963 = vrcp.pop %v1960
          %v1964 = vmul.f32 1.0, %v1963
          %v1965 = vrcp.pop %v1961
          %v1966 = vmul.f32 1.0, %v1965
          %v1967 = vrcp.pop %v1962
          %v1968 = vmul.f32 1.0, %v1967
          %v1969 = vmul.f32 %v1642, %v1964
          %v1970 = vmul.f32 %v1643, %v1966
          %v1971 = vmul.f32 %v1644, %v1968
          %v1972 = vsel %vm1631, %v1969, 0.0
          %v1973 = vsel %vm1631, %v1970, 0.0
          %v1974 = vadd.f32 %v1972, %v1973
          %v1975 = vsel %vm1722, %v1971, 0.0
          %v1976 = vadd.f32 %v1974, %v1975
          %v1977 = vrot.slane %v1976, 4
          %v1978 = vadd.f32 %v1976, %v1977
          %v1979 = vrot.slane %v1978, 2
          %v1980 = vadd.f32 %v1978, %v1979
          %v1981 = vrot.slane %v1980, 1
          %v1982 = vadd.f32 %v1980, %v1981
          %v1983 = vadd.f32 %v1982, %v1671
          %v1984 = vmul.f32 %v1645, %v1926
          %v1985 = vadd.f32 %v1984, %v1646
          %v1986 = vadd.f32 %v1985, %v1983
          %v1989 = vunpack.c.l.s4 1966171168
          %v1990 = vunpack.c.0.s8 %v1989
          %v1991 = vlaneseq
          %v1992 = vshrl.u32 %v1991, 7
          %v1993 = vsub.s32 %v1990, %v1992
          %v1994 = vrot.slane %v1983, %v1993
          %v1996 = vunpack.c.l.s4 1966171168
          %v1997 = vunpack.c.0.s8 %v1996
          %v1998 = vlaneseq
          %v1999 = vshrl.u32 %v1998, 7
          %v2000 = vsub.s32 %v1997, %v1999
          %v2001 = vrot.slane %v1994, %v2000
          %2002 = vrot.lane.b32.xlu0 %v2001, 109
          %v2003 = vpop.permute.xlu0 %2002
          %v2005 = vadd.f32 %v1647, %v2003
          %v2006 = vrcp.pop %v2005
          %v2007 = vmul.f32 %v2005, %v2006
          %v2008 = vsub.f32 2.0, %v2007
          %v2009 = vmul.f32 %v2006, %v2008
          %v2010 = vmul.f32 %v1986, %v2009
          %v2012 = vlaneseq
          %v2013 = vshrl.u32 %v2012, 7
          %v2014 = vsub.s32 0, %v2013
          %v2015 = vrot.slane %v2010, %v2014
          %v2017 = vmul.f32 %v2015, %v1660
          %v2018 = vmul.f32 %v2015, %v1661
          %v2019 = vmul.f32 %v2015, %v1662
          %v2020 = vsel %vm1681, %v2017, 0.0
          %2021 = vadd.xlane.f32.xlu0 %v2020
          %v2022 = vpop.xlane.xlu0 %2021
          %v2023 = vsel %vm1681, %v2018, 0.0
          %2024 = vadd.xlane.f32.xlu0 %v2023
          %v2025 = vpop.xlane.xlu0 %2024
          %v2026 = vsel %vm1688, %v2019, 0.0
          %2027 = vadd.xlane.f32.xlu0 %v2026
          %v2028 = vpop.xlane.xlu0 %2027
          %v2029 = vsub.f32 %v2022, %v1636
          %v2030 = vsub.f32 %v2025, %v1637
          %v2031 = vsub.f32 %v2028, %v1638
          %v2032 = vmul.f32 %v2029, %v1639
          %v2033 = vmul.f32 %v2030, %v1640
          %v2034 = vmul.f32 %v2031, %v1641
          %v2035 = vxor.u32 %v2032, 2147483648
          %v2036 = vxor.u32 %v2033, 2147483648
          %v2037 = vxor.u32 %v2034, 2147483648
          %v2038 = vmul.f32 %v2035, 1.442695
          %v2039 = vpow.pop %v2038
          %v2040 = vmul.f32 %v2036, 1.442695
          %v2041 = vpow.pop %v2040
          %v2042 = vmul.f32 %v2037, 1.442695
          %v2043 = vpow.pop %v2042
          %v2044 = vadd.f32 %v2039, 1.0
          %v2045 = vadd.f32 %v2041, 1.0
          %v2046 = vadd.f32 %v2043, 1.0
          %v2047 = vrcp.pop %v2044
          %v2048 = vmul.f32 1.0, %v2047
          %v2049 = vrcp.pop %v2045
          %v2050 = vmul.f32 1.0, %v2049
          %v2051 = vrcp.pop %v2046
          %v2052 = vmul.f32 1.0, %v2051
          %v2053 = vmul.f32 %v1642, %v2048
          %v2054 = vmul.f32 %v1643, %v2050
          %v2055 = vmul.f32 %v1644, %v2052
          %v2056 = vsel %vm1631, %v2053, 0.0
          %v2057 = vsel %vm1631, %v2054, 0.0
          %v2058 = vadd.f32 %v2056, %v2057
          %v2059 = vsel %vm1722, %v2055, 0.0
          %v2060 = vadd.f32 %v2058, %v2059
          %v2061 = vrot.slane %v2060, 4
          %v2062 = vadd.f32 %v2060, %v2061
          %v2063 = vrot.slane %v2062, 2
          %v2064 = vadd.f32 %v2062, %v2063
          %v2065 = vrot.slane %v2064, 1
          %v2066 = vadd.f32 %v2064, %v2065
          %v2067 = vadd.f32 %v2066, %v1671
          %v2068 = vmul.f32 %v1645, %v2010
          %v2069 = vadd.f32 %v2068, %v1646
          %v2070 = vadd.f32 %v2069, %v2067
          %v2073 = vunpack.c.l.s4 1966171168
          %v2074 = vunpack.c.0.s8 %v2073
          %v2075 = vlaneseq
          %v2076 = vshrl.u32 %v2075, 7
          %v2077 = vsub.s32 %v2074, %v2076
          %v2078 = vrot.slane %v2067, %v2077
          %v2080 = vunpack.c.l.s4 1966171168
          %v2081 = vunpack.c.0.s8 %v2080
          %v2082 = vlaneseq
          %v2083 = vshrl.u32 %v2082, 7
          %v2084 = vsub.s32 %v2081, %v2083
          %v2085 = vrot.slane %v2078, %v2084
          %2086 = vrot.lane.b32.xlu0 %v2085, 109
          %v2087 = vpop.permute.xlu0 %2086
          %v2089 = vadd.f32 %v1647, %v2087
          %v2090 = vrcp.pop %v2089
          %v2091 = vmul.f32 %v2089, %v2090
          %v2092 = vsub.f32 2.0, %v2091
          %v2093 = vmul.f32 %v2090, %v2092
          %v2094 = vmul.f32 %v2070, %v2093
          %v2096 = vlaneseq
          %v2097 = vshrl.u32 %v2096, 7
          %v2098 = vsub.s32 0, %v2097
          %v2099 = vrot.slane %v2094, %v2098
          %v2101 = vmul.f32 %v2099, %v1660
          %v2102 = vmul.f32 %v2099, %v1661
          %v2103 = vmul.f32 %v2099, %v1662
          %v2104 = vsel %vm1681, %v2101, 0.0
          %2105 = vadd.xlane.f32.xlu0 %v2104
          %v2106 = vpop.xlane.xlu0 %2105
          %v2107 = vsel %vm1681, %v2102, 0.0
          %2108 = vadd.xlane.f32.xlu0 %v2107
          %v2109 = vpop.xlane.xlu0 %2108
          %v2110 = vsel %vm1688, %v2103, 0.0
          %2111 = vadd.xlane.f32.xlu0 %v2110
          %v2112 = vpop.xlane.xlu0 %2111
          %v2113 = vsub.f32 %v2106, %v1636
          %v2114 = vsub.f32 %v2109, %v1637
          %v2115 = vsub.f32 %v2112, %v1638
          %v2116 = vmul.f32 %v2113, %v1639
          %v2117 = vmul.f32 %v2114, %v1640
          %v2118 = vmul.f32 %v2115, %v1641
          %v2119 = vxor.u32 %v2116, 2147483648
          %v2120 = vxor.u32 %v2117, 2147483648
          %v2121 = vxor.u32 %v2118, 2147483648
          %v2122 = vmul.f32 %v2119, 1.442695
          %v2123 = vpow.pop %v2122
          %v2124 = vmul.f32 %v2120, 1.442695
          %v2125 = vpow.pop %v2124
          %v2126 = vmul.f32 %v2121, 1.442695
          %v2127 = vpow.pop %v2126
          %v2128 = vadd.f32 %v2123, 1.0
          %v2129 = vadd.f32 %v2125, 1.0
          %v2130 = vadd.f32 %v2127, 1.0
          %v2131 = vrcp.pop %v2128
          %v2132 = vmul.f32 1.0, %v2131
          %v2133 = vrcp.pop %v2129
          %v2134 = vmul.f32 1.0, %v2133
          %v2135 = vrcp.pop %v2130
          %v2136 = vmul.f32 1.0, %v2135
          %v2137 = vmul.f32 %v1642, %v2132
          %v2138 = vmul.f32 %v1643, %v2134
          %v2139 = vmul.f32 %v1644, %v2136
          %v2140 = vsel %vm1631, %v2137, 0.0
          %v2141 = vsel %vm1631, %v2138, 0.0
          %v2142 = vadd.f32 %v2140, %v2141
          %v2143 = vsel %vm1722, %v2139, 0.0
          %v2144 = vadd.f32 %v2142, %v2143
          %v2145 = vrot.slane %v2144, 4
          %v2146 = vadd.f32 %v2144, %v2145
          %v2147 = vrot.slane %v2146, 2
          %v2148 = vadd.f32 %v2146, %v2147
          %v2149 = vrot.slane %v2148, 1
          %v2150 = vadd.f32 %v2148, %v2149
          %v2151 = vadd.f32 %v2150, %v1671
          %v2152 = vmul.f32 %v1645, %v2094
          %v2153 = vadd.f32 %v2152, %v1646
          %v2154 = vadd.f32 %v2153, %v2151
          %v2157 = vunpack.c.l.s4 1966171168
          %v2158 = vunpack.c.0.s8 %v2157
          %v2159 = vlaneseq
          %v2160 = vshrl.u32 %v2159, 7
          %v2161 = vsub.s32 %v2158, %v2160
          %v2162 = vrot.slane %v2151, %v2161
          %v2164 = vunpack.c.l.s4 1966171168
          %v2165 = vunpack.c.0.s8 %v2164
          %v2166 = vlaneseq
          %v2167 = vshrl.u32 %v2166, 7
          %v2168 = vsub.s32 %v2165, %v2167
          %v2169 = vrot.slane %v2162, %v2168
          %2170 = vrot.lane.b32.xlu0 %v2169, 109
          %v2171 = vpop.permute.xlu0 %2170
          %v2173 = vadd.f32 %v1647, %v2171
          %v2174 = vrcp.pop %v2173
          %v2175 = vmul.f32 %v2173, %v2174
          %v2176 = vsub.f32 2.0, %v2175
          %v2177 = vmul.f32 %v2174, %v2176
          %v2178 = vmul.f32 %v2154, %v2177
        $region81: #{forward.9} parent=75 // loop_footer
          %s1668 = sadd.s32 1, %s1664
        $region82: #{forward.9} parent=75 // loop_footer_branch
          %1663 = sbr.rel target = $region78
        $region83: #{forward.9} parent=75 // loop_exit
          _
        %v2179 = vld [vmem:[%s12] sm:$0x1]
        %v2180 = vmul.f32 %v1669, %v2179
        %v2181 = vld [vmem:[%s13] sm:$0x1]
        %v2182 = vadd.f32 %v2180, %v2181
        %vm2183 = vcmask 8192
        %2184 = vst.msk [vmem:[%s459] sm:$0x1] %vm2183, %v2182
        %s2185 = sand.u32 %s335, 1
        %s2186 = scalar_lea.sflag [#allocation4], %s2185
        %s2187 = sand.u32 %s335, 1
        %s2188 = scalar_lea.vmem [#allocation3], %s2187
        // Predicated region
        $region84: #{forward.9} parent=75 // pred_check
          %p2189 = pneg %p345
        $region85: #{forward.9} parent=75 // pred_check_branch
          %2191 = sbr.rel (%p2189) target = $region87
        $region86: #{forward.9} parent=75 // pred_region
          %s2193 = ssub.s32 16, 16
          %2194 = vsyncadd %s2186, %s2193
          %s2195 = smul.addr %s28, 16
          %s2196 = scalar_lea.hbm %s14, %s2195
          %s2198 = sshll.u32 %s2188, 4
          %s2199 = int_to_ptr.vmem [resolvable:$true] %s2198
          %2201 = dma.vmem_to_hbm [thread:$0]  %s2199, 16, %s2196, %s2186
        $region87: #{forward.9} parent=75 // pred_fallthru
          _
      $region76: #{forward.9} parent=5 // pred_fallthru
        _
      %p2202 = scmp.le.s32.totalorder 2, %s23
      // Predicated region
      $region88: #{forward.9} parent=5 // pred_check
        %p2203 = pneg %p2202
      $region89: #{forward.9} parent=5 // pred_check_branch
        %2205 = sbr.rel (%p2203) target = $region91
      $region90: #{forward.9} parent=5 // pred_region
        %s2206 = ssub.s32 %s23, 2
        // Predicated region
        $region92: #{forward.9} parent=90 // pred_check
          %p2207 = pneg %p351
        $region93: #{forward.9} parent=90 // pred_check_branch
          %2209 = sbr.rel (%p2207) target = $region95
        $region94: #{forward.9} parent=90 // pred_region
          %s2210 = sand.u32 %s336, 1
          %s2211 = scalar_lea.sflag [#allocation4], %s2210
          %s2212 = sand.u32 %s336, 1
          %s2213 = scalar_lea.vmem [#allocation3], %s2212
          %2214 = dma.done %s2211, 16
        $region95: #{forward.9} parent=90 // pred_fallthru
          _
      $region91: #{forward.9} parent=5 // pred_fallthru
        _
    $region6: #{forward.9} parent=1 // loop_footer
      %s27 = sadd.s32 1, %s23
    $region7: #{forward.9} parent=1 // loop_footer_branch
      %22 = sbr.rel target = $region3
    $region8: #{forward.9} parent=1 // loop_exit
      _
    %2215 = vsyncpa [#allocation4], 1
    %s2216 = scalar_lea.sflag [#allocation4], 1
    %2217 = vsyncpa %s2216, 1

</llo_original>
